<compile_context>
chip_gen: v5e
topology: v5e:2x2
jax: 0.10.0
libtpu: 0.0.40
codegen_flags: <defaults>
</compile_context>

<pallas_src>
import jax
import jax.numpy as jnp
import numpy as np
from jax.experimental import pallas as pl
from jax.experimental.pallas import tpu as pltpu

HIDDEN = 64      # nn.LSTM(hidden_size=64)
EMB = 200        # embedding_dim=200
VOCAB = 1000     # synthetic vocabulary (len(voc_model)); deterministic init
PAD = 0          # padding_idx

_VMEM_LIMIT = 48 * 1024 * 1024


def _round_up(x, m):
    return (x + m - 1) // m * m


def _pick_tc(T, cap=32):
    """Largest power-of-two chunk length <= cap that divides T."""
    tc = 1
    for cand in (2, 4, 8, 16, 32, 64, 128):
        if cand <= min(T, cap) and T % cand == 0:
            tc = cand
    return tc


def _pick_proj_rows(R, rows, cap=2048):
    """Grow the projection row-chunk (must divide R) up to `cap` rows."""
    best = rows
    k = 2
    while rows * k <= cap and R % (rows * k) == 0:
        best = rows * k
        k *= 2
    return best


# ----------------------------------------------------------------------------
# Hoisted input projections (big MXU matmuls, off the serial path)
# ----------------------------------------------------------------------------
def _proj_kernel(x_ref, w_ref, b_ref, o_ref):
    o_ref[...] = (jnp.dot(x_ref[...], w_ref[...],
                          preferred_element_type=jnp.float32) + b_ref[...])


def input_projection(x2d, w, b, *, rows_per_chunk):
    """gates_x = x2d @ w + b.  x2d: (T*B, D), w: (D, 8H), b: (1, 8H)."""
    R, D = x2d.shape
    F = w.shape[1]
    return pl.pallas_call(
        _proj_kernel,
        out_shape=jax.ShapeDtypeStruct((R, F), jnp.float32),
        grid_spec=pltpu.PrefetchScalarGridSpec(
            num_scalar_prefetch=0,
            grid=(R // rows_per_chunk,),
            in_specs=[pl.BlockSpec((rows_per_chunk, D), lambda c: (c, 0)),
                      pl.BlockSpec((D, F), lambda c: (0, 0)),
                      pl.BlockSpec((1, F), lambda c: (0, 0))],
            out_specs=pl.BlockSpec((rows_per_chunk, F), lambda c: (c, 0))),
        compiler_params=pltpu.CompilerParams(
            dimension_semantics=("parallel",),
            vmem_limit_bytes=_VMEM_LIMIT),
    )(x2d, w, b)


def _proj2_kernel(yf_ref, yb_ref, wf_ref, wb_ref, b_ref, o_ref):
    o_ref[...] = (jnp.dot(yf_ref[...], wf_ref[...],
                          preferred_element_type=jnp.float32)
                  + jnp.dot(yb_ref[...], wb_ref[...],
                            preferred_element_type=jnp.float32)
                  + b_ref[...])


def hidden_projection(yf, yb, wf, wb, b, *, rows_per_chunk):
    """Layer-1 gates_x from layer-0 outputs without materializing the
    (T*B, 2H) concatenation: yf/yb: (T*B, H), wf/wb: (H, 8H), b: (1, 8H)."""
    R, H = yf.shape
    F = wf.shape[1]
    return pl.pallas_call(
        _proj2_kernel,
        out_shape=jax.ShapeDtypeStruct((R, F), jnp.float32),
        grid_spec=pltpu.PrefetchScalarGridSpec(
            num_scalar_prefetch=0,
            grid=(R // rows_per_chunk,),
            in_specs=[pl.BlockSpec((rows_per_chunk, H), lambda c: (c, 0)),
                      pl.BlockSpec((rows_per_chunk, H), lambda c: (c, 0)),
                      pl.BlockSpec((H, F), lambda c: (0, 0)),
                      pl.BlockSpec((H, F), lambda c: (0, 0)),
                      pl.BlockSpec((1, F), lambda c: (0, 0))],
            out_specs=pl.BlockSpec((rows_per_chunk, F), lambda c: (c, 0))),
        compiler_params=pltpu.CompilerParams(
            dimension_semantics=("parallel",),
            vmem_limit_bytes=_VMEM_LIMIT),
    )(yf, yb, wf, wb, b)


# ----------------------------------------------------------------------------
# Shared LSTM cell (PyTorch gate order i, f, g, o)
# ----------------------------------------------------------------------------
def _lstm_cell(g, c_prev, H):
    i = jax.nn.sigmoid(g[:, 0 * H:1 * H])
    f = jax.nn.sigmoid(g[:, 1 * H:2 * H])
    gg = jnp.tanh(g[:, 2 * H:3 * H])
    o = jax.nn.sigmoid(g[:, 3 * H:4 * H])
    c = f * c_prev + i * gg
    h = o * jnp.tanh(c)
    return h, c


# ----------------------------------------------------------------------------
# Layer-0 bidirectional recurrence: both directions per grid step.
# grid = (time-chunk,); fwd consumes chunk c, bwd consumes chunk nc-1-c.
# ----------------------------------------------------------------------------
def _bilstm0_kernel(gxf_ref, gxb_ref, whh_ref, yf_ref, yb_ref,
                    hf_sc, cf_sc, hb_sc, cb_sc):
    B, H = hf_sc.shape
    Tc = gxf_ref.shape[0] // B

    @pl.when(pl.program_id(0) == 0)
    def _():
        hf_sc[...] = jnp.zeros_like(hf_sc)
        cf_sc[...] = jnp.zeros_like(cf_sc)
        hb_sc[...] = jnp.zeros_like(hb_sc)
        cb_sc[...] = jnp.zeros_like(cb_sc)

    whh_f = whh_ref[0]                                  # (H, 4H)
    whh_b = whh_ref[1]

    hf, cf = hf_sc[...], cf_sc[...]
    hb, cb = hb_sc[...], cb_sc[...]

    # Fully unrolled chunk; fwd/bwd steps are independent -> interleave.
    for r in range(Tc):
        rb = Tc - 1 - r                                 # bwd walks chunk back
        gf = gxf_ref[r * B:(r + 1) * B, :] + jnp.dot(
            hf, whh_f, preferred_element_type=jnp.float32)
        gb = gxb_ref[rb * B:(rb + 1) * B, :] + jnp.dot(
            hb, whh_b, preferred_element_type=jnp.float32)
        hf, cf = _lstm_cell(gf, cf, H)
        hb, cb = _lstm_cell(gb, cb, H)
        yf_ref[r * B:(r + 1) * B, :] = hf
        yb_ref[rb * B:(rb + 1) * B, :] = hb

    hf_sc[...] = hf
    cf_sc[...] = cf
    hb_sc[...] = hb
    cb_sc[...] = cb


def bilstm_layer0(gates_x, whh_stack, *, B, T, Tc):
    """gates_x: (T*B, 8H) [fwd | bwd], whh_stack: (2, H, 4H).
    Returns (y_fwd, y_bwd), each (T*B, H)."""
    H = whh_stack.shape[1]
    nc = T // Tc
    rows = Tc * B

    return pl.pallas_call(
        _bilstm0_kernel,
        out_shape=(jax.ShapeDtypeStruct((T * B, H), jnp.float32),
                   jax.ShapeDtypeStruct((T * B, H), jnp.float32)),
        grid_spec=pltpu.PrefetchScalarGridSpec(
            num_scalar_prefetch=0,
            grid=(nc,),
            in_specs=[pl.BlockSpec((rows, 4 * H), lambda c: (c, 0)),
                      pl.BlockSpec((rows, 4 * H), lambda c: (nc - 1 - c, 1)),
                      pl.BlockSpec((2, H, 4 * H), lambda c: (0, 0, 0))],
            out_specs=[pl.BlockSpec((rows, H), lambda c: (c, 0)),
                       pl.BlockSpec((rows, H), lambda c: (nc - 1 - c, 0))],
            scratch_shapes=[pltpu.VMEM((B, H), jnp.float32)] * 4),
        compiler_params=pltpu.CompilerParams(
            dimension_semantics=("arbitrary",),
            vmem_limit_bytes=_VMEM_LIMIT),
    )(gates_x, gates_x, whh_stack)


# ----------------------------------------------------------------------------
# Layer-1 bidirectional recurrence + classification head.
# No per-step outputs; the head runs inside the final grid step.
# ----------------------------------------------------------------------------
def _bilstm1_head_kernel(gxf_ref, gxb_ref, whh_ref, w1_ref, b1_ref,
                         w2_ref, b2_ref, o_ref,
                         hf_sc, cf_sc, hb_sc, cb_sc):
    c_idx = pl.program_id(0)
    nc = pl.num_programs(0)
    B, H = hf_sc.shape
    Tc = gxf_ref.shape[0] // B

    @pl.when(c_idx == 0)
    def _():
        hf_sc[...] = jnp.zeros_like(hf_sc)
        cf_sc[...] = jnp.zeros_like(cf_sc)
        hb_sc[...] = jnp.zeros_like(hb_sc)
        cb_sc[...] = jnp.zeros_like(cb_sc)

    whh_f = whh_ref[0]
    whh_b = whh_ref[1]

    hf, cf = hf_sc[...], cf_sc[...]
    hb, cb = hb_sc[...], cb_sc[...]

    for r in range(Tc):
        rb = Tc - 1 - r
        gf = gxf_ref[r * B:(r + 1) * B, :] + jnp.dot(
            hf, whh_f, preferred_element_type=jnp.float32)
        gb = gxb_ref[rb * B:(rb + 1) * B, :] + jnp.dot(
            hb, whh_b, preferred_element_type=jnp.float32)
        hf, cf = _lstm_cell(gf, cf, H)
        hb, cb = _lstm_cell(gb, cb, H)

    hf_sc[...] = hf
    cf_sc[...] = cf
    hb_sc[...] = hb
    cb_sc[...] = cb

    @pl.when(c_idx == nc - 1)
    def _():
        # torch.cat([h_n[-1] (layer-1 bwd), h_n[-2] (layer-1 fwd)], dim=-1)
        feat = jnp.concatenate([hb_sc[...], hf_sc[...]], axis=-1)   # (B, 2H)
        h1 = jnp.maximum(
            jnp.dot(feat, w1_ref[...], preferred_element_type=jnp.float32)
            + b1_ref[...], 0.0)
        logits = (jnp.dot(h1, w2_ref[...], preferred_element_type=jnp.float32)
                  + b2_ref[...])
        m = jnp.max(logits, axis=-1, keepdims=True)
        s = logits - m
        lse = jnp.log(jnp.sum(jnp.exp(s), axis=-1, keepdims=True))
        o_ref[...] = (s - lse).astype(o_ref.dtype)


def bilstm_head(gates_x, whh_stack, fc1_w, fc1_b, fc2_w, fc2_b, *, B, T, Tc):
    H = whh_stack.shape[1]
    nc = T // Tc
    rows = Tc * B

    return pl.pallas_call(
        _bilstm1_head_kernel,
        out_shape=jax.ShapeDtypeStruct((B, 2), jnp.float32),
        grid_spec=pltpu.PrefetchScalarGridSpec(
            num_scalar_prefetch=0,
            grid=(nc,),
            in_specs=[pl.BlockSpec((rows, 4 * H), lambda c: (c, 0)),
                      pl.BlockSpec((rows, 4 * H), lambda c: (nc - 1 - c, 1)),
                      pl.BlockSpec((2, H, 4 * H), lambda c: (0, 0, 0)),
                      pl.BlockSpec((2 * H, H), lambda c: (0, 0)),
                      pl.BlockSpec((1, H), lambda c: (0, 0)),
                      pl.BlockSpec((H, 2), lambda c: (0, 0)),
                      pl.BlockSpec((1, 2), lambda c: (0, 0))],
            out_specs=pl.BlockSpec((B, 2), lambda c: (0, 0)),
            scratch_shapes=[pltpu.VMEM((B, H), jnp.float32)] * 4),
        compiler_params=pltpu.CompilerParams(
            dimension_semantics=("arbitrary",),
            vmem_limit_bytes=_VMEM_LIMIT),
    )(gates_x, gates_x, whh_stack, fc1_w, fc1_b, fc2_w, fc2_b)


# ----------------------------------------------------------------------------
# Full forward pass (matches ImdbModel.forward, eval mode)
# ----------------------------------------------------------------------------
def imdb_forward(ids, params, *, time_chunk=32):
    B, T = ids.shape
    H = HIDDEN
    Bp = max(8, _round_up(B, 8))          # pad batch to full sublane tiles
    Tc = _pick_tc(T, time_chunk)

    if Bp != B:
        ids = jnp.concatenate(
            [ids, jnp.full((Bp - B, T), PAD, dtype=ids.dtype)], axis=0)

    # Time-major embedding gather (no (B,T,200) activation transpose).
    # TODO(synk): the vocabulary gather itself is left to XLA (a Pallas
    # per-row gather would need a grid point per token).
    x = params["embedding"][ids.T]                       # (T, Bp, EMB)
    x2d = x.reshape(T * Bp, EMB)

    # Pack per-direction weights: W_ih -> (D, 8H) [fwd | bwd], W_hh -> (2,H,4H)
    w_ih0 = jnp.concatenate([params["l0_fwd"][0], params["l0_bwd"][0]], axis=1)
    b0 = jnp.concatenate([params["l0_fwd"][2], params["l0_bwd"][2]], axis=1)
    whh0 = jnp.stack([params["l0_fwd"][1], params["l0_bwd"][1]])
    w_ih1 = jnp.concatenate([params["l1_fwd"][0], params["l1_bwd"][0]], axis=1)
    b1 = jnp.concatenate([params["l1_fwd"][2], params["l1_bwd"][2]], axis=1)
    whh1 = jnp.stack([params["l1_fwd"][1], params["l1_bwd"][1]])

    rows = Tc * Bp
    proj_rows = _pick_proj_rows(T * Bp, rows)

    # Layer 0: hoisted input projection + fused bidirectional recurrence.
    gx0 = input_projection(x2d, w_ih0, b0,
                           rows_per_chunk=proj_rows)              # (T*Bp, 8H)
    yf0, yb0 = bilstm_layer0(gx0, whh0, B=Bp, T=T, Tc=Tc)         # (T*Bp, H) x2

    # TODO(synk): inter-layer dropout (p=0.5) is a training-only op; eval
    # forward is dropout-free.

    # Layer 1: projection from the two direction streams (no concat copy),
    # then recurrence that keeps only h_n and fuses the classification head.
    gx1 = hidden_projection(yf0, yb0, w_ih1[:H], w_ih1[H:], b1,
                            rows_per_chunk=proj_rows)             # (T*Bp, 8H)
    logp = bilstm_head(gx1, whh1,
                       params["fc1_w"], params["fc1_b"].reshape(1, -1),
                       params["fc2_w"], params["fc2_b"].reshape(1, -1),
                       B=Bp, T=T, Tc=Tc)                          # (Bp, 2)
    return logp[:B]


# ----------------------------------------------------------------------------
# Deterministic parameter init (PyTorch-style uniform bounds)
# ----------------------------------------------------------------------------
def init_params(key):
    H = HIDDEN
    std = 1.0 / np.sqrt(H)

    def u(k, shape, s=std):
        return jax.random.uniform(k, shape, jnp.float32, -s, s)

    ks = iter(jax.random.split(key, 16))

    emb = jax.random.normal(next(ks), (VOCAB, EMB), jnp.float32)
    emb = emb.at[PAD].set(0.0)

    def lstm_dir(k, d_in):
        k1, k2, k3, k4 = jax.random.split(k, 4)
        w_ih = u(k1, (d_in, 4 * H))                    # stored transposed for x @ W
        w_hh = u(k2, (H, 4 * H))
        b = (u(k3, (4 * H,)) + u(k4, (4 * H,))).reshape(1, 4 * H)  # b_ih + b_hh
        return (w_ih, w_hh, b)

    return {
        "embedding": emb,
        "l0_fwd": lstm_dir(next(ks), EMB),
        "l0_bwd": lstm_dir(next(ks), EMB),
        "l1_fwd": lstm_dir(next(ks), 2 * H),
        "l1_bwd": lstm_dir(next(ks), 2 * H),
        "fc1_w": u(next(ks), (2 * H, H), 1.0 / np.sqrt(2 * H)),
        "fc1_b": u(next(ks), (H,), 1.0 / np.sqrt(2 * H)),
        "fc2_w": u(next(ks), (H, 2), 1.0 / np.sqrt(H)),
        "fc2_b": u(next(ks), (2,), 1.0 / np.sqrt(H)),
    }


# ----------------------------------------------------------------------------
# Pure-JAX reference for validation
# ----------------------------------------------------------------------------
def _lstm_dir_ref(x_tbd, w_ih, w_hh, b, reverse):
    T, B, _ = x_tbd.shape
    H = w_hh.shape[0]
    xs = x_tbd[::-1] if reverse else x_tbd

    def step(carry, x_t):
        h, c = carry
        gates = x_t @ w_ih + h @ w_hh + b
        i = jax.nn.sigmoid(gates[:, :H])
        f = jax.nn.sigmoid(gates[:, H:2 * H])
        g = jnp.tanh(gates[:, 2 * H:3 * H])
        o = jax.nn.sigmoid(gates[:, 3 * H:])
        c = f * c + i * g
        h = o * jnp.tanh(c)
        return (h, c), h

    (h, _), ys = jax.lax.scan(step, (jnp.zeros((B, H)), jnp.zeros((B, H))), xs)
    if reverse:
        ys = ys[::-1]
    return ys, h


def imdb_forward_ref(ids, params):
    emb = params["embedding"][ids]
    x = jnp.transpose(emb, (1, 0, 2))
    yf, _ = _lstm_dir_ref(x, *params["l0_fwd"], reverse=False)
    yb, _ = _lstm_dir_ref(x, *params["l0_bwd"], reverse=True)
    y1 = jnp.concatenate([yf, yb], axis=-1)
    _, h_fwd = _lstm_dir_ref(y1, *params["l1_fwd"], reverse=False)
    _, h_bwd = _lstm_dir_ref(y1, *params["l1_bwd"], reverse=True)
    out = jnp.concatenate([h_bwd, h_fwd], axis=-1)
    h1 = jnp.maximum(out @ params["fc1_w"] + params["fc1_b"], 0.0)
    logits = h1 @ params["fc2_w"] + params["fc2_b"]
    return jax.nn.log_softmax(logits, axis=-1)


if __name__ == "__main__":
    key = jax.random.PRNGKey(0)
    pkey, ikey = jax.random.split(key)
    params = init_params(pkey)

    B, T = 4, 8
    ids = jax.random.randint(ikey, (B, T), 0, VOCAB, dtype=jnp.int32)

    fwd = jax.jit(imdb_forward)
    out = jax.block_until_ready(fwd(ids, params))

    ref = imdb_forward_ref(ids, params)
    np.testing.assert_allclose(np.asarray(out), np.asarray(ref),
                               rtol=1e-4, atol=1e-5)
    print("KERNEL_OK")
</pallas_src>

<mosaic_0001>
module attributes {stable_mosaic.version = 11 : i64} {
  func.func @_proj_kernel(%arg0: i32, %arg1: memref<64x200xf32, #tpu.memory_space<vmem>>, %arg2: memref<200x512xf32, #tpu.memory_space<vmem>>, %arg3: memref<1x512xf32, #tpu.memory_space<vmem>>, %arg4: memref<64x512xf32, #tpu.memory_space<vmem>>) attributes {dimension_semantics = [#tpu.dimension_semantics<parallel>], iteration_bounds = array<i64: 1>, scalar_prefetch = 0 : i64, scratch_operands = 0 : i64, tpu.core_type = #tpu.core_type<tc>, window_params = [{transform_indices = @transform_0, window_bounds = array<i64: 64, 200>}, {pipeline_mode = #tpu.pipeline_mode<synchronous>, transform_indices = @transform_1, window_bounds = array<i64: 200, 512>}, {pipeline_mode = #tpu.pipeline_mode<synchronous>, transform_indices = @transform_2, window_bounds = array<i64: 1, 512>}, {transform_indices = @transform_3, window_bounds = array<i64: 64, 512>}]} {
    %c0 = arith.constant 0 : index
    %c0_0 = arith.constant 0 : index
    %0 = vector.load %arg1[%c0, %c0_0] : memref<64x200xf32, #tpu.memory_space<vmem>>, vector<64x200xf32>
    %c0_1 = arith.constant 0 : index
    %c0_2 = arith.constant 0 : index
    %1 = vector.load %arg2[%c0_1, %c0_2] : memref<200x512xf32, #tpu.memory_space<vmem>>, vector<200x512xf32>
    %cst = arith.constant dense<0.000000e+00> : vector<64x512xf32>
    %2 = tpu.matmul %0, %1, %cst {dimension_numbers = #tpu.dot_dimension_numbers<[1], [0], [0], [1], [0, 0, 1, 1], [], []>} : vector<64x200xf32>, vector<200x512xf32>, vector<64x512xf32> -> vector<64x512xf32>
    %c0_3 = arith.constant 0 : index
    %c0_4 = arith.constant 0 : index
    %3 = vector.load %arg3[%c0_3, %c0_4] : memref<1x512xf32, #tpu.memory_space<vmem>>, vector<1x512xf32>
    %4 = vector.broadcast %3 : vector<1x512xf32> to vector<64x512xf32>
    %5 = arith.addf %2, %4 : vector<64x512xf32>
    %c0_5 = arith.constant 0 : index
    %c0_6 = arith.constant 0 : index
    %6 = vector.load %arg4[%c0_5, %c0_6] : memref<64x512xf32, #tpu.memory_space<vmem>>, vector<64x512xf32>
    tpu.vector_store %arg4[%c0_5, %c0_6], %5 {strides = array<i32>} : memref<64x512xf32, #tpu.memory_space<vmem>>, vector<64x512xf32>,
    return
  }
  func.func @transform_0(%arg0: i32) -> (i32, i32) {
    %c0_i32 = arith.constant 0 : i32
    %c0_i32_0 = arith.constant 0 : i32
    return %arg0, %c0_i32 : i32, i32
  }
  func.func @transform_1(%arg0: i32) -> (i32, i32) {
    %c0_i32 = arith.constant 0 : i32
    %c0_i32_0 = arith.constant 0 : i32
    %c0_i32_1 = arith.constant 0 : i32
    return %c0_i32, %c0_i32_0 : i32, i32
  }
  func.func @transform_2(%arg0: i32) -> (i32, i32) {
    %c0_i32 = arith.constant 0 : i32
    %c0_i32_0 = arith.constant 0 : i32
    %c0_i32_1 = arith.constant 0 : i32
    return %c0_i32, %c0_i32_0 : i32, i32
  }
  func.func @transform_3(%arg0: i32) -> (i32, i32) {
    %c0_i32 = arith.constant 0 : i32
    %c0_i32_0 = arith.constant 0 : i32
    return %arg0, %c0_i32 : i32, i32
  }
}

module attributes {stable_mosaic.version = 11 : i64} {
  func.func @_bilstm0_kernel(%arg0: i32, %arg1: memref<64x256xf32, #tpu.memory_space<vmem>>, %arg2: memref<64x256xf32, #tpu.memory_space<vmem>>, %arg3: memref<2x64x256xf32, #tpu.memory_space<vmem>>, %arg4: memref<64x64xf32, #tpu.memory_space<vmem>>, %arg5: memref<64x64xf32, #tpu.memory_space<vmem>>, %arg6: memref<8x64xf32, #tpu.memory_space<vmem>>, %arg7: memref<8x64xf32, #tpu.memory_space<vmem>>, %arg8: memref<8x64xf32, #tpu.memory_space<vmem>>, %arg9: memref<8x64xf32, #tpu.memory_space<vmem>>) attributes {dimension_semantics = [#tpu.dimension_semantics<arbitrary>], iteration_bounds = array<i64: 1>, scalar_prefetch = 0 : i64, scratch_operands = 4 : i64, tpu.core_type = #tpu.core_type<tc>, window_params = [{transform_indices = @transform_0, window_bounds = array<i64: 64, 256>}, {transform_indices = @transform_1, window_bounds = array<i64: 64, 256>}, {pipeline_mode = #tpu.pipeline_mode<synchronous>, transform_indices = @transform_2, window_bounds = array<i64: 2, 64, 256>}, {transform_indices = @transform_3, window_bounds = array<i64: 64, 64>}, {transform_indices = @transform_4, window_bounds = array<i64: 64, 64>}]} {
    %c0_i32 = arith.constant 0 : i32
    %0 = arith.cmpi eq, %arg0, %c0_i32 : i32
    %1 = arith.extui %0 : i1 to i32
    %c0_i32_0 = arith.constant 0 : i32
    %2 = arith.cmpi ne, %1, %c0_i32_0 : i32
    scf.if %2 {
      %cst_141 = arith.constant 0.000000e+00 : f32
      %479 = vector.broadcast %cst_141 : f32 to vector<8x64xf32>
      %c0_142 = arith.constant 0 : index
      %c0_143 = arith.constant 0 : index
      %480 = vector.load %arg6[%c0_142, %c0_143] : memref<8x64xf32, #tpu.memory_space<vmem>>, vector<8x64xf32>
      tpu.vector_store %arg6[%c0_142, %c0_143], %479 {strides = array<i32>} : memref<8x64xf32, #tpu.memory_space<vmem>>, vector<8x64xf32>,
      %cst_144 = arith.constant 0.000000e+00 : f32
      %481 = vector.broadcast %cst_144 : f32 to vector<8x64xf32>
      %c0_145 = arith.constant 0 : index
      %c0_146 = arith.constant 0 : index
      %482 = vector.load %arg7[%c0_145, %c0_146] : memref<8x64xf32, #tpu.memory_space<vmem>>, vector<8x64xf32>
      tpu.vector_store %arg7[%c0_145, %c0_146], %481 {strides = array<i32>} : memref<8x64xf32, #tpu.memory_space<vmem>>, vector<8x64xf32>,
      %cst_147 = arith.constant 0.000000e+00 : f32
      %483 = vector.broadcast %cst_147 : f32 to vector<8x64xf32>
      %c0_148 = arith.constant 0 : index
      %c0_149 = arith.constant 0 : index
      %484 = vector.load %arg8[%c0_148, %c0_149] : memref<8x64xf32, #tpu.memory_space<vmem>>, vector<8x64xf32>
      tpu.vector_store %arg8[%c0_148, %c0_149], %483 {strides = array<i32>} : memref<8x64xf32, #tpu.memory_space<vmem>>, vector<8x64xf32>,
      %cst_150 = arith.constant 0.000000e+00 : f32
      %485 = vector.broadcast %cst_150 : f32 to vector<8x64xf32>
      %c0_151 = arith.constant 0 : index
      %c0_152 = arith.constant 0 : index
      %486 = vector.load %arg9[%c0_151, %c0_152] : memref<8x64xf32, #tpu.memory_space<vmem>>, vector<8x64xf32>
      tpu.vector_store %arg9[%c0_151, %c0_152], %485 {strides = array<i32>} : memref<8x64xf32, #tpu.memory_space<vmem>>, vector<8x64xf32>,
    } else {
    }
    %c0 = arith.constant 0 : index
    %c0_1 = arith.constant 0 : index
    %c0_2 = arith.constant 0 : index
    %3 = vector.load %arg3[%c0, %c0_1, %c0_2] : memref<2x64x256xf32, #tpu.memory_space<vmem>>, vector<1x64x256xf32>
    %4 = vector.shape_cast %3 : vector<1x64x256xf32> to vector<64x256xf32>
    %c1 = arith.constant 1 : index
    %c0_3 = arith.constant 0 : index
    %c0_4 = arith.constant 0 : index
    %5 = vector.load %arg3[%c1, %c0_3, %c0_4] : memref<2x64x256xf32, #tpu.memory_space<vmem>>, vector<1x64x256xf32>
    %6 = vector.shape_cast %5 : vector<1x64x256xf32> to vector<64x256xf32>
    %c0_5 = arith.constant 0 : index
    %c0_6 = arith.constant 0 : index
    %7 = vector.load %arg6[%c0_5, %c0_6] : memref<8x64xf32, #tpu.memory_space<vmem>>, vector<8x64xf32>
    %c0_7 = arith.constant 0 : index
    %c0_8 = arith.constant 0 : index
    %8 = vector.load %arg7[%c0_7, %c0_8] : memref<8x64xf32, #tpu.memory_space<vmem>>, vector<8x64xf32>
    %c0_9 = arith.constant 0 : index
    %c0_10 = arith.constant 0 : index
    %9 = vector.load %arg8[%c0_9, %c0_10] : memref<8x64xf32, #tpu.memory_space<vmem>>, vector<8x64xf32>
    %c0_11 = arith.constant 0 : index
    %c0_12 = arith.constant 0 : index
    %10 = vector.load %arg9[%c0_11, %c0_12] : memref<8x64xf32, #tpu.memory_space<vmem>>, vector<8x64xf32>
    %c0_13 = arith.constant 0 : index
    %c0_14 = arith.constant 0 : index
    %11 = vector.load %arg1[%c0_13, %c0_14] : memref<64x256xf32, #tpu.memory_space<vmem>>, vector<8x256xf32>
    %cst = arith.constant dense<0.000000e+00> : vector<8x256xf32>
    %12 = tpu.matmul %7, %4, %cst {dimension_numbers = #tpu.dot_dimension_numbers<[1], [0], [0], [1], [0, 0, 1, 1], [], []>} : vector<8x64xf32>, vector<64x256xf32>, vector<8x256xf32> -> vector<8x256xf32>
    %13 = arith.addf %11, %12 : vector<8x256xf32>
    %c56 = arith.constant 56 : index
    %c0_15 = arith.constant 0 : index
    %14 = vector.load %arg2[%c56, %c0_15] : memref<64x256xf32, #tpu.memory_space<vmem>>, vector<8x256xf32>
    %cst_16 = arith.constant dense<0.000000e+00> : vector<8x256xf32>
    %15 = tpu.matmul %9, %6, %cst_16 {dimension_numbers = #tpu.dot_dimension_numbers<[1], [0], [0], [1], [0, 0, 1, 1], [], []>} : vector<8x64xf32>, vector<64x256xf32>, vector<8x256xf32> -> vector<8x256xf32>
    %16 = arith.addf %14, %15 : vector<8x256xf32>
    %17 = vector.extract_strided_slice %13 {offsets = [0, 0], sizes = [8, 64], strides = [1, 1]} : vector<8x256xf32> to vector<8x64xf32>
    %18 = arith.negf %17 : vector<8x64xf32>
    %19 = math.exp %18 : vector<8x64xf32>
    %cst_17 = arith.constant 1.000000e+00 : f32
    %20 = vector.broadcast %cst_17 : f32 to vector<8x64xf32>
    %21 = arith.addf %20, %19 : vector<8x64xf32>
    %22 = arith.divf %20, %21 : vector<8x64xf32>
    %23 = vector.extract_strided_slice %13 {offsets = [0, 64], sizes = [8, 64], strides = [1, 1]} : vector<8x256xf32> to vector<8x64xf32>
    %24 = arith.negf %23 : vector<8x64xf32>
    %25 = math.exp %24 : vector<8x64xf32>
    %cst_18 = arith.constant 1.000000e+00 : f32
    %26 = vector.broadcast %cst_18 : f32 to vector<8x64xf32>
    %27 = arith.addf %26, %25 : vector<8x64xf32>
    %28 = arith.divf %26, %27 : vector<8x64xf32>
    %29 = vector.extract_strided_slice %13 {offsets = [0, 128], sizes = [8, 64], strides = [1, 1]} : vector<8x256xf32> to vector<8x64xf32>
    %30 = math.tanh %29 : vector<8x64xf32>
    %31 = vector.extract_strided_slice %13 {offsets = [0, 192], sizes = [8, 64], strides = [1, 1]} : vector<8x256xf32> to vector<8x64xf32>
    %32 = arith.negf %31 : vector<8x64xf32>
    %33 = math.exp %32 : vector<8x64xf32>
    %cst_19 = arith.constant 1.000000e+00 : f32
    %34 = vector.broadcast %cst_19 : f32 to vector<8x64xf32>
    %35 = arith.addf %34, %33 : vector<8x64xf32>
    %36 = arith.divf %34, %35 : vector<8x64xf32>
    %37 = arith.mulf %28, %8 : vector<8x64xf32>
    %38 = arith.mulf %22, %30 : vector<8x64xf32>
    %39 = arith.addf %37, %38 : vector<8x64xf32>
    %40 = math.tanh %39 : vector<8x64xf32>
    %41 = arith.mulf %36, %40 : vector<8x64xf32>
    %42 = vector.extract_strided_slice %16 {offsets = [0, 0], sizes = [8, 64], strides = [1, 1]} : vector<8x256xf32> to vector<8x64xf32>
    %43 = arith.negf %42 : vector<8x64xf32>
    %44 = math.exp %43 : vector<8x64xf32>
    %cst_20 = arith.constant 1.000000e+00 : f32
    %45 = vector.broadcast %cst_20 : f32 to vector<8x64xf32>
    %46 = arith.addf %45, %44 : vector<8x64xf32>
    %47 = arith.divf %45, %46 : vector<8x64xf32>
    %48 = vector.extract_strided_slice %16 {offsets = [0, 64], sizes = [8, 64], strides = [1, 1]} : vector<8x256xf32> to vector<8x64xf32>
    %49 = arith.negf %48 : vector<8x64xf32>
    %50 = math.exp %49 : vector<8x64xf32>
    %cst_21 = arith.constant 1.000000e+00 : f32
    %51 = vector.broadcast %cst_21 : f32 to vector<8x64xf32>
    %52 = arith.addf %51, %50 : vector<8x64xf32>
    %53 = arith.divf %51, %52 : vector<8x64xf32>
    %54 = vector.extract_strided_slice %16 {offsets = [0, 128], sizes = [8, 64], strides = [1, 1]} : vector<8x256xf32> to vector<8x64xf32>
    %55 = math.tanh %54 : vector<8x64xf32>
    %56 = vector.extract_strided_slice %16 {offsets = [0, 192], sizes = [8, 64], strides = [1, 1]} : vector<8x256xf32> to vector<8x64xf32>
    %57 = arith.negf %56 : vector<8x64xf32>
    %58 = math.exp %57 : vector<8x64xf32>
    %cst_22 = arith.constant 1.000000e+00 : f32
    %59 = vector.broadcast %cst_22 : f32 to vector<8x64xf32>
    %60 = arith.addf %59, %58 : vector<8x64xf32>
    %61 = arith.divf %59, %60 : vector<8x64xf32>
    %62 = arith.mulf %53, %10 : vector<8x64xf32>
    %63 = arith.mulf %47, %55 : vector<8x64xf32>
    %64 = arith.addf %62, %63 : vector<8x64xf32>
    %65 = math.tanh %64 : vector<8x64xf32>
    %66 = arith.mulf %61, %65 : vector<8x64xf32>
    %c0_23 = arith.constant 0 : index
    %c0_24 = arith.constant 0 : index
    %67 = vector.load %arg4[%c0_23, %c0_24] : memref<64x64xf32, #tpu.memory_space<vmem>>, vector<8x64xf32>
    tpu.vector_store %arg4[%c0_23, %c0_24], %41 {strides = array<i32>} : memref<64x64xf32, #tpu.memory_space<vmem>>, vector<8x64xf32>,
    %c56_25 = arith.constant 56 : index
    %c0_26 = arith.constant 0 : index
    %68 = vector.load %arg5[%c56_25, %c0_26] : memref<64x64xf32, #tpu.memory_space<vmem>>, vector<8x64xf32>
    tpu.vector_store %arg5[%c56_25, %c0_26], %66 {strides = array<i32>} : memref<64x64xf32, #tpu.memory_space<vmem>>, vector<8x64xf32>,
    %c8 = arith.constant 8 : index
    %c0_27 = arith.constant 0 : index
    %69 = vector.load %arg1[%c8, %c0_27] : memref<64x256xf32, #tpu.memory_space<vmem>>, vector<8x256xf32>
    %cst_28 = arith.constant dense<0.000000e+00> : vector<8x256xf32>
    %70 = tpu.matmul %41, %4, %cst_28 {dimension_numbers = #tpu.dot_dimension_numbers<[1], [0], [0], [1], [0, 0, 1, 1], [], []>} : vector<8x64xf32>, vector<64x256xf32>, vector<8x256xf32> -> vector<8x256xf32>
    %71 = arith.addf %69, %70 : vector<8x256xf32>
    %c48 = arith.constant 48 : index
    %c0_29 = arith.constant 0 : index
    %72 = vector.load %arg2[%c48, %c0_29] : memref<64x256xf32, #tpu.memory_space<vmem>>, vector<8x256xf32>
    %cst_30 = arith.constant dense<0.000000e+00> : vector<8x256xf32>
    %73 = tpu.matmul %66, %6, %cst_30 {dimension_numbers = #tpu.dot_dimension_numbers<[1], [0], [0], [1], [0, 0, 1, 1], [], []>} : vector<8x64xf32>, vector<64x256xf32>, vector<8x256xf32> -> vector<8x256xf32>
    %74 = arith.addf %72, %73 : vector<8x256xf32>
    %75 = vector.extract_strided_slice %71 {offsets = [0, 0], sizes = [8, 64], strides = [1, 1]} : vector<8x256xf32> to vector<8x64xf32>
    %76 = arith.negf %75 : vector<8x64xf32>
    %77 = math.exp %76 : vector<8x64xf32>
    %cst_31 = arith.constant 1.000000e+00 : f32
    %78 = vector.broadcast %cst_31 : f32 to vector<8x64xf32>
    %79 = arith.addf %78, %77 : vector<8x64xf32>
    %80 = arith.divf %78, %79 : vector<8x64xf32>
    %81 = vector.extract_strided_slice %71 {offsets = [0, 64], sizes = [8, 64], strides = [1, 1]} : vector<8x256xf32> to vector<8x64xf32>
    %82 = arith.negf %81 : vector<8x64xf32>
    %83 = math.exp %82 : vector<8x64xf32>
    %cst_32 = arith.constant 1.000000e+00 : f32
    %84 = vector.broadcast %cst_32 : f32 to vector<8x64xf32>
    %85 = arith.addf %84, %83 : vector<8x64xf32>
    %86 = arith.divf %84, %85 : vector<8x64xf32>
    %87 = vector.extract_strided_slice %71 {offsets = [0, 128], sizes = [8, 64], strides = [1, 1]} : vector<8x256xf32> to vector<8x64xf32>
    %88 = math.tanh %87 : vector<8x64xf32>
    %89 = vector.extract_strided_slice %71 {offsets = [0, 192], sizes = [8, 64], strides = [1, 1]} : vector<8x256xf32> to vector<8x64xf32>
    %90 = arith.negf %89 : vector<8x64xf32>
    %91 = math.exp %90 : vector<8x64xf32>
    %cst_33 = arith.constant 1.000000e+00 : f32
    %92 = vector.broadcast %cst_33 : f32 to vector<8x64xf32>
    %93 = arith.addf %92, %91 : vector<8x64xf32>
    %94 = arith.divf %92, %93 : vector<8x64xf32>
    %95 = arith.mulf %86, %39 : vector<8x64xf32>
    %96 = arith.mulf %80, %88 : vector<8x64xf32>
    %97 = arith.addf %95, %96 : vector<8x64xf32>
    %98 = math.tanh %97 : vector<8x64xf32>
    %99 = arith.mulf %94, %98 : vector<8x64xf32>
    %100 = vector.extract_strided_slice %74 {offsets = [0, 0], sizes = [8, 64], strides = [1, 1]} : vector<8x256xf32> to vector<8x64xf32>
    %101 = arith.negf %100 : vector<8x64xf32>
    %102 = math.exp %101 : vector<8x64xf32>
    %cst_34 = arith.constant 1.000000e+00 : f32
    %103 = vector.broadcast %cst_34 : f32 to vector<8x64xf32>
    %104 = arith.addf %103, %102 : vector<8x64xf32>
    %105 = arith.divf %103, %104 : vector<8x64xf32>
    %106 = vector.extract_strided_slice %74 {offsets = [0, 64], sizes = [8, 64], strides = [1, 1]} : vector<8x256xf32> to vector<8x64xf32>
    %107 = arith.negf %106 : vector<8x64xf32>
    %108 = math.exp %107 : vector<8x64xf32>
    %cst_35 = arith.constant 1.000000e+00 : f32
    %109 = vector.broadcast %cst_35 : f32 to vector<8x64xf32>
    %110 = arith.addf %109, %108 : vector<8x64xf32>
    %111 = arith.divf %109, %110 : vector<8x64xf32>
    %112 = vector.extract_strided_slice %74 {offsets = [0, 128], sizes = [8, 64], strides = [1, 1]} : vector<8x256xf32> to vector<8x64xf32>
    %113 = math.tanh %112 : vector<8x64xf32>
    %114 = vector.extract_strided_slice %74 {offsets = [0, 192], sizes = [8, 64], strides = [1, 1]} : vector<8x256xf32> to vector<8x64xf32>
    %115 = arith.negf %114 : vector<8x64xf32>
    %116 = math.exp %115 : vector<8x64xf32>
    %cst_36 = arith.constant 1.000000e+00 : f32
    %117 = vector.broadcast %cst_36 : f32 to vector<8x64xf32>
    %118 = arith.addf %117, %116 : vector<8x64xf32>
    %119 = arith.divf %117, %118 : vector<8x64xf32>
    %120 = arith.mulf %111, %64 : vector<8x64xf32>
    %121 = arith.mulf %105, %113 : vector<8x64xf32>
    %122 = arith.addf %120, %121 : vector<8x64xf32>
    %123 = math.tanh %122 : vector<8x64xf32>
    %124 = arith.mulf %119, %123 : vector<8x64xf32>
    %c8_37 = arith.constant 8 : index
    %c0_38 = arith.constant 0 : index
    %125 = vector.load %arg4[%c8_37, %c0_38] : memref<64x64xf32, #tpu.memory_space<vmem>>, vector<8x64xf32>
    tpu.vector_store %arg4[%c8_37, %c0_38], %99 {strides = array<i32>} : memref<64x64xf32, #tpu.memory_space<vmem>>, vector<8x64xf32>,
    %c48_39 = arith.constant 48 : index
    %c0_40 = arith.constant 0 : index
    %126 = vector.load %arg5[%c48_39, %c0_40] : memref<64x64xf32, #tpu.memory_space<vmem>>, vector<8x64xf32>
    tpu.vector_store %arg5[%c48_39, %c0_40], %124 {strides = array<i32>} : memref<64x64xf32, #tpu.memory_space<vmem>>, vector<8x64xf32>,
    %c16 = arith.constant 16 : index
    %c0_41 = arith.constant 0 : index
    %127 = vector.load %arg1[%c16, %c0_41] : memref<64x256xf32, #tpu.memory_space<vmem>>, vector<8x256xf32>
    %cst_42 = arith.constant dense<0.000000e+00> : vector<8x256xf32>
    %128 = tpu.matmul %99, %4, %cst_42 {dimension_numbers = #tpu.dot_dimension_numbers<[1], [0], [0], [1], [0, 0, 1, 1], [], []>} : vector<8x64xf32>, vector<64x256xf32>, vector<8x256xf32> -> vector<8x256xf32>
    %129 = arith.addf %127, %128 : vector<8x256xf32>
    %c40 = arith.constant 40 : index
    %c0_43 = arith.constant 0 : index
    %130 = vector.load %arg2[%c40, %c0_43] : memref<64x256xf32, #tpu.memory_space<vmem>>, vector<8x256xf32>
    %cst_44 = arith.constant dense<0.000000e+00> : vector<8x256xf32>
    %131 = tpu.matmul %124, %6, %cst_44 {dimension_numbers = #tpu.dot_dimension_numbers<[1], [0], [0], [1], [0, 0, 1, 1], [], []>} : vector<8x64xf32>, vector<64x256xf32>, vector<8x256xf32> -> vector<8x256xf32>
    %132 = arith.addf %130, %131 : vector<8x256xf32>
    %133 = vector.extract_strided_slice %129 {offsets = [0, 0], sizes = [8, 64], strides = [1, 1]} : vector<8x256xf32> to vector<8x64xf32>
    %134 = arith.negf %133 : vector<8x64xf32>
    %135 = math.exp %134 : vector<8x64xf32>
    %cst_45 = arith.constant 1.000000e+00 : f32
    %136 = vector.broadcast %cst_45 : f32 to vector<8x64xf32>
    %137 = arith.addf %136, %135 : vector<8x64xf32>
    %138 = arith.divf %136, %137 : vector<8x64xf32>
    %139 = vector.extract_strided_slice %129 {offsets = [0, 64], sizes = [8, 64], strides = [1, 1]} : vector<8x256xf32> to vector<8x64xf32>
    %140 = arith.negf %139 : vector<8x64xf32>
    %141 = math.exp %140 : vector<8x64xf32>
    %cst_46 = arith.constant 1.000000e+00 : f32
    %142 = vector.broadcast %cst_46 : f32 to vector<8x64xf32>
    %143 = arith.addf %142, %141 : vector<8x64xf32>
    %144 = arith.divf %142, %143 : vector<8x64xf32>
    %145 = vector.extract_strided_slice %129 {offsets = [0, 128], sizes = [8, 64], strides = [1, 1]} : vector<8x256xf32> to vector<8x64xf32>
    %146 = math.tanh %145 : vector<8x64xf32>
    %147 = vector.extract_strided_slice %129 {offsets = [0, 192], sizes = [8, 64], strides = [1, 1]} : vector<8x256xf32> to vector<8x64xf32>
    %148 = arith.negf %147 : vector<8x64xf32>
    %149 = math.exp %148 : vector<8x64xf32>
    %cst_47 = arith.constant 1.000000e+00 : f32
    %150 = vector.broadcast %cst_47 : f32 to vector<8x64xf32>
    %151 = arith.addf %150, %149 : vector<8x64xf32>
    %152 = arith.divf %150, %151 : vector<8x64xf32>
    %153 = arith.mulf %144, %97 : vector<8x64xf32>
    %154 = arith.mulf %138, %146 : vector<8x64xf32>
    %155 = arith.addf %153, %154 : vector<8x64xf32>
    %156 = math.tanh %155 : vector<8x64xf32>
    %157 = arith.mulf %152, %156 : vector<8x64xf32>
    %158 = vector.extract_strided_slice %132 {offsets = [0, 0], sizes = [8, 64], strides = [1, 1]} : vector<8x256xf32> to vector<8x64xf32>
    %159 = arith.negf %158 : vector<8x64xf32>
    %160 = math.exp %159 : vector<8x64xf32>
    %cst_48 = arith.constant 1.000000e+00 : f32
    %161 = vector.broadcast %cst_48 : f32 to vector<8x64xf32>
    %162 = arith.addf %161, %160 : vector<8x64xf32>
    %163 = arith.divf %161, %162 : vector<8x64xf32>
    %164 = vector.extract_strided_slice %132 {offsets = [0, 64], sizes = [8, 64], strides = [1, 1]} : vector<8x256xf32> to vector<8x64xf32>
    %165 = arith.negf %164 : vector<8x64xf32>
    %166 = math.exp %165 : vector<8x64xf32>
    %cst_49 = arith.constant 1.000000e+00 : f32
    %167 = vector.broadcast %cst_49 : f32 to vector<8x64xf32>
    %168 = arith.addf %167, %166 : vector<8x64xf32>
    %169 = arith.divf %167, %168 : vector<8x64xf32>
    %170 = vector.extract_strided_slice %132 {offsets = [0, 128], sizes = [8, 64], strides = [1, 1]} : vector<8x256xf32> to vector<8x64xf32>
    %171 = math.tanh %170 : vector<8x64xf32>
    %172 = vector.extract_strided_slice %132 {offsets = [0, 192], sizes = [8, 64], strides = [1, 1]} : vector<8x256xf32> to vector<8x64xf32>
    %173 = arith.negf %172 : vector<8x64xf32>
    %174 = math.exp %173 : vector<8x64xf32>
    %cst_50 = arith.constant 1.000000e+00 : f32
    %175 = vector.broadcast %cst_50 : f32 to vector<8x64xf32>
    %176 = arith.addf %175, %174 : vector<8x64xf32>
    %177 = arith.divf %175, %176 : vector<8x64xf32>
    %178 = arith.mulf %169, %122 : vector<8x64xf32>
    %179 = arith.mulf %163, %171 : vector<8x64xf32>
    %180 = arith.addf %178, %179 : vector<8x64xf32>
    %181 = math.tanh %180 : vector<8x64xf32>
    %182 = arith.mulf %177, %181 : vector<8x64xf32>
    %c16_51 = arith.constant 16 : index
    %c0_52 = arith.constant 0 : index
    %183 = vector.load %arg4[%c16_51, %c0_52] : memref<64x64xf32, #tpu.memory_space<vmem>>, vector<8x64xf32>
    tpu.vector_store %arg4[%c16_51, %c0_52], %157 {strides = array<i32>} : memref<64x64xf32, #tpu.memory_space<vmem>>, vector<8x64xf32>,
    %c40_53 = arith.constant 40 : index
    %c0_54 = arith.constant 0 : index
    %184 = vector.load %arg5[%c40_53, %c0_54] : memref<64x64xf32, #tpu.memory_space<vmem>>, vector<8x64xf32>
    tpu.vector_store %arg5[%c40_53, %c0_54], %182 {strides = array<i32>} : memref<64x64xf32, #tpu.memory_space<vmem>>, vector<8x64xf32>,
    %c24 = arith.constant 24 : index
    %c0_55 = arith.constant 0 : index
    %185 = vector.load %arg1[%c24, %c0_55] : memref<64x256xf32, #tpu.memory_space<vmem>>, vector<8x256xf32>
    %cst_56 = arith.constant dense<0.000000e+00> : vector<8x256xf32>
    %186 = tpu.matmul %157, %4, %cst_56 {dimension_numbers = #tpu.dot_dimension_numbers<[1], [0], [0], [1], [0, 0, 1, 1], [], []>} : vector<8x64xf32>, vector<64x256xf32>, vector<8x256xf32> -> vector<8x256xf32>
    %187 = arith.addf %185, %186 : vector<8x256xf32>
    %c32 = arith.constant 32 : index
    %c0_57 = arith.constant 0 : index
    %188 = vector.load %arg2[%c32, %c0_57] : memref<64x256xf32, #tpu.memory_space<vmem>>, vector<8x256xf32>
    %cst_58 = arith.constant dense<0.000000e+00> : vector<8x256xf32>
    %189 = tpu.matmul %182, %6, %cst_58 {dimension_numbers = #tpu.dot_dimension_numbers<[1], [0], [0], [1], [0, 0, 1, 1], [], []>} : vector<8x64xf32>, vector<64x256xf32>, vector<8x256xf32> -> vector<8x256xf32>
    %190 = arith.addf %188, %189 : vector<8x256xf32>
    %191 = vector.extract_strided_slice %187 {offsets = [0, 0], sizes = [8, 64], strides = [1, 1]} : vector<8x256xf32> to vector<8x64xf32>
    %192 = arith.negf %191 : vector<8x64xf32>
    %193 = math.exp %192 : vector<8x64xf32>
    %cst_59 = arith.constant 1.000000e+00 : f32
    %194 = vector.broadcast %cst_59 : f32 to vector<8x64xf32>
    %195 = arith.addf %194, %193 : vector<8x64xf32>
    %196 = arith.divf %194, %195 : vector<8x64xf32>
    %197 = vector.extract_strided_slice %187 {offsets = [0, 64], sizes = [8, 64], strides = [1, 1]} : vector<8x256xf32> to vector<8x64xf32>
    %198 = arith.negf %197 : vector<8x64xf32>
    %199 = math.exp %198 : vector<8x64xf32>
    %cst_60 = arith.constant 1.000000e+00 : f32
    %200 = vector.broadcast %cst_60 : f32 to vector<8x64xf32>
    %201 = arith.addf %200, %199 : vector<8x64xf32>
    %202 = arith.divf %200, %201 : vector<8x64xf32>
    %203 = vector.extract_strided_slice %187 {offsets = [0, 128], sizes = [8, 64], strides = [1, 1]} : vector<8x256xf32> to vector<8x64xf32>
    %204 = math.tanh %203 : vector<8x64xf32>
    %205 = vector.extract_strided_slice %187 {offsets = [0, 192], sizes = [8, 64], strides = [1, 1]} : vector<8x256xf32> to vector<8x64xf32>
    %206 = arith.negf %205 : vector<8x64xf32>
    %207 = math.exp %206 : vector<8x64xf32>
    %cst_61 = arith.constant 1.000000e+00 : f32
    %208 = vector.broadcast %cst_61 : f32 to vector<8x64xf32>
    %209 = arith.addf %208, %207 : vector<8x64xf32>
    %210 = arith.divf %208, %209 : vector<8x64xf32>
    %211 = arith.mulf %202, %155 : vector<8x64xf32>
    %212 = arith.mulf %196, %204 : vector<8x64xf32>
    %213 = arith.addf %211, %212 : vector<8x64xf32>
    %214 = math.tanh %213 : vector<8x64xf32>
    %215 = arith.mulf %210, %214 : vector<8x64xf32>
    %216 = vector.extract_strided_slice %190 {offsets = [0, 0], sizes = [8, 64], strides = [1, 1]} : vector<8x256xf32> to vector<8x64xf32>
    %217 = arith.negf %216 : vector<8x64xf32>
    %218 = math.exp %217 : vector<8x64xf32>
    %cst_62 = arith.constant 1.000000e+00 : f32
    %219 = vector.broadcast %cst_62 : f32 to vector<8x64xf32>
    %220 = arith.addf %219, %218 : vector<8x64xf32>
    %221 = arith.divf %219, %220 : vector<8x64xf32>
    %222 = vector.extract_strided_slice %190 {offsets = [0, 64], sizes = [8, 64], strides = [1, 1]} : vector<8x256xf32> to vector<8x64xf32>
    %223 = arith.negf %222 : vector<8x64xf32>
    %224 = math.exp %223 : vector<8x64xf32>
    %cst_63 = arith.constant 1.000000e+00 : f32
    %225 = vector.broadcast %cst_63 : f32 to vector<8x64xf32>
    %226 = arith.addf %225, %224 : vector<8x64xf32>
    %227 = arith.divf %225, %226 : vector<8x64xf32>
    %228 = vector.extract_strided_slice %190 {offsets = [0, 128], sizes = [8, 64], strides = [1, 1]} : vector<8x256xf32> to vector<8x64xf32>
    %229 = math.tanh %228 : vector<8x64xf32>
    %230 = vector.extract_strided_slice %190 {offsets = [0, 192], sizes = [8, 64], strides = [1, 1]} : vector<8x256xf32> to vector<8x64xf32>
    %231 = arith.negf %230 : vector<8x64xf32>
    %232 = math.exp %231 : vector<8x64xf32>
    %cst_64 = arith.constant 1.000000e+00 : f32
    %233 = vector.broadcast %cst_64 : f32 to vector<8x64xf32>
    %234 = arith.addf %233, %232 : vector<8x64xf32>
    %235 = arith.divf %233, %234 : vector<8x64xf32>
    %236 = arith.mulf %227, %180 : vector<8x64xf32>
    %237 = arith.mulf %221, %229 : vector<8x64xf32>
    %238 = arith.addf %236, %237 : vector<8x64xf32>
    %239 = math.tanh %238 : vector<8x64xf32>
    %240 = arith.mulf %235, %239 : vector<8x64xf32>
    %c24_65 = arith.constant 24 : index
    %c0_66 = arith.constant 0 : index
    %241 = vector.load %arg4[%c24_65, %c0_66] : memref<64x64xf32, #tpu.memory_space<vmem>>, vector<8x64xf32>
    tpu.vector_store %arg4[%c24_65, %c0_66], %215 {strides = array<i32>} : memref<64x64xf32, #tpu.memory_space<vmem>>, vector<8x64xf32>,
    %c32_67 = arith.constant 32 : index
    %c0_68 = arith.constant 0 : index
    %242 = vector.load %arg5[%c32_67, %c0_68] : memref<64x64xf32, #tpu.memory_space<vmem>>, vector<8x64xf32>
    tpu.vector_store %arg5[%c32_67, %c0_68], %240 {strides = array<i32>} : memref<64x64xf32, #tpu.memory_space<vmem>>, vector<8x64xf32>,
    %c32_69 = arith.constant 32 : index
    %c0_70 = arith.constant 0 : index
    %243 = vector.load %arg1[%c32_69, %c0_70] : memref<64x256xf32, #tpu.memory_space<vmem>>, vector<8x256xf32>
    %cst_71 = arith.constant dense<0.000000e+00> : vector<8x256xf32>
    %244 = tpu.matmul %215, %4, %cst_71 {dimension_numbers = #tpu.dot_dimension_numbers<[1], [0], [0], [1], [0, 0, 1, 1], [], []>} : vector<8x64xf32>, vector<64x256xf32>, vector<8x256xf32> -> vector<8x256xf32>
    %245 = arith.addf %243, %244 : vector<8x256xf32>
    %c24_72 = arith.constant 24 : index
    %c0_73 = arith.constant 0 : index
    %246 = vector.load %arg2[%c24_72, %c0_73] : memref<64x256xf32, #tpu.memory_space<vmem>>, vector<8x256xf32>
    %cst_74 = arith.constant dense<0.000000e+00> : vector<8x256xf32>
    %247 = tpu.matmul %240, %6, %cst_74 {dimension_numbers = #tpu.dot_dimension_numbers<[1], [0], [0], [1], [0, 0, 1, 1], [], []>} : vector<8x64xf32>, vector<64x256xf32>, vector<8x256xf32> -> vector<8x256xf32>
    %248 = arith.addf %246, %247 : vector<8x256xf32>
    %249 = vector.extract_strided_slice %245 {offsets = [0, 0], sizes = [8, 64], strides = [1, 1]} : vector<8x256xf32> to vector<8x64xf32>
    %250 = arith.negf %249 : vector<8x64xf32>
    %251 = math.exp %250 : vector<8x64xf32>
    %cst_75 = arith.constant 1.000000e+00 : f32
    %252 = vector.broadcast %cst_75 : f32 to vector<8x64xf32>
    %253 = arith.addf %252, %251 : vector<8x64xf32>
    %254 = arith.divf %252, %253 : vector<8x64xf32>
    %255 = vector.extract_strided_slice %245 {offsets = [0, 64], sizes = [8, 64], strides = [1, 1]} : vector<8x256xf32> to vector<8x64xf32>
    %256 = arith.negf %255 : vector<8x64xf32>
    %257 = math.exp %256 : vector<8x64xf32>
    %cst_76 = arith.constant 1.000000e+00 : f32
    %258 = vector.broadcast %cst_76 : f32 to vector<8x64xf32>
    %259 = arith.addf %258, %257 : vector<8x64xf32>
    %260 = arith.divf %258, %259 : vector<8x64xf32>
    %261 = vector.extract_strided_slice %245 {offsets = [0, 128], sizes = [8, 64], strides = [1, 1]} : vector<8x256xf32> to vector<8x64xf32>
    %262 = math.tanh %261 : vector<8x64xf32>
    %263 = vector.extract_strided_slice %245 {offsets = [0, 192], sizes = [8, 64], strides = [1, 1]} : vector<8x256xf32> to vector<8x64xf32>
    %264 = arith.negf %263 : vector<8x64xf32>
    %265 = math.exp %264 : vector<8x64xf32>
    %cst_77 = arith.constant 1.000000e+00 : f32
    %266 = vector.broadcast %cst_77 : f32 to vector<8x64xf32>
    %267 = arith.addf %266, %265 : vector<8x64xf32>
    %268 = arith.divf %266, %267 : vector<8x64xf32>
    %269 = arith.mulf %260, %213 : vector<8x64xf32>
    %270 = arith.mulf %254, %262 : vector<8x64xf32>
    %271 = arith.addf %269, %270 : vector<8x64xf32>
    %272 = math.tanh %271 : vector<8x64xf32>
    %273 = arith.mulf %268, %272 : vector<8x64xf32>
    %274 = vector.extract_strided_slice %248 {offsets = [0, 0], sizes = [8, 64], strides = [1, 1]} : vector<8x256xf32> to vector<8x64xf32>
    %275 = arith.negf %274 : vector<8x64xf32>
    %276 = math.exp %275 : vector<8x64xf32>
    %cst_78 = arith.constant 1.000000e+00 : f32
    %277 = vector.broadcast %cst_78 : f32 to vector<8x64xf32>
    %278 = arith.addf %277, %276 : vector<8x64xf32>
    %279 = arith.divf %277, %278 : vector<8x64xf32>
    %280 = vector.extract_strided_slice %248 {offsets = [0, 64], sizes = [8, 64], strides = [1, 1]} : vector<8x256xf32> to vector<8x64xf32>
    %281 = arith.negf %280 : vector<8x64xf32>
    %282 = math.exp %281 : vector<8x64xf32>
    %cst_79 = arith.constant 1.000000e+00 : f32
    %283 = vector.broadcast %cst_79 : f32 to vector<8x64xf32>
    %284 = arith.addf %283, %282 : vector<8x64xf32>
    %285 = arith.divf %283, %284 : vector<8x64xf32>
    %286 = vector.extract_strided_slice %248 {offsets = [0, 128], sizes = [8, 64], strides = [1, 1]} : vector<8x256xf32> to vector<8x64xf32>
    %287 = math.tanh %286 : vector<8x64xf32>
    %288 = vector.extract_strided_slice %248 {offsets = [0, 192], sizes = [8, 64], strides = [1, 1]} : vector<8x256xf32> to vector<8x64xf32>
    %289 = arith.negf %288 : vector<8x64xf32>
    %290 = math.exp %289 : vector<8x64xf32>
    %cst_80 = arith.constant 1.000000e+00 : f32
    %291 = vector.broadcast %cst_80 : f32 to vector<8x64xf32>
    %292 = arith.addf %291, %290 : vector<8x64xf32>
    %293 = arith.divf %291, %292 : vector<8x64xf32>
    %294 = arith.mulf %285, %238 : vector<8x64xf32>
    %295 = arith.mulf %279, %287 : vector<8x64xf32>
    %296 = arith.addf %294, %295 : vector<8x64xf32>
    %297 = math.tanh %296 : vector<8x64xf32>
    %298 = arith.mulf %293, %297 : vector<8x64xf32>
    %c32_81 = arith.constant 32 : index
    %c0_82 = arith.constant 0 : index
    %299 = vector.load %arg4[%c32_81, %c0_82] : memref<64x64xf32, #tpu.memory_space<vmem>>, vector<8x64xf32>
    tpu.vector_store %arg4[%c32_81, %c0_82], %273 {strides = array<i32>} : memref<64x64xf32, #tpu.memory_space<vmem>>, vector<8x64xf32>,
    %c24_83 = arith.constant 24 : index
    %c0_84 = arith.constant 0 : index
    %300 = vector.load %arg5[%c24_83, %c0_84] : memref<64x64xf32, #tpu.memory_space<vmem>>, vector<8x64xf32>
    tpu.vector_store %arg5[%c24_83, %c0_84], %298 {strides = array<i32>} : memref<64x64xf32, #tpu.memory_space<vmem>>, vector<8x64xf32>,
    %c40_85 = arith.constant 40 : index
    %c0_86 = arith.constant 0 : index
    %301 = vector.load %arg1[%c40_85, %c0_86] : memref<64x256xf32, #tpu.memory_space<vmem>>, vector<8x256xf32>
    %cst_87 = arith.constant dense<0.000000e+00> : vector<8x256xf32>
    %302 = tpu.matmul %273, %4, %cst_87 {dimension_numbers = #tpu.dot_dimension_numbers<[1], [0], [0], [1], [0, 0, 1, 1], [], []>} : vector<8x64xf32>, vector<64x256xf32>, vector<8x256xf32> -> vector<8x256xf32>
    %303 = arith.addf %301, %302 : vector<8x256xf32>
    %c16_88 = arith.constant 16 : index
    %c0_89 = arith.constant 0 : index
    %304 = vector.load %arg2[%c16_88, %c0_89] : memref<64x256xf32, #tpu.memory_space<vmem>>, vector<8x256xf32>
    %cst_90 = arith.constant dense<0.000000e+00> : vector<8x256xf32>
    %305 = tpu.matmul %298, %6, %cst_90 {dimension_numbers = #tpu.dot_dimension_numbers<[1], [0], [0], [1], [0, 0, 1, 1], [], []>} : vector<8x64xf32>, vector<64x256xf32>, vector<8x256xf32> -> vector<8x256xf32>
    %306 = arith.addf %304, %305 : vector<8x256xf32>
    %307 = vector.extract_strided_slice %303 {offsets = [0, 0], sizes = [8, 64], strides = [1, 1]} : vector<8x256xf32> to vector<8x64xf32>
    %308 = arith.negf %307 : vector<8x64xf32>
    %309 = math.exp %308 : vector<8x64xf32>
    %cst_91 = arith.constant 1.000000e+00 : f32
    %310 = vector.broadcast %cst_91 : f32 to vector<8x64xf32>
    %311 = arith.addf %310, %309 : vector<8x64xf32>
    %312 = arith.divf %310, %311 : vector<8x64xf32>
    %313 = vector.extract_strided_slice %303 {offsets = [0, 64], sizes = [8, 64], strides = [1, 1]} : vector<8x256xf32> to vector<8x64xf32>
    %314 = arith.negf %313 : vector<8x64xf32>
    %315 = math.exp %314 : vector<8x64xf32>
    %cst_92 = arith.constant 1.000000e+00 : f32
    %316 = vector.broadcast %cst_92 : f32 to vector<8x64xf32>
    %317 = arith.addf %316, %315 : vector<8x64xf32>
    %318 = arith.divf %316, %317 : vector<8x64xf32>
    %319 = vector.extract_strided_slice %303 {offsets = [0, 128], sizes = [8, 64], strides = [1, 1]} : vector<8x256xf32> to vector<8x64xf32>
    %320 = math.tanh %319 : vector<8x64xf32>
    %321 = vector.extract_strided_slice %303 {offsets = [0, 192], sizes = [8, 64], strides = [1, 1]} : vector<8x256xf32> to vector<8x64xf32>
    %322 = arith.negf %321 : vector<8x64xf32>
    %323 = math.exp %322 : vector<8x64xf32>
    %cst_93 = arith.constant 1.000000e+00 : f32
    %324 = vector.broadcast %cst_93 : f32 to vector<8x64xf32>
    %325 = arith.addf %324, %323 : vector<8x64xf32>
    %326 = arith.divf %324, %325 : vector<8x64xf32>
    %327 = arith.mulf %318, %271 : vector<8x64xf32>
    %328 = arith.mulf %312, %320 : vector<8x64xf32>
    %329 = arith.addf %327, %328 : vector<8x64xf32>
    %330 = math.tanh %329 : vector<8x64xf32>
    %331 = arith.mulf %326, %330 : vector<8x64xf32>
    %332 = vector.extract_strided_slice %306 {offsets = [0, 0], sizes = [8, 64], strides = [1, 1]} : vector<8x256xf32> to vector<8x64xf32>
    %333 = arith.negf %332 : vector<8x64xf32>
    %334 = math.exp %333 : vector<8x64xf32>
    %cst_94 = arith.constant 1.000000e+00 : f32
    %335 = vector.broadcast %cst_94 : f32 to vector<8x64xf32>
    %336 = arith.addf %335, %334 : vector<8x64xf32>
    %337 = arith.divf %335, %336 : vector<8x64xf32>
    %338 = vector.extract_strided_slice %306 {offsets = [0, 64], sizes = [8, 64], strides = [1, 1]} : vector<8x256xf32> to vector<8x64xf32>
    %339 = arith.negf %338 : vector<8x64xf32>
    %340 = math.exp %339 : vector<8x64xf32>
    %cst_95 = arith.constant 1.000000e+00 : f32
    %341 = vector.broadcast %cst_95 : f32 to vector<8x64xf32>
    %342 = arith.addf %341, %340 : vector<8x64xf32>
    %343 = arith.divf %341, %342 : vector<8x64xf32>
    %344 = vector.extract_strided_slice %306 {offsets = [0, 128], sizes = [8, 64], strides = [1, 1]} : vector<8x256xf32> to vector<8x64xf32>
    %345 = math.tanh %344 : vector<8x64xf32>
    %346 = vector.extract_strided_slice %306 {offsets = [0, 192], sizes = [8, 64], strides = [1, 1]} : vector<8x256xf32> to vector<8x64xf32>
    %347 = arith.negf %346 : vector<8x64xf32>
    %348 = math.exp %347 : vector<8x64xf32>
    %cst_96 = arith.constant 1.000000e+00 : f32
    %349 = vector.broadcast %cst_96 : f32 to vector<8x64xf32>
    %350 = arith.addf %349, %348 : vector<8x64xf32>
    %351 = arith.divf %349, %350 : vector<8x64xf32>
    %352 = arith.mulf %343, %296 : vector<8x64xf32>
    %353 = arith.mulf %337, %345 : vector<8x64xf32>
    %354 = arith.addf %352, %353 : vector<8x64xf32>
    %355 = math.tanh %354 : vector<8x64xf32>
    %356 = arith.mulf %351, %355 : vector<8x64xf32>
    %c40_97 = arith.constant 40 : index
    %c0_98 = arith.constant 0 : index
    %357 = vector.load %arg4[%c40_97, %c0_98] : memref<64x64xf32, #tpu.memory_space<vmem>>, vector<8x64xf32>
    tpu.vector_store %arg4[%c40_97, %c0_98], %331 {strides = array<i32>} : memref<64x64xf32, #tpu.memory_space<vmem>>, vector<8x64xf32>,
    %c16_99 = arith.constant 16 : index
    %c0_100 = arith.constant 0 : index
    %358 = vector.load %arg5[%c16_99, %c0_100] : memref<64x64xf32, #tpu.memory_space<vmem>>, vector<8x64xf32>
    tpu.vector_store %arg5[%c16_99, %c0_100], %356 {strides = array<i32>} : memref<64x64xf32, #tpu.memory_space<vmem>>, vector<8x64xf32>,
    %c48_101 = arith.constant 48 : index
    %c0_102 = arith.constant 0 : index
    %359 = vector.load %arg1[%c48_101, %c0_102] : memref<64x256xf32, #tpu.memory_space<vmem>>, vector<8x256xf32>
    %cst_103 = arith.constant dense<0.000000e+00> : vector<8x256xf32>
    %360 = tpu.matmul %331, %4, %cst_103 {dimension_numbers = #tpu.dot_dimension_numbers<[1], [0], [0], [1], [0, 0, 1, 1], [], []>} : vector<8x64xf32>, vector<64x256xf32>, vector<8x256xf32> -> vector<8x256xf32>
    %361 = arith.addf %359, %360 : vector<8x256xf32>
    %c8_104 = arith.constant 8 : index
    %c0_105 = arith.constant 0 : index
    %362 = vector.load %arg2[%c8_104, %c0_105] : memref<64x256xf32, #tpu.memory_space<vmem>>, vector<8x256xf32>
    %cst_106 = arith.constant dense<0.000000e+00> : vector<8x256xf32>
    %363 = tpu.matmul %356, %6, %cst_106 {dimension_numbers = #tpu.dot_dimension_numbers<[1], [0], [0], [1], [0, 0, 1, 1], [], []>} : vector<8x64xf32>, vector<64x256xf32>, vector<8x256xf32> -> vector<8x256xf32>
    %364 = arith.addf %362, %363 : vector<8x256xf32>
    %365 = vector.extract_strided_slice %361 {offsets = [0, 0], sizes = [8, 64], strides = [1, 1]} : vector<8x256xf32> to vector<8x64xf32>
    %366 = arith.negf %365 : vector<8x64xf32>
    %367 = math.exp %366 : vector<8x64xf32>
    %cst_107 = arith.constant 1.000000e+00 : f32
    %368 = vector.broadcast %cst_107 : f32 to vector<8x64xf32>
    %369 = arith.addf %368, %367 : vector<8x64xf32>
    %370 = arith.divf %368, %369 : vector<8x64xf32>
    %371 = vector.extract_strided_slice %361 {offsets = [0, 64], sizes = [8, 64], strides = [1, 1]} : vector<8x256xf32> to vector<8x64xf32>
    %372 = arith.negf %371 : vector<8x64xf32>
    %373 = math.exp %372 : vector<8x64xf32>
    %cst_108 = arith.constant 1.000000e+00 : f32
    %374 = vector.broadcast %cst_108 : f32 to vector<8x64xf32>
    %375 = arith.addf %374, %373 : vector<8x64xf32>
    %376 = arith.divf %374, %375 : vector<8x64xf32>
    %377 = vector.extract_strided_slice %361 {offsets = [0, 128], sizes = [8, 64], strides = [1, 1]} : vector<8x256xf32> to vector<8x64xf32>
    %378 = math.tanh %377 : vector<8x64xf32>
    %379 = vector.extract_strided_slice %361 {offsets = [0, 192], sizes = [8, 64], strides = [1, 1]} : vector<8x256xf32> to vector<8x64xf32>
    %380 = arith.negf %379 : vector<8x64xf32>
    %381 = math.exp %380 : vector<8x64xf32>
    %cst_109 = arith.constant 1.000000e+00 : f32
    %382 = vector.broadcast %cst_109 : f32 to vector<8x64xf32>
    %383 = arith.addf %382, %381 : vector<8x64xf32>
    %384 = arith.divf %382, %383 : vector<8x64xf32>
    %385 = arith.mulf %376, %329 : vector<8x64xf32>
    %386 = arith.mulf %370, %378 : vector<8x64xf32>
    %387 = arith.addf %385, %386 : vector<8x64xf32>
    %388 = math.tanh %387 : vector<8x64xf32>
    %389 = arith.mulf %384, %388 : vector<8x64xf32>
    %390 = vector.extract_strided_slice %364 {offsets = [0, 0], sizes = [8, 64], strides = [1, 1]} : vector<8x256xf32> to vector<8x64xf32>
    %391 = arith.negf %390 : vector<8x64xf32>
    %392 = math.exp %391 : vector<8x64xf32>
    %cst_110 = arith.constant 1.000000e+00 : f32
    %393 = vector.broadcast %cst_110 : f32 to vector<8x64xf32>
    %394 = arith.addf %393, %392 : vector<8x64xf32>
    %395 = arith.divf %393, %394 : vector<8x64xf32>
    %396 = vector.extract_strided_slice %364 {offsets = [0, 64], sizes = [8, 64], strides = [1, 1]} : vector<8x256xf32> to vector<8x64xf32>
    %397 = arith.negf %396 : vector<8x64xf32>
    %398 = math.exp %397 : vector<8x64xf32>
    %cst_111 = arith.constant 1.000000e+00 : f32
    %399 = vector.broadcast %cst_111 : f32 to vector<8x64xf32>
    %400 = arith.addf %399, %398 : vector<8x64xf32>
    %401 = arith.divf %399, %400 : vector<8x64xf32>
    %402 = vector.extract_strided_slice %364 {offsets = [0, 128], sizes = [8, 64], strides = [1, 1]} : vector<8x256xf32> to vector<8x64xf32>
    %403 = math.tanh %402 : vector<8x64xf32>
    %404 = vector.extract_strided_slice %364 {offsets = [0, 192], sizes = [8, 64], strides = [1, 1]} : vector<8x256xf32> to vector<8x64xf32>
    %405 = arith.negf %404 : vector<8x64xf32>
    %406 = math.exp %405 : vector<8x64xf32>
    %cst_112 = arith.constant 1.000000e+00 : f32
    %407 = vector.broadcast %cst_112 : f32 to vector<8x64xf32>
    %408 = arith.addf %407, %406 : vector<8x64xf32>
    %409 = arith.divf %407, %408 : vector<8x64xf32>
    %410 = arith.mulf %401, %354 : vector<8x64xf32>
    %411 = arith.mulf %395, %403 : vector<8x64xf32>
    %412 = arith.addf %410, %411 : vector<8x64xf32>
    %413 = math.tanh %412 : vector<8x64xf32>
    %414 = arith.mulf %409, %413 : vector<8x64xf32>
    %c48_113 = arith.constant 48 : index
    %c0_114 = arith.constant 0 : index
    %415 = vector.load %arg4[%c48_113, %c0_114] : memref<64x64xf32, #tpu.memory_space<vmem>>, vector<8x64xf32>
    tpu.vector_store %arg4[%c48_113, %c0_114], %389 {strides = array<i32>} : memref<64x64xf32, #tpu.memory_space<vmem>>, vector<8x64xf32>,
    %c8_115 = arith.constant 8 : index
    %c0_116 = arith.constant 0 : index
    %416 = vector.load %arg5[%c8_115, %c0_116] : memref<64x64xf32, #tpu.memory_space<vmem>>, vector<8x64xf32>
    tpu.vector_store %arg5[%c8_115, %c0_116], %414 {strides = array<i32>} : memref<64x64xf32, #tpu.memory_space<vmem>>, vector<8x64xf32>,
    %c56_117 = arith.constant 56 : index
    %c0_118 = arith.constant 0 : index
    %417 = vector.load %arg1[%c56_117, %c0_118] : memref<64x256xf32, #tpu.memory_space<vmem>>, vector<8x256xf32>
    %cst_119 = arith.constant dense<0.000000e+00> : vector<8x256xf32>
    %418 = tpu.matmul %389, %4, %cst_119 {dimension_numbers = #tpu.dot_dimension_numbers<[1], [0], [0], [1], [0, 0, 1, 1], [], []>} : vector<8x64xf32>, vector<64x256xf32>, vector<8x256xf32> -> vector<8x256xf32>
    %419 = arith.addf %417, %418 : vector<8x256xf32>
    %c0_120 = arith.constant 0 : index
    %c0_121 = arith.constant 0 : index
    %420 = vector.load %arg2[%c0_120, %c0_121] : memref<64x256xf32, #tpu.memory_space<vmem>>, vector<8x256xf32>
    %cst_122 = arith.constant dense<0.000000e+00> : vector<8x256xf32>
    %421 = tpu.matmul %414, %6, %cst_122 {dimension_numbers = #tpu.dot_dimension_numbers<[1], [0], [0], [1], [0, 0, 1, 1], [], []>} : vector<8x64xf32>, vector<64x256xf32>, vector<8x256xf32> -> vector<8x256xf32>
    %422 = arith.addf %420, %421 : vector<8x256xf32>
    %423 = vector.extract_strided_slice %419 {offsets = [0, 0], sizes = [8, 64], strides = [1, 1]} : vector<8x256xf32> to vector<8x64xf32>
    %424 = arith.negf %423 : vector<8x64xf32>
    %425 = math.exp %424 : vector<8x64xf32>
    %cst_123 = arith.constant 1.000000e+00 : f32
    %426 = vector.broadcast %cst_123 : f32 to vector<8x64xf32>
    %427 = arith.addf %426, %425 : vector<8x64xf32>
    %428 = arith.divf %426, %427 : vector<8x64xf32>
    %429 = vector.extract_strided_slice %419 {offsets = [0, 64], sizes = [8, 64], strides = [1, 1]} : vector<8x256xf32> to vector<8x64xf32>
    %430 = arith.negf %429 : vector<8x64xf32>
    %431 = math.exp %430 : vector<8x64xf32>
    %cst_124 = arith.constant 1.000000e+00 : f32
    %432 = vector.broadcast %cst_124 : f32 to vector<8x64xf32>
    %433 = arith.addf %432, %431 : vector<8x64xf32>
    %434 = arith.divf %432, %433 : vector<8x64xf32>
    %435 = vector.extract_strided_slice %419 {offsets = [0, 128], sizes = [8, 64], strides = [1, 1]} : vector<8x256xf32> to vector<8x64xf32>
    %436 = math.tanh %435 : vector<8x64xf32>
    %437 = vector.extract_strided_slice %419 {offsets = [0, 192], sizes = [8, 64], strides = [1, 1]} : vector<8x256xf32> to vector<8x64xf32>
    %438 = arith.negf %437 : vector<8x64xf32>
    %439 = math.exp %438 : vector<8x64xf32>
    %cst_125 = arith.constant 1.000000e+00 : f32
    %440 = vector.broadcast %cst_125 : f32 to vector<8x64xf32>
    %441 = arith.addf %440, %439 : vector<8x64xf32>
    %442 = arith.divf %440, %441 : vector<8x64xf32>
    %443 = arith.mulf %434, %387 : vector<8x64xf32>
    %444 = arith.mulf %428, %436 : vector<8x64xf32>
    %445 = arith.addf %443, %444 : vector<8x64xf32>
    %446 = math.tanh %445 : vector<8x64xf32>
    %447 = arith.mulf %442, %446 : vector<8x64xf32>
    %448 = vector.extract_strided_slice %422 {offsets = [0, 0], sizes = [8, 64], strides = [1, 1]} : vector<8x256xf32> to vector<8x64xf32>
    %449 = arith.negf %448 : vector<8x64xf32>
    %450 = math.exp %449 : vector<8x64xf32>
    %cst_126 = arith.constant 1.000000e+00 : f32
    %451 = vector.broadcast %cst_126 : f32 to vector<8x64xf32>
    %452 = arith.addf %451, %450 : vector<8x64xf32>
    %453 = arith.divf %451, %452 : vector<8x64xf32>
    %454 = vector.extract_strided_slice %422 {offsets = [0, 64], sizes = [8, 64], strides = [1, 1]} : vector<8x256xf32> to vector<8x64xf32>
    %455 = arith.negf %454 : vector<8x64xf32>
    %456 = math.exp %455 : vector<8x64xf32>
    %cst_127 = arith.constant 1.000000e+00 : f32
    %457 = vector.broadcast %cst_127 : f32 to vector<8x64xf32>
    %458 = arith.addf %457, %456 : vector<8x64xf32>
    %459 = arith.divf %457, %458 : vector<8x64xf32>
    %460 = vector.extract_strided_slice %422 {offsets = [0, 128], sizes = [8, 64], strides = [1, 1]} : vector<8x256xf32> to vector<8x64xf32>
    %461 = math.tanh %460 : vector<8x64xf32>
    %462 = vector.extract_strided_slice %422 {offsets = [0, 192], sizes = [8, 64], strides = [1, 1]} : vector<8x256xf32> to vector<8x64xf32>
    %463 = arith.negf %462 : vector<8x64xf32>
    %464 = math.exp %463 : vector<8x64xf32>
    %cst_128 = arith.constant 1.000000e+00 : f32
    %465 = vector.broadcast %cst_128 : f32 to vector<8x64xf32>
    %466 = arith.addf %465, %464 : vector<8x64xf32>
    %467 = arith.divf %465, %466 : vector<8x64xf32>
    %468 = arith.mulf %459, %412 : vector<8x64xf32>
    %469 = arith.mulf %453, %461 : vector<8x64xf32>
    %470 = arith.addf %468, %469 : vector<8x64xf32>
    %471 = math.tanh %470 : vector<8x64xf32>
    %472 = arith.mulf %467, %471 : vector<8x64xf32>
    %c56_129 = arith.constant 56 : index
    %c0_130 = arith.constant 0 : index
    %473 = vector.load %arg4[%c56_129, %c0_130] : memref<64x64xf32, #tpu.memory_space<vmem>>, vector<8x64xf32>
    tpu.vector_store %arg4[%c56_129, %c0_130], %447 {strides = array<i32>} : memref<64x64xf32, #tpu.memory_space<vmem>>, vector<8x64xf32>,
    %c0_131 = arith.constant 0 : index
    %c0_132 = arith.constant 0 : index
    %474 = vector.load %arg5[%c0_131, %c0_132] : memref<64x64xf32, #tpu.memory_space<vmem>>, vector<8x64xf32>
    tpu.vector_store %arg5[%c0_131, %c0_132], %472 {strides = array<i32>} : memref<64x64xf32, #tpu.memory_space<vmem>>, vector<8x64xf32>,
    %c0_133 = arith.constant 0 : index
    %c0_134 = arith.constant 0 : index
    %475 = vector.load %arg6[%c0_133, %c0_134] : memref<8x64xf32, #tpu.memory_space<vmem>>, vector<8x64xf32>
    tpu.vector_store %arg6[%c0_133, %c0_134], %447 {strides = array<i32>} : memref<8x64xf32, #tpu.memory_space<vmem>>, vector<8x64xf32>,
    %c0_135 = arith.constant 0 : index
    %c0_136 = arith.constant 0 : index
    %476 = vector.load %arg7[%c0_135, %c0_136] : memref<8x64xf32, #tpu.memory_space<vmem>>, vector<8x64xf32>
    tpu.vector_store %arg7[%c0_135, %c0_136], %445 {strides = array<i32>} : memref<8x64xf32, #tpu.memory_space<vmem>>, vector<8x64xf32>,
    %c0_137 = arith.constant 0 : index
    %c0_138 = arith.constant 0 : index
    %477 = vector.load %arg8[%c0_137, %c0_138] : memref<8x64xf32, #tpu.memory_space<vmem>>, vector<8x64xf32>
    tpu.vector_store %arg8[%c0_137, %c0_138], %472 {strides = array<i32>} : memref<8x64xf32, #tpu.memory_space<vmem>>, vector<8x64xf32>,
    %c0_139 = arith.constant 0 : index
    %c0_140 = arith.constant 0 : index
    %478 = vector.load %arg9[%c0_139, %c0_140] : memref<8x64xf32, #tpu.memory_space<vmem>>, vector<8x64xf32>
    tpu.vector_store %arg9[%c0_139, %c0_140], %470 {strides = array<i32>} : memref<8x64xf32, #tpu.memory_space<vmem>>, vector<8x64xf32>,
    return
  }
  func.func @transform_0(%arg0: i32) -> (i32, i32) {
    %c0_i32 = arith.constant 0 : i32
    %c0_i32_0 = arith.constant 0 : i32
    return %arg0, %c0_i32 : i32, i32
  }
  func.func @transform_1(%arg0: i32) -> (i32, i32) {
    %c0_i32 = arith.constant 0 : i32
    %0 = arith.subi %c0_i32, %arg0 : i32
    %c1_i32 = arith.constant 1 : i32
    %c0_i32_0 = arith.constant 0 : i32
    return %0, %c1_i32 : i32, i32
  }
  func.func @transform_2(%arg0: i32) -> (i32, i32, i32) {
    %c0_i32 = arith.constant 0 : i32
    %c0_i32_0 = arith.constant 0 : i32
    %c0_i32_1 = arith.constant 0 : i32
    %c0_i32_2 = arith.constant 0 : i32
    return %c0_i32, %c0_i32_0, %c0_i32_1 : i32, i32, i32
  }
  func.func @transform_3(%arg0: i32) -> (i32, i32) {
    %c0_i32 = arith.constant 0 : i32
    %c0_i32_0 = arith.constant 0 : i32
    return %arg0, %c0_i32 : i32, i32
  }
  func.func @transform_4(%arg0: i32) -> (i32, i32) {
    %c0_i32 = arith.constant 0 : i32
    %0 = arith.subi %c0_i32, %arg0 : i32
    %c0_i32_0 = arith.constant 0 : i32
    %c0_i32_1 = arith.constant 0 : i32
    return %0, %c0_i32_0 : i32, i32
  }
}

module attributes {stable_mosaic.version = 11 : i64} {
  func.func @_proj2_kernel(%arg0: i32, %arg1: memref<64x64xf32, #tpu.memory_space<vmem>>, %arg2: memref<64x64xf32, #tpu.memory_space<vmem>>, %arg3: memref<64x512xf32, #tpu.memory_space<vmem>>, %arg4: memref<64x512xf32, #tpu.memory_space<vmem>>, %arg5: memref<1x512xf32, #tpu.memory_space<vmem>>, %arg6: memref<64x512xf32, #tpu.memory_space<vmem>>) attributes {dimension_semantics = [#tpu.dimension_semantics<parallel>], iteration_bounds = array<i64: 1>, scalar_prefetch = 0 : i64, scratch_operands = 0 : i64, tpu.core_type = #tpu.core_type<tc>, window_params = [{transform_indices = @transform_0, window_bounds = array<i64: 64, 64>}, {transform_indices = @transform_1, window_bounds = array<i64: 64, 64>}, {pipeline_mode = #tpu.pipeline_mode<synchronous>, transform_indices = @transform_2, window_bounds = array<i64: 64, 512>}, {pipeline_mode = #tpu.pipeline_mode<synchronous>, transform_indices = @transform_3, window_bounds = array<i64: 64, 512>}, {pipeline_mode = #tpu.pipeline_mode<synchronous>, transform_indices = @transform_4, window_bounds = array<i64: 1, 512>}, {transform_indices = @transform_5, window_bounds = array<i64: 64, 512>}]} {
    %c0 = arith.constant 0 : index
    %c0_0 = arith.constant 0 : index
    %0 = vector.load %arg1[%c0, %c0_0] : memref<64x64xf32, #tpu.memory_space<vmem>>, vector<64x64xf32>
    %c0_1 = arith.constant 0 : index
    %c0_2 = arith.constant 0 : index
    %1 = vector.load %arg3[%c0_1, %c0_2] : memref<64x512xf32, #tpu.memory_space<vmem>>, vector<64x512xf32>
    %cst = arith.constant dense<0.000000e+00> : vector<64x512xf32>
    %2 = tpu.matmul %0, %1, %cst {dimension_numbers = #tpu.dot_dimension_numbers<[1], [0], [0], [1], [0, 0, 1, 1], [], []>} : vector<64x64xf32>, vector<64x512xf32>, vector<64x512xf32> -> vector<64x512xf32>
    %c0_3 = arith.constant 0 : index
    %c0_4 = arith.constant 0 : index
    %3 = vector.load %arg2[%c0_3, %c0_4] : memref<64x64xf32, #tpu.memory_space<vmem>>, vector<64x64xf32>
    %c0_5 = arith.constant 0 : index
    %c0_6 = arith.constant 0 : index
    %4 = vector.load %arg4[%c0_5, %c0_6] : memref<64x512xf32, #tpu.memory_space<vmem>>, vector<64x512xf32>
    %cst_7 = arith.constant dense<0.000000e+00> : vector<64x512xf32>
    %5 = tpu.matmul %3, %4, %cst_7 {dimension_numbers = #tpu.dot_dimension_numbers<[1], [0], [0], [1], [0, 0, 1, 1], [], []>} : vector<64x64xf32>, vector<64x512xf32>, vector<64x512xf32> -> vector<64x512xf32>
    %6 = arith.addf %2, %5 : vector<64x512xf32>
    %c0_8 = arith.constant 0 : index
    %c0_9 = arith.constant 0 : index
    %7 = vector.load %arg5[%c0_8, %c0_9] : memref<1x512xf32, #tpu.memory_space<vmem>>, vector<1x512xf32>
    %8 = vector.broadcast %7 : vector<1x512xf32> to vector<64x512xf32>
    %9 = arith.addf %6, %8 : vector<64x512xf32>
    %c0_10 = arith.constant 0 : index
    %c0_11 = arith.constant 0 : index
    %10 = vector.load %arg6[%c0_10, %c0_11] : memref<64x512xf32, #tpu.memory_space<vmem>>, vector<64x512xf32>
    tpu.vector_store %arg6[%c0_10, %c0_11], %9 {strides = array<i32>} : memref<64x512xf32, #tpu.memory_space<vmem>>, vector<64x512xf32>,
    return
  }
  func.func @transform_0(%arg0: i32) -> (i32, i32) {
    %c0_i32 = arith.constant 0 : i32
    %c0_i32_0 = arith.constant 0 : i32
    return %arg0, %c0_i32 : i32, i32
  }
  func.func @transform_1(%arg0: i32) -> (i32, i32) {
    %c0_i32 = arith.constant 0 : i32
    %c0_i32_0 = arith.constant 0 : i32
    return %arg0, %c0_i32 : i32, i32
  }
  func.func @transform_2(%arg0: i32) -> (i32, i32) {
    %c0_i32 = arith.constant 0 : i32
    %c0_i32_0 = arith.constant 0 : i32
    %c0_i32_1 = arith.constant 0 : i32
    return %c0_i32, %c0_i32_0 : i32, i32
  }
  func.func @transform_3(%arg0: i32) -> (i32, i32) {
    %c0_i32 = arith.constant 0 : i32
    %c0_i32_0 = arith.constant 0 : i32
    %c0_i32_1 = arith.constant 0 : i32
    return %c0_i32, %c0_i32_0 : i32, i32
  }
  func.func @transform_4(%arg0: i32) -> (i32, i32) {
    %c0_i32 = arith.constant 0 : i32
    %c0_i32_0 = arith.constant 0 : i32
    %c0_i32_1 = arith.constant 0 : i32
    return %c0_i32, %c0_i32_0 : i32, i32
  }
  func.func @transform_5(%arg0: i32) -> (i32, i32) {
    %c0_i32 = arith.constant 0 : i32
    %c0_i32_0 = arith.constant 0 : i32
    return %arg0, %c0_i32 : i32, i32
  }
}

module attributes {stable_mosaic.version = 11 : i64} {
  func.func @_bilstm1_head_kernel(%arg0: i32, %arg1: memref<64x256xf32, #tpu.memory_space<vmem>>, %arg2: memref<64x256xf32, #tpu.memory_space<vmem>>, %arg3: memref<2x64x256xf32, #tpu.memory_space<vmem>>, %arg4: memref<128x64xf32, #tpu.memory_space<vmem>>, %arg5: memref<1x64xf32, #tpu.memory_space<vmem>>, %arg6: memref<64x2xf32, #tpu.memory_space<vmem>>, %arg7: memref<1x2xf32, #tpu.memory_space<vmem>>, %arg8: memref<8x2xf32, #tpu.memory_space<vmem>>, %arg9: memref<8x64xf32, #tpu.memory_space<vmem>>, %arg10: memref<8x64xf32, #tpu.memory_space<vmem>>, %arg11: memref<8x64xf32, #tpu.memory_space<vmem>>, %arg12: memref<8x64xf32, #tpu.memory_space<vmem>>) attributes {dimension_semantics = [#tpu.dimension_semantics<arbitrary>], iteration_bounds = array<i64: 1>, scalar_prefetch = 0 : i64, scratch_operands = 4 : i64, tpu.core_type = #tpu.core_type<tc>, window_params = [{transform_indices = @transform_0, window_bounds = array<i64: 64, 256>}, {transform_indices = @transform_1, window_bounds = array<i64: 64, 256>}, {pipeline_mode = #tpu.pipeline_mode<synchronous>, transform_indices = @transform_2, window_bounds = array<i64: 2, 64, 256>}, {pipeline_mode = #tpu.pipeline_mode<synchronous>, transform_indices = @transform_3, window_bounds = array<i64: 128, 64>}, {pipeline_mode = #tpu.pipeline_mode<synchronous>, transform_indices = @transform_4, window_bounds = array<i64: 1, 64>}, {pipeline_mode = #tpu.pipeline_mode<synchronous>, transform_indices = @transform_5, window_bounds = array<i64: 64, 2>}, {pipeline_mode = #tpu.pipeline_mode<synchronous>, transform_indices = @transform_6, window_bounds = array<i64: 1, 2>}, {pipeline_mode = #tpu.pipeline_mode<synchronous>, transform_indices = @transform_7, window_bounds = array<i64: 8, 2>}]} {
    %c0_i32 = arith.constant 0 : i32
    %0 = arith.cmpi eq, %arg0, %c0_i32 : i32
    %1 = arith.extui %0 : i1 to i32
    %c0_i32_0 = arith.constant 0 : i32
    %2 = arith.cmpi ne, %1, %c0_i32_0 : i32
    scf.if %2 {
      %cst_111 = arith.constant 0.000000e+00 : f32
      %466 = vector.broadcast %cst_111 : f32 to vector<8x64xf32>
      %c0_112 = arith.constant 0 : index
      %c0_113 = arith.constant 0 : index
      %467 = vector.load %arg9[%c0_112, %c0_113] : memref<8x64xf32, #tpu.memory_space<vmem>>, vector<8x64xf32>
      tpu.vector_store %arg9[%c0_112, %c0_113], %466 {strides = array<i32>} : memref<8x64xf32, #tpu.memory_space<vmem>>, vector<8x64xf32>,
      %cst_114 = arith.constant 0.000000e+00 : f32
      %468 = vector.broadcast %cst_114 : f32 to vector<8x64xf32>
      %c0_115 = arith.constant 0 : index
      %c0_116 = arith.constant 0 : index
      %469 = vector.load %arg10[%c0_115, %c0_116] : memref<8x64xf32, #tpu.memory_space<vmem>>, vector<8x64xf32>
      tpu.vector_store %arg10[%c0_115, %c0_116], %468 {strides = array<i32>} : memref<8x64xf32, #tpu.memory_space<vmem>>, vector<8x64xf32>,
      %cst_117 = arith.constant 0.000000e+00 : f32
      %470 = vector.broadcast %cst_117 : f32 to vector<8x64xf32>
      %c0_118 = arith.constant 0 : index
      %c0_119 = arith.constant 0 : index
      %471 = vector.load %arg11[%c0_118, %c0_119] : memref<8x64xf32, #tpu.memory_space<vmem>>, vector<8x64xf32>
      tpu.vector_store %arg11[%c0_118, %c0_119], %470 {strides = array<i32>} : memref<8x64xf32, #tpu.memory_space<vmem>>, vector<8x64xf32>,
      %cst_120 = arith.constant 0.000000e+00 : f32
      %472 = vector.broadcast %cst_120 : f32 to vector<8x64xf32>
      %c0_121 = arith.constant 0 : index
      %c0_122 = arith.constant 0 : index
      %473 = vector.load %arg12[%c0_121, %c0_122] : memref<8x64xf32, #tpu.memory_space<vmem>>, vector<8x64xf32>
      tpu.vector_store %arg12[%c0_121, %c0_122], %472 {strides = array<i32>} : memref<8x64xf32, #tpu.memory_space<vmem>>, vector<8x64xf32>,
    } else {
    }
    %c0 = arith.constant 0 : index
    %c0_1 = arith.constant 0 : index
    %c0_2 = arith.constant 0 : index
    %3 = vector.load %arg3[%c0, %c0_1, %c0_2] : memref<2x64x256xf32, #tpu.memory_space<vmem>>, vector<1x64x256xf32>
    %4 = vector.shape_cast %3 : vector<1x64x256xf32> to vector<64x256xf32>
    %c1 = arith.constant 1 : index
    %c0_3 = arith.constant 0 : index
    %c0_4 = arith.constant 0 : index
    %5 = vector.load %arg3[%c1, %c0_3, %c0_4] : memref<2x64x256xf32, #tpu.memory_space<vmem>>, vector<1x64x256xf32>
    %6 = vector.shape_cast %5 : vector<1x64x256xf32> to vector<64x256xf32>
    %c0_5 = arith.constant 0 : index
    %c0_6 = arith.constant 0 : index
    %7 = vector.load %arg9[%c0_5, %c0_6] : memref<8x64xf32, #tpu.memory_space<vmem>>, vector<8x64xf32>
    %c0_7 = arith.constant 0 : index
    %c0_8 = arith.constant 0 : index
    %8 = vector.load %arg10[%c0_7, %c0_8] : memref<8x64xf32, #tpu.memory_space<vmem>>, vector<8x64xf32>
    %c0_9 = arith.constant 0 : index
    %c0_10 = arith.constant 0 : index
    %9 = vector.load %arg11[%c0_9, %c0_10] : memref<8x64xf32, #tpu.memory_space<vmem>>, vector<8x64xf32>
    %c0_11 = arith.constant 0 : index
    %c0_12 = arith.constant 0 : index
    %10 = vector.load %arg12[%c0_11, %c0_12] : memref<8x64xf32, #tpu.memory_space<vmem>>, vector<8x64xf32>
    %c0_13 = arith.constant 0 : index
    %c0_14 = arith.constant 0 : index
    %11 = vector.load %arg1[%c0_13, %c0_14] : memref<64x256xf32, #tpu.memory_space<vmem>>, vector<8x256xf32>
    %cst = arith.constant dense<0.000000e+00> : vector<8x256xf32>
    %12 = tpu.matmul %7, %4, %cst {dimension_numbers = #tpu.dot_dimension_numbers<[1], [0], [0], [1], [0, 0, 1, 1], [], []>} : vector<8x64xf32>, vector<64x256xf32>, vector<8x256xf32> -> vector<8x256xf32>
    %13 = arith.addf %11, %12 : vector<8x256xf32>
    %c56 = arith.constant 56 : index
    %c0_15 = arith.constant 0 : index
    %14 = vector.load %arg2[%c56, %c0_15] : memref<64x256xf32, #tpu.memory_space<vmem>>, vector<8x256xf32>
    %cst_16 = arith.constant dense<0.000000e+00> : vector<8x256xf32>
    %15 = tpu.matmul %9, %6, %cst_16 {dimension_numbers = #tpu.dot_dimension_numbers<[1], [0], [0], [1], [0, 0, 1, 1], [], []>} : vector<8x64xf32>, vector<64x256xf32>, vector<8x256xf32> -> vector<8x256xf32>
    %16 = arith.addf %14, %15 : vector<8x256xf32>
    %17 = vector.extract_strided_slice %13 {offsets = [0, 0], sizes = [8, 64], strides = [1, 1]} : vector<8x256xf32> to vector<8x64xf32>
    %18 = arith.negf %17 : vector<8x64xf32>
    %19 = math.exp %18 : vector<8x64xf32>
    %cst_17 = arith.constant 1.000000e+00 : f32
    %20 = vector.broadcast %cst_17 : f32 to vector<8x64xf32>
    %21 = arith.addf %20, %19 : vector<8x64xf32>
    %22 = arith.divf %20, %21 : vector<8x64xf32>
    %23 = vector.extract_strided_slice %13 {offsets = [0, 64], sizes = [8, 64], strides = [1, 1]} : vector<8x256xf32> to vector<8x64xf32>
    %24 = arith.negf %23 : vector<8x64xf32>
    %25 = math.exp %24 : vector<8x64xf32>
    %cst_18 = arith.constant 1.000000e+00 : f32
    %26 = vector.broadcast %cst_18 : f32 to vector<8x64xf32>
    %27 = arith.addf %26, %25 : vector<8x64xf32>
    %28 = arith.divf %26, %27 : vector<8x64xf32>
    %29 = vector.extract_strided_slice %13 {offsets = [0, 128], sizes = [8, 64], strides = [1, 1]} : vector<8x256xf32> to vector<8x64xf32>
    %30 = math.tanh %29 : vector<8x64xf32>
    %31 = vector.extract_strided_slice %13 {offsets = [0, 192], sizes = [8, 64], strides = [1, 1]} : vector<8x256xf32> to vector<8x64xf32>
    %32 = arith.negf %31 : vector<8x64xf32>
    %33 = math.exp %32 : vector<8x64xf32>
    %cst_19 = arith.constant 1.000000e+00 : f32
    %34 = vector.broadcast %cst_19 : f32 to vector<8x64xf32>
    %35 = arith.addf %34, %33 : vector<8x64xf32>
    %36 = arith.divf %34, %35 : vector<8x64xf32>
    %37 = arith.mulf %28, %8 : vector<8x64xf32>
    %38 = arith.mulf %22, %30 : vector<8x64xf32>
    %39 = arith.addf %37, %38 : vector<8x64xf32>
    %40 = math.tanh %39 : vector<8x64xf32>
    %41 = arith.mulf %36, %40 : vector<8x64xf32>
    %42 = vector.extract_strided_slice %16 {offsets = [0, 0], sizes = [8, 64], strides = [1, 1]} : vector<8x256xf32> to vector<8x64xf32>
    %43 = arith.negf %42 : vector<8x64xf32>
    %44 = math.exp %43 : vector<8x64xf32>
    %cst_20 = arith.constant 1.000000e+00 : f32
    %45 = vector.broadcast %cst_20 : f32 to vector<8x64xf32>
    %46 = arith.addf %45, %44 : vector<8x64xf32>
    %47 = arith.divf %45, %46 : vector<8x64xf32>
    %48 = vector.extract_strided_slice %16 {offsets = [0, 64], sizes = [8, 64], strides = [1, 1]} : vector<8x256xf32> to vector<8x64xf32>
    %49 = arith.negf %48 : vector<8x64xf32>
    %50 = math.exp %49 : vector<8x64xf32>
    %cst_21 = arith.constant 1.000000e+00 : f32
    %51 = vector.broadcast %cst_21 : f32 to vector<8x64xf32>
    %52 = arith.addf %51, %50 : vector<8x64xf32>
    %53 = arith.divf %51, %52 : vector<8x64xf32>
    %54 = vector.extract_strided_slice %16 {offsets = [0, 128], sizes = [8, 64], strides = [1, 1]} : vector<8x256xf32> to vector<8x64xf32>
    %55 = math.tanh %54 : vector<8x64xf32>
    %56 = vector.extract_strided_slice %16 {offsets = [0, 192], sizes = [8, 64], strides = [1, 1]} : vector<8x256xf32> to vector<8x64xf32>
    %57 = arith.negf %56 : vector<8x64xf32>
    %58 = math.exp %57 : vector<8x64xf32>
    %cst_22 = arith.constant 1.000000e+00 : f32
    %59 = vector.broadcast %cst_22 : f32 to vector<8x64xf32>
    %60 = arith.addf %59, %58 : vector<8x64xf32>
    %61 = arith.divf %59, %60 : vector<8x64xf32>
    %62 = arith.mulf %53, %10 : vector<8x64xf32>
    %63 = arith.mulf %47, %55 : vector<8x64xf32>
    %64 = arith.addf %62, %63 : vector<8x64xf32>
    %65 = math.tanh %64 : vector<8x64xf32>
    %66 = arith.mulf %61, %65 : vector<8x64xf32>
    %c8 = arith.constant 8 : index
    %c0_23 = arith.constant 0 : index
    %67 = vector.load %arg1[%c8, %c0_23] : memref<64x256xf32, #tpu.memory_space<vmem>>, vector<8x256xf32>
    %cst_24 = arith.constant dense<0.000000e+00> : vector<8x256xf32>
    %68 = tpu.matmul %41, %4, %cst_24 {dimension_numbers = #tpu.dot_dimension_numbers<[1], [0], [0], [1], [0, 0, 1, 1], [], []>} : vector<8x64xf32>, vector<64x256xf32>, vector<8x256xf32> -> vector<8x256xf32>
    %69 = arith.addf %67, %68 : vector<8x256xf32>
    %c48 = arith.constant 48 : index
    %c0_25 = arith.constant 0 : index
    %70 = vector.load %arg2[%c48, %c0_25] : memref<64x256xf32, #tpu.memory_space<vmem>>, vector<8x256xf32>
    %cst_26 = arith.constant dense<0.000000e+00> : vector<8x256xf32>
    %71 = tpu.matmul %66, %6, %cst_26 {dimension_numbers = #tpu.dot_dimension_numbers<[1], [0], [0], [1], [0, 0, 1, 1], [], []>} : vector<8x64xf32>, vector<64x256xf32>, vector<8x256xf32> -> vector<8x256xf32>
    %72 = arith.addf %70, %71 : vector<8x256xf32>
    %73 = vector.extract_strided_slice %69 {offsets = [0, 0], sizes = [8, 64], strides = [1, 1]} : vector<8x256xf32> to vector<8x64xf32>
    %74 = arith.negf %73 : vector<8x64xf32>
    %75 = math.exp %74 : vector<8x64xf32>
    %cst_27 = arith.constant 1.000000e+00 : f32
    %76 = vector.broadcast %cst_27 : f32 to vector<8x64xf32>
    %77 = arith.addf %76, %75 : vector<8x64xf32>
    %78 = arith.divf %76, %77 : vector<8x64xf32>
    %79 = vector.extract_strided_slice %69 {offsets = [0, 64], sizes = [8, 64], strides = [1, 1]} : vector<8x256xf32> to vector<8x64xf32>
    %80 = arith.negf %79 : vector<8x64xf32>
    %81 = math.exp %80 : vector<8x64xf32>
    %cst_28 = arith.constant 1.000000e+00 : f32
    %82 = vector.broadcast %cst_28 : f32 to vector<8x64xf32>
    %83 = arith.addf %82, %81 : vector<8x64xf32>
    %84 = arith.divf %82, %83 : vector<8x64xf32>
    %85 = vector.extract_strided_slice %69 {offsets = [0, 128], sizes = [8, 64], strides = [1, 1]} : vector<8x256xf32> to vector<8x64xf32>
    %86 = math.tanh %85 : vector<8x64xf32>
    %87 = vector.extract_strided_slice %69 {offsets = [0, 192], sizes = [8, 64], strides = [1, 1]} : vector<8x256xf32> to vector<8x64xf32>
    %88 = arith.negf %87 : vector<8x64xf32>
    %89 = math.exp %88 : vector<8x64xf32>
    %cst_29 = arith.constant 1.000000e+00 : f32
    %90 = vector.broadcast %cst_29 : f32 to vector<8x64xf32>
    %91 = arith.addf %90, %89 : vector<8x64xf32>
    %92 = arith.divf %90, %91 : vector<8x64xf32>
    %93 = arith.mulf %84, %39 : vector<8x64xf32>
    %94 = arith.mulf %78, %86 : vector<8x64xf32>
    %95 = arith.addf %93, %94 : vector<8x64xf32>
    %96 = math.tanh %95 : vector<8x64xf32>
    %97 = arith.mulf %92, %96 : vector<8x64xf32>
    %98 = vector.extract_strided_slice %72 {offsets = [0, 0], sizes = [8, 64], strides = [1, 1]} : vector<8x256xf32> to vector<8x64xf32>
    %99 = arith.negf %98 : vector<8x64xf32>
    %100 = math.exp %99 : vector<8x64xf32>
    %cst_30 = arith.constant 1.000000e+00 : f32
    %101 = vector.broadcast %cst_30 : f32 to vector<8x64xf32>
    %102 = arith.addf %101, %100 : vector<8x64xf32>
    %103 = arith.divf %101, %102 : vector<8x64xf32>
    %104 = vector.extract_strided_slice %72 {offsets = [0, 64], sizes = [8, 64], strides = [1, 1]} : vector<8x256xf32> to vector<8x64xf32>
    %105 = arith.negf %104 : vector<8x64xf32>
    %106 = math.exp %105 : vector<8x64xf32>
    %cst_31 = arith.constant 1.000000e+00 : f32
    %107 = vector.broadcast %cst_31 : f32 to vector<8x64xf32>
    %108 = arith.addf %107, %106 : vector<8x64xf32>
    %109 = arith.divf %107, %108 : vector<8x64xf32>
    %110 = vector.extract_strided_slice %72 {offsets = [0, 128], sizes = [8, 64], strides = [1, 1]} : vector<8x256xf32> to vector<8x64xf32>
    %111 = math.tanh %110 : vector<8x64xf32>
    %112 = vector.extract_strided_slice %72 {offsets = [0, 192], sizes = [8, 64], strides = [1, 1]} : vector<8x256xf32> to vector<8x64xf32>
    %113 = arith.negf %112 : vector<8x64xf32>
    %114 = math.exp %113 : vector<8x64xf32>
    %cst_32 = arith.constant 1.000000e+00 : f32
    %115 = vector.broadcast %cst_32 : f32 to vector<8x64xf32>
    %116 = arith.addf %115, %114 : vector<8x64xf32>
    %117 = arith.divf %115, %116 : vector<8x64xf32>
    %118 = arith.mulf %109, %64 : vector<8x64xf32>
    %119 = arith.mulf %103, %111 : vector<8x64xf32>
    %120 = arith.addf %118, %119 : vector<8x64xf32>
    %121 = math.tanh %120 : vector<8x64xf32>
    %122 = arith.mulf %117, %121 : vector<8x64xf32>
    %c16 = arith.constant 16 : index
    %c0_33 = arith.constant 0 : index
    %123 = vector.load %arg1[%c16, %c0_33] : memref<64x256xf32, #tpu.memory_space<vmem>>, vector<8x256xf32>
    %cst_34 = arith.constant dense<0.000000e+00> : vector<8x256xf32>
    %124 = tpu.matmul %97, %4, %cst_34 {dimension_numbers = #tpu.dot_dimension_numbers<[1], [0], [0], [1], [0, 0, 1, 1], [], []>} : vector<8x64xf32>, vector<64x256xf32>, vector<8x256xf32> -> vector<8x256xf32>
    %125 = arith.addf %123, %124 : vector<8x256xf32>
    %c40 = arith.constant 40 : index
    %c0_35 = arith.constant 0 : index
    %126 = vector.load %arg2[%c40, %c0_35] : memref<64x256xf32, #tpu.memory_space<vmem>>, vector<8x256xf32>
    %cst_36 = arith.constant dense<0.000000e+00> : vector<8x256xf32>
    %127 = tpu.matmul %122, %6, %cst_36 {dimension_numbers = #tpu.dot_dimension_numbers<[1], [0], [0], [1], [0, 0, 1, 1], [], []>} : vector<8x64xf32>, vector<64x256xf32>, vector<8x256xf32> -> vector<8x256xf32>
    %128 = arith.addf %126, %127 : vector<8x256xf32>
    %129 = vector.extract_strided_slice %125 {offsets = [0, 0], sizes = [8, 64], strides = [1, 1]} : vector<8x256xf32> to vector<8x64xf32>
    %130 = arith.negf %129 : vector<8x64xf32>
    %131 = math.exp %130 : vector<8x64xf32>
    %cst_37 = arith.constant 1.000000e+00 : f32
    %132 = vector.broadcast %cst_37 : f32 to vector<8x64xf32>
    %133 = arith.addf %132, %131 : vector<8x64xf32>
    %134 = arith.divf %132, %133 : vector<8x64xf32>
    %135 = vector.extract_strided_slice %125 {offsets = [0, 64], sizes = [8, 64], strides = [1, 1]} : vector<8x256xf32> to vector<8x64xf32>
    %136 = arith.negf %135 : vector<8x64xf32>
    %137 = math.exp %136 : vector<8x64xf32>
    %cst_38 = arith.constant 1.000000e+00 : f32
    %138 = vector.broadcast %cst_38 : f32 to vector<8x64xf32>
    %139 = arith.addf %138, %137 : vector<8x64xf32>
    %140 = arith.divf %138, %139 : vector<8x64xf32>
    %141 = vector.extract_strided_slice %125 {offsets = [0, 128], sizes = [8, 64], strides = [1, 1]} : vector<8x256xf32> to vector<8x64xf32>
    %142 = math.tanh %141 : vector<8x64xf32>
    %143 = vector.extract_strided_slice %125 {offsets = [0, 192], sizes = [8, 64], strides = [1, 1]} : vector<8x256xf32> to vector<8x64xf32>
    %144 = arith.negf %143 : vector<8x64xf32>
    %145 = math.exp %144 : vector<8x64xf32>
    %cst_39 = arith.constant 1.000000e+00 : f32
    %146 = vector.broadcast %cst_39 : f32 to vector<8x64xf32>
    %147 = arith.addf %146, %145 : vector<8x64xf32>
    %148 = arith.divf %146, %147 : vector<8x64xf32>
    %149 = arith.mulf %140, %95 : vector<8x64xf32>
    %150 = arith.mulf %134, %142 : vector<8x64xf32>
    %151 = arith.addf %149, %150 : vector<8x64xf32>
    %152 = math.tanh %151 : vector<8x64xf32>
    %153 = arith.mulf %148, %152 : vector<8x64xf32>
    %154 = vector.extract_strided_slice %128 {offsets = [0, 0], sizes = [8, 64], strides = [1, 1]} : vector<8x256xf32> to vector<8x64xf32>
    %155 = arith.negf %154 : vector<8x64xf32>
    %156 = math.exp %155 : vector<8x64xf32>
    %cst_40 = arith.constant 1.000000e+00 : f32
    %157 = vector.broadcast %cst_40 : f32 to vector<8x64xf32>
    %158 = arith.addf %157, %156 : vector<8x64xf32>
    %159 = arith.divf %157, %158 : vector<8x64xf32>
    %160 = vector.extract_strided_slice %128 {offsets = [0, 64], sizes = [8, 64], strides = [1, 1]} : vector<8x256xf32> to vector<8x64xf32>
    %161 = arith.negf %160 : vector<8x64xf32>
    %162 = math.exp %161 : vector<8x64xf32>
    %cst_41 = arith.constant 1.000000e+00 : f32
    %163 = vector.broadcast %cst_41 : f32 to vector<8x64xf32>
    %164 = arith.addf %163, %162 : vector<8x64xf32>
    %165 = arith.divf %163, %164 : vector<8x64xf32>
    %166 = vector.extract_strided_slice %128 {offsets = [0, 128], sizes = [8, 64], strides = [1, 1]} : vector<8x256xf32> to vector<8x64xf32>
    %167 = math.tanh %166 : vector<8x64xf32>
    %168 = vector.extract_strided_slice %128 {offsets = [0, 192], sizes = [8, 64], strides = [1, 1]} : vector<8x256xf32> to vector<8x64xf32>
    %169 = arith.negf %168 : vector<8x64xf32>
    %170 = math.exp %169 : vector<8x64xf32>
    %cst_42 = arith.constant 1.000000e+00 : f32
    %171 = vector.broadcast %cst_42 : f32 to vector<8x64xf32>
    %172 = arith.addf %171, %170 : vector<8x64xf32>
    %173 = arith.divf %171, %172 : vector<8x64xf32>
    %174 = arith.mulf %165, %120 : vector<8x64xf32>
    %175 = arith.mulf %159, %167 : vector<8x64xf32>
    %176 = arith.addf %174, %175 : vector<8x64xf32>
    %177 = math.tanh %176 : vector<8x64xf32>
    %178 = arith.mulf %173, %177 : vector<8x64xf32>
    %c24 = arith.constant 24 : index
    %c0_43 = arith.constant 0 : index
    %179 = vector.load %arg1[%c24, %c0_43] : memref<64x256xf32, #tpu.memory_space<vmem>>, vector<8x256xf32>
    %cst_44 = arith.constant dense<0.000000e+00> : vector<8x256xf32>
    %180 = tpu.matmul %153, %4, %cst_44 {dimension_numbers = #tpu.dot_dimension_numbers<[1], [0], [0], [1], [0, 0, 1, 1], [], []>} : vector<8x64xf32>, vector<64x256xf32>, vector<8x256xf32> -> vector<8x256xf32>
    %181 = arith.addf %179, %180 : vector<8x256xf32>
    %c32 = arith.constant 32 : index
    %c0_45 = arith.constant 0 : index
    %182 = vector.load %arg2[%c32, %c0_45] : memref<64x256xf32, #tpu.memory_space<vmem>>, vector<8x256xf32>
    %cst_46 = arith.constant dense<0.000000e+00> : vector<8x256xf32>
    %183 = tpu.matmul %178, %6, %cst_46 {dimension_numbers = #tpu.dot_dimension_numbers<[1], [0], [0], [1], [0, 0, 1, 1], [], []>} : vector<8x64xf32>, vector<64x256xf32>, vector<8x256xf32> -> vector<8x256xf32>
    %184 = arith.addf %182, %183 : vector<8x256xf32>
    %185 = vector.extract_strided_slice %181 {offsets = [0, 0], sizes = [8, 64], strides = [1, 1]} : vector<8x256xf32> to vector<8x64xf32>
    %186 = arith.negf %185 : vector<8x64xf32>
    %187 = math.exp %186 : vector<8x64xf32>
    %cst_47 = arith.constant 1.000000e+00 : f32
    %188 = vector.broadcast %cst_47 : f32 to vector<8x64xf32>
    %189 = arith.addf %188, %187 : vector<8x64xf32>
    %190 = arith.divf %188, %189 : vector<8x64xf32>
    %191 = vector.extract_strided_slice %181 {offsets = [0, 64], sizes = [8, 64], strides = [1, 1]} : vector<8x256xf32> to vector<8x64xf32>
    %192 = arith.negf %191 : vector<8x64xf32>
    %193 = math.exp %192 : vector<8x64xf32>
    %cst_48 = arith.constant 1.000000e+00 : f32
    %194 = vector.broadcast %cst_48 : f32 to vector<8x64xf32>
    %195 = arith.addf %194, %193 : vector<8x64xf32>
    %196 = arith.divf %194, %195 : vector<8x64xf32>
    %197 = vector.extract_strided_slice %181 {offsets = [0, 128], sizes = [8, 64], strides = [1, 1]} : vector<8x256xf32> to vector<8x64xf32>
    %198 = math.tanh %197 : vector<8x64xf32>
    %199 = vector.extract_strided_slice %181 {offsets = [0, 192], sizes = [8, 64], strides = [1, 1]} : vector<8x256xf32> to vector<8x64xf32>
    %200 = arith.negf %199 : vector<8x64xf32>
    %201 = math.exp %200 : vector<8x64xf32>
    %cst_49 = arith.constant 1.000000e+00 : f32
    %202 = vector.broadcast %cst_49 : f32 to vector<8x64xf32>
    %203 = arith.addf %202, %201 : vector<8x64xf32>
    %204 = arith.divf %202, %203 : vector<8x64xf32>
    %205 = arith.mulf %196, %151 : vector<8x64xf32>
    %206 = arith.mulf %190, %198 : vector<8x64xf32>
    %207 = arith.addf %205, %206 : vector<8x64xf32>
    %208 = math.tanh %207 : vector<8x64xf32>
    %209 = arith.mulf %204, %208 : vector<8x64xf32>
    %210 = vector.extract_strided_slice %184 {offsets = [0, 0], sizes = [8, 64], strides = [1, 1]} : vector<8x256xf32> to vector<8x64xf32>
    %211 = arith.negf %210 : vector<8x64xf32>
    %212 = math.exp %211 : vector<8x64xf32>
    %cst_50 = arith.constant 1.000000e+00 : f32
    %213 = vector.broadcast %cst_50 : f32 to vector<8x64xf32>
    %214 = arith.addf %213, %212 : vector<8x64xf32>
    %215 = arith.divf %213, %214 : vector<8x64xf32>
    %216 = vector.extract_strided_slice %184 {offsets = [0, 64], sizes = [8, 64], strides = [1, 1]} : vector<8x256xf32> to vector<8x64xf32>
    %217 = arith.negf %216 : vector<8x64xf32>
    %218 = math.exp %217 : vector<8x64xf32>
    %cst_51 = arith.constant 1.000000e+00 : f32
    %219 = vector.broadcast %cst_51 : f32 to vector<8x64xf32>
    %220 = arith.addf %219, %218 : vector<8x64xf32>
    %221 = arith.divf %219, %220 : vector<8x64xf32>
    %222 = vector.extract_strided_slice %184 {offsets = [0, 128], sizes = [8, 64], strides = [1, 1]} : vector<8x256xf32> to vector<8x64xf32>
    %223 = math.tanh %222 : vector<8x64xf32>
    %224 = vector.extract_strided_slice %184 {offsets = [0, 192], sizes = [8, 64], strides = [1, 1]} : vector<8x256xf32> to vector<8x64xf32>
    %225 = arith.negf %224 : vector<8x64xf32>
    %226 = math.exp %225 : vector<8x64xf32>
    %cst_52 = arith.constant 1.000000e+00 : f32
    %227 = vector.broadcast %cst_52 : f32 to vector<8x64xf32>
    %228 = arith.addf %227, %226 : vector<8x64xf32>
    %229 = arith.divf %227, %228 : vector<8x64xf32>
    %230 = arith.mulf %221, %176 : vector<8x64xf32>
    %231 = arith.mulf %215, %223 : vector<8x64xf32>
    %232 = arith.addf %230, %231 : vector<8x64xf32>
    %233 = math.tanh %232 : vector<8x64xf32>
    %234 = arith.mulf %229, %233 : vector<8x64xf32>
    %c32_53 = arith.constant 32 : index
    %c0_54 = arith.constant 0 : index
    %235 = vector.load %arg1[%c32_53, %c0_54] : memref<64x256xf32, #tpu.memory_space<vmem>>, vector<8x256xf32>
    %cst_55 = arith.constant dense<0.000000e+00> : vector<8x256xf32>
    %236 = tpu.matmul %209, %4, %cst_55 {dimension_numbers = #tpu.dot_dimension_numbers<[1], [0], [0], [1], [0, 0, 1, 1], [], []>} : vector<8x64xf32>, vector<64x256xf32>, vector<8x256xf32> -> vector<8x256xf32>
    %237 = arith.addf %235, %236 : vector<8x256xf32>
    %c24_56 = arith.constant 24 : index
    %c0_57 = arith.constant 0 : index
    %238 = vector.load %arg2[%c24_56, %c0_57] : memref<64x256xf32, #tpu.memory_space<vmem>>, vector<8x256xf32>
    %cst_58 = arith.constant dense<0.000000e+00> : vector<8x256xf32>
    %239 = tpu.matmul %234, %6, %cst_58 {dimension_numbers = #tpu.dot_dimension_numbers<[1], [0], [0], [1], [0, 0, 1, 1], [], []>} : vector<8x64xf32>, vector<64x256xf32>, vector<8x256xf32> -> vector<8x256xf32>
    %240 = arith.addf %238, %239 : vector<8x256xf32>
    %241 = vector.extract_strided_slice %237 {offsets = [0, 0], sizes = [8, 64], strides = [1, 1]} : vector<8x256xf32> to vector<8x64xf32>
    %242 = arith.negf %241 : vector<8x64xf32>
    %243 = math.exp %242 : vector<8x64xf32>
    %cst_59 = arith.constant 1.000000e+00 : f32
    %244 = vector.broadcast %cst_59 : f32 to vector<8x64xf32>
    %245 = arith.addf %244, %243 : vector<8x64xf32>
    %246 = arith.divf %244, %245 : vector<8x64xf32>
    %247 = vector.extract_strided_slice %237 {offsets = [0, 64], sizes = [8, 64], strides = [1, 1]} : vector<8x256xf32> to vector<8x64xf32>
    %248 = arith.negf %247 : vector<8x64xf32>
    %249 = math.exp %248 : vector<8x64xf32>
    %cst_60 = arith.constant 1.000000e+00 : f32
    %250 = vector.broadcast %cst_60 : f32 to vector<8x64xf32>
    %251 = arith.addf %250, %249 : vector<8x64xf32>
    %252 = arith.divf %250, %251 : vector<8x64xf32>
    %253 = vector.extract_strided_slice %237 {offsets = [0, 128], sizes = [8, 64], strides = [1, 1]} : vector<8x256xf32> to vector<8x64xf32>
    %254 = math.tanh %253 : vector<8x64xf32>
    %255 = vector.extract_strided_slice %237 {offsets = [0, 192], sizes = [8, 64], strides = [1, 1]} : vector<8x256xf32> to vector<8x64xf32>
    %256 = arith.negf %255 : vector<8x64xf32>
    %257 = math.exp %256 : vector<8x64xf32>
    %cst_61 = arith.constant 1.000000e+00 : f32
    %258 = vector.broadcast %cst_61 : f32 to vector<8x64xf32>
    %259 = arith.addf %258, %257 : vector<8x64xf32>
    %260 = arith.divf %258, %259 : vector<8x64xf32>
    %261 = arith.mulf %252, %207 : vector<8x64xf32>
    %262 = arith.mulf %246, %254 : vector<8x64xf32>
    %263 = arith.addf %261, %262 : vector<8x64xf32>
    %264 = math.tanh %263 : vector<8x64xf32>
    %265 = arith.mulf %260, %264 : vector<8x64xf32>
    %266 = vector.extract_strided_slice %240 {offsets = [0, 0], sizes = [8, 64], strides = [1, 1]} : vector<8x256xf32> to vector<8x64xf32>
    %267 = arith.negf %266 : vector<8x64xf32>
    %268 = math.exp %267 : vector<8x64xf32>
    %cst_62 = arith.constant 1.000000e+00 : f32
    %269 = vector.broadcast %cst_62 : f32 to vector<8x64xf32>
    %270 = arith.addf %269, %268 : vector<8x64xf32>
    %271 = arith.divf %269, %270 : vector<8x64xf32>
    %272 = vector.extract_strided_slice %240 {offsets = [0, 64], sizes = [8, 64], strides = [1, 1]} : vector<8x256xf32> to vector<8x64xf32>
    %273 = arith.negf %272 : vector<8x64xf32>
    %274 = math.exp %273 : vector<8x64xf32>
    %cst_63 = arith.constant 1.000000e+00 : f32
    %275 = vector.broadcast %cst_63 : f32 to vector<8x64xf32>
    %276 = arith.addf %275, %274 : vector<8x64xf32>
    %277 = arith.divf %275, %276 : vector<8x64xf32>
    %278 = vector.extract_strided_slice %240 {offsets = [0, 128], sizes = [8, 64], strides = [1, 1]} : vector<8x256xf32> to vector<8x64xf32>
    %279 = math.tanh %278 : vector<8x64xf32>
    %280 = vector.extract_strided_slice %240 {offsets = [0, 192], sizes = [8, 64], strides = [1, 1]} : vector<8x256xf32> to vector<8x64xf32>
    %281 = arith.negf %280 : vector<8x64xf32>
    %282 = math.exp %281 : vector<8x64xf32>
    %cst_64 = arith.constant 1.000000e+00 : f32
    %283 = vector.broadcast %cst_64 : f32 to vector<8x64xf32>
    %284 = arith.addf %283, %282 : vector<8x64xf32>
    %285 = arith.divf %283, %284 : vector<8x64xf32>
    %286 = arith.mulf %277, %232 : vector<8x64xf32>
    %287 = arith.mulf %271, %279 : vector<8x64xf32>
    %288 = arith.addf %286, %287 : vector<8x64xf32>
    %289 = math.tanh %288 : vector<8x64xf32>
    %290 = arith.mulf %285, %289 : vector<8x64xf32>
    %c40_65 = arith.constant 40 : index
    %c0_66 = arith.constant 0 : index
    %291 = vector.load %arg1[%c40_65, %c0_66] : memref<64x256xf32, #tpu.memory_space<vmem>>, vector<8x256xf32>
    %cst_67 = arith.constant dense<0.000000e+00> : vector<8x256xf32>
    %292 = tpu.matmul %265, %4, %cst_67 {dimension_numbers = #tpu.dot_dimension_numbers<[1], [0], [0], [1], [0, 0, 1, 1], [], []>} : vector<8x64xf32>, vector<64x256xf32>, vector<8x256xf32> -> vector<8x256xf32>
    %293 = arith.addf %291, %292 : vector<8x256xf32>
    %c16_68 = arith.constant 16 : index
    %c0_69 = arith.constant 0 : index
    %294 = vector.load %arg2[%c16_68, %c0_69] : memref<64x256xf32, #tpu.memory_space<vmem>>, vector<8x256xf32>
    %cst_70 = arith.constant dense<0.000000e+00> : vector<8x256xf32>
    %295 = tpu.matmul %290, %6, %cst_70 {dimension_numbers = #tpu.dot_dimension_numbers<[1], [0], [0], [1], [0, 0, 1, 1], [], []>} : vector<8x64xf32>, vector<64x256xf32>, vector<8x256xf32> -> vector<8x256xf32>
    %296 = arith.addf %294, %295 : vector<8x256xf32>
    %297 = vector.extract_strided_slice %293 {offsets = [0, 0], sizes = [8, 64], strides = [1, 1]} : vector<8x256xf32> to vector<8x64xf32>
    %298 = arith.negf %297 : vector<8x64xf32>
    %299 = math.exp %298 : vector<8x64xf32>
    %cst_71 = arith.constant 1.000000e+00 : f32
    %300 = vector.broadcast %cst_71 : f32 to vector<8x64xf32>
    %301 = arith.addf %300, %299 : vector<8x64xf32>
    %302 = arith.divf %300, %301 : vector<8x64xf32>
    %303 = vector.extract_strided_slice %293 {offsets = [0, 64], sizes = [8, 64], strides = [1, 1]} : vector<8x256xf32> to vector<8x64xf32>
    %304 = arith.negf %303 : vector<8x64xf32>
    %305 = math.exp %304 : vector<8x64xf32>
    %cst_72 = arith.constant 1.000000e+00 : f32
    %306 = vector.broadcast %cst_72 : f32 to vector<8x64xf32>
    %307 = arith.addf %306, %305 : vector<8x64xf32>
    %308 = arith.divf %306, %307 : vector<8x64xf32>
    %309 = vector.extract_strided_slice %293 {offsets = [0, 128], sizes = [8, 64], strides = [1, 1]} : vector<8x256xf32> to vector<8x64xf32>
    %310 = math.tanh %309 : vector<8x64xf32>
    %311 = vector.extract_strided_slice %293 {offsets = [0, 192], sizes = [8, 64], strides = [1, 1]} : vector<8x256xf32> to vector<8x64xf32>
    %312 = arith.negf %311 : vector<8x64xf32>
    %313 = math.exp %312 : vector<8x64xf32>
    %cst_73 = arith.constant 1.000000e+00 : f32
    %314 = vector.broadcast %cst_73 : f32 to vector<8x64xf32>
    %315 = arith.addf %314, %313 : vector<8x64xf32>
    %316 = arith.divf %314, %315 : vector<8x64xf32>
    %317 = arith.mulf %308, %263 : vector<8x64xf32>
    %318 = arith.mulf %302, %310 : vector<8x64xf32>
    %319 = arith.addf %317, %318 : vector<8x64xf32>
    %320 = math.tanh %319 : vector<8x64xf32>
    %321 = arith.mulf %316, %320 : vector<8x64xf32>
    %322 = vector.extract_strided_slice %296 {offsets = [0, 0], sizes = [8, 64], strides = [1, 1]} : vector<8x256xf32> to vector<8x64xf32>
    %323 = arith.negf %322 : vector<8x64xf32>
    %324 = math.exp %323 : vector<8x64xf32>
    %cst_74 = arith.constant 1.000000e+00 : f32
    %325 = vector.broadcast %cst_74 : f32 to vector<8x64xf32>
    %326 = arith.addf %325, %324 : vector<8x64xf32>
    %327 = arith.divf %325, %326 : vector<8x64xf32>
    %328 = vector.extract_strided_slice %296 {offsets = [0, 64], sizes = [8, 64], strides = [1, 1]} : vector<8x256xf32> to vector<8x64xf32>
    %329 = arith.negf %328 : vector<8x64xf32>
    %330 = math.exp %329 : vector<8x64xf32>
    %cst_75 = arith.constant 1.000000e+00 : f32
    %331 = vector.broadcast %cst_75 : f32 to vector<8x64xf32>
    %332 = arith.addf %331, %330 : vector<8x64xf32>
    %333 = arith.divf %331, %332 : vector<8x64xf32>
    %334 = vector.extract_strided_slice %296 {offsets = [0, 128], sizes = [8, 64], strides = [1, 1]} : vector<8x256xf32> to vector<8x64xf32>
    %335 = math.tanh %334 : vector<8x64xf32>
    %336 = vector.extract_strided_slice %296 {offsets = [0, 192], sizes = [8, 64], strides = [1, 1]} : vector<8x256xf32> to vector<8x64xf32>
    %337 = arith.negf %336 : vector<8x64xf32>
    %338 = math.exp %337 : vector<8x64xf32>
    %cst_76 = arith.constant 1.000000e+00 : f32
    %339 = vector.broadcast %cst_76 : f32 to vector<8x64xf32>
    %340 = arith.addf %339, %338 : vector<8x64xf32>
    %341 = arith.divf %339, %340 : vector<8x64xf32>
    %342 = arith.mulf %333, %288 : vector<8x64xf32>
    %343 = arith.mulf %327, %335 : vector<8x64xf32>
    %344 = arith.addf %342, %343 : vector<8x64xf32>
    %345 = math.tanh %344 : vector<8x64xf32>
    %346 = arith.mulf %341, %345 : vector<8x64xf32>
    %c48_77 = arith.constant 48 : index
    %c0_78 = arith.constant 0 : index
    %347 = vector.load %arg1[%c48_77, %c0_78] : memref<64x256xf32, #tpu.memory_space<vmem>>, vector<8x256xf32>
    %cst_79 = arith.constant dense<0.000000e+00> : vector<8x256xf32>
    %348 = tpu.matmul %321, %4, %cst_79 {dimension_numbers = #tpu.dot_dimension_numbers<[1], [0], [0], [1], [0, 0, 1, 1], [], []>} : vector<8x64xf32>, vector<64x256xf32>, vector<8x256xf32> -> vector<8x256xf32>
    %349 = arith.addf %347, %348 : vector<8x256xf32>
    %c8_80 = arith.constant 8 : index
    %c0_81 = arith.constant 0 : index
    %350 = vector.load %arg2[%c8_80, %c0_81] : memref<64x256xf32, #tpu.memory_space<vmem>>, vector<8x256xf32>
    %cst_82 = arith.constant dense<0.000000e+00> : vector<8x256xf32>
    %351 = tpu.matmul %346, %6, %cst_82 {dimension_numbers = #tpu.dot_dimension_numbers<[1], [0], [0], [1], [0, 0, 1, 1], [], []>} : vector<8x64xf32>, vector<64x256xf32>, vector<8x256xf32> -> vector<8x256xf32>
    %352 = arith.addf %350, %351 : vector<8x256xf32>
    %353 = vector.extract_strided_slice %349 {offsets = [0, 0], sizes = [8, 64], strides = [1, 1]} : vector<8x256xf32> to vector<8x64xf32>
    %354 = arith.negf %353 : vector<8x64xf32>
    %355 = math.exp %354 : vector<8x64xf32>
    %cst_83 = arith.constant 1.000000e+00 : f32
    %356 = vector.broadcast %cst_83 : f32 to vector<8x64xf32>
    %357 = arith.addf %356, %355 : vector<8x64xf32>
    %358 = arith.divf %356, %357 : vector<8x64xf32>
    %359 = vector.extract_strided_slice %349 {offsets = [0, 64], sizes = [8, 64], strides = [1, 1]} : vector<8x256xf32> to vector<8x64xf32>
    %360 = arith.negf %359 : vector<8x64xf32>
    %361 = math.exp %360 : vector<8x64xf32>
    %cst_84 = arith.constant 1.000000e+00 : f32
    %362 = vector.broadcast %cst_84 : f32 to vector<8x64xf32>
    %363 = arith.addf %362, %361 : vector<8x64xf32>
    %364 = arith.divf %362, %363 : vector<8x64xf32>
    %365 = vector.extract_strided_slice %349 {offsets = [0, 128], sizes = [8, 64], strides = [1, 1]} : vector<8x256xf32> to vector<8x64xf32>
    %366 = math.tanh %365 : vector<8x64xf32>
    %367 = vector.extract_strided_slice %349 {offsets = [0, 192], sizes = [8, 64], strides = [1, 1]} : vector<8x256xf32> to vector<8x64xf32>
    %368 = arith.negf %367 : vector<8x64xf32>
    %369 = math.exp %368 : vector<8x64xf32>
    %cst_85 = arith.constant 1.000000e+00 : f32
    %370 = vector.broadcast %cst_85 : f32 to vector<8x64xf32>
    %371 = arith.addf %370, %369 : vector<8x64xf32>
    %372 = arith.divf %370, %371 : vector<8x64xf32>
    %373 = arith.mulf %364, %319 : vector<8x64xf32>
    %374 = arith.mulf %358, %366 : vector<8x64xf32>
    %375 = arith.addf %373, %374 : vector<8x64xf32>
    %376 = math.tanh %375 : vector<8x64xf32>
    %377 = arith.mulf %372, %376 : vector<8x64xf32>
    %378 = vector.extract_strided_slice %352 {offsets = [0, 0], sizes = [8, 64], strides = [1, 1]} : vector<8x256xf32> to vector<8x64xf32>
    %379 = arith.negf %378 : vector<8x64xf32>
    %380 = math.exp %379 : vector<8x64xf32>
    %cst_86 = arith.constant 1.000000e+00 : f32
    %381 = vector.broadcast %cst_86 : f32 to vector<8x64xf32>
    %382 = arith.addf %381, %380 : vector<8x64xf32>
    %383 = arith.divf %381, %382 : vector<8x64xf32>
    %384 = vector.extract_strided_slice %352 {offsets = [0, 64], sizes = [8, 64], strides = [1, 1]} : vector<8x256xf32> to vector<8x64xf32>
    %385 = arith.negf %384 : vector<8x64xf32>
    %386 = math.exp %385 : vector<8x64xf32>
    %cst_87 = arith.constant 1.000000e+00 : f32
    %387 = vector.broadcast %cst_87 : f32 to vector<8x64xf32>
    %388 = arith.addf %387, %386 : vector<8x64xf32>
    %389 = arith.divf %387, %388 : vector<8x64xf32>
    %390 = vector.extract_strided_slice %352 {offsets = [0, 128], sizes = [8, 64], strides = [1, 1]} : vector<8x256xf32> to vector<8x64xf32>
    %391 = math.tanh %390 : vector<8x64xf32>
    %392 = vector.extract_strided_slice %352 {offsets = [0, 192], sizes = [8, 64], strides = [1, 1]} : vector<8x256xf32> to vector<8x64xf32>
    %393 = arith.negf %392 : vector<8x64xf32>
    %394 = math.exp %393 : vector<8x64xf32>
    %cst_88 = arith.constant 1.000000e+00 : f32
    %395 = vector.broadcast %cst_88 : f32 to vector<8x64xf32>
    %396 = arith.addf %395, %394 : vector<8x64xf32>
    %397 = arith.divf %395, %396 : vector<8x64xf32>
    %398 = arith.mulf %389, %344 : vector<8x64xf32>
    %399 = arith.mulf %383, %391 : vector<8x64xf32>
    %400 = arith.addf %398, %399 : vector<8x64xf32>
    %401 = math.tanh %400 : vector<8x64xf32>
    %402 = arith.mulf %397, %401 : vector<8x64xf32>
    %c56_89 = arith.constant 56 : index
    %c0_90 = arith.constant 0 : index
    %403 = vector.load %arg1[%c56_89, %c0_90] : memref<64x256xf32, #tpu.memory_space<vmem>>, vector<8x256xf32>
    %cst_91 = arith.constant dense<0.000000e+00> : vector<8x256xf32>
    %404 = tpu.matmul %377, %4, %cst_91 {dimension_numbers = #tpu.dot_dimension_numbers<[1], [0], [0], [1], [0, 0, 1, 1], [], []>} : vector<8x64xf32>, vector<64x256xf32>, vector<8x256xf32> -> vector<8x256xf32>
    %405 = arith.addf %403, %404 : vector<8x256xf32>
    %c0_92 = arith.constant 0 : index
    %c0_93 = arith.constant 0 : index
    %406 = vector.load %arg2[%c0_92, %c0_93] : memref<64x256xf32, #tpu.memory_space<vmem>>, vector<8x256xf32>
    %cst_94 = arith.constant dense<0.000000e+00> : vector<8x256xf32>
    %407 = tpu.matmul %402, %6, %cst_94 {dimension_numbers = #tpu.dot_dimension_numbers<[1], [0], [0], [1], [0, 0, 1, 1], [], []>} : vector<8x64xf32>, vector<64x256xf32>, vector<8x256xf32> -> vector<8x256xf32>
    %408 = arith.addf %406, %407 : vector<8x256xf32>
    %409 = vector.extract_strided_slice %405 {offsets = [0, 0], sizes = [8, 64], strides = [1, 1]} : vector<8x256xf32> to vector<8x64xf32>
    %410 = arith.negf %409 : vector<8x64xf32>
    %411 = math.exp %410 : vector<8x64xf32>
    %cst_95 = arith.constant 1.000000e+00 : f32
    %412 = vector.broadcast %cst_95 : f32 to vector<8x64xf32>
    %413 = arith.addf %412, %411 : vector<8x64xf32>
    %414 = arith.divf %412, %413 : vector<8x64xf32>
    %415 = vector.extract_strided_slice %405 {offsets = [0, 64], sizes = [8, 64], strides = [1, 1]} : vector<8x256xf32> to vector<8x64xf32>
    %416 = arith.negf %415 : vector<8x64xf32>
    %417 = math.exp %416 : vector<8x64xf32>
    %cst_96 = arith.constant 1.000000e+00 : f32
    %418 = vector.broadcast %cst_96 : f32 to vector<8x64xf32>
    %419 = arith.addf %418, %417 : vector<8x64xf32>
    %420 = arith.divf %418, %419 : vector<8x64xf32>
    %421 = vector.extract_strided_slice %405 {offsets = [0, 128], sizes = [8, 64], strides = [1, 1]} : vector<8x256xf32> to vector<8x64xf32>
    %422 = math.tanh %421 : vector<8x64xf32>
    %423 = vector.extract_strided_slice %405 {offsets = [0, 192], sizes = [8, 64], strides = [1, 1]} : vector<8x256xf32> to vector<8x64xf32>
    %424 = arith.negf %423 : vector<8x64xf32>
    %425 = math.exp %424 : vector<8x64xf32>
    %cst_97 = arith.constant 1.000000e+00 : f32
    %426 = vector.broadcast %cst_97 : f32 to vector<8x64xf32>
    %427 = arith.addf %426, %425 : vector<8x64xf32>
    %428 = arith.divf %426, %427 : vector<8x64xf32>
    %429 = arith.mulf %420, %375 : vector<8x64xf32>
    %430 = arith.mulf %414, %422 : vector<8x64xf32>
    %431 = arith.addf %429, %430 : vector<8x64xf32>
    %432 = math.tanh %431 : vector<8x64xf32>
    %433 = arith.mulf %428, %432 : vector<8x64xf32>
    %434 = vector.extract_strided_slice %408 {offsets = [0, 0], sizes = [8, 64], strides = [1, 1]} : vector<8x256xf32> to vector<8x64xf32>
    %435 = arith.negf %434 : vector<8x64xf32>
    %436 = math.exp %435 : vector<8x64xf32>
    %cst_98 = arith.constant 1.000000e+00 : f32
    %437 = vector.broadcast %cst_98 : f32 to vector<8x64xf32>
    %438 = arith.addf %437, %436 : vector<8x64xf32>
    %439 = arith.divf %437, %438 : vector<8x64xf32>
    %440 = vector.extract_strided_slice %408 {offsets = [0, 64], sizes = [8, 64], strides = [1, 1]} : vector<8x256xf32> to vector<8x64xf32>
    %441 = arith.negf %440 : vector<8x64xf32>
    %442 = math.exp %441 : vector<8x64xf32>
    %cst_99 = arith.constant 1.000000e+00 : f32
    %443 = vector.broadcast %cst_99 : f32 to vector<8x64xf32>
    %444 = arith.addf %443, %442 : vector<8x64xf32>
    %445 = arith.divf %443, %444 : vector<8x64xf32>
    %446 = vector.extract_strided_slice %408 {offsets = [0, 128], sizes = [8, 64], strides = [1, 1]} : vector<8x256xf32> to vector<8x64xf32>
    %447 = math.tanh %446 : vector<8x64xf32>
    %448 = vector.extract_strided_slice %408 {offsets = [0, 192], sizes = [8, 64], strides = [1, 1]} : vector<8x256xf32> to vector<8x64xf32>
    %449 = arith.negf %448 : vector<8x64xf32>
    %450 = math.exp %449 : vector<8x64xf32>
    %cst_100 = arith.constant 1.000000e+00 : f32
    %451 = vector.broadcast %cst_100 : f32 to vector<8x64xf32>
    %452 = arith.addf %451, %450 : vector<8x64xf32>
    %453 = arith.divf %451, %452 : vector<8x64xf32>
    %454 = arith.mulf %445, %400 : vector<8x64xf32>
    %455 = arith.mulf %439, %447 : vector<8x64xf32>
    %456 = arith.addf %454, %455 : vector<8x64xf32>
    %457 = math.tanh %456 : vector<8x64xf32>
    %458 = arith.mulf %453, %457 : vector<8x64xf32>
    %c0_101 = arith.constant 0 : index
    %c0_102 = arith.constant 0 : index
    %459 = vector.load %arg9[%c0_101, %c0_102] : memref<8x64xf32, #tpu.memory_space<vmem>>, vector<8x64xf32>
    tpu.vector_store %arg9[%c0_101, %c0_102], %433 {strides = array<i32>} : memref<8x64xf32, #tpu.memory_space<vmem>>, vector<8x64xf32>,
    %c0_103 = arith.constant 0 : index
    %c0_104 = arith.constant 0 : index
    %460 = vector.load %arg10[%c0_103, %c0_104] : memref<8x64xf32, #tpu.memory_space<vmem>>, vector<8x64xf32>
    tpu.vector_store %arg10[%c0_103, %c0_104], %431 {strides = array<i32>} : memref<8x64xf32, #tpu.memory_space<vmem>>, vector<8x64xf32>,
    %c0_105 = arith.constant 0 : index
    %c0_106 = arith.constant 0 : index
    %461 = vector.load %arg11[%c0_105, %c0_106] : memref<8x64xf32, #tpu.memory_space<vmem>>, vector<8x64xf32>
    tpu.vector_store %arg11[%c0_105, %c0_106], %458 {strides = array<i32>} : memref<8x64xf32, #tpu.memory_space<vmem>>, vector<8x64xf32>,
    %c0_107 = arith.constant 0 : index
    %c0_108 = arith.constant 0 : index
    %462 = vector.load %arg12[%c0_107, %c0_108] : memref<8x64xf32, #tpu.memory_space<vmem>>, vector<8x64xf32>
    tpu.vector_store %arg12[%c0_107, %c0_108], %456 {strides = array<i32>} : memref<8x64xf32, #tpu.memory_space<vmem>>, vector<8x64xf32>,
    %c0_i32_109 = arith.constant 0 : i32
    %463 = arith.cmpi eq, %arg0, %c0_i32_109 : i32
    %464 = arith.extui %463 : i1 to i32
    %c0_i32_110 = arith.constant 0 : i32
    %465 = arith.cmpi ne, %464, %c0_i32_110 : i32
    scf.if %465 {
      %c0_111 = arith.constant 0 : index
      %c0_112 = arith.constant 0 : index
      %466 = vector.load %arg11[%c0_111, %c0_112] : memref<8x64xf32, #tpu.memory_space<vmem>>, vector<8x64xf32>
      %c0_113 = arith.constant 0 : index
      %c0_114 = arith.constant 0 : index
      %467 = vector.load %arg9[%c0_113, %c0_114] : memref<8x64xf32, #tpu.memory_space<vmem>>, vector<8x64xf32>
      %468 = tpu.concatenate %466, %467 in 1 : vector<8x64xf32>, vector<8x64xf32> -> vector<8x128xf32>
      %c0_115 = arith.constant 0 : index
      %c0_116 = arith.constant 0 : index
      %469 = vector.load %arg4[%c0_115, %c0_116] : memref<128x64xf32, #tpu.memory_space<vmem>>, vector<128x64xf32>
      %cst_117 = arith.constant dense<0.000000e+00> : vector<8x64xf32>
      %470 = tpu.matmul %468, %469, %cst_117 {dimension_numbers = #tpu.dot_dimension_numbers<[1], [0], [0], [1], [0, 0, 1, 1], [], []>} : vector<8x128xf32>, vector<128x64xf32>, vector<8x64xf32> -> vector<8x64xf32>
      %c0_118 = arith.constant 0 : index
      %c0_119 = arith.constant 0 : index
      %471 = vector.load %arg5[%c0_118, %c0_119] : memref<1x64xf32, #tpu.memory_space<vmem>>, vector<1x64xf32>
      %472 = vector.broadcast %471 : vector<1x64xf32> to vector<8x64xf32>
      %473 = arith.addf %470, %472 : vector<8x64xf32>
      %cst_120 = arith.constant 0.000000e+00 : f32
      %474 = vector.broadcast %cst_120 : f32 to vector<8x64xf32>
      %475 = arith.maximumf %473, %474 : vector<8x64xf32>
      %c0_121 = arith.constant 0 : index
      %c0_122 = arith.constant 0 : index
      %476 = vector.load %arg6[%c0_121, %c0_122] : memref<64x2xf32, #tpu.memory_space<vmem>>, vector<64x2xf32>
      %cst_123 = arith.constant dense<0.000000e+00> : vector<8x2xf32>
      %477 = tpu.matmul %475, %476, %cst_123 {dimension_numbers = #tpu.dot_dimension_numbers<[1], [0], [0], [1], [0, 0, 1, 1], [], []>} : vector<8x64xf32>, vector<64x2xf32>, vector<8x2xf32> -> vector<8x2xf32>
      %c0_124 = arith.constant 0 : index
      %c0_125 = arith.constant 0 : index
      %478 = vector.load %arg7[%c0_124, %c0_125] : memref<1x2xf32, #tpu.memory_space<vmem>>, vector<1x2xf32>
      %479 = vector.broadcast %478 : vector<1x2xf32> to vector<8x2xf32>
      %480 = arith.addf %477, %479 : vector<8x2xf32>
      %cst_126 = arith.constant dense<0xFF800000> : vector<8xf32>
      %481 = vector.multi_reduction <maximumf>, %480, %cst_126 [1] : vector<8x2xf32> to vector<8xf32>
      %482 = vector.shape_cast %481 : vector<8xf32> to vector<8x1xf32>
      %483 = vector.broadcast %482 : vector<8x1xf32> to vector<8x2xf32>
      %484 = arith.subf %480, %483 : vector<8x2xf32>
      %485 = math.exp %484 : vector<8x2xf32>
      %cst_127 = arith.constant dense<0.000000e+00> : vector<8xf32>
      %486 = vector.multi_reduction <add>, %485, %cst_127 [1] : vector<8x2xf32> to vector<8xf32>
      %487 = vector.shape_cast %486 : vector<8xf32> to vector<8x1xf32>
      %488 = math.log %487 : vector<8x1xf32>
      %489 = vector.broadcast %488 : vector<8x1xf32> to vector<8x2xf32>
      %490 = arith.subf %484, %489 : vector<8x2xf32>
      %c0_128 = arith.constant 0 : index
      %c0_129 = arith.constant 0 : index
      %491 = vector.load %arg8[%c0_128, %c0_129] : memref<8x2xf32, #tpu.memory_space<vmem>>, vector<8x2xf32>
      tpu.vector_store %arg8[%c0_128, %c0_129], %490 {strides = array<i32>} : memref<8x2xf32, #tpu.memory_space<vmem>>, vector<8x2xf32>,
    } else {
    }
    return
  }
  func.func @transform_0(%arg0: i32) -> (i32, i32) {
    %c0_i32 = arith.constant 0 : i32
    %c0_i32_0 = arith.constant 0 : i32
    return %arg0, %c0_i32 : i32, i32
  }
  func.func @transform_1(%arg0: i32) -> (i32, i32) {
    %c0_i32 = arith.constant 0 : i32
    %0 = arith.subi %c0_i32, %arg0 : i32
    %c1_i32 = arith.constant 1 : i32
    %c0_i32_0 = arith.constant 0 : i32
    return %0, %c1_i32 : i32, i32
  }
  func.func @transform_2(%arg0: i32) -> (i32, i32, i32) {
    %c0_i32 = arith.constant 0 : i32
    %c0_i32_0 = arith.constant 0 : i32
    %c0_i32_1 = arith.constant 0 : i32
    %c0_i32_2 = arith.constant 0 : i32
    return %c0_i32, %c0_i32_0, %c0_i32_1 : i32, i32, i32
  }
  func.func @transform_3(%arg0: i32) -> (i32, i32) {
    %c0_i32 = arith.constant 0 : i32
    %c0_i32_0 = arith.constant 0 : i32
    %c0_i32_1 = arith.constant 0 : i32
    return %c0_i32, %c0_i32_0 : i32, i32
  }
  func.func @transform_4(%arg0: i32) -> (i32, i32) {
    %c0_i32 = arith.constant 0 : i32
    %c0_i32_0 = arith.constant 0 : i32
    %c0_i32_1 = arith.constant 0 : i32
    return %c0_i32, %c0_i32_0 : i32, i32
  }
  func.func @transform_5(%arg0: i32) -> (i32, i32) {
    %c0_i32 = arith.constant 0 : i32
    %c0_i32_0 = arith.constant 0 : i32
    %c0_i32_1 = arith.constant 0 : i32
    return %c0_i32, %c0_i32_0 : i32, i32
  }
  func.func @transform_6(%arg0: i32) -> (i32, i32) {
    %c0_i32 = arith.constant 0 : i32
    %c0_i32_0 = arith.constant 0 : i32
    %c0_i32_1 = arith.constant 0 : i32
    return %c0_i32, %c0_i32_0 : i32, i32
  }
  func.func @transform_7(%arg0: i32) -> (i32, i32) {
    %c0_i32 = arith.constant 0 : i32
    %c0_i32_0 = arith.constant 0 : i32
    %c0_i32_1 = arith.constant 0 : i32
    return %c0_i32, %c0_i32_0 : i32, i32
  }
}

</mosaic_0001>

<llo_original>
// kernel: imdb_forward.4
$region0: #{imdb_forward.4}
  #allocation0 [shape = 'u32[]', space=smem, size = 0x4, offset = 0x4, fixed_abs, tag = 'smem constant byte address 0x4 - core index']
  #allocation1 [shape = 'u32[72,128]{1,0:T(1,128)}', space=vmem, size = 0x9000, scoped, tag = 'internal scratch']
  %s0 = inlined_call_operand.vmem [shape: f32[64,200], index: 0, kind: input, shape index: {}]
  %s1 = inlined_call_operand.vmem [shape: f32[200,512], index: 1, kind: input, shape index: {}]
  %s2 = inlined_call_operand.vmem [shape: f32[1,512], index: 2, kind: input, shape index: {}]
  %s3 = inlined_call_operand.vmem [shape: f32[64,512], index: 3, kind: output, shape index: {}]
  %s4 = sld [smem:[#allocation0]]
  $region22: #{imdb_forward.4} parent=0
    _
  %s6 = ssub.s32 1, %s4
  %s7 = scalar_select 0, %s6, %s4
  // Predicated region
  $region2: #{imdb_forward.4} parent=0 // pred_check
    _
  $region3: #{imdb_forward.4} parent=0 // pred_check_branch
    %9 = sbr.rel (0) target = $region5
  $region4: #{imdb_forward.4} parent=0 // pred_region
    _
  $region5: #{imdb_forward.4} parent=0 // pred_fallthru
    _
  // Predicated region
  $region6: #{imdb_forward.4} parent=0 // pred_check
    _
  $region7: #{imdb_forward.4} parent=0 // pred_check_branch
    %11 = sbr.rel (0) target = $region9
  $region8: #{imdb_forward.4} parent=0 // pred_region
    _
  $region9: #{imdb_forward.4} parent=0 // pred_fallthru
    _
  // Predicated region
  $region10: #{imdb_forward.4} parent=0 // pred_check
    _
  $region11: #{imdb_forward.4} parent=0 // pred_check_branch
    %13 = sbr.rel (0) target = $region13
  $region12: #{imdb_forward.4} parent=0 // pred_region
    _
  $region13: #{imdb_forward.4} parent=0 // pred_fallthru
    _
  %v14 = vld [vmem:[%s0] sm:$0xff]
  %v15 = vld [vmem:[%s0 + $0x8] sm:$0xff]
  %v16 = vld [vmem:[%s0 + $0x10] sm:$0xff]
  %v17 = vld [vmem:[%s0 + $0x18] sm:$0xff]
  %v18 = vld [vmem:[%s0 + $0x20] sm:$0xff]
  %v19 = vld [vmem:[%s0 + $0x28] sm:$0xff]
  %v20 = vld [vmem:[%s0 + $0x30] sm:$0xff]
  %v21 = vld [vmem:[%s0 + $0x38] sm:$0xff]
  %v22 = vld [vmem:[%s0 + $0x40] sm:$0xff]
  %v23 = vld [vmem:[%s0 + $0x48] sm:$0xff]
  %v24 = vld [vmem:[%s0 + $0x50] sm:$0xff]
  %v25 = vld [vmem:[%s0 + $0x58] sm:$0xff]
  %v26 = vld [vmem:[%s0 + $0x60] sm:$0xff]
  %v27 = vld [vmem:[%s0 + $0x68] sm:$0xff]
  %v28 = vld [vmem:[%s0 + $0x70] sm:$0xff]
  %v29 = vld [vmem:[%s0 + $0x78] sm:$0xff]
  %v30 = vld [vmem:[%s1] sm:$0xff]
  %v31 = vld [vmem:[%s1 + $0x8] sm:$0xff]
  %v32 = vld [vmem:[%s1 + $0x10] sm:$0xff]
  %v33 = vld [vmem:[%s1 + $0x18] sm:$0xff]
  %v34 = vld [vmem:[%s1 + $0x20] sm:$0xff]
  %v35 = vld [vmem:[%s1 + $0x28] sm:$0xff]
  %v36 = vld [vmem:[%s1 + $0x30] sm:$0xff]
  %v37 = vld [vmem:[%s1 + $0x38] sm:$0xff]
  %v38 = vld [vmem:[%s1 + $0x40] sm:$0xff]
  %v39 = vld [vmem:[%s1 + $0x48] sm:$0xff]
  %v40 = vld [vmem:[%s1 + $0x50] sm:$0xff]
  %v41 = vld [vmem:[%s1 + $0x58] sm:$0xff]
  %v42 = vld [vmem:[%s1 + $0x60] sm:$0xff]
  %v43 = vld [vmem:[%s1 + $0x68] sm:$0xff]
  %v44 = vld [vmem:[%s1 + $0x70] sm:$0xff]
  %v45 = vld [vmem:[%s1 + $0x78] sm:$0xff]
  %v46 = vld [vmem:[%s1 + $0x80] sm:$0xff]
  %v47 = vld [vmem:[%s1 + $0x88] sm:$0xff]
  %v48 = vld [vmem:[%s1 + $0x90] sm:$0xff]
  %v49 = vld [vmem:[%s1 + $0x98] sm:$0xff]
  %v50 = vld [vmem:[%s1 + $0xa0] sm:$0xff]
  %v51 = vld [vmem:[%s1 + $0xa8] sm:$0xff]
  %v52 = vld [vmem:[%s1 + $0xb0] sm:$0xff]
  %v53 = vld [vmem:[%s1 + $0xb8] sm:$0xff]
  %v54 = vld [vmem:[%s1 + $0xc0] sm:$0xff]
  %v55 = vld [vmem:[%s1 + $0xc8] sm:$0xff]
  %v56 = vld [vmem:[%s1 + $0xd0] sm:$0xff]
  %v57 = vld [vmem:[%s1 + $0xd8] sm:$0xff]
  %v58 = vld [vmem:[%s1 + $0xe0] sm:$0xff]
  %v59 = vld [vmem:[%s1 + $0xe8] sm:$0xff]
  %v60 = vld [vmem:[%s1 + $0xf0] sm:$0xff]
  %v61 = vld [vmem:[%s1 + $0xf8] sm:$0xff]
  %v62 = vld [vmem:[%s1 + $0x100] sm:$0xff]
  %v63 = vld [vmem:[%s1 + $0x108] sm:$0xff]
  %v64 = vld [vmem:[%s1 + $0x110] sm:$0xff]
  %v65 = vld [vmem:[%s1 + $0x118] sm:$0xff]
  %v66 = vld [vmem:[%s1 + $0x120] sm:$0xff]
  %v67 = vld [vmem:[%s1 + $0x128] sm:$0xff]
  %v68 = vld [vmem:[%s1 + $0x130] sm:$0xff]
  %v69 = vld [vmem:[%s1 + $0x138] sm:$0xff]
  %v70 = vld [vmem:[%s1 + $0x140] sm:$0xff]
  %v71 = vld [vmem:[%s1 + $0x148] sm:$0xff]
  %v72 = vld [vmem:[%s1 + $0x150] sm:$0xff]
  %v73 = vld [vmem:[%s1 + $0x158] sm:$0xff]
  %v74 = vld [vmem:[%s1 + $0x160] sm:$0xff]
  %v75 = vld [vmem:[%s1 + $0x168] sm:$0xff]
  %v76 = vld [vmem:[%s1 + $0x170] sm:$0xff]
  %v77 = vld [vmem:[%s1 + $0x178] sm:$0xff]
  %v78 = vld [vmem:[%s1 + $0x180] sm:$0xff]
  %v79 = vld [vmem:[%s1 + $0x188] sm:$0xff]
  %v80 = vld [vmem:[%s1 + $0x190] sm:$0xff]
  %v81 = vld [vmem:[%s1 + $0x198] sm:$0xff]
  %v82 = vld [vmem:[%s1 + $0x1a0] sm:$0xff]
  %v83 = vld [vmem:[%s1 + $0x1a8] sm:$0xff]
  %v84 = vld [vmem:[%s1 + $0x1b0] sm:$0xff]
  %v85 = vld [vmem:[%s1 + $0x1b8] sm:$0xff]
  %v86 = vld [vmem:[%s1 + $0x1c0] sm:$0xff]
  %v87 = vld [vmem:[%s1 + $0x1c8] sm:$0xff]
  %v88 = vld [vmem:[%s1 + $0x1d0] sm:$0xff]
  %v89 = vld [vmem:[%s1 + $0x1d8] sm:$0xff]
  %v90 = vld [vmem:[%s1 + $0x1e0] sm:$0xff]
  %v91 = vld [vmem:[%s1 + $0x1e8] sm:$0xff]
  %v92 = vld [vmem:[%s1 + $0x1f0] sm:$0xff]
  %v93 = vld [vmem:[%s1 + $0x1f8] sm:$0xff]
  %v94 = vld [vmem:[%s1 + $0x200] sm:$0xff]
  %v95 = vld [vmem:[%s1 + $0x208] sm:$0xff]
  %v96 = vld [vmem:[%s1 + $0x210] sm:$0xff]
  %v97 = vld [vmem:[%s1 + $0x218] sm:$0xff]
  %v98 = vld [vmem:[%s1 + $0x220] sm:$0xff]
  %v99 = vld [vmem:[%s1 + $0x228] sm:$0xff]
  %v100 = vld [vmem:[%s1 + $0x230] sm:$0xff]
  %v101 = vld [vmem:[%s1 + $0x238] sm:$0xff]
  %v102 = vld [vmem:[%s1 + $0x240] sm:$0xff]
  %v103 = vld [vmem:[%s1 + $0x248] sm:$0xff]
  %v104 = vld [vmem:[%s1 + $0x250] sm:$0xff]
  %v105 = vld [vmem:[%s1 + $0x258] sm:$0xff]
  %v106 = vld [vmem:[%s1 + $0x260] sm:$0xff]
  %v107 = vld [vmem:[%s1 + $0x268] sm:$0xff]
  %v108 = vld [vmem:[%s1 + $0x270] sm:$0xff]
  %v109 = vld [vmem:[%s1 + $0x278] sm:$0xff]
  %v110 = vld [vmem:[%s1 + $0x280] sm:$0xff]
  %v111 = vld [vmem:[%s1 + $0x288] sm:$0xff]
  %v112 = vld [vmem:[%s1 + $0x290] sm:$0xff]
  %v113 = vld [vmem:[%s1 + $0x298] sm:$0xff]
  %v114 = vld [vmem:[%s1 + $0x2a0] sm:$0xff]
  %v115 = vld [vmem:[%s1 + $0x2a8] sm:$0xff]
  %v116 = vld [vmem:[%s1 + $0x2b0] sm:$0xff]
  %v117 = vld [vmem:[%s1 + $0x2b8] sm:$0xff]
  %v118 = vld [vmem:[%s1 + $0x2c0] sm:$0xff]
  %v119 = vld [vmem:[%s1 + $0x2c8] sm:$0xff]
  %v120 = vld [vmem:[%s1 + $0x2d0] sm:$0xff]
  %v121 = vld [vmem:[%s1 + $0x2d8] sm:$0xff]
  %v122 = vld [vmem:[%s1 + $0x2e0] sm:$0xff]
  %v123 = vld [vmem:[%s1 + $0x2e8] sm:$0xff]
  %v124 = vld [vmem:[%s1 + $0x2f0] sm:$0xff]
  %v125 = vld [vmem:[%s1 + $0x2f8] sm:$0xff]
  %v126 = vld [vmem:[%s1 + $0x300] sm:$0xff]
  %v127 = vld [vmem:[%s1 + $0x308] sm:$0xff]
  %v128 = vld [vmem:[%s1 + $0x310] sm:$0xff]
  %v129 = vld [vmem:[%s1 + $0x318] sm:$0xff]
  %v130 = vld [vmem:[%s2] sm:$0xf]
  %v132 = vperm.slane %v130, 0
  %v133 = vperm.slane %v130, 1
  %v134 = vperm.slane %v130, 2
  %v135 = vperm.slane %v130, 3
  %vm140 = vcmask 588800
  %v142 = vsel %vm140, %v15, 0
  %v145 = vsel %vm140, %v17, 0
  %v148 = vsel %vm140, %v19, 0
  %v151 = vsel %vm140, %v21, 0
  %v154 = vsel %vm140, %v23, 0
  %v157 = vsel %vm140, %v25, 0
  %v160 = vsel %vm140, %v27, 0
  %v163 = vsel %vm140, %v29, 0
  %165 = vmatpush.msra.mxu0 %v90
  %166 = vmatpush.msra.mxu0 %v86
  %167 = vmatpush.msra.mxu0 %v82
  %168 = vmatpush.msra.mxu0 %v78
  %169 = vmatpush.msra.mxu0 %v74
  %170 = vmatpush.msra.mxu0 %v70
  %171 = vmatpush.msra.mxu0 %v66
  %172 = vmatpush.msra.mxu0 %v62
  %173 = vmatpush.msra.mxu0 %v58
  %174 = vmatpush.msra.mxu0 %v54
  %175 = vmatpush.msra.mxu0 %v50
  %176 = vmatpush.msra.mxu0 %v46
  %177 = vmatpush.msra.mxu0 %v42
  %178 = vmatpush.msra.mxu0 %v38
  %179 = vmatpush.msra.mxu0 %v34
  %180 = vmatpush.msra.mxu0 %v30
  %181 = vmatmul.f32.gmra.mxu0 %v14
  %v182 = vpop.f32.mrf.mxu0
  %v183 = vadd.f32 %v132, %v182
  %184 = vmatmul.f32.gmra.mxu0 %v16
  %v185 = vpop.f32.mrf.mxu0
  %v186 = vadd.f32 %v132, %v185
  %187 = vmatmul.f32.gmra.mxu0 %v18
  %v188 = vpop.f32.mrf.mxu0
  %v189 = vadd.f32 %v132, %v188
  %190 = vmatmul.f32.gmra.mxu0 %v20
  %v191 = vpop.f32.mrf.mxu0
  %v192 = vadd.f32 %v132, %v191
  %193 = vmatmul.f32.gmra.mxu0 %v22
  %v194 = vpop.f32.mrf.mxu0
  %v195 = vadd.f32 %v132, %v194
  %196 = vmatmul.f32.gmra.mxu0 %v24
  %v197 = vpop.f32.mrf.mxu0
  %v198 = vadd.f32 %v132, %v197
  %199 = vmatmul.f32.gmra.mxu0 %v26
  %v200 = vpop.f32.mrf.mxu0
  %v201 = vadd.f32 %v132, %v200
  %202 = vmatmul.f32.gmra.mxu0 %v28
  %v203 = vpop.f32.mrf.mxu0
  %v204 = vadd.f32 %v132, %v203
  %205 = vdwg.mxu0
  %206 = vmatpush.msra.mxu0 0.0
  %207 = vmatpush.msra.mxu0 0.0
  %208 = vmatpush.msra.mxu0 0.0
  %209 = vmatpush.msra.mxu0 0.0
  %210 = vmatpush.msra.mxu0 0.0
  %211 = vmatpush.msra.mxu0 0.0
  %212 = vmatpush.msra.mxu0 0.0
  %213 = vmatpush.msra.mxu0 %v126
  %214 = vmatpush.msra.mxu0 %v122
  %215 = vmatpush.msra.mxu0 %v118
  %216 = vmatpush.msra.mxu0 %v114
  %217 = vmatpush.msra.mxu0 %v110
  %218 = vmatpush.msra.mxu0 %v106
  %219 = vmatpush.msra.mxu0 %v102
  %220 = vmatpush.msra.mxu0 %v98
  %221 = vmatpush.msra.mxu0 %v94
  %222 = vmatmul.f32.gmra.mxu0 %v142
  %v223 = vpop.f32.mrf.mxu0
  %v224 = vadd.f32 %v183, %v223
  %225 = vmatmul.f32.gmra.mxu0 %v145
  %v226 = vpop.f32.mrf.mxu0
  %v227 = vadd.f32 %v186, %v226
  %228 = vmatmul.f32.gmra.mxu0 %v148
  %v229 = vpop.f32.mrf.mxu0
  %v230 = vadd.f32 %v189, %v229
  %231 = vmatmul.f32.gmra.mxu0 %v151
  %v232 = vpop.f32.mrf.mxu0
  %v233 = vadd.f32 %v192, %v232
  %234 = vmatmul.f32.gmra.mxu0 %v154
  %v235 = vpop.f32.mrf.mxu0
  %v236 = vadd.f32 %v195, %v235
  %237 = vmatmul.f32.gmra.mxu0 %v157
  %v238 = vpop.f32.mrf.mxu0
  %v239 = vadd.f32 %v198, %v238
  %240 = vmatmul.f32.gmra.mxu0 %v160
  %v241 = vpop.f32.mrf.mxu0
  %v242 = vadd.f32 %v201, %v241
  %243 = vmatmul.f32.gmra.mxu0 %v163
  %v244 = vpop.f32.mrf.mxu0
  %v245 = vadd.f32 %v204, %v244
  %246 = vdwg.mxu0
  %247 = vmatpush.msra.mxu0 %v91
  %248 = vmatpush.msra.mxu0 %v87
  %249 = vmatpush.msra.mxu0 %v83
  %250 = vmatpush.msra.mxu0 %v79
  %251 = vmatpush.msra.mxu0 %v75
  %252 = vmatpush.msra.mxu0 %v71
  %253 = vmatpush.msra.mxu0 %v67
  %254 = vmatpush.msra.mxu0 %v63
  %255 = vmatpush.msra.mxu0 %v59
  %256 = vmatpush.msra.mxu0 %v55
  %257 = vmatpush.msra.mxu0 %v51
  %258 = vmatpush.msra.mxu0 %v47
  %259 = vmatpush.msra.mxu0 %v43
  %260 = vmatpush.msra.mxu0 %v39
  %261 = vmatpush.msra.mxu0 %v35
  %262 = vmatpush.msra.mxu0 %v31
  %263 = vmatmul.f32.gmra.mxu0 %v14
  %v264 = vpop.f32.mrf.mxu0
  %v265 = vadd.f32 %v133, %v264
  %266 = vmatmul.f32.gmra.mxu0 %v16
  %v267 = vpop.f32.mrf.mxu0
  %v268 = vadd.f32 %v133, %v267
  %269 = vmatmul.f32.gmra.mxu0 %v18
  %v270 = vpop.f32.mrf.mxu0
  %v271 = vadd.f32 %v133, %v270
  %272 = vmatmul.f32.gmra.mxu0 %v20
  %v273 = vpop.f32.mrf.mxu0
  %v274 = vadd.f32 %v133, %v273
  %275 = vmatmul.f32.gmra.mxu0 %v22
  %v276 = vpop.f32.mrf.mxu0
  %v277 = vadd.f32 %v133, %v276
  %278 = vmatmul.f32.gmra.mxu0 %v24
  %v279 = vpop.f32.mrf.mxu0
  %v280 = vadd.f32 %v133, %v279
  %281 = vmatmul.f32.gmra.mxu0 %v26
  %v282 = vpop.f32.mrf.mxu0
  %v283 = vadd.f32 %v133, %v282
  %284 = vmatmul.f32.gmra.mxu0 %v28
  %v285 = vpop.f32.mrf.mxu0
  %v286 = vadd.f32 %v133, %v285
  %287 = vdwg.mxu0
  %288 = vmatpush.msra.mxu0 0.0
  %289 = vmatpush.msra.mxu0 0.0
  %290 = vmatpush.msra.mxu0 0.0
  %291 = vmatpush.msra.mxu0 0.0
  %292 = vmatpush.msra.mxu0 0.0
  %293 = vmatpush.msra.mxu0 0.0
  %294 = vmatpush.msra.mxu0 0.0
  %295 = vmatpush.msra.mxu0 %v127
  %296 = vmatpush.msra.mxu0 %v123
  %297 = vmatpush.msra.mxu0 %v119
  %298 = vmatpush.msra.mxu0 %v115
  %299 = vmatpush.msra.mxu0 %v111
  %300 = vmatpush.msra.mxu0 %v107
  %301 = vmatpush.msra.mxu0 %v103
  %302 = vmatpush.msra.mxu0 %v99
  %303 = vmatpush.msra.mxu0 %v95
  %304 = vmatmul.f32.gmra.mxu0 %v142
  %v305 = vpop.f32.mrf.mxu0
  %v306 = vadd.f32 %v265, %v305
  %307 = vmatmul.f32.gmra.mxu0 %v145
  %v308 = vpop.f32.mrf.mxu0
  %v309 = vadd.f32 %v268, %v308
  %310 = vmatmul.f32.gmra.mxu0 %v148
  %v311 = vpop.f32.mrf.mxu0
  %v312 = vadd.f32 %v271, %v311
  %313 = vmatmul.f32.gmra.mxu0 %v151
  %v314 = vpop.f32.mrf.mxu0
  %v315 = vadd.f32 %v274, %v314
  %316 = vmatmul.f32.gmra.mxu0 %v154
  %v317 = vpop.f32.mrf.mxu0
  %v318 = vadd.f32 %v277, %v317
  %319 = vmatmul.f32.gmra.mxu0 %v157
  %v320 = vpop.f32.mrf.mxu0
  %v321 = vadd.f32 %v280, %v320
  %322 = vmatmul.f32.gmra.mxu0 %v160
  %v323 = vpop.f32.mrf.mxu0
  %v324 = vadd.f32 %v283, %v323
  %325 = vmatmul.f32.gmra.mxu0 %v163
  %v326 = vpop.f32.mrf.mxu0
  %v327 = vadd.f32 %v286, %v326
  %328 = vdwg.mxu0
  %329 = vmatpush.msra.mxu0 %v92
  %330 = vmatpush.msra.mxu0 %v88
  %331 = vmatpush.msra.mxu0 %v84
  %332 = vmatpush.msra.mxu0 %v80
  %333 = vmatpush.msra.mxu0 %v76
  %334 = vmatpush.msra.mxu0 %v72
  %335 = vmatpush.msra.mxu0 %v68
  %336 = vmatpush.msra.mxu0 %v64
  %337 = vmatpush.msra.mxu0 %v60
  %338 = vmatpush.msra.mxu0 %v56
  %339 = vmatpush.msra.mxu0 %v52
  %340 = vmatpush.msra.mxu0 %v48
  %341 = vmatpush.msra.mxu0 %v44
  %342 = vmatpush.msra.mxu0 %v40
  %343 = vmatpush.msra.mxu0 %v36
  %344 = vmatpush.msra.mxu0 %v32
  %345 = vmatmul.f32.gmra.mxu0 %v14
  %v346 = vpop.f32.mrf.mxu0
  %v347 = vadd.f32 %v134, %v346
  %348 = vmatmul.f32.gmra.mxu0 %v16
  %v349 = vpop.f32.mrf.mxu0
  %v350 = vadd.f32 %v134, %v349
  %351 = vmatmul.f32.gmra.mxu0 %v18
  %v352 = vpop.f32.mrf.mxu0
  %v353 = vadd.f32 %v134, %v352
  %354 = vmatmul.f32.gmra.mxu0 %v20
  %v355 = vpop.f32.mrf.mxu0
  %v356 = vadd.f32 %v134, %v355
  %357 = vmatmul.f32.gmra.mxu0 %v22
  %v358 = vpop.f32.mrf.mxu0
  %v359 = vadd.f32 %v134, %v358
  %360 = vmatmul.f32.gmra.mxu0 %v24
  %v361 = vpop.f32.mrf.mxu0
  %v362 = vadd.f32 %v134, %v361
  %363 = vmatmul.f32.gmra.mxu0 %v26
  %v364 = vpop.f32.mrf.mxu0
  %v365 = vadd.f32 %v134, %v364
  %366 = vmatmul.f32.gmra.mxu0 %v28
  %v367 = vpop.f32.mrf.mxu0
  %v368 = vadd.f32 %v134, %v367
  %369 = vdwg.mxu0
  %370 = vmatpush.msra.mxu0 0.0
  %371 = vmatpush.msra.mxu0 0.0
  %372 = vmatpush.msra.mxu0 0.0
  %373 = vmatpush.msra.mxu0 0.0
  %374 = vmatpush.msra.mxu0 0.0
  %375 = vmatpush.msra.mxu0 0.0
  %376 = vmatpush.msra.mxu0 0.0
  %377 = vmatpush.msra.mxu0 %v128
  %378 = vmatpush.msra.mxu0 %v124
  %379 = vmatpush.msra.mxu0 %v120
  %380 = vmatpush.msra.mxu0 %v116
  %381 = vmatpush.msra.mxu0 %v112
  %382 = vmatpush.msra.mxu0 %v108
  %383 = vmatpush.msra.mxu0 %v104
  %384 = vmatpush.msra.mxu0 %v100
  %385 = vmatpush.msra.mxu0 %v96
  %386 = vmatmul.f32.gmra.mxu0 %v142
  %v387 = vpop.f32.mrf.mxu0
  %v388 = vadd.f32 %v347, %v387
  %389 = vmatmul.f32.gmra.mxu0 %v145
  %v390 = vpop.f32.mrf.mxu0
  %v391 = vadd.f32 %v350, %v390
  %392 = vmatmul.f32.gmra.mxu0 %v148
  %v393 = vpop.f32.mrf.mxu0
  %v394 = vadd.f32 %v353, %v393
  %395 = vmatmul.f32.gmra.mxu0 %v151
  %v396 = vpop.f32.mrf.mxu0
  %v397 = vadd.f32 %v356, %v396
  %398 = vmatmul.f32.gmra.mxu0 %v154
  %v399 = vpop.f32.mrf.mxu0
  %v400 = vadd.f32 %v359, %v399
  %401 = vmatmul.f32.gmra.mxu0 %v157
  %v402 = vpop.f32.mrf.mxu0
  %v403 = vadd.f32 %v362, %v402
  %404 = vmatmul.f32.gmra.mxu0 %v160
  %v405 = vpop.f32.mrf.mxu0
  %v406 = vadd.f32 %v365, %v405
  %407 = vmatmul.f32.gmra.mxu0 %v163
  %v408 = vpop.f32.mrf.mxu0
  %v409 = vadd.f32 %v368, %v408
  %410 = vdwg.mxu0
  %411 = vmatpush.msra.mxu0 %v93
  %412 = vmatpush.msra.mxu0 %v89
  %413 = vmatpush.msra.mxu0 %v85
  %414 = vmatpush.msra.mxu0 %v81
  %415 = vmatpush.msra.mxu0 %v77
  %416 = vmatpush.msra.mxu0 %v73
  %417 = vmatpush.msra.mxu0 %v69
  %418 = vmatpush.msra.mxu0 %v65
  %419 = vmatpush.msra.mxu0 %v61
  %420 = vmatpush.msra.mxu0 %v57
  %421 = vmatpush.msra.mxu0 %v53
  %422 = vmatpush.msra.mxu0 %v49
  %423 = vmatpush.msra.mxu0 %v45
  %424 = vmatpush.msra.mxu0 %v41
  %425 = vmatpush.msra.mxu0 %v37
  %426 = vmatpush.msra.mxu0 %v33
  %427 = vmatmul.f32.gmra.mxu0 %v14
  %v428 = vpop.f32.mrf.mxu0
  %v429 = vadd.f32 %v135, %v428
  %430 = vmatmul.f32.gmra.mxu0 %v16
  %v431 = vpop.f32.mrf.mxu0
  %v432 = vadd.f32 %v135, %v431
  %433 = vmatmul.f32.gmra.mxu0 %v18
  %v434 = vpop.f32.mrf.mxu0
  %v435 = vadd.f32 %v135, %v434
  %436 = vmatmul.f32.gmra.mxu0 %v20
  %v437 = vpop.f32.mrf.mxu0
  %v438 = vadd.f32 %v135, %v437
  %439 = vmatmul.f32.gmra.mxu0 %v22
  %v440 = vpop.f32.mrf.mxu0
  %v441 = vadd.f32 %v135, %v440
  %442 = vmatmul.f32.gmra.mxu0 %v24
  %v443 = vpop.f32.mrf.mxu0
  %v444 = vadd.f32 %v135, %v443
  %445 = vmatmul.f32.gmra.mxu0 %v26
  %v446 = vpop.f32.mrf.mxu0
  %v447 = vadd.f32 %v135, %v446
  %448 = vmatmul.f32.gmra.mxu0 %v28
  %v449 = vpop.f32.mrf.mxu0
  %v450 = vadd.f32 %v135, %v449
  %451 = vdwg.mxu0
  %452 = vmatpush.msra.mxu0 0.0
  %453 = vmatpush.msra.mxu0 0.0
  %454 = vmatpush.msra.mxu0 0.0
  %455 = vmatpush.msra.mxu0 0.0
  %456 = vmatpush.msra.mxu0 0.0
  %457 = vmatpush.msra.mxu0 0.0
  %458 = vmatpush.msra.mxu0 0.0
  %459 = vmatpush.msra.mxu0 %v129
  %460 = vmatpush.msra.mxu0 %v125
  %461 = vmatpush.msra.mxu0 %v121
  %462 = vmatpush.msra.mxu0 %v117
  %463 = vmatpush.msra.mxu0 %v113
  %464 = vmatpush.msra.mxu0 %v109
  %465 = vmatpush.msra.mxu0 %v105
  %466 = vmatpush.msra.mxu0 %v101
  %467 = vmatpush.msra.mxu0 %v97
  %468 = vmatmul.f32.gmra.mxu0 %v142
  %v469 = vpop.f32.mrf.mxu0
  %v470 = vadd.f32 %v429, %v469
  %471 = vmatmul.f32.gmra.mxu0 %v145
  %v472 = vpop.f32.mrf.mxu0
  %v473 = vadd.f32 %v432, %v472
  %474 = vmatmul.f32.gmra.mxu0 %v148
  %v475 = vpop.f32.mrf.mxu0
  %v476 = vadd.f32 %v435, %v475
  %477 = vmatmul.f32.gmra.mxu0 %v151
  %v478 = vpop.f32.mrf.mxu0
  %v479 = vadd.f32 %v438, %v478
  %480 = vmatmul.f32.gmra.mxu0 %v154
  %v481 = vpop.f32.mrf.mxu0
  %v482 = vadd.f32 %v441, %v481
  %483 = vmatmul.f32.gmra.mxu0 %v157
  %v484 = vpop.f32.mrf.mxu0
  %v485 = vadd.f32 %v444, %v484
  %486 = vmatmul.f32.gmra.mxu0 %v160
  %v487 = vpop.f32.mrf.mxu0
  %v488 = vadd.f32 %v447, %v487
  %489 = vmatmul.f32.gmra.mxu0 %v163
  %v490 = vpop.f32.mrf.mxu0
  %v491 = vadd.f32 %v450, %v490
  %492 = vdwg.mxu0
  %493 = vst [vmem:[%s3] sm:$0xff] %v224
  %494 = vst [vmem:[%s3 + $0x8] sm:$0xff] %v306
  %495 = vst [vmem:[%s3 + $0x10] sm:$0xff] %v388
  %496 = vst [vmem:[%s3 + $0x18] sm:$0xff] %v470
  %497 = vst [vmem:[%s3 + $0x20] sm:$0xff] %v227
  %498 = vst [vmem:[%s3 + $0x28] sm:$0xff] %v309
  %499 = vst [vmem:[%s3 + $0x30] sm:$0xff] %v391
  %500 = vst [vmem:[%s3 + $0x38] sm:$0xff] %v473
  %501 = vst [vmem:[%s3 + $0x40] sm:$0xff] %v230
  %502 = vst [vmem:[%s3 + $0x48] sm:$0xff] %v312
  %503 = vst [vmem:[%s3 + $0x50] sm:$0xff] %v394
  %504 = vst [vmem:[%s3 + $0x58] sm:$0xff] %v476
  %505 = vst [vmem:[%s3 + $0x60] sm:$0xff] %v233
  %506 = vst [vmem:[%s3 + $0x68] sm:$0xff] %v315
  %507 = vst [vmem:[%s3 + $0x70] sm:$0xff] %v397
  %508 = vst [vmem:[%s3 + $0x78] sm:$0xff] %v479
  %509 = vst [vmem:[%s3 + $0x80] sm:$0xff] %v236
  %510 = vst [vmem:[%s3 + $0x88] sm:$0xff] %v318
  %511 = vst [vmem:[%s3 + $0x90] sm:$0xff] %v400
  %512 = vst [vmem:[%s3 + $0x98] sm:$0xff] %v482
  %513 = vst [vmem:[%s3 + $0xa0] sm:$0xff] %v239
  %514 = vst [vmem:[%s3 + $0xa8] sm:$0xff] %v321
  %515 = vst [vmem:[%s3 + $0xb0] sm:$0xff] %v403
  %516 = vst [vmem:[%s3 + $0xb8] sm:$0xff] %v485
  %517 = vst [vmem:[%s3 + $0xc0] sm:$0xff] %v242
  %518 = vst [vmem:[%s3 + $0xc8] sm:$0xff] %v324
  %519 = vst [vmem:[%s3 + $0xd0] sm:$0xff] %v406
  %520 = vst [vmem:[%s3 + $0xd8] sm:$0xff] %v488
  %521 = vst [vmem:[%s3 + $0xe0] sm:$0xff] %v245
  %522 = vst [vmem:[%s3 + $0xe8] sm:$0xff] %v327
  %523 = vst [vmem:[%s3 + $0xf0] sm:$0xff] %v409
  %524 = vst [vmem:[%s3 + $0xf8] sm:$0xff] %v491
  // Predicated region
  $region14: #{imdb_forward.4} parent=0 // pred_check
    _
  $region15: #{imdb_forward.4} parent=0 // pred_check_branch
    %526 = sbr.rel (0) target = $region17
  $region16: #{imdb_forward.4} parent=0 // pred_region
    _
  $region17: #{imdb_forward.4} parent=0 // pred_fallthru
    _
  // Predicated region
  $region18: #{imdb_forward.4} parent=0 // pred_check
    _
  $region19: #{imdb_forward.4} parent=0 // pred_check_branch
    %528 = sbr.rel (0) target = $region21
  $region20: #{imdb_forward.4} parent=0 // pred_region
    _
  $region21: #{imdb_forward.4} parent=0 // pred_fallthru
    _

// kernel: imdb_forward.6
$region0: #{imdb_forward.6}
  #allocation0 [shape = 'u32[]', space=smem, size = 0x4, offset = 0x4, fixed_abs, tag = 'smem constant byte address 0x4 - core index']
  #allocation1 [shape = 'u32[72,128]{1,0:T(1,128)}', space=vmem, size = 0x9000, scoped, tag = 'internal scratch']
  %s0 = inlined_call_operand.vmem [shape: f32[64,64], index: 0, kind: input, shape index: {}]
  %s1 = inlined_call_operand.vmem [shape: f32[64,64], index: 1, kind: input, shape index: {}]
  %s2 = inlined_call_operand.vmem [shape: f32[64,512], index: 2, kind: input, shape index: {}]
  %s3 = inlined_call_operand.vmem [shape: f32[64,512], index: 3, kind: input, shape index: {}]
  %s4 = inlined_call_operand.vmem [shape: f32[1,512], index: 4, kind: input, shape index: {}]
  %s5 = inlined_call_operand.vmem [shape: f32[64,512], index: 5, kind: output, shape index: {}]
  %s6 = sld [smem:[#allocation0]]
  $region30: #{imdb_forward.6} parent=0
    _
  %s8 = ssub.s32 1, %s6
  %s9 = scalar_select 0, %s8, %s6
  // Predicated region
  $region2: #{imdb_forward.6} parent=0 // pred_check
    _
  $region3: #{imdb_forward.6} parent=0 // pred_check_branch
    %11 = sbr.rel (0) target = $region5
  $region4: #{imdb_forward.6} parent=0 // pred_region
    _
  $region5: #{imdb_forward.6} parent=0 // pred_fallthru
    _
  // Predicated region
  $region6: #{imdb_forward.6} parent=0 // pred_check
    _
  $region7: #{imdb_forward.6} parent=0 // pred_check_branch
    %13 = sbr.rel (0) target = $region9
  $region8: #{imdb_forward.6} parent=0 // pred_region
    _
  $region9: #{imdb_forward.6} parent=0 // pred_fallthru
    _
  // Predicated region
  $region10: #{imdb_forward.6} parent=0 // pred_check
    _
  $region11: #{imdb_forward.6} parent=0 // pred_check_branch
    %15 = sbr.rel (0) target = $region13
  $region12: #{imdb_forward.6} parent=0 // pred_region
    _
  $region13: #{imdb_forward.6} parent=0 // pred_fallthru
    _
  // Predicated region
  $region14: #{imdb_forward.6} parent=0 // pred_check
    _
  $region15: #{imdb_forward.6} parent=0 // pred_check_branch
    %17 = sbr.rel (0) target = $region17
  $region16: #{imdb_forward.6} parent=0 // pred_region
    _
  $region17: #{imdb_forward.6} parent=0 // pred_fallthru
    _
  // Predicated region
  $region18: #{imdb_forward.6} parent=0 // pred_check
    _
  $region19: #{imdb_forward.6} parent=0 // pred_check_branch
    %19 = sbr.rel (0) target = $region21
  $region20: #{imdb_forward.6} parent=0 // pred_region
    _
  $region21: #{imdb_forward.6} parent=0 // pred_fallthru
    _
  %v20 = vld [vmem:[%s0] sm:$0xff]
  %v21 = vld [vmem:[%s0 + $0x8] sm:$0xff]
  %v22 = vld [vmem:[%s0 + $0x10] sm:$0xff]
  %v23 = vld [vmem:[%s0 + $0x18] sm:$0xff]
  %v24 = vld [vmem:[%s0 + $0x20] sm:$0xff]
  %v25 = vld [vmem:[%s0 + $0x28] sm:$0xff]
  %v26 = vld [vmem:[%s0 + $0x30] sm:$0xff]
  %v27 = vld [vmem:[%s0 + $0x38] sm:$0xff]
  %v28 = vld [vmem:[%s2] sm:$0xff]
  %v29 = vld [vmem:[%s2 + $0x8] sm:$0xff]
  %v30 = vld [vmem:[%s2 + $0x10] sm:$0xff]
  %v31 = vld [vmem:[%s2 + $0x18] sm:$0xff]
  %v32 = vld [vmem:[%s2 + $0x20] sm:$0xff]
  %v33 = vld [vmem:[%s2 + $0x28] sm:$0xff]
  %v34 = vld [vmem:[%s2 + $0x30] sm:$0xff]
  %v35 = vld [vmem:[%s2 + $0x38] sm:$0xff]
  %v36 = vld [vmem:[%s2 + $0x40] sm:$0xff]
  %v37 = vld [vmem:[%s2 + $0x48] sm:$0xff]
  %v38 = vld [vmem:[%s2 + $0x50] sm:$0xff]
  %v39 = vld [vmem:[%s2 + $0x58] sm:$0xff]
  %v40 = vld [vmem:[%s2 + $0x60] sm:$0xff]
  %v41 = vld [vmem:[%s2 + $0x68] sm:$0xff]
  %v42 = vld [vmem:[%s2 + $0x70] sm:$0xff]
  %v43 = vld [vmem:[%s2 + $0x78] sm:$0xff]
  %v44 = vld [vmem:[%s2 + $0x80] sm:$0xff]
  %v45 = vld [vmem:[%s2 + $0x88] sm:$0xff]
  %v46 = vld [vmem:[%s2 + $0x90] sm:$0xff]
  %v47 = vld [vmem:[%s2 + $0x98] sm:$0xff]
  %v48 = vld [vmem:[%s2 + $0xa0] sm:$0xff]
  %v49 = vld [vmem:[%s2 + $0xa8] sm:$0xff]
  %v50 = vld [vmem:[%s2 + $0xb0] sm:$0xff]
  %v51 = vld [vmem:[%s2 + $0xb8] sm:$0xff]
  %v52 = vld [vmem:[%s2 + $0xc0] sm:$0xff]
  %v53 = vld [vmem:[%s2 + $0xc8] sm:$0xff]
  %v54 = vld [vmem:[%s2 + $0xd0] sm:$0xff]
  %v55 = vld [vmem:[%s2 + $0xd8] sm:$0xff]
  %v56 = vld [vmem:[%s2 + $0xe0] sm:$0xff]
  %v57 = vld [vmem:[%s2 + $0xe8] sm:$0xff]
  %v58 = vld [vmem:[%s2 + $0xf0] sm:$0xff]
  %v59 = vld [vmem:[%s2 + $0xf8] sm:$0xff]
  %v60 = vld [vmem:[%s1] sm:$0xff]
  %v61 = vld [vmem:[%s1 + $0x8] sm:$0xff]
  %v62 = vld [vmem:[%s1 + $0x10] sm:$0xff]
  %v63 = vld [vmem:[%s1 + $0x18] sm:$0xff]
  %v64 = vld [vmem:[%s1 + $0x20] sm:$0xff]
  %v65 = vld [vmem:[%s1 + $0x28] sm:$0xff]
  %v66 = vld [vmem:[%s1 + $0x30] sm:$0xff]
  %v67 = vld [vmem:[%s1 + $0x38] sm:$0xff]
  %v68 = vld [vmem:[%s3] sm:$0xff]
  %v69 = vld [vmem:[%s3 + $0x8] sm:$0xff]
  %v70 = vld [vmem:[%s3 + $0x10] sm:$0xff]
  %v71 = vld [vmem:[%s3 + $0x18] sm:$0xff]
  %v72 = vld [vmem:[%s3 + $0x20] sm:$0xff]
  %v73 = vld [vmem:[%s3 + $0x28] sm:$0xff]
  %v74 = vld [vmem:[%s3 + $0x30] sm:$0xff]
  %v75 = vld [vmem:[%s3 + $0x38] sm:$0xff]
  %v76 = vld [vmem:[%s3 + $0x40] sm:$0xff]
  %v77 = vld [vmem:[%s3 + $0x48] sm:$0xff]
  %v78 = vld [vmem:[%s3 + $0x50] sm:$0xff]
  %v79 = vld [vmem:[%s3 + $0x58] sm:$0xff]
  %v80 = vld [vmem:[%s3 + $0x60] sm:$0xff]
  %v81 = vld [vmem:[%s3 + $0x68] sm:$0xff]
  %v82 = vld [vmem:[%s3 + $0x70] sm:$0xff]
  %v83 = vld [vmem:[%s3 + $0x78] sm:$0xff]
  %v84 = vld [vmem:[%s3 + $0x80] sm:$0xff]
  %v85 = vld [vmem:[%s3 + $0x88] sm:$0xff]
  %v86 = vld [vmem:[%s3 + $0x90] sm:$0xff]
  %v87 = vld [vmem:[%s3 + $0x98] sm:$0xff]
  %v88 = vld [vmem:[%s3 + $0xa0] sm:$0xff]
  %v89 = vld [vmem:[%s3 + $0xa8] sm:$0xff]
  %v90 = vld [vmem:[%s3 + $0xb0] sm:$0xff]
  %v91 = vld [vmem:[%s3 + $0xb8] sm:$0xff]
  %v92 = vld [vmem:[%s3 + $0xc0] sm:$0xff]
  %v93 = vld [vmem:[%s3 + $0xc8] sm:$0xff]
  %v94 = vld [vmem:[%s3 + $0xd0] sm:$0xff]
  %v95 = vld [vmem:[%s3 + $0xd8] sm:$0xff]
  %v96 = vld [vmem:[%s3 + $0xe0] sm:$0xff]
  %v97 = vld [vmem:[%s3 + $0xe8] sm:$0xff]
  %v98 = vld [vmem:[%s3 + $0xf0] sm:$0xff]
  %v99 = vld [vmem:[%s3 + $0xf8] sm:$0xff]
  %vm100 = vcmask 523264
  %v102 = vsel %vm100, %v60, 0
  %v105 = vsel %vm100, %v61, 0
  %v108 = vsel %vm100, %v62, 0
  %v111 = vsel %vm100, %v63, 0
  %v114 = vsel %vm100, %v64, 0
  %v117 = vsel %vm100, %v65, 0
  %v120 = vsel %vm100, %v66, 0
  %v123 = vsel %vm100, %v67, 0
  %125 = vmatpush.msra.mxu0 0.0
  %126 = vmatpush.msra.mxu0 0.0
  %127 = vmatpush.msra.mxu0 0.0
  %128 = vmatpush.msra.mxu0 0.0
  %129 = vmatpush.msra.mxu0 0.0
  %130 = vmatpush.msra.mxu0 0.0
  %131 = vmatpush.msra.mxu0 0.0
  %132 = vmatpush.msra.mxu0 0.0
  %133 = vmatpush.msra.mxu0 %v96
  %134 = vmatpush.msra.mxu0 %v92
  %135 = vmatpush.msra.mxu0 %v88
  %136 = vmatpush.msra.mxu0 %v84
  %137 = vmatpush.msra.mxu0 %v80
  %138 = vmatpush.msra.mxu0 %v76
  %139 = vmatpush.msra.mxu0 %v72
  %140 = vmatpush.msra.mxu0 %v68
  %141 = vmatmul.f32.gmra.mxu0 %v102
  %v142 = vpop.f32.mrf.mxu0
  %v143 = vadd.f32 0.0, %v142
  %144 = vmatmul.f32.gmra.mxu0 %v105
  %v145 = vpop.f32.mrf.mxu0
  %v146 = vadd.f32 0.0, %v145
  %147 = vmatmul.f32.gmra.mxu0 %v108
  %v148 = vpop.f32.mrf.mxu0
  %v149 = vadd.f32 0.0, %v148
  %150 = vmatmul.f32.gmra.mxu0 %v111
  %v151 = vpop.f32.mrf.mxu0
  %v152 = vadd.f32 0.0, %v151
  %153 = vmatmul.f32.gmra.mxu0 %v114
  %v154 = vpop.f32.mrf.mxu0
  %v155 = vadd.f32 0.0, %v154
  %156 = vmatmul.f32.gmra.mxu0 %v117
  %v157 = vpop.f32.mrf.mxu0
  %v158 = vadd.f32 0.0, %v157
  %159 = vmatmul.f32.gmra.mxu0 %v120
  %v160 = vpop.f32.mrf.mxu0
  %v161 = vadd.f32 0.0, %v160
  %162 = vmatmul.f32.gmra.mxu0 %v123
  %v163 = vpop.f32.mrf.mxu0
  %v164 = vadd.f32 0.0, %v163
  %165 = vdwg.mxu0
  %166 = vmatpush.msra.mxu0 0.0
  %167 = vmatpush.msra.mxu0 0.0
  %168 = vmatpush.msra.mxu0 0.0
  %169 = vmatpush.msra.mxu0 0.0
  %170 = vmatpush.msra.mxu0 0.0
  %171 = vmatpush.msra.mxu0 0.0
  %172 = vmatpush.msra.mxu0 0.0
  %173 = vmatpush.msra.mxu0 0.0
  %174 = vmatpush.msra.mxu0 %v97
  %175 = vmatpush.msra.mxu0 %v93
  %176 = vmatpush.msra.mxu0 %v89
  %177 = vmatpush.msra.mxu0 %v85
  %178 = vmatpush.msra.mxu0 %v81
  %179 = vmatpush.msra.mxu0 %v77
  %180 = vmatpush.msra.mxu0 %v73
  %181 = vmatpush.msra.mxu0 %v69
  %182 = vmatmul.f32.gmra.mxu0 %v102
  %v183 = vpop.f32.mrf.mxu0
  %v184 = vadd.f32 0.0, %v183
  %185 = vmatmul.f32.gmra.mxu0 %v105
  %v186 = vpop.f32.mrf.mxu0
  %v187 = vadd.f32 0.0, %v186
  %188 = vmatmul.f32.gmra.mxu0 %v108
  %v189 = vpop.f32.mrf.mxu0
  %v190 = vadd.f32 0.0, %v189
  %191 = vmatmul.f32.gmra.mxu0 %v111
  %v192 = vpop.f32.mrf.mxu0
  %v193 = vadd.f32 0.0, %v192
  %194 = vmatmul.f32.gmra.mxu0 %v114
  %v195 = vpop.f32.mrf.mxu0
  %v196 = vadd.f32 0.0, %v195
  %197 = vmatmul.f32.gmra.mxu0 %v117
  %v198 = vpop.f32.mrf.mxu0
  %v199 = vadd.f32 0.0, %v198
  %200 = vmatmul.f32.gmra.mxu0 %v120
  %v201 = vpop.f32.mrf.mxu0
  %v202 = vadd.f32 0.0, %v201
  %203 = vmatmul.f32.gmra.mxu0 %v123
  %v204 = vpop.f32.mrf.mxu0
  %v205 = vadd.f32 0.0, %v204
  %206 = vdwg.mxu0
  %207 = vmatpush.msra.mxu0 0.0
  %208 = vmatpush.msra.mxu0 0.0
  %209 = vmatpush.msra.mxu0 0.0
  %210 = vmatpush.msra.mxu0 0.0
  %211 = vmatpush.msra.mxu0 0.0
  %212 = vmatpush.msra.mxu0 0.0
  %213 = vmatpush.msra.mxu0 0.0
  %214 = vmatpush.msra.mxu0 0.0
  %215 = vmatpush.msra.mxu0 %v98
  %216 = vmatpush.msra.mxu0 %v94
  %217 = vmatpush.msra.mxu0 %v90
  %218 = vmatpush.msra.mxu0 %v86
  %219 = vmatpush.msra.mxu0 %v82
  %220 = vmatpush.msra.mxu0 %v78
  %221 = vmatpush.msra.mxu0 %v74
  %222 = vmatpush.msra.mxu0 %v70
  %223 = vmatmul.f32.gmra.mxu0 %v102
  %v224 = vpop.f32.mrf.mxu0
  %v225 = vadd.f32 0.0, %v224
  %226 = vmatmul.f32.gmra.mxu0 %v105
  %v227 = vpop.f32.mrf.mxu0
  %v228 = vadd.f32 0.0, %v227
  %229 = vmatmul.f32.gmra.mxu0 %v108
  %v230 = vpop.f32.mrf.mxu0
  %v231 = vadd.f32 0.0, %v230
  %232 = vmatmul.f32.gmra.mxu0 %v111
  %v233 = vpop.f32.mrf.mxu0
  %v234 = vadd.f32 0.0, %v233
  %235 = vmatmul.f32.gmra.mxu0 %v114
  %v236 = vpop.f32.mrf.mxu0
  %v237 = vadd.f32 0.0, %v236
  %238 = vmatmul.f32.gmra.mxu0 %v117
  %v239 = vpop.f32.mrf.mxu0
  %v240 = vadd.f32 0.0, %v239
  %241 = vmatmul.f32.gmra.mxu0 %v120
  %v242 = vpop.f32.mrf.mxu0
  %v243 = vadd.f32 0.0, %v242
  %244 = vmatmul.f32.gmra.mxu0 %v123
  %v245 = vpop.f32.mrf.mxu0
  %v246 = vadd.f32 0.0, %v245
  %247 = vdwg.mxu0
  %248 = vmatpush.msra.mxu0 0.0
  %249 = vmatpush.msra.mxu0 0.0
  %250 = vmatpush.msra.mxu0 0.0
  %251 = vmatpush.msra.mxu0 0.0
  %252 = vmatpush.msra.mxu0 0.0
  %253 = vmatpush.msra.mxu0 0.0
  %254 = vmatpush.msra.mxu0 0.0
  %255 = vmatpush.msra.mxu0 0.0
  %256 = vmatpush.msra.mxu0 %v99
  %257 = vmatpush.msra.mxu0 %v95
  %258 = vmatpush.msra.mxu0 %v91
  %259 = vmatpush.msra.mxu0 %v87
  %260 = vmatpush.msra.mxu0 %v83
  %261 = vmatpush.msra.mxu0 %v79
  %262 = vmatpush.msra.mxu0 %v75
  %263 = vmatpush.msra.mxu0 %v71
  %264 = vmatmul.f32.gmra.mxu0 %v102
  %v265 = vpop.f32.mrf.mxu0
  %v266 = vadd.f32 0.0, %v265
  %267 = vmatmul.f32.gmra.mxu0 %v105
  %v268 = vpop.f32.mrf.mxu0
  %v269 = vadd.f32 0.0, %v268
  %270 = vmatmul.f32.gmra.mxu0 %v108
  %v271 = vpop.f32.mrf.mxu0
  %v272 = vadd.f32 0.0, %v271
  %273 = vmatmul.f32.gmra.mxu0 %v111
  %v274 = vpop.f32.mrf.mxu0
  %v275 = vadd.f32 0.0, %v274
  %276 = vmatmul.f32.gmra.mxu0 %v114
  %v277 = vpop.f32.mrf.mxu0
  %v278 = vadd.f32 0.0, %v277
  %279 = vmatmul.f32.gmra.mxu0 %v117
  %v280 = vpop.f32.mrf.mxu0
  %v281 = vadd.f32 0.0, %v280
  %282 = vmatmul.f32.gmra.mxu0 %v120
  %v283 = vpop.f32.mrf.mxu0
  %v284 = vadd.f32 0.0, %v283
  %285 = vmatmul.f32.gmra.mxu0 %v123
  %v286 = vpop.f32.mrf.mxu0
  %v287 = vadd.f32 0.0, %v286
  %288 = vdwg.mxu0
  %v290 = vsel %vm100, %v20, 0
  %v293 = vsel %vm100, %v21, 0
  %v296 = vsel %vm100, %v22, 0
  %v299 = vsel %vm100, %v23, 0
  %v302 = vsel %vm100, %v24, 0
  %v305 = vsel %vm100, %v25, 0
  %v308 = vsel %vm100, %v26, 0
  %v311 = vsel %vm100, %v27, 0
  %313 = vmatpush.msra.mxu0 0.0
  %314 = vmatpush.msra.mxu0 0.0
  %315 = vmatpush.msra.mxu0 0.0
  %316 = vmatpush.msra.mxu0 0.0
  %317 = vmatpush.msra.mxu0 0.0
  %318 = vmatpush.msra.mxu0 0.0
  %319 = vmatpush.msra.mxu0 0.0
  %320 = vmatpush.msra.mxu0 0.0
  %321 = vmatpush.msra.mxu0 %v56
  %322 = vmatpush.msra.mxu0 %v52
  %323 = vmatpush.msra.mxu0 %v48
  %324 = vmatpush.msra.mxu0 %v44
  %325 = vmatpush.msra.mxu0 %v40
  %326 = vmatpush.msra.mxu0 %v36
  %327 = vmatpush.msra.mxu0 %v32
  %328 = vmatpush.msra.mxu0 %v28
  %329 = vmatmul.f32.gmra.mxu0 %v290
  %v330 = vpop.f32.mrf.mxu0
  %v331 = vadd.f32 %v143, %v330
  %332 = vmatmul.f32.gmra.mxu0 %v293
  %v333 = vpop.f32.mrf.mxu0
  %v334 = vadd.f32 %v146, %v333
  %335 = vmatmul.f32.gmra.mxu0 %v296
  %v336 = vpop.f32.mrf.mxu0
  %v337 = vadd.f32 %v149, %v336
  %338 = vmatmul.f32.gmra.mxu0 %v299
  %v339 = vpop.f32.mrf.mxu0
  %v340 = vadd.f32 %v152, %v339
  %341 = vmatmul.f32.gmra.mxu0 %v302
  %v342 = vpop.f32.mrf.mxu0
  %v343 = vadd.f32 %v155, %v342
  %344 = vmatmul.f32.gmra.mxu0 %v305
  %v345 = vpop.f32.mrf.mxu0
  %v346 = vadd.f32 %v158, %v345
  %347 = vmatmul.f32.gmra.mxu0 %v308
  %v348 = vpop.f32.mrf.mxu0
  %v349 = vadd.f32 %v161, %v348
  %350 = vmatmul.f32.gmra.mxu0 %v311
  %v351 = vpop.f32.mrf.mxu0
  %v352 = vadd.f32 %v164, %v351
  %353 = vdwg.mxu0
  %354 = vmatpush.msra.mxu0 0.0
  %355 = vmatpush.msra.mxu0 0.0
  %356 = vmatpush.msra.mxu0 0.0
  %357 = vmatpush.msra.mxu0 0.0
  %358 = vmatpush.msra.mxu0 0.0
  %359 = vmatpush.msra.mxu0 0.0
  %360 = vmatpush.msra.mxu0 0.0
  %361 = vmatpush.msra.mxu0 0.0
  %362 = vmatpush.msra.mxu0 %v57
  %363 = vmatpush.msra.mxu0 %v53
  %364 = vmatpush.msra.mxu0 %v49
  %365 = vmatpush.msra.mxu0 %v45
  %366 = vmatpush.msra.mxu0 %v41
  %367 = vmatpush.msra.mxu0 %v37
  %368 = vmatpush.msra.mxu0 %v33
  %369 = vmatpush.msra.mxu0 %v29
  %370 = vmatmul.f32.gmra.mxu0 %v290
  %v371 = vpop.f32.mrf.mxu0
  %v372 = vadd.f32 %v184, %v371
  %373 = vmatmul.f32.gmra.mxu0 %v293
  %v374 = vpop.f32.mrf.mxu0
  %v375 = vadd.f32 %v187, %v374
  %376 = vmatmul.f32.gmra.mxu0 %v296
  %v377 = vpop.f32.mrf.mxu0
  %v378 = vadd.f32 %v190, %v377
  %379 = vmatmul.f32.gmra.mxu0 %v299
  %v380 = vpop.f32.mrf.mxu0
  %v381 = vadd.f32 %v193, %v380
  %382 = vmatmul.f32.gmra.mxu0 %v302
  %v383 = vpop.f32.mrf.mxu0
  %v384 = vadd.f32 %v196, %v383
  %385 = vmatmul.f32.gmra.mxu0 %v305
  %v386 = vpop.f32.mrf.mxu0
  %v387 = vadd.f32 %v199, %v386
  %388 = vmatmul.f32.gmra.mxu0 %v308
  %v389 = vpop.f32.mrf.mxu0
  %v390 = vadd.f32 %v202, %v389
  %391 = vmatmul.f32.gmra.mxu0 %v311
  %v392 = vpop.f32.mrf.mxu0
  %v393 = vadd.f32 %v205, %v392
  %394 = vdwg.mxu0
  %395 = vmatpush.msra.mxu0 0.0
  %396 = vmatpush.msra.mxu0 0.0
  %397 = vmatpush.msra.mxu0 0.0
  %398 = vmatpush.msra.mxu0 0.0
  %399 = vmatpush.msra.mxu0 0.0
  %400 = vmatpush.msra.mxu0 0.0
  %401 = vmatpush.msra.mxu0 0.0
  %402 = vmatpush.msra.mxu0 0.0
  %403 = vmatpush.msra.mxu0 %v58
  %404 = vmatpush.msra.mxu0 %v54
  %405 = vmatpush.msra.mxu0 %v50
  %406 = vmatpush.msra.mxu0 %v46
  %407 = vmatpush.msra.mxu0 %v42
  %408 = vmatpush.msra.mxu0 %v38
  %409 = vmatpush.msra.mxu0 %v34
  %410 = vmatpush.msra.mxu0 %v30
  %411 = vmatmul.f32.gmra.mxu0 %v290
  %v412 = vpop.f32.mrf.mxu0
  %v413 = vadd.f32 %v225, %v412
  %414 = vmatmul.f32.gmra.mxu0 %v293
  %v415 = vpop.f32.mrf.mxu0
  %v416 = vadd.f32 %v228, %v415
  %417 = vmatmul.f32.gmra.mxu0 %v296
  %v418 = vpop.f32.mrf.mxu0
  %v419 = vadd.f32 %v231, %v418
  %420 = vmatmul.f32.gmra.mxu0 %v299
  %v421 = vpop.f32.mrf.mxu0
  %v422 = vadd.f32 %v234, %v421
  %423 = vmatmul.f32.gmra.mxu0 %v302
  %v424 = vpop.f32.mrf.mxu0
  %v425 = vadd.f32 %v237, %v424
  %426 = vmatmul.f32.gmra.mxu0 %v305
  %v427 = vpop.f32.mrf.mxu0
  %v428 = vadd.f32 %v240, %v427
  %429 = vmatmul.f32.gmra.mxu0 %v308
  %v430 = vpop.f32.mrf.mxu0
  %v431 = vadd.f32 %v243, %v430
  %432 = vmatmul.f32.gmra.mxu0 %v311
  %v433 = vpop.f32.mrf.mxu0
  %v434 = vadd.f32 %v246, %v433
  %435 = vdwg.mxu0
  %436 = vmatpush.msra.mxu0 0.0
  %437 = vmatpush.msra.mxu0 0.0
  %438 = vmatpush.msra.mxu0 0.0
  %439 = vmatpush.msra.mxu0 0.0
  %440 = vmatpush.msra.mxu0 0.0
  %441 = vmatpush.msra.mxu0 0.0
  %442 = vmatpush.msra.mxu0 0.0
  %443 = vmatpush.msra.mxu0 0.0
  %444 = vmatpush.msra.mxu0 %v59
  %445 = vmatpush.msra.mxu0 %v55
  %446 = vmatpush.msra.mxu0 %v51
  %447 = vmatpush.msra.mxu0 %v47
  %448 = vmatpush.msra.mxu0 %v43
  %449 = vmatpush.msra.mxu0 %v39
  %450 = vmatpush.msra.mxu0 %v35
  %451 = vmatpush.msra.mxu0 %v31
  %452 = vmatmul.f32.gmra.mxu0 %v290
  %v453 = vpop.f32.mrf.mxu0
  %v454 = vadd.f32 %v266, %v453
  %455 = vmatmul.f32.gmra.mxu0 %v293
  %v456 = vpop.f32.mrf.mxu0
  %v457 = vadd.f32 %v269, %v456
  %458 = vmatmul.f32.gmra.mxu0 %v296
  %v459 = vpop.f32.mrf.mxu0
  %v460 = vadd.f32 %v272, %v459
  %461 = vmatmul.f32.gmra.mxu0 %v299
  %v462 = vpop.f32.mrf.mxu0
  %v463 = vadd.f32 %v275, %v462
  %464 = vmatmul.f32.gmra.mxu0 %v302
  %v465 = vpop.f32.mrf.mxu0
  %v466 = vadd.f32 %v278, %v465
  %467 = vmatmul.f32.gmra.mxu0 %v305
  %v468 = vpop.f32.mrf.mxu0
  %v469 = vadd.f32 %v281, %v468
  %470 = vmatmul.f32.gmra.mxu0 %v308
  %v471 = vpop.f32.mrf.mxu0
  %v472 = vadd.f32 %v284, %v471
  %473 = vmatmul.f32.gmra.mxu0 %v311
  %v474 = vpop.f32.mrf.mxu0
  %v475 = vadd.f32 %v287, %v474
  %476 = vdwg.mxu0
  %v477 = vld [vmem:[%s4] sm:$0xf]
  %v479 = vperm.slane %v477, 0
  %v480 = vperm.slane %v477, 1
  %v481 = vperm.slane %v477, 2
  %v482 = vperm.slane %v477, 3
  %v487 = vadd.f32 %v331, %v479
  %v488 = vadd.f32 %v372, %v480
  %v489 = vadd.f32 %v413, %v481
  %v490 = vadd.f32 %v454, %v482
  %v491 = vadd.f32 %v334, %v479
  %v492 = vadd.f32 %v375, %v480
  %v493 = vadd.f32 %v416, %v481
  %v494 = vadd.f32 %v457, %v482
  %v495 = vadd.f32 %v337, %v479
  %v496 = vadd.f32 %v378, %v480
  %v497 = vadd.f32 %v419, %v481
  %v498 = vadd.f32 %v460, %v482
  %v499 = vadd.f32 %v340, %v479
  %v500 = vadd.f32 %v381, %v480
  %v501 = vadd.f32 %v422, %v481
  %v502 = vadd.f32 %v463, %v482
  %v503 = vadd.f32 %v343, %v479
  %v504 = vadd.f32 %v384, %v480
  %v505 = vadd.f32 %v425, %v481
  %v506 = vadd.f32 %v466, %v482
  %v507 = vadd.f32 %v346, %v479
  %v508 = vadd.f32 %v387, %v480
  %v509 = vadd.f32 %v428, %v481
  %v510 = vadd.f32 %v469, %v482
  %v511 = vadd.f32 %v349, %v479
  %v512 = vadd.f32 %v390, %v480
  %v513 = vadd.f32 %v431, %v481
  %v514 = vadd.f32 %v472, %v482
  %v515 = vadd.f32 %v352, %v479
  %v516 = vadd.f32 %v393, %v480
  %v517 = vadd.f32 %v434, %v481
  %v518 = vadd.f32 %v475, %v482
  %519 = vst [vmem:[%s5] sm:$0xff] %v487
  %520 = vst [vmem:[%s5 + $0x8] sm:$0xff] %v488
  %521 = vst [vmem:[%s5 + $0x10] sm:$0xff] %v489
  %522 = vst [vmem:[%s5 + $0x18] sm:$0xff] %v490
  %523 = vst [vmem:[%s5 + $0x20] sm:$0xff] %v491
  %524 = vst [vmem:[%s5 + $0x28] sm:$0xff] %v492
  %525 = vst [vmem:[%s5 + $0x30] sm:$0xff] %v493
  %526 = vst [vmem:[%s5 + $0x38] sm:$0xff] %v494
  %527 = vst [vmem:[%s5 + $0x40] sm:$0xff] %v495
  %528 = vst [vmem:[%s5 + $0x48] sm:$0xff] %v496
  %529 = vst [vmem:[%s5 + $0x50] sm:$0xff] %v497
  %530 = vst [vmem:[%s5 + $0x58] sm:$0xff] %v498
  %531 = vst [vmem:[%s5 + $0x60] sm:$0xff] %v499
  %532 = vst [vmem:[%s5 + $0x68] sm:$0xff] %v500
  %533 = vst [vmem:[%s5 + $0x70] sm:$0xff] %v501
  %534 = vst [vmem:[%s5 + $0x78] sm:$0xff] %v502
  %535 = vst [vmem:[%s5 + $0x80] sm:$0xff] %v503
  %536 = vst [vmem:[%s5 + $0x88] sm:$0xff] %v504
  %537 = vst [vmem:[%s5 + $0x90] sm:$0xff] %v505
  %538 = vst [vmem:[%s5 + $0x98] sm:$0xff] %v506
  %539 = vst [vmem:[%s5 + $0xa0] sm:$0xff] %v507
  %540 = vst [vmem:[%s5 + $0xa8] sm:$0xff] %v508
  %541 = vst [vmem:[%s5 + $0xb0] sm:$0xff] %v509
  %542 = vst [vmem:[%s5 + $0xb8] sm:$0xff] %v510
  %543 = vst [vmem:[%s5 + $0xc0] sm:$0xff] %v511
  %544 = vst [vmem:[%s5 + $0xc8] sm:$0xff] %v512
  %545 = vst [vmem:[%s5 + $0xd0] sm:$0xff] %v513
  %546 = vst [vmem:[%s5 + $0xd8] sm:$0xff] %v514
  %547 = vst [vmem:[%s5 + $0xe0] sm:$0xff] %v515
  %548 = vst [vmem:[%s5 + $0xe8] sm:$0xff] %v516
  %549 = vst [vmem:[%s5 + $0xf0] sm:$0xff] %v517
  %550 = vst [vmem:[%s5 + $0xf8] sm:$0xff] %v518
  // Predicated region
  $region22: #{imdb_forward.6} parent=0 // pred_check
    _
  $region23: #{imdb_forward.6} parent=0 // pred_check_branch
    %552 = sbr.rel (0) target = $region25
  $region24: #{imdb_forward.6} parent=0 // pred_region
    _
  $region25: #{imdb_forward.6} parent=0 // pred_fallthru
    _
  // Predicated region
  $region26: #{imdb_forward.6} parent=0 // pred_check
    _
  $region27: #{imdb_forward.6} parent=0 // pred_check_branch
    %554 = sbr.rel (0) target = $region29
  $region28: #{imdb_forward.6} parent=0 // pred_region
    _
  $region29: #{imdb_forward.6} parent=0 // pred_fallthru
    _

// kernel: imdb_forward.5
$region0: #{imdb_forward.5}
  #allocation0 [shape = 'u32[]', space=smem, size = 0x4, offset = 0x4, fixed_abs, tag = 'smem constant byte address 0x4 - core index']
  #allocation1 [shape = 'u32[72,128]{1,0:T(1,128)}', space=vmem, size = 0x9000, scoped, tag = 'internal scratch']
  #allocation2 [shape = 'f32[8,64]{1,0:T(8,128)}', space=vmem, size = 0x1000, scoped, tag = 'scratch operand']
  #allocation3 [shape = 'f32[8,64]{1,0:T(8,128)}', space=vmem, size = 0x1000, scoped, tag = 'scratch operand']
  #allocation4 [shape = 'f32[8,64]{1,0:T(8,128)}', space=vmem, size = 0x1000, scoped, tag = 'scratch operand']
  #allocation5 [shape = 'f32[8,64]{1,0:T(8,128)}', space=vmem, size = 0x1000, scoped, tag = 'scratch operand']
  %s0 = inlined_call_operand.vmem [shape: f32[64,512], index: 0, kind: input, shape index: {}, may-alias: {0,1}]
  %s1 = inlined_call_operand.vmem [shape: f32[64,512], index: 1, kind: input, shape index: {}, may-alias: {0,1}]
  %s2 = inlined_call_operand.vmem [shape: f32[2,64,256], index: 2, kind: input, shape index: {}]
  %s3 = inlined_call_operand.vmem [shape: f32[64,64], index: 3, kind: output, shape index: {0}]
  %s4 = inlined_call_operand.vmem [shape: f32[64,64], index: 4, kind: output, shape index: {1}]
  %5 = xla_tuple %s3, %s4
  %s6 = sld [smem:[#allocation0]]
  $region80: #{imdb_forward.5} parent=0
    _
  %s8 = ssub.s32 1, %s6
  %s9 = scalar_select 0, %s8, %s6
  $region1: #{imdb_forward.5} parent=0
    #allocation6 [shape = 'u8[65536]{0}', space=vmem, size = 0x10000, scoped, tag = 'input window, operand 0, single buffered']
    #allocation7 [shape = 'u8[65536]{0}', space=vmem, size = 0x10000, scoped, tag = 'input window, operand 1, single buffered']
    // Predicated region
    $region2: #{imdb_forward.5} parent=1 // pred_check
      _
    $region3: #{imdb_forward.5} parent=1 // pred_check_branch
      %11 = sbr.rel (0) target = $region5
    $region4: #{imdb_forward.5} parent=1 // pred_region
      // Predicated region
      $region6: #{imdb_forward.5} parent=4 // pred_check
        _
      $region7: #{imdb_forward.5} parent=4 // pred_check_branch
        %13 = sbr.rel (0) target = $region9
      $region8: #{imdb_forward.5} parent=4 // pred_region
        // Predicated region
        $region10: #{imdb_forward.5} parent=8 // pred_check
          _
        $region11: #{imdb_forward.5} parent=8 // pred_check_branch
          %15 = sbr.rel (0) target = $region13
        $region12: #{imdb_forward.5} parent=8 // pred_region
          loop: start=0, step=1, limit=1
          $region14: #{imdb_forward.5} parent=12 // loop_pre_header
            _
          $region15: #{imdb_forward.5} parent=12 // loop_header
            %s17 = sphi 0, %s21
            %p18 = scmp.ge.s32.totalorder %s17, 1
            %s22 = sphi %s0, %s0
            %s23 = sphi [#allocation6], [#allocation6]
          $region16: #{imdb_forward.5} parent=12 // loop_header_branch
            %20 = sbr.rel (%p18) target = $region20
          $region17: #{imdb_forward.5} parent=12 // loop_body
            %v24 = vld [vmem:[%s22] sm:$0xff]
            %25 = vst [vmem:[%s23] sm:$0xff] %v24
            %v26 = vld [vmem:[%s22 + $0x8] sm:$0xff]
            %27 = vst [vmem:[%s23 + $0x8] sm:$0xff] %v26
            %v28 = vld [vmem:[%s22 + $0x20] sm:$0xff]
            %29 = vst [vmem:[%s23 + $0x10] sm:$0xff] %v28
            %v30 = vld [vmem:[%s22 + $0x28] sm:$0xff]
            %31 = vst [vmem:[%s23 + $0x18] sm:$0xff] %v30
            %v32 = vld [vmem:[%s22 + $0x40] sm:$0xff]
            %33 = vst [vmem:[%s23 + $0x20] sm:$0xff] %v32
            %v34 = vld [vmem:[%s22 + $0x48] sm:$0xff]
            %35 = vst [vmem:[%s23 + $0x28] sm:$0xff] %v34
            %v36 = vld [vmem:[%s22 + $0x60] sm:$0xff]
            %37 = vst [vmem:[%s23 + $0x30] sm:$0xff] %v36
            %v38 = vld [vmem:[%s22 + $0x68] sm:$0xff]
            %39 = vst [vmem:[%s23 + $0x38] sm:$0xff] %v38
            %v40 = vld [vmem:[%s22 + $0x80] sm:$0xff]
            %41 = vst [vmem:[%s23 + $0x40] sm:$0xff] %v40
            %v42 = vld [vmem:[%s22 + $0x88] sm:$0xff]
            %43 = vst [vmem:[%s23 + $0x48] sm:$0xff] %v42
            %v44 = vld [vmem:[%s22 + $0xa0] sm:$0xff]
            %45 = vst [vmem:[%s23 + $0x50] sm:$0xff] %v44
            %v46 = vld [vmem:[%s22 + $0xa8] sm:$0xff]
            %47 = vst [vmem:[%s23 + $0x58] sm:$0xff] %v46
            %v48 = vld [vmem:[%s22 + $0xc0] sm:$0xff]
            %49 = vst [vmem:[%s23 + $0x60] sm:$0xff] %v48
            %v50 = vld [vmem:[%s22 + $0xc8] sm:$0xff]
            %51 = vst [vmem:[%s23 + $0x68] sm:$0xff] %v50
            %v52 = vld [vmem:[%s22 + $0xe0] sm:$0xff]
            %53 = vst [vmem:[%s23 + $0x70] sm:$0xff] %v52
            %v54 = vld [vmem:[%s22 + $0xe8] sm:$0xff]
            %55 = vst [vmem:[%s23 + $0x78] sm:$0xff] %v54
          $region18: #{imdb_forward.5} parent=12 // loop_footer
            %s21 = sadd.s32 1, %s17
          $region19: #{imdb_forward.5} parent=12 // loop_footer_branch
            %16 = sbr.rel target = $region15
          $region20: #{imdb_forward.5} parent=12 // loop_exit
            _
        $region13: #{imdb_forward.5} parent=8 // pred_fallthru
          _
        // Predicated region
        $region21: #{imdb_forward.5} parent=8 // pred_check
          _
        $region22: #{imdb_forward.5} parent=8 // pred_check_branch
          %57 = sbr.rel target = $region24
        $region23: #{imdb_forward.5} parent=8 // pred_region
          _
        $region24: #{imdb_forward.5} parent=8 // pred_fallthru
          _
      $region9: #{imdb_forward.5} parent=4 // pred_fallthru
        _
      %58 = vnop
    $region5: #{imdb_forward.5} parent=1 // pred_fallthru
      _
    // Predicated region
    $region25: #{imdb_forward.5} parent=1 // pred_check
      _
    $region26: #{imdb_forward.5} parent=1 // pred_check_branch
      %60 = sbr.rel (0) target = $region28
    $region27: #{imdb_forward.5} parent=1 // pred_region
      %s61 = ssub.s32 0, 0
      %s62 = smul.u32 8, %s61
      %s63 = smul.addr %s62, 4
      %s64 = sadd.s32 2, %s63
      %s65 = smul.addr %s64, 8
      %s66 = scalar_lea.vmem %s1, %s65
      // Predicated region
      $region29: #{imdb_forward.5} parent=27 // pred_check
        _
      $region30: #{imdb_forward.5} parent=27 // pred_check_branch
        %68 = sbr.rel (0) target = $region32
      $region31: #{imdb_forward.5} parent=27 // pred_region
        // Predicated region
        $region33: #{imdb_forward.5} parent=31 // pred_check
          _
        $region34: #{imdb_forward.5} parent=31 // pred_check_branch
          %70 = sbr.rel (0) target = $region36
        $region35: #{imdb_forward.5} parent=31 // pred_region
          loop: start=0, step=1, limit=1
          $region37: #{imdb_forward.5} parent=35 // loop_pre_header
            _
          $region38: #{imdb_forward.5} parent=35 // loop_header
            %s72 = sphi 0, %s76
            %p73 = scmp.ge.s32.totalorder %s72, 1
            %s77 = sphi %s66, %s66
            %s78 = sphi [#allocation7], [#allocation7]
          $region39: #{imdb_forward.5} parent=35 // loop_header_branch
            %75 = sbr.rel (%p73) target = $region43
          $region40: #{imdb_forward.5} parent=35 // loop_body
            %v79 = vld [vmem:[%s77] sm:$0xff]
            %80 = vst [vmem:[%s78] sm:$0xff] %v79
            %v81 = vld [vmem:[%s77 + $0x8] sm:$0xff]
            %82 = vst [vmem:[%s78 + $0x8] sm:$0xff] %v81
            %v83 = vld [vmem:[%s77 + $0x20] sm:$0xff]
            %84 = vst [vmem:[%s78 + $0x10] sm:$0xff] %v83
            %v85 = vld [vmem:[%s77 + $0x28] sm:$0xff]
            %86 = vst [vmem:[%s78 + $0x18] sm:$0xff] %v85
            %v87 = vld [vmem:[%s77 + $0x40] sm:$0xff]
            %88 = vst [vmem:[%s78 + $0x20] sm:$0xff] %v87
            %v89 = vld [vmem:[%s77 + $0x48] sm:$0xff]
            %90 = vst [vmem:[%s78 + $0x28] sm:$0xff] %v89
            %v91 = vld [vmem:[%s77 + $0x60] sm:$0xff]
            %92 = vst [vmem:[%s78 + $0x30] sm:$0xff] %v91
            %v93 = vld [vmem:[%s77 + $0x68] sm:$0xff]
            %94 = vst [vmem:[%s78 + $0x38] sm:$0xff] %v93
            %v95 = vld [vmem:[%s77 + $0x80] sm:$0xff]
            %96 = vst [vmem:[%s78 + $0x40] sm:$0xff] %v95
            %v97 = vld [vmem:[%s77 + $0x88] sm:$0xff]
            %98 = vst [vmem:[%s78 + $0x48] sm:$0xff] %v97
            %v99 = vld [vmem:[%s77 + $0xa0] sm:$0xff]
            %100 = vst [vmem:[%s78 + $0x50] sm:$0xff] %v99
            %v101 = vld [vmem:[%s77 + $0xa8] sm:$0xff]
            %102 = vst [vmem:[%s78 + $0x58] sm:$0xff] %v101
            %v103 = vld [vmem:[%s77 + $0xc0] sm:$0xff]
            %104 = vst [vmem:[%s78 + $0x60] sm:$0xff] %v103
            %v105 = vld [vmem:[%s77 + $0xc8] sm:$0xff]
            %106 = vst [vmem:[%s78 + $0x68] sm:$0xff] %v105
            %v107 = vld [vmem:[%s77 + $0xe0] sm:$0xff]
            %108 = vst [vmem:[%s78 + $0x70] sm:$0xff] %v107
            %v109 = vld [vmem:[%s77 + $0xe8] sm:$0xff]
            %110 = vst [vmem:[%s78 + $0x78] sm:$0xff] %v109
          $region41: #{imdb_forward.5} parent=35 // loop_footer
            %s76 = sadd.s32 1, %s72
          $region42: #{imdb_forward.5} parent=35 // loop_footer_branch
            %71 = sbr.rel target = $region38
          $region43: #{imdb_forward.5} parent=35 // loop_exit
            _
        $region36: #{imdb_forward.5} parent=31 // pred_fallthru
          _
        // Predicated region
        $region44: #{imdb_forward.5} parent=31 // pred_check
          _
        $region45: #{imdb_forward.5} parent=31 // pred_check_branch
          %112 = sbr.rel target = $region47
        $region46: #{imdb_forward.5} parent=31 // pred_region
          _
        $region47: #{imdb_forward.5} parent=31 // pred_fallthru
          _
      $region32: #{imdb_forward.5} parent=27 // pred_fallthru
        _
      %113 = vnop
    $region28: #{imdb_forward.5} parent=1 // pred_fallthru
      _
    // Predicated region
    $region48: #{imdb_forward.5} parent=1 // pred_check
      _
    $region49: #{imdb_forward.5} parent=1 // pred_check_branch
      %115 = sbr.rel (0) target = $region51
    $region50: #{imdb_forward.5} parent=1 // pred_region
      _
    $region51: #{imdb_forward.5} parent=1 // pred_fallthru
      _
    // Predicated region
    $region52: #{imdb_forward.5} parent=1 // pred_check
      _
    $region53: #{imdb_forward.5} parent=1 // pred_check_branch
      %117 = sbr.rel (0) target = $region55
    $region54: #{imdb_forward.5} parent=1 // pred_region
      _
    $region55: #{imdb_forward.5} parent=1 // pred_fallthru
      _
    // Predicated region
    $region56: #{imdb_forward.5} parent=1 // pred_check
      _
    $region57: #{imdb_forward.5} parent=1 // pred_check_branch
      %119 = sbr.rel (0) target = $region59
    $region58: #{imdb_forward.5} parent=1 // pred_region
      _
    $region59: #{imdb_forward.5} parent=1 // pred_fallthru
      _
    %s120 = ssub.s32 0, 0
    %s121 = smul.u32 8, %s120
    %p122 = scmp.lt.s32.totalorder %s121, 7
    %s123 = scalar_select %p122, %s121, 7
    %s124 = smul.addr %s123, 8
    %s125 = scalar_lea.vmem %s4, %s124
    %s126 = ssub.s32 0, 0
    %s127 = smul.u32 8, %s126
    %s128 = ssub.s32 0, 0
    %s129 = smul.u32 8, %s128
    %p130 = scmp.lt.s32.totalorder %s129, 7
    %s131 = scalar_select %p130, %s129, 7
    %s132 = smul.addr %s131, 8
    %s133 = scalar_lea.vmem %s4, %s132
    %s134 = ssub.s32 0, 0
    %s135 = smul.u32 8, %s134
    %p136 = scmp.eq.s32.totalorder 0, 0
    // Predicated region
    $region60: #{imdb_forward.5} parent=1 // pred_check
      %p137 = pneg %p136
    $region61: #{imdb_forward.5} parent=1 // pred_check_branch
      %139 = sbr.rel (%p137) target = $region63
    $region62: #{imdb_forward.5} parent=1 // pred_region
      %vm140 = vcmask 523264
      %141 = vst.msk [vmem:[#allocation2] sm:$0xff] %vm140, 0.0
      %142 = vst.msk [vmem:[#allocation3] sm:$0xff] %vm140, 0.0
      %143 = vst.msk [vmem:[#allocation4] sm:$0xff] %vm140, 0.0
      %144 = vst.msk [vmem:[#allocation5] sm:$0xff] %vm140, 0.0
    $region63: #{imdb_forward.5} parent=1 // pred_fallthru
      _
    %v145 = vld [vmem:[%s2] sm:$0xff]
    %v146 = vld [vmem:[%s2 + $0x8] sm:$0xff]
    %v147 = vld [vmem:[%s2 + $0x10] sm:$0xff]
    %v148 = vld [vmem:[%s2 + $0x18] sm:$0xff]
    %v149 = vld [vmem:[%s2 + $0x20] sm:$0xff]
    %v150 = vld [vmem:[%s2 + $0x28] sm:$0xff]
    %v151 = vld [vmem:[%s2 + $0x30] sm:$0xff]
    %v152 = vld [vmem:[%s2 + $0x38] sm:$0xff]
    %v153 = vld [vmem:[%s2 + $0x40] sm:$0xff]
    %v154 = vld [vmem:[%s2 + $0x48] sm:$0xff]
    %v155 = vld [vmem:[%s2 + $0x50] sm:$0xff]
    %v156 = vld [vmem:[%s2 + $0x58] sm:$0xff]
    %v157 = vld [vmem:[%s2 + $0x60] sm:$0xff]
    %v158 = vld [vmem:[%s2 + $0x68] sm:$0xff]
    %v159 = vld [vmem:[%s2 + $0x70] sm:$0xff]
    %v160 = vld [vmem:[%s2 + $0x78] sm:$0xff]
    %s161 = scalar_lea.vmem %s2, 128
    %v162 = vld [vmem:[%s161] sm:$0xff]
    %v163 = vld [vmem:[%s161 + $0x8] sm:$0xff]
    %v164 = vld [vmem:[%s161 + $0x10] sm:$0xff]
    %v165 = vld [vmem:[%s161 + $0x18] sm:$0xff]
    %v166 = vld [vmem:[%s161 + $0x20] sm:$0xff]
    %v167 = vld [vmem:[%s161 + $0x28] sm:$0xff]
    %v168 = vld [vmem:[%s161 + $0x30] sm:$0xff]
    %v169 = vld [vmem:[%s161 + $0x38] sm:$0xff]
    %v170 = vld [vmem:[%s161 + $0x40] sm:$0xff]
    %v171 = vld [vmem:[%s161 + $0x48] sm:$0xff]
    %v172 = vld [vmem:[%s161 + $0x50] sm:$0xff]
    %v173 = vld [vmem:[%s161 + $0x58] sm:$0xff]
    %v174 = vld [vmem:[%s161 + $0x60] sm:$0xff]
    %v175 = vld [vmem:[%s161 + $0x68] sm:$0xff]
    %v176 = vld [vmem:[%s161 + $0x70] sm:$0xff]
    %v177 = vld [vmem:[%s161 + $0x78] sm:$0xff]
    %v178 = vld [vmem:[#allocation2] sm:$0xff]
    %v179 = vld [vmem:[#allocation3] sm:$0xff]
    %v180 = vld [vmem:[#allocation4] sm:$0xff]
    %v181 = vld [vmem:[#allocation5] sm:$0xff]
    %v182 = vld [vmem:[#allocation6] sm:$0xff]
    %v183 = vld [vmem:[#allocation6 + $0x8] sm:$0xff]
    %vm184 = vcmask 523264
    %v186 = vsel %vm184, %v178, 0
    %188 = vmatpush.msra.mxu0 0.0
    %189 = vmatpush.msra.mxu0 0.0
    %190 = vmatpush.msra.mxu0 0.0
    %191 = vmatpush.msra.mxu0 0.0
    %192 = vmatpush.msra.mxu0 0.0
    %193 = vmatpush.msra.mxu0 0.0
    %194 = vmatpush.msra.mxu0 0.0
    %195 = vmatpush.msra.mxu0 0.0
    %196 = vmatpush.msra.mxu0 %v159
    %197 = vmatpush.msra.mxu0 %v157
    %198 = vmatpush.msra.mxu0 %v155
    %199 = vmatpush.msra.mxu0 %v153
    %200 = vmatpush.msra.mxu0 %v151
    %201 = vmatpush.msra.mxu0 %v149
    %202 = vmatpush.msra.mxu0 %v147
    %203 = vmatpush.msra.mxu0 %v145
    %204 = vmatmul.f32.gmra.mxu0 %v186
    %v205 = vpop.f32.mrf.mxu0
    %v206 = vadd.f32 0.0, %v205
    %207 = vdwg.mxu0
    %208 = vmatpush.msra.mxu0 0.0
    %209 = vmatpush.msra.mxu0 0.0
    %210 = vmatpush.msra.mxu0 0.0
    %211 = vmatpush.msra.mxu0 0.0
    %212 = vmatpush.msra.mxu0 0.0
    %213 = vmatpush.msra.mxu0 0.0
    %214 = vmatpush.msra.mxu0 0.0
    %215 = vmatpush.msra.mxu0 0.0
    %216 = vmatpush.msra.mxu0 %v160
    %217 = vmatpush.msra.mxu0 %v158
    %218 = vmatpush.msra.mxu0 %v156
    %219 = vmatpush.msra.mxu0 %v154
    %220 = vmatpush.msra.mxu0 %v152
    %221 = vmatpush.msra.mxu0 %v150
    %222 = vmatpush.msra.mxu0 %v148
    %223 = vmatpush.msra.mxu0 %v146
    %224 = vmatmul.f32.gmra.mxu0 %v186
    %v225 = vpop.f32.mrf.mxu0
    %v226 = vadd.f32 0.0, %v225
    %227 = vdwg.mxu0
    %v228 = vadd.f32 %v182, %v206
    %v229 = vadd.f32 %v183, %v226
    %v230 = vld [vmem:[#allocation7 + $0x70] sm:$0xff]
    %v231 = vld [vmem:[#allocation7 + $0x78] sm:$0xff]
    %v233 = vsel %vm184, %v180, 0
    %235 = vmatpush.msra.mxu0 0.0
    %236 = vmatpush.msra.mxu0 0.0
    %237 = vmatpush.msra.mxu0 0.0
    %238 = vmatpush.msra.mxu0 0.0
    %239 = vmatpush.msra.mxu0 0.0
    %240 = vmatpush.msra.mxu0 0.0
    %241 = vmatpush.msra.mxu0 0.0
    %242 = vmatpush.msra.mxu0 0.0
    %243 = vmatpush.msra.mxu0 %v176
    %244 = vmatpush.msra.mxu0 %v174
    %245 = vmatpush.msra.mxu0 %v172
    %246 = vmatpush.msra.mxu0 %v170
    %247 = vmatpush.msra.mxu0 %v168
    %248 = vmatpush.msra.mxu0 %v166
    %249 = vmatpush.msra.mxu0 %v164
    %250 = vmatpush.msra.mxu0 %v162
    %251 = vmatmul.f32.gmra.mxu0 %v233
    %v252 = vpop.f32.mrf.mxu0
    %v253 = vadd.f32 0.0, %v252
    %254 = vdwg.mxu0
    %255 = vmatpush.msra.mxu0 0.0
    %256 = vmatpush.msra.mxu0 0.0
    %257 = vmatpush.msra.mxu0 0.0
    %258 = vmatpush.msra.mxu0 0.0
    %259 = vmatpush.msra.mxu0 0.0
    %260 = vmatpush.msra.mxu0 0.0
    %261 = vmatpush.msra.mxu0 0.0
    %262 = vmatpush.msra.mxu0 0.0
    %263 = vmatpush.msra.mxu0 %v177
    %264 = vmatpush.msra.mxu0 %v175
    %265 = vmatpush.msra.mxu0 %v173
    %266 = vmatpush.msra.mxu0 %v171
    %267 = vmatpush.msra.mxu0 %v169
    %268 = vmatpush.msra.mxu0 %v167
    %269 = vmatpush.msra.mxu0 %v165
    %270 = vmatpush.msra.mxu0 %v163
    %271 = vmatmul.f32.gmra.mxu0 %v233
    %v272 = vpop.f32.mrf.mxu0
    %v273 = vadd.f32 0.0, %v272
    %274 = vdwg.mxu0
    %v275 = vadd.f32 %v230, %v253
    %v276 = vadd.f32 %v231, %v273
    %v277 = vxor.u32 %v228, 2147483648
    %v278 = vmul.f32 %v277, 1.442695
    %v279 = vpow.pop %v278
    %v280 = vadd.f32 %v279, 1.0
    %v281 = vrcp.pop %v280
    %v282 = vmul.f32 %v280, %v281
    %v283 = vsub.f32 1.0, %v282
    %v284 = vmul.f32 %v281, %v283
    %v285 = vadd.f32 %v281, %v284
    %vm286 = vweird.f32 %v280
    %vm287 = vweird.f32 %v281
    %vm288 = vmor %vm286, %vm287
    %v289 = vsel %vm288, %v281, %v285
    %v290 = vand.u32 2147483647, %v280
    %vm291 = vcmp.eq.f32.partialorder %v290, 8.507059e+37
    %v292 = vand.u32 %v280, 2147483648
    %v293 = vor.u32 1.1754944e-38, %v292
    %v294 = vsel %vm291, %v293, %v289
    %v295 = vmul.f32 1.0, %v294
    %v296 = vtanh.pop %v229
    %v297 = vxor.u32 %v229, 2147483648
    %v298 = vmul.f32 %v297, 1.442695
    %v299 = vpow.pop %v298
    %v300 = vadd.f32 %v299, 1.0
    %v301 = vrcp.pop %v300
    %v302 = vmul.f32 %v300, %v301
    %v303 = vsub.f32 1.0, %v302
    %v304 = vmul.f32 %v301, %v303
    %v305 = vadd.f32 %v301, %v304
    %vm306 = vweird.f32 %v300
    %vm307 = vweird.f32 %v301
    %vm308 = vmor %vm306, %vm307
    %v309 = vsel %vm308, %v301, %v305
    %v310 = vand.u32 2147483647, %v300
    %vm311 = vcmp.eq.f32.partialorder %v310, 8.507059e+37
    %v312 = vand.u32 %v300, 2147483648
    %v313 = vor.u32 1.1754944e-38, %v312
    %v314 = vsel %vm311, %v313, %v309
    %v315 = vmul.f32 1.0, %v314
    %317 = vrot.lane.b32.xlu0 %v179, 64
    %v318 = vpop.permute.xlu0 %317
    %v320 = vmul.f32 %v295, %v318
    %v321 = vmul.f32 %v295, %v296
    %323 = vrot.lane.b32.xlu0 %v321, 64
    %v324 = vpop.permute.xlu0 %323
    %v326 = vadd.f32 %v320, %v324
    %v327 = vtanh.pop %v326
    %v328 = vmul.f32 %v315, %v327
    %v329 = vxor.u32 %v275, 2147483648
    %v330 = vmul.f32 %v329, 1.442695
    %v331 = vpow.pop %v330
    %v332 = vadd.f32 %v331, 1.0
    %v333 = vrcp.pop %v332
    %v334 = vmul.f32 %v332, %v333
    %v335 = vsub.f32 1.0, %v334
    %v336 = vmul.f32 %v333, %v335
    %v337 = vadd.f32 %v333, %v336
    %vm338 = vweird.f32 %v332
    %vm339 = vweird.f32 %v333
    %vm340 = vmor %vm338, %vm339
    %v341 = vsel %vm340, %v333, %v337
    %v342 = vand.u32 2147483647, %v332
    %vm343 = vcmp.eq.f32.partialorder %v342, 8.507059e+37
    %v344 = vand.u32 %v332, 2147483648
    %v345 = vor.u32 1.1754944e-38, %v344
    %v346 = vsel %vm343, %v345, %v341
    %v347 = vmul.f32 1.0, %v346
    %v348 = vtanh.pop %v276
    %v349 = vxor.u32 %v276, 2147483648
    %v350 = vmul.f32 %v349, 1.442695
    %v351 = vpow.pop %v350
    %v352 = vadd.f32 %v351, 1.0
    %v353 = vrcp.pop %v352
    %v354 = vmul.f32 %v352, %v353
    %v355 = vsub.f32 1.0, %v354
    %v356 = vmul.f32 %v353, %v355
    %v357 = vadd.f32 %v353, %v356
    %vm358 = vweird.f32 %v352
    %vm359 = vweird.f32 %v353
    %vm360 = vmor %vm358, %vm359
    %v361 = vsel %vm360, %v353, %v357
    %v362 = vand.u32 2147483647, %v352
    %vm363 = vcmp.eq.f32.partialorder %v362, 8.507059e+37
    %v364 = vand.u32 %v352, 2147483648
    %v365 = vor.u32 1.1754944e-38, %v364
    %v366 = vsel %vm363, %v365, %v361
    %v367 = vmul.f32 1.0, %v366
    %369 = vrot.lane.b32.xlu0 %v181, 64
    %v370 = vpop.permute.xlu0 %369
    %v372 = vmul.f32 %v347, %v370
    %v373 = vmul.f32 %v347, %v348
    %375 = vrot.lane.b32.xlu0 %v373, 64
    %v376 = vpop.permute.xlu0 %375
    %v378 = vadd.f32 %v372, %v376
    %v379 = vtanh.pop %v378
    %v380 = vmul.f32 %v367, %v379
    %382 = vrot.lane.b32.xlu0 %v328, 64
    %v383 = vpop.permute.xlu0 %382
    %385 = vst.msk [vmem:[%s3] sm:$0xff] %vm184, %v383
    %387 = vrot.lane.b32.xlu0 %v380, 64
    %v388 = vpop.permute.xlu0 %387
    %390 = vst.msk [vmem:[%s133 + $0x38] sm:$0xff] %vm184, %v388
    %v391 = vld [vmem:[#allocation6 + $0x10] sm:$0xff]
    %v392 = vld [vmem:[#allocation6 + $0x18] sm:$0xff]
    %v393 = vsel %vm184, %v383, 0
    %395 = vmatpush.msra.mxu0 0.0
    %396 = vmatpush.msra.mxu0 0.0
    %397 = vmatpush.msra.mxu0 0.0
    %398 = vmatpush.msra.mxu0 0.0
    %399 = vmatpush.msra.mxu0 0.0
    %400 = vmatpush.msra.mxu0 0.0
    %401 = vmatpush.msra.mxu0 0.0
    %402 = vmatpush.msra.mxu0 0.0
    %403 = vmatpush.msra.mxu0 %v159
    %404 = vmatpush.msra.mxu0 %v157
    %405 = vmatpush.msra.mxu0 %v155
    %406 = vmatpush.msra.mxu0 %v153
    %407 = vmatpush.msra.mxu0 %v151
    %408 = vmatpush.msra.mxu0 %v149
    %409 = vmatpush.msra.mxu0 %v147
    %410 = vmatpush.msra.mxu0 %v145
    %411 = vmatmul.f32.gmra.mxu0 %v393
    %v412 = vpop.f32.mrf.mxu0
    %v413 = vadd.f32 0.0, %v412
    %414 = vdwg.mxu0
    %415 = vmatpush.msra.mxu0 0.0
    %416 = vmatpush.msra.mxu0 0.0
    %417 = vmatpush.msra.mxu0 0.0
    %418 = vmatpush.msra.mxu0 0.0
    %419 = vmatpush.msra.mxu0 0.0
    %420 = vmatpush.msra.mxu0 0.0
    %421 = vmatpush.msra.mxu0 0.0
    %422 = vmatpush.msra.mxu0 0.0
    %423 = vmatpush.msra.mxu0 %v160
    %424 = vmatpush.msra.mxu0 %v158
    %425 = vmatpush.msra.mxu0 %v156
    %426 = vmatpush.msra.mxu0 %v154
    %427 = vmatpush.msra.mxu0 %v152
    %428 = vmatpush.msra.mxu0 %v150
    %429 = vmatpush.msra.mxu0 %v148
    %430 = vmatpush.msra.mxu0 %v146
    %431 = vmatmul.f32.gmra.mxu0 %v393
    %v432 = vpop.f32.mrf.mxu0
    %v433 = vadd.f32 0.0, %v432
    %434 = vdwg.mxu0
    %v435 = vadd.f32 %v391, %v413
    %v436 = vadd.f32 %v392, %v433
    %v437 = vld [vmem:[#allocation7 + $0x60] sm:$0xff]
    %v438 = vld [vmem:[#allocation7 + $0x68] sm:$0xff]
    %v439 = vsel %vm184, %v388, 0
    %441 = vmatpush.msra.mxu0 0.0
    %442 = vmatpush.msra.mxu0 0.0
    %443 = vmatpush.msra.mxu0 0.0
    %444 = vmatpush.msra.mxu0 0.0
    %445 = vmatpush.msra.mxu0 0.0
    %446 = vmatpush.msra.mxu0 0.0
    %447 = vmatpush.msra.mxu0 0.0
    %448 = vmatpush.msra.mxu0 0.0
    %449 = vmatpush.msra.mxu0 %v176
    %450 = vmatpush.msra.mxu0 %v174
    %451 = vmatpush.msra.mxu0 %v172
    %452 = vmatpush.msra.mxu0 %v170
    %453 = vmatpush.msra.mxu0 %v168
    %454 = vmatpush.msra.mxu0 %v166
    %455 = vmatpush.msra.mxu0 %v164
    %456 = vmatpush.msra.mxu0 %v162
    %457 = vmatmul.f32.gmra.mxu0 %v439
    %v458 = vpop.f32.mrf.mxu0
    %v459 = vadd.f32 0.0, %v458
    %460 = vdwg.mxu0
    %461 = vmatpush.msra.mxu0 0.0
    %462 = vmatpush.msra.mxu0 0.0
    %463 = vmatpush.msra.mxu0 0.0
    %464 = vmatpush.msra.mxu0 0.0
    %465 = vmatpush.msra.mxu0 0.0
    %466 = vmatpush.msra.mxu0 0.0
    %467 = vmatpush.msra.mxu0 0.0
    %468 = vmatpush.msra.mxu0 0.0
    %469 = vmatpush.msra.mxu0 %v177
    %470 = vmatpush.msra.mxu0 %v175
    %471 = vmatpush.msra.mxu0 %v173
    %472 = vmatpush.msra.mxu0 %v171
    %473 = vmatpush.msra.mxu0 %v169
    %474 = vmatpush.msra.mxu0 %v167
    %475 = vmatpush.msra.mxu0 %v165
    %476 = vmatpush.msra.mxu0 %v163
    %477 = vmatmul.f32.gmra.mxu0 %v439
    %v478 = vpop.f32.mrf.mxu0
    %v479 = vadd.f32 0.0, %v478
    %480 = vdwg.mxu0
    %v481 = vadd.f32 %v437, %v459
    %v482 = vadd.f32 %v438, %v479
    %v483 = vxor.u32 %v435, 2147483648
    %v484 = vmul.f32 %v483, 1.442695
    %v485 = vpow.pop %v484
    %v486 = vadd.f32 %v485, 1.0
    %v487 = vrcp.pop %v486
    %v488 = vmul.f32 %v486, %v487
    %v489 = vsub.f32 1.0, %v488
    %v490 = vmul.f32 %v487, %v489
    %v491 = vadd.f32 %v487, %v490
    %vm492 = vweird.f32 %v486
    %vm493 = vweird.f32 %v487
    %vm494 = vmor %vm492, %vm493
    %v495 = vsel %vm494, %v487, %v491
    %v496 = vand.u32 2147483647, %v486
    %vm497 = vcmp.eq.f32.partialorder %v496, 8.507059e+37
    %v498 = vand.u32 %v486, 2147483648
    %v499 = vor.u32 1.1754944e-38, %v498
    %v500 = vsel %vm497, %v499, %v495
    %v501 = vmul.f32 1.0, %v500
    %v502 = vtanh.pop %v436
    %v503 = vxor.u32 %v436, 2147483648
    %v504 = vmul.f32 %v503, 1.442695
    %v505 = vpow.pop %v504
    %v506 = vadd.f32 %v505, 1.0
    %v507 = vrcp.pop %v506
    %v508 = vmul.f32 %v506, %v507
    %v509 = vsub.f32 1.0, %v508
    %v510 = vmul.f32 %v507, %v509
    %v511 = vadd.f32 %v507, %v510
    %vm512 = vweird.f32 %v506
    %vm513 = vweird.f32 %v507
    %vm514 = vmor %vm512, %vm513
    %v515 = vsel %vm514, %v507, %v511
    %v516 = vand.u32 2147483647, %v506
    %vm517 = vcmp.eq.f32.partialorder %v516, 8.507059e+37
    %v518 = vand.u32 %v506, 2147483648
    %v519 = vor.u32 1.1754944e-38, %v518
    %v520 = vsel %vm517, %v519, %v515
    %v521 = vmul.f32 1.0, %v520
    %v522 = vmul.f32 %v501, %v326
    %v523 = vmul.f32 %v501, %v502
    %525 = vrot.lane.b32.xlu0 %v523, 64
    %v526 = vpop.permute.xlu0 %525
    %v528 = vadd.f32 %v522, %v526
    %v529 = vtanh.pop %v528
    %v530 = vmul.f32 %v521, %v529
    %v531 = vxor.u32 %v481, 2147483648
    %v532 = vmul.f32 %v531, 1.442695
    %v533 = vpow.pop %v532
    %v534 = vadd.f32 %v533, 1.0
    %v535 = vrcp.pop %v534
    %v536 = vmul.f32 %v534, %v535
    %v537 = vsub.f32 1.0, %v536
    %v538 = vmul.f32 %v535, %v537
    %v539 = vadd.f32 %v535, %v538
    %vm540 = vweird.f32 %v534
    %vm541 = vweird.f32 %v535
    %vm542 = vmor %vm540, %vm541
    %v543 = vsel %vm542, %v535, %v539
    %v544 = vand.u32 2147483647, %v534
    %vm545 = vcmp.eq.f32.partialorder %v544, 8.507059e+37
    %v546 = vand.u32 %v534, 2147483648
    %v547 = vor.u32 1.1754944e-38, %v546
    %v548 = vsel %vm545, %v547, %v543
    %v549 = vmul.f32 1.0, %v548
    %v550 = vtanh.pop %v482
    %v551 = vxor.u32 %v482, 2147483648
    %v552 = vmul.f32 %v551, 1.442695
    %v553 = vpow.pop %v552
    %v554 = vadd.f32 %v553, 1.0
    %v555 = vrcp.pop %v554
    %v556 = vmul.f32 %v554, %v555
    %v557 = vsub.f32 1.0, %v556
    %v558 = vmul.f32 %v555, %v557
    %v559 = vadd.f32 %v555, %v558
    %vm560 = vweird.f32 %v554
    %vm561 = vweird.f32 %v555
    %vm562 = vmor %vm560, %vm561
    %v563 = vsel %vm562, %v555, %v559
    %v564 = vand.u32 2147483647, %v554
    %vm565 = vcmp.eq.f32.partialorder %v564, 8.507059e+37
    %v566 = vand.u32 %v554, 2147483648
    %v567 = vor.u32 1.1754944e-38, %v566
    %v568 = vsel %vm565, %v567, %v563
    %v569 = vmul.f32 1.0, %v568
    %v570 = vmul.f32 %v549, %v378
    %v571 = vmul.f32 %v549, %v550
    %573 = vrot.lane.b32.xlu0 %v571, 64
    %v574 = vpop.permute.xlu0 %573
    %v576 = vadd.f32 %v570, %v574
    %v577 = vtanh.pop %v576
    %v578 = vmul.f32 %v569, %v577
    %580 = vrot.lane.b32.xlu0 %v530, 64
    %v581 = vpop.permute.xlu0 %580
    %583 = vst.msk [vmem:[%s3 + $0x8] sm:$0xff] %vm184, %v581
    %585 = vrot.lane.b32.xlu0 %v578, 64
    %v586 = vpop.permute.xlu0 %585
    %588 = vst.msk [vmem:[%s133 + $0x30] sm:$0xff] %vm184, %v586
    %v589 = vld [vmem:[#allocation6 + $0x20] sm:$0xff]
    %v590 = vld [vmem:[#allocation6 + $0x28] sm:$0xff]
    %v591 = vsel %vm184, %v581, 0
    %593 = vmatpush.msra.mxu0 0.0
    %594 = vmatpush.msra.mxu0 0.0
    %595 = vmatpush.msra.mxu0 0.0
    %596 = vmatpush.msra.mxu0 0.0
    %597 = vmatpush.msra.mxu0 0.0
    %598 = vmatpush.msra.mxu0 0.0
    %599 = vmatpush.msra.mxu0 0.0
    %600 = vmatpush.msra.mxu0 0.0
    %601 = vmatpush.msra.mxu0 %v159
    %602 = vmatpush.msra.mxu0 %v157
    %603 = vmatpush.msra.mxu0 %v155
    %604 = vmatpush.msra.mxu0 %v153
    %605 = vmatpush.msra.mxu0 %v151
    %606 = vmatpush.msra.mxu0 %v149
    %607 = vmatpush.msra.mxu0 %v147
    %608 = vmatpush.msra.mxu0 %v145
    %609 = vmatmul.f32.gmra.mxu0 %v591
    %v610 = vpop.f32.mrf.mxu0
    %v611 = vadd.f32 0.0, %v610
    %612 = vdwg.mxu0
    %613 = vmatpush.msra.mxu0 0.0
    %614 = vmatpush.msra.mxu0 0.0
    %615 = vmatpush.msra.mxu0 0.0
    %616 = vmatpush.msra.mxu0 0.0
    %617 = vmatpush.msra.mxu0 0.0
    %618 = vmatpush.msra.mxu0 0.0
    %619 = vmatpush.msra.mxu0 0.0
    %620 = vmatpush.msra.mxu0 0.0
    %621 = vmatpush.msra.mxu0 %v160
    %622 = vmatpush.msra.mxu0 %v158
    %623 = vmatpush.msra.mxu0 %v156
    %624 = vmatpush.msra.mxu0 %v154
    %625 = vmatpush.msra.mxu0 %v152
    %626 = vmatpush.msra.mxu0 %v150
    %627 = vmatpush.msra.mxu0 %v148
    %628 = vmatpush.msra.mxu0 %v146
    %629 = vmatmul.f32.gmra.mxu0 %v591
    %v630 = vpop.f32.mrf.mxu0
    %v631 = vadd.f32 0.0, %v630
    %632 = vdwg.mxu0
    %v633 = vadd.f32 %v589, %v611
    %v634 = vadd.f32 %v590, %v631
    %v635 = vld [vmem:[#allocation7 + $0x50] sm:$0xff]
    %v636 = vld [vmem:[#allocation7 + $0x58] sm:$0xff]
    %v637 = vsel %vm184, %v586, 0
    %639 = vmatpush.msra.mxu0 0.0
    %640 = vmatpush.msra.mxu0 0.0
    %641 = vmatpush.msra.mxu0 0.0
    %642 = vmatpush.msra.mxu0 0.0
    %643 = vmatpush.msra.mxu0 0.0
    %644 = vmatpush.msra.mxu0 0.0
    %645 = vmatpush.msra.mxu0 0.0
    %646 = vmatpush.msra.mxu0 0.0
    %647 = vmatpush.msra.mxu0 %v176
    %648 = vmatpush.msra.mxu0 %v174
    %649 = vmatpush.msra.mxu0 %v172
    %650 = vmatpush.msra.mxu0 %v170
    %651 = vmatpush.msra.mxu0 %v168
    %652 = vmatpush.msra.mxu0 %v166
    %653 = vmatpush.msra.mxu0 %v164
    %654 = vmatpush.msra.mxu0 %v162
    %655 = vmatmul.f32.gmra.mxu0 %v637
    %v656 = vpop.f32.mrf.mxu0
    %v657 = vadd.f32 0.0, %v656
    %658 = vdwg.mxu0
    %659 = vmatpush.msra.mxu0 0.0
    %660 = vmatpush.msra.mxu0 0.0
    %661 = vmatpush.msra.mxu0 0.0
    %662 = vmatpush.msra.mxu0 0.0
    %663 = vmatpush.msra.mxu0 0.0
    %664 = vmatpush.msra.mxu0 0.0
    %665 = vmatpush.msra.mxu0 0.0
    %666 = vmatpush.msra.mxu0 0.0
    %667 = vmatpush.msra.mxu0 %v177
    %668 = vmatpush.msra.mxu0 %v175
    %669 = vmatpush.msra.mxu0 %v173
    %670 = vmatpush.msra.mxu0 %v171
    %671 = vmatpush.msra.mxu0 %v169
    %672 = vmatpush.msra.mxu0 %v167
    %673 = vmatpush.msra.mxu0 %v165
    %674 = vmatpush.msra.mxu0 %v163
    %675 = vmatmul.f32.gmra.mxu0 %v637
    %v676 = vpop.f32.mrf.mxu0
    %v677 = vadd.f32 0.0, %v676
    %678 = vdwg.mxu0
    %v679 = vadd.f32 %v635, %v657
    %v680 = vadd.f32 %v636, %v677
    %v681 = vxor.u32 %v633, 2147483648
    %v682 = vmul.f32 %v681, 1.442695
    %v683 = vpow.pop %v682
    %v684 = vadd.f32 %v683, 1.0
    %v685 = vrcp.pop %v684
    %v686 = vmul.f32 %v684, %v685
    %v687 = vsub.f32 1.0, %v686
    %v688 = vmul.f32 %v685, %v687
    %v689 = vadd.f32 %v685, %v688
    %vm690 = vweird.f32 %v684
    %vm691 = vweird.f32 %v685
    %vm692 = vmor %vm690, %vm691
    %v693 = vsel %vm692, %v685, %v689
    %v694 = vand.u32 2147483647, %v684
    %vm695 = vcmp.eq.f32.partialorder %v694, 8.507059e+37
    %v696 = vand.u32 %v684, 2147483648
    %v697 = vor.u32 1.1754944e-38, %v696
    %v698 = vsel %vm695, %v697, %v693
    %v699 = vmul.f32 1.0, %v698
    %v700 = vtanh.pop %v634
    %v701 = vxor.u32 %v634, 2147483648
    %v702 = vmul.f32 %v701, 1.442695
    %v703 = vpow.pop %v702
    %v704 = vadd.f32 %v703, 1.0
    %v705 = vrcp.pop %v704
    %v706 = vmul.f32 %v704, %v705
    %v707 = vsub.f32 1.0, %v706
    %v708 = vmul.f32 %v705, %v707
    %v709 = vadd.f32 %v705, %v708
    %vm710 = vweird.f32 %v704
    %vm711 = vweird.f32 %v705
    %vm712 = vmor %vm710, %vm711
    %v713 = vsel %vm712, %v705, %v709
    %v714 = vand.u32 2147483647, %v704
    %vm715 = vcmp.eq.f32.partialorder %v714, 8.507059e+37
    %v716 = vand.u32 %v704, 2147483648
    %v717 = vor.u32 1.1754944e-38, %v716
    %v718 = vsel %vm715, %v717, %v713
    %v719 = vmul.f32 1.0, %v718
    %v720 = vmul.f32 %v699, %v528
    %v721 = vmul.f32 %v699, %v700
    %723 = vrot.lane.b32.xlu0 %v721, 64
    %v724 = vpop.permute.xlu0 %723
    %v726 = vadd.f32 %v720, %v724
    %v727 = vtanh.pop %v726
    %v728 = vmul.f32 %v719, %v727
    %v729 = vxor.u32 %v679, 2147483648
    %v730 = vmul.f32 %v729, 1.442695
    %v731 = vpow.pop %v730
    %v732 = vadd.f32 %v731, 1.0
    %v733 = vrcp.pop %v732
    %v734 = vmul.f32 %v732, %v733
    %v735 = vsub.f32 1.0, %v734
    %v736 = vmul.f32 %v733, %v735
    %v737 = vadd.f32 %v733, %v736
    %vm738 = vweird.f32 %v732
    %vm739 = vweird.f32 %v733
    %vm740 = vmor %vm738, %vm739
    %v741 = vsel %vm740, %v733, %v737
    %v742 = vand.u32 2147483647, %v732
    %vm743 = vcmp.eq.f32.partialorder %v742, 8.507059e+37
    %v744 = vand.u32 %v732, 2147483648
    %v745 = vor.u32 1.1754944e-38, %v744
    %v746 = vsel %vm743, %v745, %v741
    %v747 = vmul.f32 1.0, %v746
    %v748 = vtanh.pop %v680
    %v749 = vxor.u32 %v680, 2147483648
    %v750 = vmul.f32 %v749, 1.442695
    %v751 = vpow.pop %v750
    %v752 = vadd.f32 %v751, 1.0
    %v753 = vrcp.pop %v752
    %v754 = vmul.f32 %v752, %v753
    %v755 = vsub.f32 1.0, %v754
    %v756 = vmul.f32 %v753, %v755
    %v757 = vadd.f32 %v753, %v756
    %vm758 = vweird.f32 %v752
    %vm759 = vweird.f32 %v753
    %vm760 = vmor %vm758, %vm759
    %v761 = vsel %vm760, %v753, %v757
    %v762 = vand.u32 2147483647, %v752
    %vm763 = vcmp.eq.f32.partialorder %v762, 8.507059e+37
    %v764 = vand.u32 %v752, 2147483648
    %v765 = vor.u32 1.1754944e-38, %v764
    %v766 = vsel %vm763, %v765, %v761
    %v767 = vmul.f32 1.0, %v766
    %v768 = vmul.f32 %v747, %v576
    %v769 = vmul.f32 %v747, %v748
    %771 = vrot.lane.b32.xlu0 %v769, 64
    %v772 = vpop.permute.xlu0 %771
    %v774 = vadd.f32 %v768, %v772
    %v775 = vtanh.pop %v774
    %v776 = vmul.f32 %v767, %v775
    %778 = vrot.lane.b32.xlu0 %v728, 64
    %v779 = vpop.permute.xlu0 %778
    %781 = vst.msk [vmem:[%s3 + $0x10] sm:$0xff] %vm184, %v779
    %783 = vrot.lane.b32.xlu0 %v776, 64
    %v784 = vpop.permute.xlu0 %783
    %786 = vst.msk [vmem:[%s133 + $0x28] sm:$0xff] %vm184, %v784
    %v787 = vld [vmem:[#allocation6 + $0x30] sm:$0xff]
    %v788 = vld [vmem:[#allocation6 + $0x38] sm:$0xff]
    %v789 = vsel %vm184, %v779, 0
    %791 = vmatpush.msra.mxu0 0.0
    %792 = vmatpush.msra.mxu0 0.0
    %793 = vmatpush.msra.mxu0 0.0
    %794 = vmatpush.msra.mxu0 0.0
    %795 = vmatpush.msra.mxu0 0.0
    %796 = vmatpush.msra.mxu0 0.0
    %797 = vmatpush.msra.mxu0 0.0
    %798 = vmatpush.msra.mxu0 0.0
    %799 = vmatpush.msra.mxu0 %v159
    %800 = vmatpush.msra.mxu0 %v157
    %801 = vmatpush.msra.mxu0 %v155
    %802 = vmatpush.msra.mxu0 %v153
    %803 = vmatpush.msra.mxu0 %v151
    %804 = vmatpush.msra.mxu0 %v149
    %805 = vmatpush.msra.mxu0 %v147
    %806 = vmatpush.msra.mxu0 %v145
    %807 = vmatmul.f32.gmra.mxu0 %v789
    %v808 = vpop.f32.mrf.mxu0
    %v809 = vadd.f32 0.0, %v808
    %810 = vdwg.mxu0
    %811 = vmatpush.msra.mxu0 0.0
    %812 = vmatpush.msra.mxu0 0.0
    %813 = vmatpush.msra.mxu0 0.0
    %814 = vmatpush.msra.mxu0 0.0
    %815 = vmatpush.msra.mxu0 0.0
    %816 = vmatpush.msra.mxu0 0.0
    %817 = vmatpush.msra.mxu0 0.0
    %818 = vmatpush.msra.mxu0 0.0
    %819 = vmatpush.msra.mxu0 %v160
    %820 = vmatpush.msra.mxu0 %v158
    %821 = vmatpush.msra.mxu0 %v156
    %822 = vmatpush.msra.mxu0 %v154
    %823 = vmatpush.msra.mxu0 %v152
    %824 = vmatpush.msra.mxu0 %v150
    %825 = vmatpush.msra.mxu0 %v148
    %826 = vmatpush.msra.mxu0 %v146
    %827 = vmatmul.f32.gmra.mxu0 %v789
    %v828 = vpop.f32.mrf.mxu0
    %v829 = vadd.f32 0.0, %v828
    %830 = vdwg.mxu0
    %v831 = vadd.f32 %v787, %v809
    %v832 = vadd.f32 %v788, %v829
    %v833 = vld [vmem:[#allocation7 + $0x40] sm:$0xff]
    %v834 = vld [vmem:[#allocation7 + $0x48] sm:$0xff]
    %v835 = vsel %vm184, %v784, 0
    %837 = vmatpush.msra.mxu0 0.0
    %838 = vmatpush.msra.mxu0 0.0
    %839 = vmatpush.msra.mxu0 0.0
    %840 = vmatpush.msra.mxu0 0.0
    %841 = vmatpush.msra.mxu0 0.0
    %842 = vmatpush.msra.mxu0 0.0
    %843 = vmatpush.msra.mxu0 0.0
    %844 = vmatpush.msra.mxu0 0.0
    %845 = vmatpush.msra.mxu0 %v176
    %846 = vmatpush.msra.mxu0 %v174
    %847 = vmatpush.msra.mxu0 %v172
    %848 = vmatpush.msra.mxu0 %v170
    %849 = vmatpush.msra.mxu0 %v168
    %850 = vmatpush.msra.mxu0 %v166
    %851 = vmatpush.msra.mxu0 %v164
    %852 = vmatpush.msra.mxu0 %v162
    %853 = vmatmul.f32.gmra.mxu0 %v835
    %v854 = vpop.f32.mrf.mxu0
    %v855 = vadd.f32 0.0, %v854
    %856 = vdwg.mxu0
    %857 = vmatpush.msra.mxu0 0.0
    %858 = vmatpush.msra.mxu0 0.0
    %859 = vmatpush.msra.mxu0 0.0
    %860 = vmatpush.msra.mxu0 0.0
    %861 = vmatpush.msra.mxu0 0.0
    %862 = vmatpush.msra.mxu0 0.0
    %863 = vmatpush.msra.mxu0 0.0
    %864 = vmatpush.msra.mxu0 0.0
    %865 = vmatpush.msra.mxu0 %v177
    %866 = vmatpush.msra.mxu0 %v175
    %867 = vmatpush.msra.mxu0 %v173
    %868 = vmatpush.msra.mxu0 %v171
    %869 = vmatpush.msra.mxu0 %v169
    %870 = vmatpush.msra.mxu0 %v167
    %871 = vmatpush.msra.mxu0 %v165
    %872 = vmatpush.msra.mxu0 %v163
    %873 = vmatmul.f32.gmra.mxu0 %v835
    %v874 = vpop.f32.mrf.mxu0
    %v875 = vadd.f32 0.0, %v874
    %876 = vdwg.mxu0
    %v877 = vadd.f32 %v833, %v855
    %v878 = vadd.f32 %v834, %v875
    %v879 = vxor.u32 %v831, 2147483648
    %v880 = vmul.f32 %v879, 1.442695
    %v881 = vpow.pop %v880
    %v882 = vadd.f32 %v881, 1.0
    %v883 = vrcp.pop %v882
    %v884 = vmul.f32 %v882, %v883
    %v885 = vsub.f32 1.0, %v884
    %v886 = vmul.f32 %v883, %v885
    %v887 = vadd.f32 %v883, %v886
    %vm888 = vweird.f32 %v882
    %vm889 = vweird.f32 %v883
    %vm890 = vmor %vm888, %vm889
    %v891 = vsel %vm890, %v883, %v887
    %v892 = vand.u32 2147483647, %v882
    %vm893 = vcmp.eq.f32.partialorder %v892, 8.507059e+37
    %v894 = vand.u32 %v882, 2147483648
    %v895 = vor.u32 1.1754944e-38, %v894
    %v896 = vsel %vm893, %v895, %v891
    %v897 = vmul.f32 1.0, %v896
    %v898 = vtanh.pop %v832
    %v899 = vxor.u32 %v832, 2147483648
    %v900 = vmul.f32 %v899, 1.442695
    %v901 = vpow.pop %v900
    %v902 = vadd.f32 %v901, 1.0
    %v903 = vrcp.pop %v902
    %v904 = vmul.f32 %v902, %v903
    %v905 = vsub.f32 1.0, %v904
    %v906 = vmul.f32 %v903, %v905
    %v907 = vadd.f32 %v903, %v906
    %vm908 = vweird.f32 %v902
    %vm909 = vweird.f32 %v903
    %vm910 = vmor %vm908, %vm909
    %v911 = vsel %vm910, %v903, %v907
    %v912 = vand.u32 2147483647, %v902
    %vm913 = vcmp.eq.f32.partialorder %v912, 8.507059e+37
    %v914 = vand.u32 %v902, 2147483648
    %v915 = vor.u32 1.1754944e-38, %v914
    %v916 = vsel %vm913, %v915, %v911
    %v917 = vmul.f32 1.0, %v916
    %v918 = vmul.f32 %v897, %v726
    %v919 = vmul.f32 %v897, %v898
    %921 = vrot.lane.b32.xlu0 %v919, 64
    %v922 = vpop.permute.xlu0 %921
    %v924 = vadd.f32 %v918, %v922
    %v925 = vtanh.pop %v924
    %v926 = vmul.f32 %v917, %v925
    %v927 = vxor.u32 %v877, 2147483648
    %v928 = vmul.f32 %v927, 1.442695
    %v929 = vpow.pop %v928
    %v930 = vadd.f32 %v929, 1.0
    %v931 = vrcp.pop %v930
    %v932 = vmul.f32 %v930, %v931
    %v933 = vsub.f32 1.0, %v932
    %v934 = vmul.f32 %v931, %v933
    %v935 = vadd.f32 %v931, %v934
    %vm936 = vweird.f32 %v930
    %vm937 = vweird.f32 %v931
    %vm938 = vmor %vm936, %vm937
    %v939 = vsel %vm938, %v931, %v935
    %v940 = vand.u32 2147483647, %v930
    %vm941 = vcmp.eq.f32.partialorder %v940, 8.507059e+37
    %v942 = vand.u32 %v930, 2147483648
    %v943 = vor.u32 1.1754944e-38, %v942
    %v944 = vsel %vm941, %v943, %v939
    %v945 = vmul.f32 1.0, %v944
    %v946 = vtanh.pop %v878
    %v947 = vxor.u32 %v878, 2147483648
    %v948 = vmul.f32 %v947, 1.442695
    %v949 = vpow.pop %v948
    %v950 = vadd.f32 %v949, 1.0
    %v951 = vrcp.pop %v950
    %v952 = vmul.f32 %v950, %v951
    %v953 = vsub.f32 1.0, %v952
    %v954 = vmul.f32 %v951, %v953
    %v955 = vadd.f32 %v951, %v954
    %vm956 = vweird.f32 %v950
    %vm957 = vweird.f32 %v951
    %vm958 = vmor %vm956, %vm957
    %v959 = vsel %vm958, %v951, %v955
    %v960 = vand.u32 2147483647, %v950
    %vm961 = vcmp.eq.f32.partialorder %v960, 8.507059e+37
    %v962 = vand.u32 %v950, 2147483648
    %v963 = vor.u32 1.1754944e-38, %v962
    %v964 = vsel %vm961, %v963, %v959
    %v965 = vmul.f32 1.0, %v964
    %v966 = vmul.f32 %v945, %v774
    %v967 = vmul.f32 %v945, %v946
    %969 = vrot.lane.b32.xlu0 %v967, 64
    %v970 = vpop.permute.xlu0 %969
    %v972 = vadd.f32 %v966, %v970
    %v973 = vtanh.pop %v972
    %v974 = vmul.f32 %v965, %v973
    %976 = vrot.lane.b32.xlu0 %v926, 64
    %v977 = vpop.permute.xlu0 %976
    %979 = vst.msk [vmem:[%s3 + $0x18] sm:$0xff] %vm184, %v977
    %981 = vrot.lane.b32.xlu0 %v974, 64
    %v982 = vpop.permute.xlu0 %981
    %984 = vst.msk [vmem:[%s133 + $0x20] sm:$0xff] %vm184, %v982
    %v985 = vld [vmem:[#allocation6 + $0x40] sm:$0xff]
    %v986 = vld [vmem:[#allocation6 + $0x48] sm:$0xff]
    %v987 = vsel %vm184, %v977, 0
    %989 = vmatpush.msra.mxu0 0.0
    %990 = vmatpush.msra.mxu0 0.0
    %991 = vmatpush.msra.mxu0 0.0
    %992 = vmatpush.msra.mxu0 0.0
    %993 = vmatpush.msra.mxu0 0.0
    %994 = vmatpush.msra.mxu0 0.0
    %995 = vmatpush.msra.mxu0 0.0
    %996 = vmatpush.msra.mxu0 0.0
    %997 = vmatpush.msra.mxu0 %v159
    %998 = vmatpush.msra.mxu0 %v157
    %999 = vmatpush.msra.mxu0 %v155
    %1000 = vmatpush.msra.mxu0 %v153
    %1001 = vmatpush.msra.mxu0 %v151
    %1002 = vmatpush.msra.mxu0 %v149
    %1003 = vmatpush.msra.mxu0 %v147
    %1004 = vmatpush.msra.mxu0 %v145
    %1005 = vmatmul.f32.gmra.mxu0 %v987
    %v1006 = vpop.f32.mrf.mxu0
    %v1007 = vadd.f32 0.0, %v1006
    %1008 = vdwg.mxu0
    %1009 = vmatpush.msra.mxu0 0.0
    %1010 = vmatpush.msra.mxu0 0.0
    %1011 = vmatpush.msra.mxu0 0.0
    %1012 = vmatpush.msra.mxu0 0.0
    %1013 = vmatpush.msra.mxu0 0.0
    %1014 = vmatpush.msra.mxu0 0.0
    %1015 = vmatpush.msra.mxu0 0.0
    %1016 = vmatpush.msra.mxu0 0.0
    %1017 = vmatpush.msra.mxu0 %v160
    %1018 = vmatpush.msra.mxu0 %v158
    %1019 = vmatpush.msra.mxu0 %v156
    %1020 = vmatpush.msra.mxu0 %v154
    %1021 = vmatpush.msra.mxu0 %v152
    %1022 = vmatpush.msra.mxu0 %v150
    %1023 = vmatpush.msra.mxu0 %v148
    %1024 = vmatpush.msra.mxu0 %v146
    %1025 = vmatmul.f32.gmra.mxu0 %v987
    %v1026 = vpop.f32.mrf.mxu0
    %v1027 = vadd.f32 0.0, %v1026
    %1028 = vdwg.mxu0
    %v1029 = vadd.f32 %v985, %v1007
    %v1030 = vadd.f32 %v986, %v1027
    %v1031 = vld [vmem:[#allocation7 + $0x30] sm:$0xff]
    %v1032 = vld [vmem:[#allocation7 + $0x38] sm:$0xff]
    %v1033 = vsel %vm184, %v982, 0
    %1035 = vmatpush.msra.mxu0 0.0
    %1036 = vmatpush.msra.mxu0 0.0
    %1037 = vmatpush.msra.mxu0 0.0
    %1038 = vmatpush.msra.mxu0 0.0
    %1039 = vmatpush.msra.mxu0 0.0
    %1040 = vmatpush.msra.mxu0 0.0
    %1041 = vmatpush.msra.mxu0 0.0
    %1042 = vmatpush.msra.mxu0 0.0
    %1043 = vmatpush.msra.mxu0 %v176
    %1044 = vmatpush.msra.mxu0 %v174
    %1045 = vmatpush.msra.mxu0 %v172
    %1046 = vmatpush.msra.mxu0 %v170
    %1047 = vmatpush.msra.mxu0 %v168
    %1048 = vmatpush.msra.mxu0 %v166
    %1049 = vmatpush.msra.mxu0 %v164
    %1050 = vmatpush.msra.mxu0 %v162
    %1051 = vmatmul.f32.gmra.mxu0 %v1033
    %v1052 = vpop.f32.mrf.mxu0
    %v1053 = vadd.f32 0.0, %v1052
    %1054 = vdwg.mxu0
    %1055 = vmatpush.msra.mxu0 0.0
    %1056 = vmatpush.msra.mxu0 0.0
    %1057 = vmatpush.msra.mxu0 0.0
    %1058 = vmatpush.msra.mxu0 0.0
    %1059 = vmatpush.msra.mxu0 0.0
    %1060 = vmatpush.msra.mxu0 0.0
    %1061 = vmatpush.msra.mxu0 0.0
    %1062 = vmatpush.msra.mxu0 0.0
    %1063 = vmatpush.msra.mxu0 %v177
    %1064 = vmatpush.msra.mxu0 %v175
    %1065 = vmatpush.msra.mxu0 %v173
    %1066 = vmatpush.msra.mxu0 %v171
    %1067 = vmatpush.msra.mxu0 %v169
    %1068 = vmatpush.msra.mxu0 %v167
    %1069 = vmatpush.msra.mxu0 %v165
    %1070 = vmatpush.msra.mxu0 %v163
    %1071 = vmatmul.f32.gmra.mxu0 %v1033
    %v1072 = vpop.f32.mrf.mxu0
    %v1073 = vadd.f32 0.0, %v1072
    %1074 = vdwg.mxu0
    %v1075 = vadd.f32 %v1031, %v1053
    %v1076 = vadd.f32 %v1032, %v1073
    %v1077 = vxor.u32 %v1029, 2147483648
    %v1078 = vmul.f32 %v1077, 1.442695
    %v1079 = vpow.pop %v1078
    %v1080 = vadd.f32 %v1079, 1.0
    %v1081 = vrcp.pop %v1080
    %v1082 = vmul.f32 %v1080, %v1081
    %v1083 = vsub.f32 1.0, %v1082
    %v1084 = vmul.f32 %v1081, %v1083
    %v1085 = vadd.f32 %v1081, %v1084
    %vm1086 = vweird.f32 %v1080
    %vm1087 = vweird.f32 %v1081
    %vm1088 = vmor %vm1086, %vm1087
    %v1089 = vsel %vm1088, %v1081, %v1085
    %v1090 = vand.u32 2147483647, %v1080
    %vm1091 = vcmp.eq.f32.partialorder %v1090, 8.507059e+37
    %v1092 = vand.u32 %v1080, 2147483648
    %v1093 = vor.u32 1.1754944e-38, %v1092
    %v1094 = vsel %vm1091, %v1093, %v1089
    %v1095 = vmul.f32 1.0, %v1094
    %v1096 = vtanh.pop %v1030
    %v1097 = vxor.u32 %v1030, 2147483648
    %v1098 = vmul.f32 %v1097, 1.442695
    %v1099 = vpow.pop %v1098
    %v1100 = vadd.f32 %v1099, 1.0
    %v1101 = vrcp.pop %v1100
    %v1102 = vmul.f32 %v1100, %v1101
    %v1103 = vsub.f32 1.0, %v1102
    %v1104 = vmul.f32 %v1101, %v1103
    %v1105 = vadd.f32 %v1101, %v1104
    %vm1106 = vweird.f32 %v1100
    %vm1107 = vweird.f32 %v1101
    %vm1108 = vmor %vm1106, %vm1107
    %v1109 = vsel %vm1108, %v1101, %v1105
    %v1110 = vand.u32 2147483647, %v1100
    %vm1111 = vcmp.eq.f32.partialorder %v1110, 8.507059e+37
    %v1112 = vand.u32 %v1100, 2147483648
    %v1113 = vor.u32 1.1754944e-38, %v1112
    %v1114 = vsel %vm1111, %v1113, %v1109
    %v1115 = vmul.f32 1.0, %v1114
    %v1116 = vmul.f32 %v1095, %v924
    %v1117 = vmul.f32 %v1095, %v1096
    %1119 = vrot.lane.b32.xlu0 %v1117, 64
    %v1120 = vpop.permute.xlu0 %1119
    %v1122 = vadd.f32 %v1116, %v1120
    %v1123 = vtanh.pop %v1122
    %v1124 = vmul.f32 %v1115, %v1123
    %v1125 = vxor.u32 %v1075, 2147483648
    %v1126 = vmul.f32 %v1125, 1.442695
    %v1127 = vpow.pop %v1126
    %v1128 = vadd.f32 %v1127, 1.0
    %v1129 = vrcp.pop %v1128
    %v1130 = vmul.f32 %v1128, %v1129
    %v1131 = vsub.f32 1.0, %v1130
    %v1132 = vmul.f32 %v1129, %v1131
    %v1133 = vadd.f32 %v1129, %v1132
    %vm1134 = vweird.f32 %v1128
    %vm1135 = vweird.f32 %v1129
    %vm1136 = vmor %vm1134, %vm1135
    %v1137 = vsel %vm1136, %v1129, %v1133
    %v1138 = vand.u32 2147483647, %v1128
    %vm1139 = vcmp.eq.f32.partialorder %v1138, 8.507059e+37
    %v1140 = vand.u32 %v1128, 2147483648
    %v1141 = vor.u32 1.1754944e-38, %v1140
    %v1142 = vsel %vm1139, %v1141, %v1137
    %v1143 = vmul.f32 1.0, %v1142
    %v1144 = vtanh.pop %v1076
    %v1145 = vxor.u32 %v1076, 2147483648
    %v1146 = vmul.f32 %v1145, 1.442695
    %v1147 = vpow.pop %v1146
    %v1148 = vadd.f32 %v1147, 1.0
    %v1149 = vrcp.pop %v1148
    %v1150 = vmul.f32 %v1148, %v1149
    %v1151 = vsub.f32 1.0, %v1150
    %v1152 = vmul.f32 %v1149, %v1151
    %v1153 = vadd.f32 %v1149, %v1152
    %vm1154 = vweird.f32 %v1148
    %vm1155 = vweird.f32 %v1149
    %vm1156 = vmor %vm1154, %vm1155
    %v1157 = vsel %vm1156, %v1149, %v1153
    %v1158 = vand.u32 2147483647, %v1148
    %vm1159 = vcmp.eq.f32.partialorder %v1158, 8.507059e+37
    %v1160 = vand.u32 %v1148, 2147483648
    %v1161 = vor.u32 1.1754944e-38, %v1160
    %v1162 = vsel %vm1159, %v1161, %v1157
    %v1163 = vmul.f32 1.0, %v1162
    %v1164 = vmul.f32 %v1143, %v972
    %v1165 = vmul.f32 %v1143, %v1144
    %1167 = vrot.lane.b32.xlu0 %v1165, 64
    %v1168 = vpop.permute.xlu0 %1167
    %v1170 = vadd.f32 %v1164, %v1168
    %v1171 = vtanh.pop %v1170
    %v1172 = vmul.f32 %v1163, %v1171
    %1174 = vrot.lane.b32.xlu0 %v1124, 64
    %v1175 = vpop.permute.xlu0 %1174
    %1177 = vst.msk [vmem:[%s3 + $0x20] sm:$0xff] %vm184, %v1175
    %1179 = vrot.lane.b32.xlu0 %v1172, 64
    %v1180 = vpop.permute.xlu0 %1179
    %1182 = vst.msk [vmem:[%s133 + $0x18] sm:$0xff] %vm184, %v1180
    %v1183 = vld [vmem:[#allocation6 + $0x50] sm:$0xff]
    %v1184 = vld [vmem:[#allocation6 + $0x58] sm:$0xff]
    %v1185 = vsel %vm184, %v1175, 0
    %1187 = vmatpush.msra.mxu0 0.0
    %1188 = vmatpush.msra.mxu0 0.0
    %1189 = vmatpush.msra.mxu0 0.0
    %1190 = vmatpush.msra.mxu0 0.0
    %1191 = vmatpush.msra.mxu0 0.0
    %1192 = vmatpush.msra.mxu0 0.0
    %1193 = vmatpush.msra.mxu0 0.0
    %1194 = vmatpush.msra.mxu0 0.0
    %1195 = vmatpush.msra.mxu0 %v159
    %1196 = vmatpush.msra.mxu0 %v157
    %1197 = vmatpush.msra.mxu0 %v155
    %1198 = vmatpush.msra.mxu0 %v153
    %1199 = vmatpush.msra.mxu0 %v151
    %1200 = vmatpush.msra.mxu0 %v149
    %1201 = vmatpush.msra.mxu0 %v147
    %1202 = vmatpush.msra.mxu0 %v145
    %1203 = vmatmul.f32.gmra.mxu0 %v1185
    %v1204 = vpop.f32.mrf.mxu0
    %v1205 = vadd.f32 0.0, %v1204
    %1206 = vdwg.mxu0
    %1207 = vmatpush.msra.mxu0 0.0
    %1208 = vmatpush.msra.mxu0 0.0
    %1209 = vmatpush.msra.mxu0 0.0
    %1210 = vmatpush.msra.mxu0 0.0
    %1211 = vmatpush.msra.mxu0 0.0
    %1212 = vmatpush.msra.mxu0 0.0
    %1213 = vmatpush.msra.mxu0 0.0
    %1214 = vmatpush.msra.mxu0 0.0
    %1215 = vmatpush.msra.mxu0 %v160
    %1216 = vmatpush.msra.mxu0 %v158
    %1217 = vmatpush.msra.mxu0 %v156
    %1218 = vmatpush.msra.mxu0 %v154
    %1219 = vmatpush.msra.mxu0 %v152
    %1220 = vmatpush.msra.mxu0 %v150
    %1221 = vmatpush.msra.mxu0 %v148
    %1222 = vmatpush.msra.mxu0 %v146
    %1223 = vmatmul.f32.gmra.mxu0 %v1185
    %v1224 = vpop.f32.mrf.mxu0
    %v1225 = vadd.f32 0.0, %v1224
    %1226 = vdwg.mxu0
    %v1227 = vadd.f32 %v1183, %v1205
    %v1228 = vadd.f32 %v1184, %v1225
    %v1229 = vld [vmem:[#allocation7 + $0x20] sm:$0xff]
    %v1230 = vld [vmem:[#allocation7 + $0x28] sm:$0xff]
    %v1231 = vsel %vm184, %v1180, 0
    %1233 = vmatpush.msra.mxu0 0.0
    %1234 = vmatpush.msra.mxu0 0.0
    %1235 = vmatpush.msra.mxu0 0.0
    %1236 = vmatpush.msra.mxu0 0.0
    %1237 = vmatpush.msra.mxu0 0.0
    %1238 = vmatpush.msra.mxu0 0.0
    %1239 = vmatpush.msra.mxu0 0.0
    %1240 = vmatpush.msra.mxu0 0.0
    %1241 = vmatpush.msra.mxu0 %v176
    %1242 = vmatpush.msra.mxu0 %v174
    %1243 = vmatpush.msra.mxu0 %v172
    %1244 = vmatpush.msra.mxu0 %v170
    %1245 = vmatpush.msra.mxu0 %v168
    %1246 = vmatpush.msra.mxu0 %v166
    %1247 = vmatpush.msra.mxu0 %v164
    %1248 = vmatpush.msra.mxu0 %v162
    %1249 = vmatmul.f32.gmra.mxu0 %v1231
    %v1250 = vpop.f32.mrf.mxu0
    %v1251 = vadd.f32 0.0, %v1250
    %1252 = vdwg.mxu0
    %1253 = vmatpush.msra.mxu0 0.0
    %1254 = vmatpush.msra.mxu0 0.0
    %1255 = vmatpush.msra.mxu0 0.0
    %1256 = vmatpush.msra.mxu0 0.0
    %1257 = vmatpush.msra.mxu0 0.0
    %1258 = vmatpush.msra.mxu0 0.0
    %1259 = vmatpush.msra.mxu0 0.0
    %1260 = vmatpush.msra.mxu0 0.0
    %1261 = vmatpush.msra.mxu0 %v177
    %1262 = vmatpush.msra.mxu0 %v175
    %1263 = vmatpush.msra.mxu0 %v173
    %1264 = vmatpush.msra.mxu0 %v171
    %1265 = vmatpush.msra.mxu0 %v169
    %1266 = vmatpush.msra.mxu0 %v167
    %1267 = vmatpush.msra.mxu0 %v165
    %1268 = vmatpush.msra.mxu0 %v163
    %1269 = vmatmul.f32.gmra.mxu0 %v1231
    %v1270 = vpop.f32.mrf.mxu0
    %v1271 = vadd.f32 0.0, %v1270
    %1272 = vdwg.mxu0
    %v1273 = vadd.f32 %v1229, %v1251
    %v1274 = vadd.f32 %v1230, %v1271
    %v1275 = vxor.u32 %v1227, 2147483648
    %v1276 = vmul.f32 %v1275, 1.442695
    %v1277 = vpow.pop %v1276
    %v1278 = vadd.f32 %v1277, 1.0
    %v1279 = vrcp.pop %v1278
    %v1280 = vmul.f32 %v1278, %v1279
    %v1281 = vsub.f32 1.0, %v1280
    %v1282 = vmul.f32 %v1279, %v1281
    %v1283 = vadd.f32 %v1279, %v1282
    %vm1284 = vweird.f32 %v1278
    %vm1285 = vweird.f32 %v1279
    %vm1286 = vmor %vm1284, %vm1285
    %v1287 = vsel %vm1286, %v1279, %v1283
    %v1288 = vand.u32 2147483647, %v1278
    %vm1289 = vcmp.eq.f32.partialorder %v1288, 8.507059e+37
    %v1290 = vand.u32 %v1278, 2147483648
    %v1291 = vor.u32 1.1754944e-38, %v1290
    %v1292 = vsel %vm1289, %v1291, %v1287
    %v1293 = vmul.f32 1.0, %v1292
    %v1294 = vtanh.pop %v1228
    %v1295 = vxor.u32 %v1228, 2147483648
    %v1296 = vmul.f32 %v1295, 1.442695
    %v1297 = vpow.pop %v1296
    %v1298 = vadd.f32 %v1297, 1.0
    %v1299 = vrcp.pop %v1298
    %v1300 = vmul.f32 %v1298, %v1299
    %v1301 = vsub.f32 1.0, %v1300
    %v1302 = vmul.f32 %v1299, %v1301
    %v1303 = vadd.f32 %v1299, %v1302
    %vm1304 = vweird.f32 %v1298
    %vm1305 = vweird.f32 %v1299
    %vm1306 = vmor %vm1304, %vm1305
    %v1307 = vsel %vm1306, %v1299, %v1303
    %v1308 = vand.u32 2147483647, %v1298
    %vm1309 = vcmp.eq.f32.partialorder %v1308, 8.507059e+37
    %v1310 = vand.u32 %v1298, 2147483648
    %v1311 = vor.u32 1.1754944e-38, %v1310
    %v1312 = vsel %vm1309, %v1311, %v1307
    %v1313 = vmul.f32 1.0, %v1312
    %v1314 = vmul.f32 %v1293, %v1122
    %v1315 = vmul.f32 %v1293, %v1294
    %1317 = vrot.lane.b32.xlu0 %v1315, 64
    %v1318 = vpop.permute.xlu0 %1317
    %v1320 = vadd.f32 %v1314, %v1318
    %v1321 = vtanh.pop %v1320
    %v1322 = vmul.f32 %v1313, %v1321
    %v1323 = vxor.u32 %v1273, 2147483648
    %v1324 = vmul.f32 %v1323, 1.442695
    %v1325 = vpow.pop %v1324
    %v1326 = vadd.f32 %v1325, 1.0
    %v1327 = vrcp.pop %v1326
    %v1328 = vmul.f32 %v1326, %v1327
    %v1329 = vsub.f32 1.0, %v1328
    %v1330 = vmul.f32 %v1327, %v1329
    %v1331 = vadd.f32 %v1327, %v1330
    %vm1332 = vweird.f32 %v1326
    %vm1333 = vweird.f32 %v1327
    %vm1334 = vmor %vm1332, %vm1333
    %v1335 = vsel %vm1334, %v1327, %v1331
    %v1336 = vand.u32 2147483647, %v1326
    %vm1337 = vcmp.eq.f32.partialorder %v1336, 8.507059e+37
    %v1338 = vand.u32 %v1326, 2147483648
    %v1339 = vor.u32 1.1754944e-38, %v1338
    %v1340 = vsel %vm1337, %v1339, %v1335
    %v1341 = vmul.f32 1.0, %v1340
    %v1342 = vtanh.pop %v1274
    %v1343 = vxor.u32 %v1274, 2147483648
    %v1344 = vmul.f32 %v1343, 1.442695
    %v1345 = vpow.pop %v1344
    %v1346 = vadd.f32 %v1345, 1.0
    %v1347 = vrcp.pop %v1346
    %v1348 = vmul.f32 %v1346, %v1347
    %v1349 = vsub.f32 1.0, %v1348
    %v1350 = vmul.f32 %v1347, %v1349
    %v1351 = vadd.f32 %v1347, %v1350
    %vm1352 = vweird.f32 %v1346
    %vm1353 = vweird.f32 %v1347
    %vm1354 = vmor %vm1352, %vm1353
    %v1355 = vsel %vm1354, %v1347, %v1351
    %v1356 = vand.u32 2147483647, %v1346
    %vm1357 = vcmp.eq.f32.partialorder %v1356, 8.507059e+37
    %v1358 = vand.u32 %v1346, 2147483648
    %v1359 = vor.u32 1.1754944e-38, %v1358
    %v1360 = vsel %vm1357, %v1359, %v1355
    %v1361 = vmul.f32 1.0, %v1360
    %v1362 = vmul.f32 %v1341, %v1170
    %v1363 = vmul.f32 %v1341, %v1342
    %1365 = vrot.lane.b32.xlu0 %v1363, 64
    %v1366 = vpop.permute.xlu0 %1365
    %v1368 = vadd.f32 %v1362, %v1366
    %v1369 = vtanh.pop %v1368
    %v1370 = vmul.f32 %v1361, %v1369
    %1372 = vrot.lane.b32.xlu0 %v1322, 64
    %v1373 = vpop.permute.xlu0 %1372
    %1375 = vst.msk [vmem:[%s3 + $0x28] sm:$0xff] %vm184, %v1373
    %1377 = vrot.lane.b32.xlu0 %v1370, 64
    %v1378 = vpop.permute.xlu0 %1377
    %1380 = vst.msk [vmem:[%s133 + $0x10] sm:$0xff] %vm184, %v1378
    %v1381 = vld [vmem:[#allocation6 + $0x60] sm:$0xff]
    %v1382 = vld [vmem:[#allocation6 + $0x68] sm:$0xff]
    %v1383 = vsel %vm184, %v1373, 0
    %1385 = vmatpush.msra.mxu0 0.0
    %1386 = vmatpush.msra.mxu0 0.0
    %1387 = vmatpush.msra.mxu0 0.0
    %1388 = vmatpush.msra.mxu0 0.0
    %1389 = vmatpush.msra.mxu0 0.0
    %1390 = vmatpush.msra.mxu0 0.0
    %1391 = vmatpush.msra.mxu0 0.0
    %1392 = vmatpush.msra.mxu0 0.0
    %1393 = vmatpush.msra.mxu0 %v159
    %1394 = vmatpush.msra.mxu0 %v157
    %1395 = vmatpush.msra.mxu0 %v155
    %1396 = vmatpush.msra.mxu0 %v153
    %1397 = vmatpush.msra.mxu0 %v151
    %1398 = vmatpush.msra.mxu0 %v149
    %1399 = vmatpush.msra.mxu0 %v147
    %1400 = vmatpush.msra.mxu0 %v145
    %1401 = vmatmul.f32.gmra.mxu0 %v1383
    %v1402 = vpop.f32.mrf.mxu0
    %v1403 = vadd.f32 0.0, %v1402
    %1404 = vdwg.mxu0
    %1405 = vmatpush.msra.mxu0 0.0
    %1406 = vmatpush.msra.mxu0 0.0
    %1407 = vmatpush.msra.mxu0 0.0
    %1408 = vmatpush.msra.mxu0 0.0
    %1409 = vmatpush.msra.mxu0 0.0
    %1410 = vmatpush.msra.mxu0 0.0
    %1411 = vmatpush.msra.mxu0 0.0
    %1412 = vmatpush.msra.mxu0 0.0
    %1413 = vmatpush.msra.mxu0 %v160
    %1414 = vmatpush.msra.mxu0 %v158
    %1415 = vmatpush.msra.mxu0 %v156
    %1416 = vmatpush.msra.mxu0 %v154
    %1417 = vmatpush.msra.mxu0 %v152
    %1418 = vmatpush.msra.mxu0 %v150
    %1419 = vmatpush.msra.mxu0 %v148
    %1420 = vmatpush.msra.mxu0 %v146
    %1421 = vmatmul.f32.gmra.mxu0 %v1383
    %v1422 = vpop.f32.mrf.mxu0
    %v1423 = vadd.f32 0.0, %v1422
    %1424 = vdwg.mxu0
    %v1425 = vadd.f32 %v1381, %v1403
    %v1426 = vadd.f32 %v1382, %v1423
    %v1427 = vld [vmem:[#allocation7 + $0x10] sm:$0xff]
    %v1428 = vld [vmem:[#allocation7 + $0x18] sm:$0xff]
    %v1429 = vsel %vm184, %v1378, 0
    %1431 = vmatpush.msra.mxu0 0.0
    %1432 = vmatpush.msra.mxu0 0.0
    %1433 = vmatpush.msra.mxu0 0.0
    %1434 = vmatpush.msra.mxu0 0.0
    %1435 = vmatpush.msra.mxu0 0.0
    %1436 = vmatpush.msra.mxu0 0.0
    %1437 = vmatpush.msra.mxu0 0.0
    %1438 = vmatpush.msra.mxu0 0.0
    %1439 = vmatpush.msra.mxu0 %v176
    %1440 = vmatpush.msra.mxu0 %v174
    %1441 = vmatpush.msra.mxu0 %v172
    %1442 = vmatpush.msra.mxu0 %v170
    %1443 = vmatpush.msra.mxu0 %v168
    %1444 = vmatpush.msra.mxu0 %v166
    %1445 = vmatpush.msra.mxu0 %v164
    %1446 = vmatpush.msra.mxu0 %v162
    %1447 = vmatmul.f32.gmra.mxu0 %v1429
    %v1448 = vpop.f32.mrf.mxu0
    %v1449 = vadd.f32 0.0, %v1448
    %1450 = vdwg.mxu0
    %1451 = vmatpush.msra.mxu0 0.0
    %1452 = vmatpush.msra.mxu0 0.0
    %1453 = vmatpush.msra.mxu0 0.0
    %1454 = vmatpush.msra.mxu0 0.0
    %1455 = vmatpush.msra.mxu0 0.0
    %1456 = vmatpush.msra.mxu0 0.0
    %1457 = vmatpush.msra.mxu0 0.0
    %1458 = vmatpush.msra.mxu0 0.0
    %1459 = vmatpush.msra.mxu0 %v177
    %1460 = vmatpush.msra.mxu0 %v175
    %1461 = vmatpush.msra.mxu0 %v173
    %1462 = vmatpush.msra.mxu0 %v171
    %1463 = vmatpush.msra.mxu0 %v169
    %1464 = vmatpush.msra.mxu0 %v167
    %1465 = vmatpush.msra.mxu0 %v165
    %1466 = vmatpush.msra.mxu0 %v163
    %1467 = vmatmul.f32.gmra.mxu0 %v1429
    %v1468 = vpop.f32.mrf.mxu0
    %v1469 = vadd.f32 0.0, %v1468
    %1470 = vdwg.mxu0
    %v1471 = vadd.f32 %v1427, %v1449
    %v1472 = vadd.f32 %v1428, %v1469
    %v1473 = vxor.u32 %v1425, 2147483648
    %v1474 = vmul.f32 %v1473, 1.442695
    %v1475 = vpow.pop %v1474
    %v1476 = vadd.f32 %v1475, 1.0
    %v1477 = vrcp.pop %v1476
    %v1478 = vmul.f32 %v1476, %v1477
    %v1479 = vsub.f32 1.0, %v1478
    %v1480 = vmul.f32 %v1477, %v1479
    %v1481 = vadd.f32 %v1477, %v1480
    %vm1482 = vweird.f32 %v1476
    %vm1483 = vweird.f32 %v1477
    %vm1484 = vmor %vm1482, %vm1483
    %v1485 = vsel %vm1484, %v1477, %v1481
    %v1486 = vand.u32 2147483647, %v1476
    %vm1487 = vcmp.eq.f32.partialorder %v1486, 8.507059e+37
    %v1488 = vand.u32 %v1476, 2147483648
    %v1489 = vor.u32 1.1754944e-38, %v1488
    %v1490 = vsel %vm1487, %v1489, %v1485
    %v1491 = vmul.f32 1.0, %v1490
    %v1492 = vtanh.pop %v1426
    %v1493 = vxor.u32 %v1426, 2147483648
    %v1494 = vmul.f32 %v1493, 1.442695
    %v1495 = vpow.pop %v1494
    %v1496 = vadd.f32 %v1495, 1.0
    %v1497 = vrcp.pop %v1496
    %v1498 = vmul.f32 %v1496, %v1497
    %v1499 = vsub.f32 1.0, %v1498
    %v1500 = vmul.f32 %v1497, %v1499
    %v1501 = vadd.f32 %v1497, %v1500
    %vm1502 = vweird.f32 %v1496
    %vm1503 = vweird.f32 %v1497
    %vm1504 = vmor %vm1502, %vm1503
    %v1505 = vsel %vm1504, %v1497, %v1501
    %v1506 = vand.u32 2147483647, %v1496
    %vm1507 = vcmp.eq.f32.partialorder %v1506, 8.507059e+37
    %v1508 = vand.u32 %v1496, 2147483648
    %v1509 = vor.u32 1.1754944e-38, %v1508
    %v1510 = vsel %vm1507, %v1509, %v1505
    %v1511 = vmul.f32 1.0, %v1510
    %v1512 = vmul.f32 %v1491, %v1320
    %v1513 = vmul.f32 %v1491, %v1492
    %1515 = vrot.lane.b32.xlu0 %v1513, 64
    %v1516 = vpop.permute.xlu0 %1515
    %v1518 = vadd.f32 %v1512, %v1516
    %v1519 = vtanh.pop %v1518
    %v1520 = vmul.f32 %v1511, %v1519
    %v1521 = vxor.u32 %v1471, 2147483648
    %v1522 = vmul.f32 %v1521, 1.442695
    %v1523 = vpow.pop %v1522
    %v1524 = vadd.f32 %v1523, 1.0
    %v1525 = vrcp.pop %v1524
    %v1526 = vmul.f32 %v1524, %v1525
    %v1527 = vsub.f32 1.0, %v1526
    %v1528 = vmul.f32 %v1525, %v1527
    %v1529 = vadd.f32 %v1525, %v1528
    %vm1530 = vweird.f32 %v1524
    %vm1531 = vweird.f32 %v1525
    %vm1532 = vmor %vm1530, %vm1531
    %v1533 = vsel %vm1532, %v1525, %v1529
    %v1534 = vand.u32 2147483647, %v1524
    %vm1535 = vcmp.eq.f32.partialorder %v1534, 8.507059e+37
    %v1536 = vand.u32 %v1524, 2147483648
    %v1537 = vor.u32 1.1754944e-38, %v1536
    %v1538 = vsel %vm1535, %v1537, %v1533
    %v1539 = vmul.f32 1.0, %v1538
    %v1540 = vtanh.pop %v1472
    %v1541 = vxor.u32 %v1472, 2147483648
    %v1542 = vmul.f32 %v1541, 1.442695
    %v1543 = vpow.pop %v1542
    %v1544 = vadd.f32 %v1543, 1.0
    %v1545 = vrcp.pop %v1544
    %v1546 = vmul.f32 %v1544, %v1545
    %v1547 = vsub.f32 1.0, %v1546
    %v1548 = vmul.f32 %v1545, %v1547
    %v1549 = vadd.f32 %v1545, %v1548
    %vm1550 = vweird.f32 %v1544
    %vm1551 = vweird.f32 %v1545
    %vm1552 = vmor %vm1550, %vm1551
    %v1553 = vsel %vm1552, %v1545, %v1549
    %v1554 = vand.u32 2147483647, %v1544
    %vm1555 = vcmp.eq.f32.partialorder %v1554, 8.507059e+37
    %v1556 = vand.u32 %v1544, 2147483648
    %v1557 = vor.u32 1.1754944e-38, %v1556
    %v1558 = vsel %vm1555, %v1557, %v1553
    %v1559 = vmul.f32 1.0, %v1558
    %v1560 = vmul.f32 %v1539, %v1368
    %v1561 = vmul.f32 %v1539, %v1540
    %1563 = vrot.lane.b32.xlu0 %v1561, 64
    %v1564 = vpop.permute.xlu0 %1563
    %v1566 = vadd.f32 %v1560, %v1564
    %v1567 = vtanh.pop %v1566
    %v1568 = vmul.f32 %v1559, %v1567
    %1570 = vrot.lane.b32.xlu0 %v1520, 64
    %v1571 = vpop.permute.xlu0 %1570
    %1573 = vst.msk [vmem:[%s3 + $0x30] sm:$0xff] %vm184, %v1571
    %1575 = vrot.lane.b32.xlu0 %v1568, 64
    %v1576 = vpop.permute.xlu0 %1575
    %1578 = vst.msk [vmem:[%s133 + $0x8] sm:$0xff] %vm184, %v1576
    %v1579 = vld [vmem:[#allocation6 + $0x70] sm:$0xff]
    %v1580 = vld [vmem:[#allocation6 + $0x78] sm:$0xff]
    %v1581 = vsel %vm184, %v1571, 0
    %1583 = vmatpush.msra.mxu0 0.0
    %1584 = vmatpush.msra.mxu0 0.0
    %1585 = vmatpush.msra.mxu0 0.0
    %1586 = vmatpush.msra.mxu0 0.0
    %1587 = vmatpush.msra.mxu0 0.0
    %1588 = vmatpush.msra.mxu0 0.0
    %1589 = vmatpush.msra.mxu0 0.0
    %1590 = vmatpush.msra.mxu0 0.0
    %1591 = vmatpush.msra.mxu0 %v159
    %1592 = vmatpush.msra.mxu0 %v157
    %1593 = vmatpush.msra.mxu0 %v155
    %1594 = vmatpush.msra.mxu0 %v153
    %1595 = vmatpush.msra.mxu0 %v151
    %1596 = vmatpush.msra.mxu0 %v149
    %1597 = vmatpush.msra.mxu0 %v147
    %1598 = vmatpush.msra.mxu0 %v145
    %1599 = vmatmul.f32.gmra.mxu0 %v1581
    %v1600 = vpop.f32.mrf.mxu0
    %v1601 = vadd.f32 0.0, %v1600
    %1602 = vdwg.mxu0
    %1603 = vmatpush.msra.mxu0 0.0
    %1604 = vmatpush.msra.mxu0 0.0
    %1605 = vmatpush.msra.mxu0 0.0
    %1606 = vmatpush.msra.mxu0 0.0
    %1607 = vmatpush.msra.mxu0 0.0
    %1608 = vmatpush.msra.mxu0 0.0
    %1609 = vmatpush.msra.mxu0 0.0
    %1610 = vmatpush.msra.mxu0 0.0
    %1611 = vmatpush.msra.mxu0 %v160
    %1612 = vmatpush.msra.mxu0 %v158
    %1613 = vmatpush.msra.mxu0 %v156
    %1614 = vmatpush.msra.mxu0 %v154
    %1615 = vmatpush.msra.mxu0 %v152
    %1616 = vmatpush.msra.mxu0 %v150
    %1617 = vmatpush.msra.mxu0 %v148
    %1618 = vmatpush.msra.mxu0 %v146
    %1619 = vmatmul.f32.gmra.mxu0 %v1581
    %v1620 = vpop.f32.mrf.mxu0
    %v1621 = vadd.f32 0.0, %v1620
    %1622 = vdwg.mxu0
    %v1623 = vadd.f32 %v1579, %v1601
    %v1624 = vadd.f32 %v1580, %v1621
    %v1625 = vld [vmem:[#allocation7] sm:$0xff]
    %v1626 = vld [vmem:[#allocation7 + $0x8] sm:$0xff]
    %v1627 = vsel %vm184, %v1576, 0
    %1629 = vmatpush.msra.mxu0 0.0
    %1630 = vmatpush.msra.mxu0 0.0
    %1631 = vmatpush.msra.mxu0 0.0
    %1632 = vmatpush.msra.mxu0 0.0
    %1633 = vmatpush.msra.mxu0 0.0
    %1634 = vmatpush.msra.mxu0 0.0
    %1635 = vmatpush.msra.mxu0 0.0
    %1636 = vmatpush.msra.mxu0 0.0
    %1637 = vmatpush.msra.mxu0 %v176
    %1638 = vmatpush.msra.mxu0 %v174
    %1639 = vmatpush.msra.mxu0 %v172
    %1640 = vmatpush.msra.mxu0 %v170
    %1641 = vmatpush.msra.mxu0 %v168
    %1642 = vmatpush.msra.mxu0 %v166
    %1643 = vmatpush.msra.mxu0 %v164
    %1644 = vmatpush.msra.mxu0 %v162
    %1645 = vmatmul.f32.gmra.mxu0 %v1627
    %v1646 = vpop.f32.mrf.mxu0
    %v1647 = vadd.f32 0.0, %v1646
    %1648 = vdwg.mxu0
    %1649 = vmatpush.msra.mxu0 0.0
    %1650 = vmatpush.msra.mxu0 0.0
    %1651 = vmatpush.msra.mxu0 0.0
    %1652 = vmatpush.msra.mxu0 0.0
    %1653 = vmatpush.msra.mxu0 0.0
    %1654 = vmatpush.msra.mxu0 0.0
    %1655 = vmatpush.msra.mxu0 0.0
    %1656 = vmatpush.msra.mxu0 0.0
    %1657 = vmatpush.msra.mxu0 %v177
    %1658 = vmatpush.msra.mxu0 %v175
    %1659 = vmatpush.msra.mxu0 %v173
    %1660 = vmatpush.msra.mxu0 %v171
    %1661 = vmatpush.msra.mxu0 %v169
    %1662 = vmatpush.msra.mxu0 %v167
    %1663 = vmatpush.msra.mxu0 %v165
    %1664 = vmatpush.msra.mxu0 %v163
    %1665 = vmatmul.f32.gmra.mxu0 %v1627
    %v1666 = vpop.f32.mrf.mxu0
    %v1667 = vadd.f32 0.0, %v1666
    %1668 = vdwg.mxu0
    %v1669 = vadd.f32 %v1625, %v1647
    %v1670 = vadd.f32 %v1626, %v1667
    %v1671 = vxor.u32 %v1623, 2147483648
    %v1672 = vmul.f32 %v1671, 1.442695
    %v1673 = vpow.pop %v1672
    %v1674 = vadd.f32 %v1673, 1.0
    %v1675 = vrcp.pop %v1674
    %v1676 = vmul.f32 %v1674, %v1675
    %v1677 = vsub.f32 1.0, %v1676
    %v1678 = vmul.f32 %v1675, %v1677
    %v1679 = vadd.f32 %v1675, %v1678
    %vm1680 = vweird.f32 %v1674
    %vm1681 = vweird.f32 %v1675
    %vm1682 = vmor %vm1680, %vm1681
    %v1683 = vsel %vm1682, %v1675, %v1679
    %v1684 = vand.u32 2147483647, %v1674
    %vm1685 = vcmp.eq.f32.partialorder %v1684, 8.507059e+37
    %v1686 = vand.u32 %v1674, 2147483648
    %v1687 = vor.u32 1.1754944e-38, %v1686
    %v1688 = vsel %vm1685, %v1687, %v1683
    %v1689 = vmul.f32 1.0, %v1688
    %v1690 = vtanh.pop %v1624
    %v1691 = vxor.u32 %v1624, 2147483648
    %v1692 = vmul.f32 %v1691, 1.442695
    %v1693 = vpow.pop %v1692
    %v1694 = vadd.f32 %v1693, 1.0
    %v1695 = vrcp.pop %v1694
    %v1696 = vmul.f32 %v1694, %v1695
    %v1697 = vsub.f32 1.0, %v1696
    %v1698 = vmul.f32 %v1695, %v1697
    %v1699 = vadd.f32 %v1695, %v1698
    %vm1700 = vweird.f32 %v1694
    %vm1701 = vweird.f32 %v1695
    %vm1702 = vmor %vm1700, %vm1701
    %v1703 = vsel %vm1702, %v1695, %v1699
    %v1704 = vand.u32 2147483647, %v1694
    %vm1705 = vcmp.eq.f32.partialorder %v1704, 8.507059e+37
    %v1706 = vand.u32 %v1694, 2147483648
    %v1707 = vor.u32 1.1754944e-38, %v1706
    %v1708 = vsel %vm1705, %v1707, %v1703
    %v1709 = vmul.f32 1.0, %v1708
    %v1710 = vmul.f32 %v1689, %v1518
    %v1711 = vmul.f32 %v1689, %v1690
    %1713 = vrot.lane.b32.xlu0 %v1711, 64
    %v1714 = vpop.permute.xlu0 %1713
    %v1716 = vadd.f32 %v1710, %v1714
    %v1717 = vtanh.pop %v1716
    %v1718 = vmul.f32 %v1709, %v1717
    %v1719 = vxor.u32 %v1669, 2147483648
    %v1720 = vmul.f32 %v1719, 1.442695
    %v1721 = vpow.pop %v1720
    %v1722 = vadd.f32 %v1721, 1.0
    %v1723 = vrcp.pop %v1722
    %v1724 = vmul.f32 %v1722, %v1723
    %v1725 = vsub.f32 1.0, %v1724
    %v1726 = vmul.f32 %v1723, %v1725
    %v1727 = vadd.f32 %v1723, %v1726
    %vm1728 = vweird.f32 %v1722
    %vm1729 = vweird.f32 %v1723
    %vm1730 = vmor %vm1728, %vm1729
    %v1731 = vsel %vm1730, %v1723, %v1727
    %v1732 = vand.u32 2147483647, %v1722
    %vm1733 = vcmp.eq.f32.partialorder %v1732, 8.507059e+37
    %v1734 = vand.u32 %v1722, 2147483648
    %v1735 = vor.u32 1.1754944e-38, %v1734
    %v1736 = vsel %vm1733, %v1735, %v1731
    %v1737 = vmul.f32 1.0, %v1736
    %v1738 = vtanh.pop %v1670
    %v1739 = vxor.u32 %v1670, 2147483648
    %v1740 = vmul.f32 %v1739, 1.442695
    %v1741 = vpow.pop %v1740
    %v1742 = vadd.f32 %v1741, 1.0
    %v1743 = vrcp.pop %v1742
    %v1744 = vmul.f32 %v1742, %v1743
    %v1745 = vsub.f32 1.0, %v1744
    %v1746 = vmul.f32 %v1743, %v1745
    %v1747 = vadd.f32 %v1743, %v1746
    %vm1748 = vweird.f32 %v1742
    %vm1749 = vweird.f32 %v1743
    %vm1750 = vmor %vm1748, %vm1749
    %v1751 = vsel %vm1750, %v1743, %v1747
    %v1752 = vand.u32 2147483647, %v1742
    %vm1753 = vcmp.eq.f32.partialorder %v1752, 8.507059e+37
    %v1754 = vand.u32 %v1742, 2147483648
    %v1755 = vor.u32 1.1754944e-38, %v1754
    %v1756 = vsel %vm1753, %v1755, %v1751
    %v1757 = vmul.f32 1.0, %v1756
    %v1758 = vmul.f32 %v1737, %v1566
    %v1759 = vmul.f32 %v1737, %v1738
    %1761 = vrot.lane.b32.xlu0 %v1759, 64
    %v1762 = vpop.permute.xlu0 %1761
    %v1764 = vadd.f32 %v1758, %v1762
    %v1765 = vtanh.pop %v1764
    %v1766 = vmul.f32 %v1757, %v1765
    %1768 = vrot.lane.b32.xlu0 %v1718, 64
    %v1769 = vpop.permute.xlu0 %1768
    %1771 = vst.msk [vmem:[%s3 + $0x38] sm:$0xff] %vm184, %v1769
    %1773 = vrot.lane.b32.xlu0 %v1766, 64
    %v1774 = vpop.permute.xlu0 %1773
    %1776 = vst.msk [vmem:[%s133] sm:$0xff] %vm184, %v1774
    %1777 = vst.msk [vmem:[#allocation2] sm:$0xff] %vm184, %v1769
    %1779 = vrot.lane.b32.xlu0 %v1716, 64
    %v1780 = vpop.permute.xlu0 %1779
    %1782 = vst.msk [vmem:[#allocation3] sm:$0xff] %vm184, %v1780
    %1783 = vst.msk [vmem:[#allocation4] sm:$0xff] %vm184, %v1774
    %1785 = vrot.lane.b32.xlu0 %v1764, 64
    %v1786 = vpop.permute.xlu0 %1785
    %1788 = vst.msk [vmem:[#allocation5] sm:$0xff] %vm184, %v1786
    %s1789 = ssub.s32 0, 0
    %s1790 = smul.u32 8, %s1789
    %p1791 = scmp.lt.s32.totalorder %s1790, 7
    %s1792 = scalar_select %p1791, %s1790, 7
    %s1793 = smul.addr %s1792, 8
    %s1794 = scalar_lea.vmem %s4, %s1793
    // Predicated region
    $region64: #{imdb_forward.5} parent=1 // pred_check
      _
    $region65: #{imdb_forward.5} parent=1 // pred_check_branch
      %1796 = sbr.rel (0) target = $region67
    $region66: #{imdb_forward.5} parent=1 // pred_region
      _
    $region67: #{imdb_forward.5} parent=1 // pred_fallthru
      _
    // Predicated region
    $region68: #{imdb_forward.5} parent=1 // pred_check
      _
    $region69: #{imdb_forward.5} parent=1 // pred_check_branch
      %1798 = sbr.rel (0) target = $region71
    $region70: #{imdb_forward.5} parent=1 // pred_region
      %s1799 = ssub.s32 0, 0
      %s1800 = smul.u32 8, %s1799
    $region71: #{imdb_forward.5} parent=1 // pred_fallthru
      _
    // Predicated region
    $region72: #{imdb_forward.5} parent=1 // pred_check
      _
    $region73: #{imdb_forward.5} parent=1 // pred_check_branch
      %1802 = sbr.rel (0) target = $region75
    $region74: #{imdb_forward.5} parent=1 // pred_region
      _
    $region75: #{imdb_forward.5} parent=1 // pred_fallthru
      _
    // Predicated region
    $region76: #{imdb_forward.5} parent=1 // pred_check
      _
    $region77: #{imdb_forward.5} parent=1 // pred_check_branch
      %1804 = sbr.rel (0) target = $region79
    $region78: #{imdb_forward.5} parent=1 // pred_region
      %s1805 = ssub.s32 0, 0
      %s1806 = smul.u32 8, %s1805
      %p1807 = scmp.lt.s32.totalorder %s1806, 7
      %s1808 = scalar_select %p1807, %s1806, 7
      %s1809 = smul.addr %s1808, 8
      %s1810 = scalar_lea.vmem %s4, %s1809
    $region79: #{imdb_forward.5} parent=1 // pred_fallthru
      _

// kernel: imdb_forward.7
$region0: #{imdb_forward.7}
  #allocation0 [shape = 'u32[]', space=smem, size = 0x4, offset = 0x4, fixed_abs, tag = 'smem constant byte address 0x4 - core index']
  #allocation1 [shape = 'u32[72,128]{1,0:T(1,128)}', space=vmem, size = 0x9000, scoped, tag = 'internal scratch']
  #allocation2 [shape = 'f32[8,64]{1,0:T(8,128)}', space=vmem, size = 0x1000, scoped, tag = 'scratch operand']
  #allocation3 [shape = 'f32[8,64]{1,0:T(8,128)}', space=vmem, size = 0x1000, scoped, tag = 'scratch operand']
  #allocation4 [shape = 'f32[8,64]{1,0:T(8,128)}', space=vmem, size = 0x1000, scoped, tag = 'scratch operand']
  #allocation5 [shape = 'f32[8,64]{1,0:T(8,128)}', space=vmem, size = 0x1000, scoped, tag = 'scratch operand']
  %s0 = inlined_call_operand.vmem [shape: f32[64,512], index: 0, kind: input, shape index: {}, may-alias: {0,1}]
  %s1 = inlined_call_operand.vmem [shape: f32[64,512], index: 1, kind: input, shape index: {}, may-alias: {0,1}]
  %s2 = inlined_call_operand.vmem [shape: f32[2,64,256], index: 2, kind: input, shape index: {}]
  %s3 = inlined_call_operand.vmem [shape: f32[128,64], index: 3, kind: input, shape index: {}]
  %s4 = inlined_call_operand.vmem [shape: f32[1,64], index: 4, kind: input, shape index: {}]
  %s5 = inlined_call_operand.vmem [shape: f32[64,2], index: 5, kind: input, shape index: {}]
  %s6 = inlined_call_operand.vmem [shape: f32[1,2], index: 6, kind: input, shape index: {}]
  %s7 = inlined_call_operand.vmem [shape: f32[8,2], index: 7, kind: output, shape index: {}]
  %s8 = sld [smem:[#allocation0]]
  $region92: #{imdb_forward.7} parent=0
    _
  %s10 = ssub.s32 1, %s8
  %s11 = scalar_select 0, %s10, %s8
  $region1: #{imdb_forward.7} parent=0
    #allocation6 [shape = 'u8[65536]{0}', space=vmem, size = 0x10000, scoped, tag = 'input window, operand 0, single buffered']
    #allocation7 [shape = 'u8[65536]{0}', space=vmem, size = 0x10000, scoped, tag = 'input window, operand 1, single buffered']
    // Predicated region
    $region2: #{imdb_forward.7} parent=1 // pred_check
      _
    $region3: #{imdb_forward.7} parent=1 // pred_check_branch
      %13 = sbr.rel (0) target = $region5
    $region4: #{imdb_forward.7} parent=1 // pred_region
      // Predicated region
      $region6: #{imdb_forward.7} parent=4 // pred_check
        _
      $region7: #{imdb_forward.7} parent=4 // pred_check_branch
        %15 = sbr.rel (0) target = $region9
      $region8: #{imdb_forward.7} parent=4 // pred_region
        // Predicated region
        $region10: #{imdb_forward.7} parent=8 // pred_check
          _
        $region11: #{imdb_forward.7} parent=8 // pred_check_branch
          %17 = sbr.rel (0) target = $region13
        $region12: #{imdb_forward.7} parent=8 // pred_region
          loop: start=0, step=1, limit=1
          $region14: #{imdb_forward.7} parent=12 // loop_pre_header
            _
          $region15: #{imdb_forward.7} parent=12 // loop_header
            %s19 = sphi 0, %s23
            %p20 = scmp.ge.s32.totalorder %s19, 1
            %s24 = sphi %s0, %s0
            %s25 = sphi [#allocation6], [#allocation6]
          $region16: #{imdb_forward.7} parent=12 // loop_header_branch
            %22 = sbr.rel (%p20) target = $region20
          $region17: #{imdb_forward.7} parent=12 // loop_body
            %v26 = vld [vmem:[%s24] sm:$0xff]
            %27 = vst [vmem:[%s25] sm:$0xff] %v26
            %v28 = vld [vmem:[%s24 + $0x8] sm:$0xff]
            %29 = vst [vmem:[%s25 + $0x8] sm:$0xff] %v28
            %v30 = vld [vmem:[%s24 + $0x20] sm:$0xff]
            %31 = vst [vmem:[%s25 + $0x10] sm:$0xff] %v30
            %v32 = vld [vmem:[%s24 + $0x28] sm:$0xff]
            %33 = vst [vmem:[%s25 + $0x18] sm:$0xff] %v32
            %v34 = vld [vmem:[%s24 + $0x40] sm:$0xff]
            %35 = vst [vmem:[%s25 + $0x20] sm:$0xff] %v34
            %v36 = vld [vmem:[%s24 + $0x48] sm:$0xff]
            %37 = vst [vmem:[%s25 + $0x28] sm:$0xff] %v36
            %v38 = vld [vmem:[%s24 + $0x60] sm:$0xff]
            %39 = vst [vmem:[%s25 + $0x30] sm:$0xff] %v38
            %v40 = vld [vmem:[%s24 + $0x68] sm:$0xff]
            %41 = vst [vmem:[%s25 + $0x38] sm:$0xff] %v40
            %v42 = vld [vmem:[%s24 + $0x80] sm:$0xff]
            %43 = vst [vmem:[%s25 + $0x40] sm:$0xff] %v42
            %v44 = vld [vmem:[%s24 + $0x88] sm:$0xff]
            %45 = vst [vmem:[%s25 + $0x48] sm:$0xff] %v44
            %v46 = vld [vmem:[%s24 + $0xa0] sm:$0xff]
            %47 = vst [vmem:[%s25 + $0x50] sm:$0xff] %v46
            %v48 = vld [vmem:[%s24 + $0xa8] sm:$0xff]
            %49 = vst [vmem:[%s25 + $0x58] sm:$0xff] %v48
            %v50 = vld [vmem:[%s24 + $0xc0] sm:$0xff]
            %51 = vst [vmem:[%s25 + $0x60] sm:$0xff] %v50
            %v52 = vld [vmem:[%s24 + $0xc8] sm:$0xff]
            %53 = vst [vmem:[%s25 + $0x68] sm:$0xff] %v52
            %v54 = vld [vmem:[%s24 + $0xe0] sm:$0xff]
            %55 = vst [vmem:[%s25 + $0x70] sm:$0xff] %v54
            %v56 = vld [vmem:[%s24 + $0xe8] sm:$0xff]
            %57 = vst [vmem:[%s25 + $0x78] sm:$0xff] %v56
          $region18: #{imdb_forward.7} parent=12 // loop_footer
            %s23 = sadd.s32 1, %s19
          $region19: #{imdb_forward.7} parent=12 // loop_footer_branch
            %18 = sbr.rel target = $region15
          $region20: #{imdb_forward.7} parent=12 // loop_exit
            _
        $region13: #{imdb_forward.7} parent=8 // pred_fallthru
          _
        // Predicated region
        $region21: #{imdb_forward.7} parent=8 // pred_check
          _
        $region22: #{imdb_forward.7} parent=8 // pred_check_branch
          %59 = sbr.rel target = $region24
        $region23: #{imdb_forward.7} parent=8 // pred_region
          _
        $region24: #{imdb_forward.7} parent=8 // pred_fallthru
          _
      $region9: #{imdb_forward.7} parent=4 // pred_fallthru
        _
      %60 = vnop
    $region5: #{imdb_forward.7} parent=1 // pred_fallthru
      _
    // Predicated region
    $region25: #{imdb_forward.7} parent=1 // pred_check
      _
    $region26: #{imdb_forward.7} parent=1 // pred_check_branch
      %62 = sbr.rel (0) target = $region28
    $region27: #{imdb_forward.7} parent=1 // pred_region
      %s63 = ssub.s32 0, 0
      %s64 = smul.u32 8, %s63
      %s65 = smul.addr %s64, 4
      %s66 = sadd.s32 2, %s65
      %s67 = smul.addr %s66, 8
      %s68 = scalar_lea.vmem %s1, %s67
      // Predicated region
      $region29: #{imdb_forward.7} parent=27 // pred_check
        _
      $region30: #{imdb_forward.7} parent=27 // pred_check_branch
        %70 = sbr.rel (0) target = $region32
      $region31: #{imdb_forward.7} parent=27 // pred_region
        // Predicated region
        $region33: #{imdb_forward.7} parent=31 // pred_check
          _
        $region34: #{imdb_forward.7} parent=31 // pred_check_branch
          %72 = sbr.rel (0) target = $region36
        $region35: #{imdb_forward.7} parent=31 // pred_region
          loop: start=0, step=1, limit=1
          $region37: #{imdb_forward.7} parent=35 // loop_pre_header
            _
          $region38: #{imdb_forward.7} parent=35 // loop_header
            %s74 = sphi 0, %s78
            %p75 = scmp.ge.s32.totalorder %s74, 1
            %s79 = sphi %s68, %s68
            %s80 = sphi [#allocation7], [#allocation7]
          $region39: #{imdb_forward.7} parent=35 // loop_header_branch
            %77 = sbr.rel (%p75) target = $region43
          $region40: #{imdb_forward.7} parent=35 // loop_body
            %v81 = vld [vmem:[%s79] sm:$0xff]
            %82 = vst [vmem:[%s80] sm:$0xff] %v81
            %v83 = vld [vmem:[%s79 + $0x8] sm:$0xff]
            %84 = vst [vmem:[%s80 + $0x8] sm:$0xff] %v83
            %v85 = vld [vmem:[%s79 + $0x20] sm:$0xff]
            %86 = vst [vmem:[%s80 + $0x10] sm:$0xff] %v85
            %v87 = vld [vmem:[%s79 + $0x28] sm:$0xff]
            %88 = vst [vmem:[%s80 + $0x18] sm:$0xff] %v87
            %v89 = vld [vmem:[%s79 + $0x40] sm:$0xff]
            %90 = vst [vmem:[%s80 + $0x20] sm:$0xff] %v89
            %v91 = vld [vmem:[%s79 + $0x48] sm:$0xff]
            %92 = vst [vmem:[%s80 + $0x28] sm:$0xff] %v91
            %v93 = vld [vmem:[%s79 + $0x60] sm:$0xff]
            %94 = vst [vmem:[%s80 + $0x30] sm:$0xff] %v93
            %v95 = vld [vmem:[%s79 + $0x68] sm:$0xff]
            %96 = vst [vmem:[%s80 + $0x38] sm:$0xff] %v95
            %v97 = vld [vmem:[%s79 + $0x80] sm:$0xff]
            %98 = vst [vmem:[%s80 + $0x40] sm:$0xff] %v97
            %v99 = vld [vmem:[%s79 + $0x88] sm:$0xff]
            %100 = vst [vmem:[%s80 + $0x48] sm:$0xff] %v99
            %v101 = vld [vmem:[%s79 + $0xa0] sm:$0xff]
            %102 = vst [vmem:[%s80 + $0x50] sm:$0xff] %v101
            %v103 = vld [vmem:[%s79 + $0xa8] sm:$0xff]
            %104 = vst [vmem:[%s80 + $0x58] sm:$0xff] %v103
            %v105 = vld [vmem:[%s79 + $0xc0] sm:$0xff]
            %106 = vst [vmem:[%s80 + $0x60] sm:$0xff] %v105
            %v107 = vld [vmem:[%s79 + $0xc8] sm:$0xff]
            %108 = vst [vmem:[%s80 + $0x68] sm:$0xff] %v107
            %v109 = vld [vmem:[%s79 + $0xe0] sm:$0xff]
            %110 = vst [vmem:[%s80 + $0x70] sm:$0xff] %v109
            %v111 = vld [vmem:[%s79 + $0xe8] sm:$0xff]
            %112 = vst [vmem:[%s80 + $0x78] sm:$0xff] %v111
          $region41: #{imdb_forward.7} parent=35 // loop_footer
            %s78 = sadd.s32 1, %s74
          $region42: #{imdb_forward.7} parent=35 // loop_footer_branch
            %73 = sbr.rel target = $region38
          $region43: #{imdb_forward.7} parent=35 // loop_exit
            _
        $region36: #{imdb_forward.7} parent=31 // pred_fallthru
          _
        // Predicated region
        $region44: #{imdb_forward.7} parent=31 // pred_check
          _
        $region45: #{imdb_forward.7} parent=31 // pred_check_branch
          %114 = sbr.rel target = $region47
        $region46: #{imdb_forward.7} parent=31 // pred_region
          _
        $region47: #{imdb_forward.7} parent=31 // pred_fallthru
          _
      $region32: #{imdb_forward.7} parent=27 // pred_fallthru
        _
      %115 = vnop
    $region28: #{imdb_forward.7} parent=1 // pred_fallthru
      _
    // Predicated region
    $region48: #{imdb_forward.7} parent=1 // pred_check
      _
    $region49: #{imdb_forward.7} parent=1 // pred_check_branch
      %117 = sbr.rel (0) target = $region51
    $region50: #{imdb_forward.7} parent=1 // pred_region
      _
    $region51: #{imdb_forward.7} parent=1 // pred_fallthru
      _
    // Predicated region
    $region52: #{imdb_forward.7} parent=1 // pred_check
      _
    $region53: #{imdb_forward.7} parent=1 // pred_check_branch
      %119 = sbr.rel (0) target = $region55
    $region54: #{imdb_forward.7} parent=1 // pred_region
      _
    $region55: #{imdb_forward.7} parent=1 // pred_fallthru
      _
    // Predicated region
    $region56: #{imdb_forward.7} parent=1 // pred_check
      _
    $region57: #{imdb_forward.7} parent=1 // pred_check_branch
      %121 = sbr.rel (0) target = $region59
    $region58: #{imdb_forward.7} parent=1 // pred_region
      _
    $region59: #{imdb_forward.7} parent=1 // pred_fallthru
      _
    // Predicated region
    $region60: #{imdb_forward.7} parent=1 // pred_check
      _
    $region61: #{imdb_forward.7} parent=1 // pred_check_branch
      %123 = sbr.rel (0) target = $region63
    $region62: #{imdb_forward.7} parent=1 // pred_region
      _
    $region63: #{imdb_forward.7} parent=1 // pred_fallthru
      _
    // Predicated region
    $region64: #{imdb_forward.7} parent=1 // pred_check
      _
    $region65: #{imdb_forward.7} parent=1 // pred_check_branch
      %125 = sbr.rel (0) target = $region67
    $region66: #{imdb_forward.7} parent=1 // pred_region
      _
    $region67: #{imdb_forward.7} parent=1 // pred_fallthru
      _
    // Predicated region
    $region68: #{imdb_forward.7} parent=1 // pred_check
      _
    $region69: #{imdb_forward.7} parent=1 // pred_check_branch
      %127 = sbr.rel (0) target = $region71
    $region70: #{imdb_forward.7} parent=1 // pred_region
      _
    $region71: #{imdb_forward.7} parent=1 // pred_fallthru
      _
    // Predicated region
    $region72: #{imdb_forward.7} parent=1 // pred_check
      _
    $region73: #{imdb_forward.7} parent=1 // pred_check_branch
      %129 = sbr.rel (0) target = $region75
    $region74: #{imdb_forward.7} parent=1 // pred_region
      _
    $region75: #{imdb_forward.7} parent=1 // pred_fallthru
      _
    %s130 = ssub.s32 0, 0
    %s131 = smul.u32 8, %s130
    %p132 = scmp.eq.s32.totalorder 0, 0
    // Predicated region
    $region76: #{imdb_forward.7} parent=1 // pred_check
      %p133 = pneg %p132
    $region77: #{imdb_forward.7} parent=1 // pred_check_branch
      %135 = sbr.rel (%p133) target = $region79
    $region78: #{imdb_forward.7} parent=1 // pred_region
      %vm136 = vcmask 523264
      %137 = vst.msk [vmem:[#allocation2] sm:$0xff] %vm136, 0.0
      %138 = vst.msk [vmem:[#allocation3] sm:$0xff] %vm136, 0.0
      %139 = vst.msk [vmem:[#allocation4] sm:$0xff] %vm136, 0.0
      %140 = vst.msk [vmem:[#allocation5] sm:$0xff] %vm136, 0.0
    $region79: #{imdb_forward.7} parent=1 // pred_fallthru
      _
    %v141 = vld [vmem:[%s2] sm:$0xff]
    %v142 = vld [vmem:[%s2 + $0x8] sm:$0xff]
    %v143 = vld [vmem:[%s2 + $0x10] sm:$0xff]
    %v144 = vld [vmem:[%s2 + $0x18] sm:$0xff]
    %v145 = vld [vmem:[%s2 + $0x20] sm:$0xff]
    %v146 = vld [vmem:[%s2 + $0x28] sm:$0xff]
    %v147 = vld [vmem:[%s2 + $0x30] sm:$0xff]
    %v148 = vld [vmem:[%s2 + $0x38] sm:$0xff]
    %v149 = vld [vmem:[%s2 + $0x40] sm:$0xff]
    %v150 = vld [vmem:[%s2 + $0x48] sm:$0xff]
    %v151 = vld [vmem:[%s2 + $0x50] sm:$0xff]
    %v152 = vld [vmem:[%s2 + $0x58] sm:$0xff]
    %v153 = vld [vmem:[%s2 + $0x60] sm:$0xff]
    %v154 = vld [vmem:[%s2 + $0x68] sm:$0xff]
    %v155 = vld [vmem:[%s2 + $0x70] sm:$0xff]
    %v156 = vld [vmem:[%s2 + $0x78] sm:$0xff]
    %s157 = scalar_lea.vmem %s2, 128
    %v158 = vld [vmem:[%s157] sm:$0xff]
    %v159 = vld [vmem:[%s157 + $0x8] sm:$0xff]
    %v160 = vld [vmem:[%s157 + $0x10] sm:$0xff]
    %v161 = vld [vmem:[%s157 + $0x18] sm:$0xff]
    %v162 = vld [vmem:[%s157 + $0x20] sm:$0xff]
    %v163 = vld [vmem:[%s157 + $0x28] sm:$0xff]
    %v164 = vld [vmem:[%s157 + $0x30] sm:$0xff]
    %v165 = vld [vmem:[%s157 + $0x38] sm:$0xff]
    %v166 = vld [vmem:[%s157 + $0x40] sm:$0xff]
    %v167 = vld [vmem:[%s157 + $0x48] sm:$0xff]
    %v168 = vld [vmem:[%s157 + $0x50] sm:$0xff]
    %v169 = vld [vmem:[%s157 + $0x58] sm:$0xff]
    %v170 = vld [vmem:[%s157 + $0x60] sm:$0xff]
    %v171 = vld [vmem:[%s157 + $0x68] sm:$0xff]
    %v172 = vld [vmem:[%s157 + $0x70] sm:$0xff]
    %v173 = vld [vmem:[%s157 + $0x78] sm:$0xff]
    %v174 = vld [vmem:[#allocation2] sm:$0xff]
    %v175 = vld [vmem:[#allocation3] sm:$0xff]
    %v176 = vld [vmem:[#allocation4] sm:$0xff]
    %v177 = vld [vmem:[#allocation5] sm:$0xff]
    %v178 = vld [vmem:[#allocation6] sm:$0xff]
    %v179 = vld [vmem:[#allocation6 + $0x8] sm:$0xff]
    %vm180 = vcmask 523264
    %v182 = vsel %vm180, %v174, 0
    %184 = vmatpush.msra.mxu0 0.0
    %185 = vmatpush.msra.mxu0 0.0
    %186 = vmatpush.msra.mxu0 0.0
    %187 = vmatpush.msra.mxu0 0.0
    %188 = vmatpush.msra.mxu0 0.0
    %189 = vmatpush.msra.mxu0 0.0
    %190 = vmatpush.msra.mxu0 0.0
    %191 = vmatpush.msra.mxu0 0.0
    %192 = vmatpush.msra.mxu0 %v155
    %193 = vmatpush.msra.mxu0 %v153
    %194 = vmatpush.msra.mxu0 %v151
    %195 = vmatpush.msra.mxu0 %v149
    %196 = vmatpush.msra.mxu0 %v147
    %197 = vmatpush.msra.mxu0 %v145
    %198 = vmatpush.msra.mxu0 %v143
    %199 = vmatpush.msra.mxu0 %v141
    %200 = vmatmul.f32.gmra.mxu0 %v182
    %v201 = vpop.f32.mrf.mxu0
    %v202 = vadd.f32 0.0, %v201
    %203 = vdwg.mxu0
    %204 = vmatpush.msra.mxu0 0.0
    %205 = vmatpush.msra.mxu0 0.0
    %206 = vmatpush.msra.mxu0 0.0
    %207 = vmatpush.msra.mxu0 0.0
    %208 = vmatpush.msra.mxu0 0.0
    %209 = vmatpush.msra.mxu0 0.0
    %210 = vmatpush.msra.mxu0 0.0
    %211 = vmatpush.msra.mxu0 0.0
    %212 = vmatpush.msra.mxu0 %v156
    %213 = vmatpush.msra.mxu0 %v154
    %214 = vmatpush.msra.mxu0 %v152
    %215 = vmatpush.msra.mxu0 %v150
    %216 = vmatpush.msra.mxu0 %v148
    %217 = vmatpush.msra.mxu0 %v146
    %218 = vmatpush.msra.mxu0 %v144
    %219 = vmatpush.msra.mxu0 %v142
    %220 = vmatmul.f32.gmra.mxu0 %v182
    %v221 = vpop.f32.mrf.mxu0
    %v222 = vadd.f32 0.0, %v221
    %223 = vdwg.mxu0
    %v224 = vadd.f32 %v178, %v202
    %v225 = vadd.f32 %v179, %v222
    %v226 = vld [vmem:[#allocation7 + $0x70] sm:$0xff]
    %v227 = vld [vmem:[#allocation7 + $0x78] sm:$0xff]
    %v229 = vsel %vm180, %v176, 0
    %231 = vmatpush.msra.mxu0 0.0
    %232 = vmatpush.msra.mxu0 0.0
    %233 = vmatpush.msra.mxu0 0.0
    %234 = vmatpush.msra.mxu0 0.0
    %235 = vmatpush.msra.mxu0 0.0
    %236 = vmatpush.msra.mxu0 0.0
    %237 = vmatpush.msra.mxu0 0.0
    %238 = vmatpush.msra.mxu0 0.0
    %239 = vmatpush.msra.mxu0 %v172
    %240 = vmatpush.msra.mxu0 %v170
    %241 = vmatpush.msra.mxu0 %v168
    %242 = vmatpush.msra.mxu0 %v166
    %243 = vmatpush.msra.mxu0 %v164
    %244 = vmatpush.msra.mxu0 %v162
    %245 = vmatpush.msra.mxu0 %v160
    %246 = vmatpush.msra.mxu0 %v158
    %247 = vmatmul.f32.gmra.mxu0 %v229
    %v248 = vpop.f32.mrf.mxu0
    %v249 = vadd.f32 0.0, %v248
    %250 = vdwg.mxu0
    %251 = vmatpush.msra.mxu0 0.0
    %252 = vmatpush.msra.mxu0 0.0
    %253 = vmatpush.msra.mxu0 0.0
    %254 = vmatpush.msra.mxu0 0.0
    %255 = vmatpush.msra.mxu0 0.0
    %256 = vmatpush.msra.mxu0 0.0
    %257 = vmatpush.msra.mxu0 0.0
    %258 = vmatpush.msra.mxu0 0.0
    %259 = vmatpush.msra.mxu0 %v173
    %260 = vmatpush.msra.mxu0 %v171
    %261 = vmatpush.msra.mxu0 %v169
    %262 = vmatpush.msra.mxu0 %v167
    %263 = vmatpush.msra.mxu0 %v165
    %264 = vmatpush.msra.mxu0 %v163
    %265 = vmatpush.msra.mxu0 %v161
    %266 = vmatpush.msra.mxu0 %v159
    %267 = vmatmul.f32.gmra.mxu0 %v229
    %v268 = vpop.f32.mrf.mxu0
    %v269 = vadd.f32 0.0, %v268
    %270 = vdwg.mxu0
    %v271 = vadd.f32 %v226, %v249
    %v272 = vadd.f32 %v227, %v269
    %v273 = vxor.u32 %v224, 2147483648
    %v274 = vmul.f32 %v273, 1.442695
    %v275 = vpow.pop %v274
    %v276 = vadd.f32 %v275, 1.0
    %v277 = vrcp.pop %v276
    %v278 = vmul.f32 %v276, %v277
    %v279 = vsub.f32 1.0, %v278
    %v280 = vmul.f32 %v277, %v279
    %v281 = vadd.f32 %v277, %v280
    %vm282 = vweird.f32 %v276
    %vm283 = vweird.f32 %v277
    %vm284 = vmor %vm282, %vm283
    %v285 = vsel %vm284, %v277, %v281
    %v286 = vand.u32 2147483647, %v276
    %vm287 = vcmp.eq.f32.partialorder %v286, 8.507059e+37
    %v288 = vand.u32 %v276, 2147483648
    %v289 = vor.u32 1.1754944e-38, %v288
    %v290 = vsel %vm287, %v289, %v285
    %v291 = vmul.f32 1.0, %v290
    %v292 = vtanh.pop %v225
    %v293 = vxor.u32 %v225, 2147483648
    %v294 = vmul.f32 %v293, 1.442695
    %v295 = vpow.pop %v294
    %v296 = vadd.f32 %v295, 1.0
    %v297 = vrcp.pop %v296
    %v298 = vmul.f32 %v296, %v297
    %v299 = vsub.f32 1.0, %v298
    %v300 = vmul.f32 %v297, %v299
    %v301 = vadd.f32 %v297, %v300
    %vm302 = vweird.f32 %v296
    %vm303 = vweird.f32 %v297
    %vm304 = vmor %vm302, %vm303
    %v305 = vsel %vm304, %v297, %v301
    %v306 = vand.u32 2147483647, %v296
    %vm307 = vcmp.eq.f32.partialorder %v306, 8.507059e+37
    %v308 = vand.u32 %v296, 2147483648
    %v309 = vor.u32 1.1754944e-38, %v308
    %v310 = vsel %vm307, %v309, %v305
    %v311 = vmul.f32 1.0, %v310
    %313 = vrot.lane.b32.xlu0 %v175, 64
    %v314 = vpop.permute.xlu0 %313
    %v316 = vmul.f32 %v291, %v314
    %v317 = vmul.f32 %v291, %v292
    %319 = vrot.lane.b32.xlu0 %v317, 64
    %v320 = vpop.permute.xlu0 %319
    %v322 = vadd.f32 %v316, %v320
    %v323 = vtanh.pop %v322
    %v324 = vmul.f32 %v311, %v323
    %v325 = vxor.u32 %v271, 2147483648
    %v326 = vmul.f32 %v325, 1.442695
    %v327 = vpow.pop %v326
    %v328 = vadd.f32 %v327, 1.0
    %v329 = vrcp.pop %v328
    %v330 = vmul.f32 %v328, %v329
    %v331 = vsub.f32 1.0, %v330
    %v332 = vmul.f32 %v329, %v331
    %v333 = vadd.f32 %v329, %v332
    %vm334 = vweird.f32 %v328
    %vm335 = vweird.f32 %v329
    %vm336 = vmor %vm334, %vm335
    %v337 = vsel %vm336, %v329, %v333
    %v338 = vand.u32 2147483647, %v328
    %vm339 = vcmp.eq.f32.partialorder %v338, 8.507059e+37
    %v340 = vand.u32 %v328, 2147483648
    %v341 = vor.u32 1.1754944e-38, %v340
    %v342 = vsel %vm339, %v341, %v337
    %v343 = vmul.f32 1.0, %v342
    %v344 = vtanh.pop %v272
    %v345 = vxor.u32 %v272, 2147483648
    %v346 = vmul.f32 %v345, 1.442695
    %v347 = vpow.pop %v346
    %v348 = vadd.f32 %v347, 1.0
    %v349 = vrcp.pop %v348
    %v350 = vmul.f32 %v348, %v349
    %v351 = vsub.f32 1.0, %v350
    %v352 = vmul.f32 %v349, %v351
    %v353 = vadd.f32 %v349, %v352
    %vm354 = vweird.f32 %v348
    %vm355 = vweird.f32 %v349
    %vm356 = vmor %vm354, %vm355
    %v357 = vsel %vm356, %v349, %v353
    %v358 = vand.u32 2147483647, %v348
    %vm359 = vcmp.eq.f32.partialorder %v358, 8.507059e+37
    %v360 = vand.u32 %v348, 2147483648
    %v361 = vor.u32 1.1754944e-38, %v360
    %v362 = vsel %vm359, %v361, %v357
    %v363 = vmul.f32 1.0, %v362
    %365 = vrot.lane.b32.xlu0 %v177, 64
    %v366 = vpop.permute.xlu0 %365
    %v368 = vmul.f32 %v343, %v366
    %v369 = vmul.f32 %v343, %v344
    %371 = vrot.lane.b32.xlu0 %v369, 64
    %v372 = vpop.permute.xlu0 %371
    %v374 = vadd.f32 %v368, %v372
    %v375 = vtanh.pop %v374
    %v376 = vmul.f32 %v363, %v375
    %v377 = vld [vmem:[#allocation6 + $0x10] sm:$0xff]
    %v378 = vld [vmem:[#allocation6 + $0x18] sm:$0xff]
    %380 = vrot.lane.b32.xlu0 %v324, 64
    %v381 = vpop.permute.xlu0 %380
    %v382 = vsel %vm180, %v381, 0
    %384 = vmatpush.msra.mxu0 0.0
    %385 = vmatpush.msra.mxu0 0.0
    %386 = vmatpush.msra.mxu0 0.0
    %387 = vmatpush.msra.mxu0 0.0
    %388 = vmatpush.msra.mxu0 0.0
    %389 = vmatpush.msra.mxu0 0.0
    %390 = vmatpush.msra.mxu0 0.0
    %391 = vmatpush.msra.mxu0 0.0
    %392 = vmatpush.msra.mxu0 %v155
    %393 = vmatpush.msra.mxu0 %v153
    %394 = vmatpush.msra.mxu0 %v151
    %395 = vmatpush.msra.mxu0 %v149
    %396 = vmatpush.msra.mxu0 %v147
    %397 = vmatpush.msra.mxu0 %v145
    %398 = vmatpush.msra.mxu0 %v143
    %399 = vmatpush.msra.mxu0 %v141
    %400 = vmatmul.f32.gmra.mxu0 %v382
    %v401 = vpop.f32.mrf.mxu0
    %v402 = vadd.f32 0.0, %v401
    %403 = vdwg.mxu0
    %404 = vmatpush.msra.mxu0 0.0
    %405 = vmatpush.msra.mxu0 0.0
    %406 = vmatpush.msra.mxu0 0.0
    %407 = vmatpush.msra.mxu0 0.0
    %408 = vmatpush.msra.mxu0 0.0
    %409 = vmatpush.msra.mxu0 0.0
    %410 = vmatpush.msra.mxu0 0.0
    %411 = vmatpush.msra.mxu0 0.0
    %412 = vmatpush.msra.mxu0 %v156
    %413 = vmatpush.msra.mxu0 %v154
    %414 = vmatpush.msra.mxu0 %v152
    %415 = vmatpush.msra.mxu0 %v150
    %416 = vmatpush.msra.mxu0 %v148
    %417 = vmatpush.msra.mxu0 %v146
    %418 = vmatpush.msra.mxu0 %v144
    %419 = vmatpush.msra.mxu0 %v142
    %420 = vmatmul.f32.gmra.mxu0 %v382
    %v421 = vpop.f32.mrf.mxu0
    %v422 = vadd.f32 0.0, %v421
    %423 = vdwg.mxu0
    %v424 = vadd.f32 %v377, %v402
    %v425 = vadd.f32 %v378, %v422
    %v426 = vld [vmem:[#allocation7 + $0x60] sm:$0xff]
    %v427 = vld [vmem:[#allocation7 + $0x68] sm:$0xff]
    %429 = vrot.lane.b32.xlu0 %v376, 64
    %v430 = vpop.permute.xlu0 %429
    %v431 = vsel %vm180, %v430, 0
    %433 = vmatpush.msra.mxu0 0.0
    %434 = vmatpush.msra.mxu0 0.0
    %435 = vmatpush.msra.mxu0 0.0
    %436 = vmatpush.msra.mxu0 0.0
    %437 = vmatpush.msra.mxu0 0.0
    %438 = vmatpush.msra.mxu0 0.0
    %439 = vmatpush.msra.mxu0 0.0
    %440 = vmatpush.msra.mxu0 0.0
    %441 = vmatpush.msra.mxu0 %v172
    %442 = vmatpush.msra.mxu0 %v170
    %443 = vmatpush.msra.mxu0 %v168
    %444 = vmatpush.msra.mxu0 %v166
    %445 = vmatpush.msra.mxu0 %v164
    %446 = vmatpush.msra.mxu0 %v162
    %447 = vmatpush.msra.mxu0 %v160
    %448 = vmatpush.msra.mxu0 %v158
    %449 = vmatmul.f32.gmra.mxu0 %v431
    %v450 = vpop.f32.mrf.mxu0
    %v451 = vadd.f32 0.0, %v450
    %452 = vdwg.mxu0
    %453 = vmatpush.msra.mxu0 0.0
    %454 = vmatpush.msra.mxu0 0.0
    %455 = vmatpush.msra.mxu0 0.0
    %456 = vmatpush.msra.mxu0 0.0
    %457 = vmatpush.msra.mxu0 0.0
    %458 = vmatpush.msra.mxu0 0.0
    %459 = vmatpush.msra.mxu0 0.0
    %460 = vmatpush.msra.mxu0 0.0
    %461 = vmatpush.msra.mxu0 %v173
    %462 = vmatpush.msra.mxu0 %v171
    %463 = vmatpush.msra.mxu0 %v169
    %464 = vmatpush.msra.mxu0 %v167
    %465 = vmatpush.msra.mxu0 %v165
    %466 = vmatpush.msra.mxu0 %v163
    %467 = vmatpush.msra.mxu0 %v161
    %468 = vmatpush.msra.mxu0 %v159
    %469 = vmatmul.f32.gmra.mxu0 %v431
    %v470 = vpop.f32.mrf.mxu0
    %v471 = vadd.f32 0.0, %v470
    %472 = vdwg.mxu0
    %v473 = vadd.f32 %v426, %v451
    %v474 = vadd.f32 %v427, %v471
    %v475 = vxor.u32 %v424, 2147483648
    %v476 = vmul.f32 %v475, 1.442695
    %v477 = vpow.pop %v476
    %v478 = vadd.f32 %v477, 1.0
    %v479 = vrcp.pop %v478
    %v480 = vmul.f32 %v478, %v479
    %v481 = vsub.f32 1.0, %v480
    %v482 = vmul.f32 %v479, %v481
    %v483 = vadd.f32 %v479, %v482
    %vm484 = vweird.f32 %v478
    %vm485 = vweird.f32 %v479
    %vm486 = vmor %vm484, %vm485
    %v487 = vsel %vm486, %v479, %v483
    %v488 = vand.u32 2147483647, %v478
    %vm489 = vcmp.eq.f32.partialorder %v488, 8.507059e+37
    %v490 = vand.u32 %v478, 2147483648
    %v491 = vor.u32 1.1754944e-38, %v490
    %v492 = vsel %vm489, %v491, %v487
    %v493 = vmul.f32 1.0, %v492
    %v494 = vtanh.pop %v425
    %v495 = vxor.u32 %v425, 2147483648
    %v496 = vmul.f32 %v495, 1.442695
    %v497 = vpow.pop %v496
    %v498 = vadd.f32 %v497, 1.0
    %v499 = vrcp.pop %v498
    %v500 = vmul.f32 %v498, %v499
    %v501 = vsub.f32 1.0, %v500
    %v502 = vmul.f32 %v499, %v501
    %v503 = vadd.f32 %v499, %v502
    %vm504 = vweird.f32 %v498
    %vm505 = vweird.f32 %v499
    %vm506 = vmor %vm504, %vm505
    %v507 = vsel %vm506, %v499, %v503
    %v508 = vand.u32 2147483647, %v498
    %vm509 = vcmp.eq.f32.partialorder %v508, 8.507059e+37
    %v510 = vand.u32 %v498, 2147483648
    %v511 = vor.u32 1.1754944e-38, %v510
    %v512 = vsel %vm509, %v511, %v507
    %v513 = vmul.f32 1.0, %v512
    %v514 = vmul.f32 %v493, %v322
    %v515 = vmul.f32 %v493, %v494
    %517 = vrot.lane.b32.xlu0 %v515, 64
    %v518 = vpop.permute.xlu0 %517
    %v520 = vadd.f32 %v514, %v518
    %v521 = vtanh.pop %v520
    %v522 = vmul.f32 %v513, %v521
    %v523 = vxor.u32 %v473, 2147483648
    %v524 = vmul.f32 %v523, 1.442695
    %v525 = vpow.pop %v524
    %v526 = vadd.f32 %v525, 1.0
    %v527 = vrcp.pop %v526
    %v528 = vmul.f32 %v526, %v527
    %v529 = vsub.f32 1.0, %v528
    %v530 = vmul.f32 %v527, %v529
    %v531 = vadd.f32 %v527, %v530
    %vm532 = vweird.f32 %v526
    %vm533 = vweird.f32 %v527
    %vm534 = vmor %vm532, %vm533
    %v535 = vsel %vm534, %v527, %v531
    %v536 = vand.u32 2147483647, %v526
    %vm537 = vcmp.eq.f32.partialorder %v536, 8.507059e+37
    %v538 = vand.u32 %v526, 2147483648
    %v539 = vor.u32 1.1754944e-38, %v538
    %v540 = vsel %vm537, %v539, %v535
    %v541 = vmul.f32 1.0, %v540
    %v542 = vtanh.pop %v474
    %v543 = vxor.u32 %v474, 2147483648
    %v544 = vmul.f32 %v543, 1.442695
    %v545 = vpow.pop %v544
    %v546 = vadd.f32 %v545, 1.0
    %v547 = vrcp.pop %v546
    %v548 = vmul.f32 %v546, %v547
    %v549 = vsub.f32 1.0, %v548
    %v550 = vmul.f32 %v547, %v549
    %v551 = vadd.f32 %v547, %v550
    %vm552 = vweird.f32 %v546
    %vm553 = vweird.f32 %v547
    %vm554 = vmor %vm552, %vm553
    %v555 = vsel %vm554, %v547, %v551
    %v556 = vand.u32 2147483647, %v546
    %vm557 = vcmp.eq.f32.partialorder %v556, 8.507059e+37
    %v558 = vand.u32 %v546, 2147483648
    %v559 = vor.u32 1.1754944e-38, %v558
    %v560 = vsel %vm557, %v559, %v555
    %v561 = vmul.f32 1.0, %v560
    %v562 = vmul.f32 %v541, %v374
    %v563 = vmul.f32 %v541, %v542
    %565 = vrot.lane.b32.xlu0 %v563, 64
    %v566 = vpop.permute.xlu0 %565
    %v568 = vadd.f32 %v562, %v566
    %v569 = vtanh.pop %v568
    %v570 = vmul.f32 %v561, %v569
    %v571 = vld [vmem:[#allocation6 + $0x20] sm:$0xff]
    %v572 = vld [vmem:[#allocation6 + $0x28] sm:$0xff]
    %574 = vrot.lane.b32.xlu0 %v522, 64
    %v575 = vpop.permute.xlu0 %574
    %v576 = vsel %vm180, %v575, 0
    %578 = vmatpush.msra.mxu0 0.0
    %579 = vmatpush.msra.mxu0 0.0
    %580 = vmatpush.msra.mxu0 0.0
    %581 = vmatpush.msra.mxu0 0.0
    %582 = vmatpush.msra.mxu0 0.0
    %583 = vmatpush.msra.mxu0 0.0
    %584 = vmatpush.msra.mxu0 0.0
    %585 = vmatpush.msra.mxu0 0.0
    %586 = vmatpush.msra.mxu0 %v155
    %587 = vmatpush.msra.mxu0 %v153
    %588 = vmatpush.msra.mxu0 %v151
    %589 = vmatpush.msra.mxu0 %v149
    %590 = vmatpush.msra.mxu0 %v147
    %591 = vmatpush.msra.mxu0 %v145
    %592 = vmatpush.msra.mxu0 %v143
    %593 = vmatpush.msra.mxu0 %v141
    %594 = vmatmul.f32.gmra.mxu0 %v576
    %v595 = vpop.f32.mrf.mxu0
    %v596 = vadd.f32 0.0, %v595
    %597 = vdwg.mxu0
    %598 = vmatpush.msra.mxu0 0.0
    %599 = vmatpush.msra.mxu0 0.0
    %600 = vmatpush.msra.mxu0 0.0
    %601 = vmatpush.msra.mxu0 0.0
    %602 = vmatpush.msra.mxu0 0.0
    %603 = vmatpush.msra.mxu0 0.0
    %604 = vmatpush.msra.mxu0 0.0
    %605 = vmatpush.msra.mxu0 0.0
    %606 = vmatpush.msra.mxu0 %v156
    %607 = vmatpush.msra.mxu0 %v154
    %608 = vmatpush.msra.mxu0 %v152
    %609 = vmatpush.msra.mxu0 %v150
    %610 = vmatpush.msra.mxu0 %v148
    %611 = vmatpush.msra.mxu0 %v146
    %612 = vmatpush.msra.mxu0 %v144
    %613 = vmatpush.msra.mxu0 %v142
    %614 = vmatmul.f32.gmra.mxu0 %v576
    %v615 = vpop.f32.mrf.mxu0
    %v616 = vadd.f32 0.0, %v615
    %617 = vdwg.mxu0
    %v618 = vadd.f32 %v571, %v596
    %v619 = vadd.f32 %v572, %v616
    %v620 = vld [vmem:[#allocation7 + $0x50] sm:$0xff]
    %v621 = vld [vmem:[#allocation7 + $0x58] sm:$0xff]
    %623 = vrot.lane.b32.xlu0 %v570, 64
    %v624 = vpop.permute.xlu0 %623
    %v625 = vsel %vm180, %v624, 0
    %627 = vmatpush.msra.mxu0 0.0
    %628 = vmatpush.msra.mxu0 0.0
    %629 = vmatpush.msra.mxu0 0.0
    %630 = vmatpush.msra.mxu0 0.0
    %631 = vmatpush.msra.mxu0 0.0
    %632 = vmatpush.msra.mxu0 0.0
    %633 = vmatpush.msra.mxu0 0.0
    %634 = vmatpush.msra.mxu0 0.0
    %635 = vmatpush.msra.mxu0 %v172
    %636 = vmatpush.msra.mxu0 %v170
    %637 = vmatpush.msra.mxu0 %v168
    %638 = vmatpush.msra.mxu0 %v166
    %639 = vmatpush.msra.mxu0 %v164
    %640 = vmatpush.msra.mxu0 %v162
    %641 = vmatpush.msra.mxu0 %v160
    %642 = vmatpush.msra.mxu0 %v158
    %643 = vmatmul.f32.gmra.mxu0 %v625
    %v644 = vpop.f32.mrf.mxu0
    %v645 = vadd.f32 0.0, %v644
    %646 = vdwg.mxu0
    %647 = vmatpush.msra.mxu0 0.0
    %648 = vmatpush.msra.mxu0 0.0
    %649 = vmatpush.msra.mxu0 0.0
    %650 = vmatpush.msra.mxu0 0.0
    %651 = vmatpush.msra.mxu0 0.0
    %652 = vmatpush.msra.mxu0 0.0
    %653 = vmatpush.msra.mxu0 0.0
    %654 = vmatpush.msra.mxu0 0.0
    %655 = vmatpush.msra.mxu0 %v173
    %656 = vmatpush.msra.mxu0 %v171
    %657 = vmatpush.msra.mxu0 %v169
    %658 = vmatpush.msra.mxu0 %v167
    %659 = vmatpush.msra.mxu0 %v165
    %660 = vmatpush.msra.mxu0 %v163
    %661 = vmatpush.msra.mxu0 %v161
    %662 = vmatpush.msra.mxu0 %v159
    %663 = vmatmul.f32.gmra.mxu0 %v625
    %v664 = vpop.f32.mrf.mxu0
    %v665 = vadd.f32 0.0, %v664
    %666 = vdwg.mxu0
    %v667 = vadd.f32 %v620, %v645
    %v668 = vadd.f32 %v621, %v665
    %v669 = vxor.u32 %v618, 2147483648
    %v670 = vmul.f32 %v669, 1.442695
    %v671 = vpow.pop %v670
    %v672 = vadd.f32 %v671, 1.0
    %v673 = vrcp.pop %v672
    %v674 = vmul.f32 %v672, %v673
    %v675 = vsub.f32 1.0, %v674
    %v676 = vmul.f32 %v673, %v675
    %v677 = vadd.f32 %v673, %v676
    %vm678 = vweird.f32 %v672
    %vm679 = vweird.f32 %v673
    %vm680 = vmor %vm678, %vm679
    %v681 = vsel %vm680, %v673, %v677
    %v682 = vand.u32 2147483647, %v672
    %vm683 = vcmp.eq.f32.partialorder %v682, 8.507059e+37
    %v684 = vand.u32 %v672, 2147483648
    %v685 = vor.u32 1.1754944e-38, %v684
    %v686 = vsel %vm683, %v685, %v681
    %v687 = vmul.f32 1.0, %v686
    %v688 = vtanh.pop %v619
    %v689 = vxor.u32 %v619, 2147483648
    %v690 = vmul.f32 %v689, 1.442695
    %v691 = vpow.pop %v690
    %v692 = vadd.f32 %v691, 1.0
    %v693 = vrcp.pop %v692
    %v694 = vmul.f32 %v692, %v693
    %v695 = vsub.f32 1.0, %v694
    %v696 = vmul.f32 %v693, %v695
    %v697 = vadd.f32 %v693, %v696
    %vm698 = vweird.f32 %v692
    %vm699 = vweird.f32 %v693
    %vm700 = vmor %vm698, %vm699
    %v701 = vsel %vm700, %v693, %v697
    %v702 = vand.u32 2147483647, %v692
    %vm703 = vcmp.eq.f32.partialorder %v702, 8.507059e+37
    %v704 = vand.u32 %v692, 2147483648
    %v705 = vor.u32 1.1754944e-38, %v704
    %v706 = vsel %vm703, %v705, %v701
    %v707 = vmul.f32 1.0, %v706
    %v708 = vmul.f32 %v687, %v520
    %v709 = vmul.f32 %v687, %v688
    %711 = vrot.lane.b32.xlu0 %v709, 64
    %v712 = vpop.permute.xlu0 %711
    %v714 = vadd.f32 %v708, %v712
    %v715 = vtanh.pop %v714
    %v716 = vmul.f32 %v707, %v715
    %v717 = vxor.u32 %v667, 2147483648
    %v718 = vmul.f32 %v717, 1.442695
    %v719 = vpow.pop %v718
    %v720 = vadd.f32 %v719, 1.0
    %v721 = vrcp.pop %v720
    %v722 = vmul.f32 %v720, %v721
    %v723 = vsub.f32 1.0, %v722
    %v724 = vmul.f32 %v721, %v723
    %v725 = vadd.f32 %v721, %v724
    %vm726 = vweird.f32 %v720
    %vm727 = vweird.f32 %v721
    %vm728 = vmor %vm726, %vm727
    %v729 = vsel %vm728, %v721, %v725
    %v730 = vand.u32 2147483647, %v720
    %vm731 = vcmp.eq.f32.partialorder %v730, 8.507059e+37
    %v732 = vand.u32 %v720, 2147483648
    %v733 = vor.u32 1.1754944e-38, %v732
    %v734 = vsel %vm731, %v733, %v729
    %v735 = vmul.f32 1.0, %v734
    %v736 = vtanh.pop %v668
    %v737 = vxor.u32 %v668, 2147483648
    %v738 = vmul.f32 %v737, 1.442695
    %v739 = vpow.pop %v738
    %v740 = vadd.f32 %v739, 1.0
    %v741 = vrcp.pop %v740
    %v742 = vmul.f32 %v740, %v741
    %v743 = vsub.f32 1.0, %v742
    %v744 = vmul.f32 %v741, %v743
    %v745 = vadd.f32 %v741, %v744
    %vm746 = vweird.f32 %v740
    %vm747 = vweird.f32 %v741
    %vm748 = vmor %vm746, %vm747
    %v749 = vsel %vm748, %v741, %v745
    %v750 = vand.u32 2147483647, %v740
    %vm751 = vcmp.eq.f32.partialorder %v750, 8.507059e+37
    %v752 = vand.u32 %v740, 2147483648
    %v753 = vor.u32 1.1754944e-38, %v752
    %v754 = vsel %vm751, %v753, %v749
    %v755 = vmul.f32 1.0, %v754
    %v756 = vmul.f32 %v735, %v568
    %v757 = vmul.f32 %v735, %v736
    %759 = vrot.lane.b32.xlu0 %v757, 64
    %v760 = vpop.permute.xlu0 %759
    %v762 = vadd.f32 %v756, %v760
    %v763 = vtanh.pop %v762
    %v764 = vmul.f32 %v755, %v763
    %v765 = vld [vmem:[#allocation6 + $0x30] sm:$0xff]
    %v766 = vld [vmem:[#allocation6 + $0x38] sm:$0xff]
    %768 = vrot.lane.b32.xlu0 %v716, 64
    %v769 = vpop.permute.xlu0 %768
    %v770 = vsel %vm180, %v769, 0
    %772 = vmatpush.msra.mxu0 0.0
    %773 = vmatpush.msra.mxu0 0.0
    %774 = vmatpush.msra.mxu0 0.0
    %775 = vmatpush.msra.mxu0 0.0
    %776 = vmatpush.msra.mxu0 0.0
    %777 = vmatpush.msra.mxu0 0.0
    %778 = vmatpush.msra.mxu0 0.0
    %779 = vmatpush.msra.mxu0 0.0
    %780 = vmatpush.msra.mxu0 %v155
    %781 = vmatpush.msra.mxu0 %v153
    %782 = vmatpush.msra.mxu0 %v151
    %783 = vmatpush.msra.mxu0 %v149
    %784 = vmatpush.msra.mxu0 %v147
    %785 = vmatpush.msra.mxu0 %v145
    %786 = vmatpush.msra.mxu0 %v143
    %787 = vmatpush.msra.mxu0 %v141
    %788 = vmatmul.f32.gmra.mxu0 %v770
    %v789 = vpop.f32.mrf.mxu0
    %v790 = vadd.f32 0.0, %v789
    %791 = vdwg.mxu0
    %792 = vmatpush.msra.mxu0 0.0
    %793 = vmatpush.msra.mxu0 0.0
    %794 = vmatpush.msra.mxu0 0.0
    %795 = vmatpush.msra.mxu0 0.0
    %796 = vmatpush.msra.mxu0 0.0
    %797 = vmatpush.msra.mxu0 0.0
    %798 = vmatpush.msra.mxu0 0.0
    %799 = vmatpush.msra.mxu0 0.0
    %800 = vmatpush.msra.mxu0 %v156
    %801 = vmatpush.msra.mxu0 %v154
    %802 = vmatpush.msra.mxu0 %v152
    %803 = vmatpush.msra.mxu0 %v150
    %804 = vmatpush.msra.mxu0 %v148
    %805 = vmatpush.msra.mxu0 %v146
    %806 = vmatpush.msra.mxu0 %v144
    %807 = vmatpush.msra.mxu0 %v142
    %808 = vmatmul.f32.gmra.mxu0 %v770
    %v809 = vpop.f32.mrf.mxu0
    %v810 = vadd.f32 0.0, %v809
    %811 = vdwg.mxu0
    %v812 = vadd.f32 %v765, %v790
    %v813 = vadd.f32 %v766, %v810
    %v814 = vld [vmem:[#allocation7 + $0x40] sm:$0xff]
    %v815 = vld [vmem:[#allocation7 + $0x48] sm:$0xff]
    %817 = vrot.lane.b32.xlu0 %v764, 64
    %v818 = vpop.permute.xlu0 %817
    %v819 = vsel %vm180, %v818, 0
    %821 = vmatpush.msra.mxu0 0.0
    %822 = vmatpush.msra.mxu0 0.0
    %823 = vmatpush.msra.mxu0 0.0
    %824 = vmatpush.msra.mxu0 0.0
    %825 = vmatpush.msra.mxu0 0.0
    %826 = vmatpush.msra.mxu0 0.0
    %827 = vmatpush.msra.mxu0 0.0
    %828 = vmatpush.msra.mxu0 0.0
    %829 = vmatpush.msra.mxu0 %v172
    %830 = vmatpush.msra.mxu0 %v170
    %831 = vmatpush.msra.mxu0 %v168
    %832 = vmatpush.msra.mxu0 %v166
    %833 = vmatpush.msra.mxu0 %v164
    %834 = vmatpush.msra.mxu0 %v162
    %835 = vmatpush.msra.mxu0 %v160
    %836 = vmatpush.msra.mxu0 %v158
    %837 = vmatmul.f32.gmra.mxu0 %v819
    %v838 = vpop.f32.mrf.mxu0
    %v839 = vadd.f32 0.0, %v838
    %840 = vdwg.mxu0
    %841 = vmatpush.msra.mxu0 0.0
    %842 = vmatpush.msra.mxu0 0.0
    %843 = vmatpush.msra.mxu0 0.0
    %844 = vmatpush.msra.mxu0 0.0
    %845 = vmatpush.msra.mxu0 0.0
    %846 = vmatpush.msra.mxu0 0.0
    %847 = vmatpush.msra.mxu0 0.0
    %848 = vmatpush.msra.mxu0 0.0
    %849 = vmatpush.msra.mxu0 %v173
    %850 = vmatpush.msra.mxu0 %v171
    %851 = vmatpush.msra.mxu0 %v169
    %852 = vmatpush.msra.mxu0 %v167
    %853 = vmatpush.msra.mxu0 %v165
    %854 = vmatpush.msra.mxu0 %v163
    %855 = vmatpush.msra.mxu0 %v161
    %856 = vmatpush.msra.mxu0 %v159
    %857 = vmatmul.f32.gmra.mxu0 %v819
    %v858 = vpop.f32.mrf.mxu0
    %v859 = vadd.f32 0.0, %v858
    %860 = vdwg.mxu0
    %v861 = vadd.f32 %v814, %v839
    %v862 = vadd.f32 %v815, %v859
    %v863 = vxor.u32 %v812, 2147483648
    %v864 = vmul.f32 %v863, 1.442695
    %v865 = vpow.pop %v864
    %v866 = vadd.f32 %v865, 1.0
    %v867 = vrcp.pop %v866
    %v868 = vmul.f32 %v866, %v867
    %v869 = vsub.f32 1.0, %v868
    %v870 = vmul.f32 %v867, %v869
    %v871 = vadd.f32 %v867, %v870
    %vm872 = vweird.f32 %v866
    %vm873 = vweird.f32 %v867
    %vm874 = vmor %vm872, %vm873
    %v875 = vsel %vm874, %v867, %v871
    %v876 = vand.u32 2147483647, %v866
    %vm877 = vcmp.eq.f32.partialorder %v876, 8.507059e+37
    %v878 = vand.u32 %v866, 2147483648
    %v879 = vor.u32 1.1754944e-38, %v878
    %v880 = vsel %vm877, %v879, %v875
    %v881 = vmul.f32 1.0, %v880
    %v882 = vtanh.pop %v813
    %v883 = vxor.u32 %v813, 2147483648
    %v884 = vmul.f32 %v883, 1.442695
    %v885 = vpow.pop %v884
    %v886 = vadd.f32 %v885, 1.0
    %v887 = vrcp.pop %v886
    %v888 = vmul.f32 %v886, %v887
    %v889 = vsub.f32 1.0, %v888
    %v890 = vmul.f32 %v887, %v889
    %v891 = vadd.f32 %v887, %v890
    %vm892 = vweird.f32 %v886
    %vm893 = vweird.f32 %v887
    %vm894 = vmor %vm892, %vm893
    %v895 = vsel %vm894, %v887, %v891
    %v896 = vand.u32 2147483647, %v886
    %vm897 = vcmp.eq.f32.partialorder %v896, 8.507059e+37
    %v898 = vand.u32 %v886, 2147483648
    %v899 = vor.u32 1.1754944e-38, %v898
    %v900 = vsel %vm897, %v899, %v895
    %v901 = vmul.f32 1.0, %v900
    %v902 = vmul.f32 %v881, %v714
    %v903 = vmul.f32 %v881, %v882
    %905 = vrot.lane.b32.xlu0 %v903, 64
    %v906 = vpop.permute.xlu0 %905
    %v908 = vadd.f32 %v902, %v906
    %v909 = vtanh.pop %v908
    %v910 = vmul.f32 %v901, %v909
    %v911 = vxor.u32 %v861, 2147483648
    %v912 = vmul.f32 %v911, 1.442695
    %v913 = vpow.pop %v912
    %v914 = vadd.f32 %v913, 1.0
    %v915 = vrcp.pop %v914
    %v916 = vmul.f32 %v914, %v915
    %v917 = vsub.f32 1.0, %v916
    %v918 = vmul.f32 %v915, %v917
    %v919 = vadd.f32 %v915, %v918
    %vm920 = vweird.f32 %v914
    %vm921 = vweird.f32 %v915
    %vm922 = vmor %vm920, %vm921
    %v923 = vsel %vm922, %v915, %v919
    %v924 = vand.u32 2147483647, %v914
    %vm925 = vcmp.eq.f32.partialorder %v924, 8.507059e+37
    %v926 = vand.u32 %v914, 2147483648
    %v927 = vor.u32 1.1754944e-38, %v926
    %v928 = vsel %vm925, %v927, %v923
    %v929 = vmul.f32 1.0, %v928
    %v930 = vtanh.pop %v862
    %v931 = vxor.u32 %v862, 2147483648
    %v932 = vmul.f32 %v931, 1.442695
    %v933 = vpow.pop %v932
    %v934 = vadd.f32 %v933, 1.0
    %v935 = vrcp.pop %v934
    %v936 = vmul.f32 %v934, %v935
    %v937 = vsub.f32 1.0, %v936
    %v938 = vmul.f32 %v935, %v937
    %v939 = vadd.f32 %v935, %v938
    %vm940 = vweird.f32 %v934
    %vm941 = vweird.f32 %v935
    %vm942 = vmor %vm940, %vm941
    %v943 = vsel %vm942, %v935, %v939
    %v944 = vand.u32 2147483647, %v934
    %vm945 = vcmp.eq.f32.partialorder %v944, 8.507059e+37
    %v946 = vand.u32 %v934, 2147483648
    %v947 = vor.u32 1.1754944e-38, %v946
    %v948 = vsel %vm945, %v947, %v943
    %v949 = vmul.f32 1.0, %v948
    %v950 = vmul.f32 %v929, %v762
    %v951 = vmul.f32 %v929, %v930
    %953 = vrot.lane.b32.xlu0 %v951, 64
    %v954 = vpop.permute.xlu0 %953
    %v956 = vadd.f32 %v950, %v954
    %v957 = vtanh.pop %v956
    %v958 = vmul.f32 %v949, %v957
    %v959 = vld [vmem:[#allocation6 + $0x40] sm:$0xff]
    %v960 = vld [vmem:[#allocation6 + $0x48] sm:$0xff]
    %962 = vrot.lane.b32.xlu0 %v910, 64
    %v963 = vpop.permute.xlu0 %962
    %v964 = vsel %vm180, %v963, 0
    %966 = vmatpush.msra.mxu0 0.0
    %967 = vmatpush.msra.mxu0 0.0
    %968 = vmatpush.msra.mxu0 0.0
    %969 = vmatpush.msra.mxu0 0.0
    %970 = vmatpush.msra.mxu0 0.0
    %971 = vmatpush.msra.mxu0 0.0
    %972 = vmatpush.msra.mxu0 0.0
    %973 = vmatpush.msra.mxu0 0.0
    %974 = vmatpush.msra.mxu0 %v155
    %975 = vmatpush.msra.mxu0 %v153
    %976 = vmatpush.msra.mxu0 %v151
    %977 = vmatpush.msra.mxu0 %v149
    %978 = vmatpush.msra.mxu0 %v147
    %979 = vmatpush.msra.mxu0 %v145
    %980 = vmatpush.msra.mxu0 %v143
    %981 = vmatpush.msra.mxu0 %v141
    %982 = vmatmul.f32.gmra.mxu0 %v964
    %v983 = vpop.f32.mrf.mxu0
    %v984 = vadd.f32 0.0, %v983
    %985 = vdwg.mxu0
    %986 = vmatpush.msra.mxu0 0.0
    %987 = vmatpush.msra.mxu0 0.0
    %988 = vmatpush.msra.mxu0 0.0
    %989 = vmatpush.msra.mxu0 0.0
    %990 = vmatpush.msra.mxu0 0.0
    %991 = vmatpush.msra.mxu0 0.0
    %992 = vmatpush.msra.mxu0 0.0
    %993 = vmatpush.msra.mxu0 0.0
    %994 = vmatpush.msra.mxu0 %v156
    %995 = vmatpush.msra.mxu0 %v154
    %996 = vmatpush.msra.mxu0 %v152
    %997 = vmatpush.msra.mxu0 %v150
    %998 = vmatpush.msra.mxu0 %v148
    %999 = vmatpush.msra.mxu0 %v146
    %1000 = vmatpush.msra.mxu0 %v144
    %1001 = vmatpush.msra.mxu0 %v142
    %1002 = vmatmul.f32.gmra.mxu0 %v964
    %v1003 = vpop.f32.mrf.mxu0
    %v1004 = vadd.f32 0.0, %v1003
    %1005 = vdwg.mxu0
    %v1006 = vadd.f32 %v959, %v984
    %v1007 = vadd.f32 %v960, %v1004
    %v1008 = vld [vmem:[#allocation7 + $0x30] sm:$0xff]
    %v1009 = vld [vmem:[#allocation7 + $0x38] sm:$0xff]
    %1011 = vrot.lane.b32.xlu0 %v958, 64
    %v1012 = vpop.permute.xlu0 %1011
    %v1013 = vsel %vm180, %v1012, 0
    %1015 = vmatpush.msra.mxu0 0.0
    %1016 = vmatpush.msra.mxu0 0.0
    %1017 = vmatpush.msra.mxu0 0.0
    %1018 = vmatpush.msra.mxu0 0.0
    %1019 = vmatpush.msra.mxu0 0.0
    %1020 = vmatpush.msra.mxu0 0.0
    %1021 = vmatpush.msra.mxu0 0.0
    %1022 = vmatpush.msra.mxu0 0.0
    %1023 = vmatpush.msra.mxu0 %v172
    %1024 = vmatpush.msra.mxu0 %v170
    %1025 = vmatpush.msra.mxu0 %v168
    %1026 = vmatpush.msra.mxu0 %v166
    %1027 = vmatpush.msra.mxu0 %v164
    %1028 = vmatpush.msra.mxu0 %v162
    %1029 = vmatpush.msra.mxu0 %v160
    %1030 = vmatpush.msra.mxu0 %v158
    %1031 = vmatmul.f32.gmra.mxu0 %v1013
    %v1032 = vpop.f32.mrf.mxu0
    %v1033 = vadd.f32 0.0, %v1032
    %1034 = vdwg.mxu0
    %1035 = vmatpush.msra.mxu0 0.0
    %1036 = vmatpush.msra.mxu0 0.0
    %1037 = vmatpush.msra.mxu0 0.0
    %1038 = vmatpush.msra.mxu0 0.0
    %1039 = vmatpush.msra.mxu0 0.0
    %1040 = vmatpush.msra.mxu0 0.0
    %1041 = vmatpush.msra.mxu0 0.0
    %1042 = vmatpush.msra.mxu0 0.0
    %1043 = vmatpush.msra.mxu0 %v173
    %1044 = vmatpush.msra.mxu0 %v171
    %1045 = vmatpush.msra.mxu0 %v169
    %1046 = vmatpush.msra.mxu0 %v167
    %1047 = vmatpush.msra.mxu0 %v165
    %1048 = vmatpush.msra.mxu0 %v163
    %1049 = vmatpush.msra.mxu0 %v161
    %1050 = vmatpush.msra.mxu0 %v159
    %1051 = vmatmul.f32.gmra.mxu0 %v1013
    %v1052 = vpop.f32.mrf.mxu0
    %v1053 = vadd.f32 0.0, %v1052
    %1054 = vdwg.mxu0
    %v1055 = vadd.f32 %v1008, %v1033
    %v1056 = vadd.f32 %v1009, %v1053
    %v1057 = vxor.u32 %v1006, 2147483648
    %v1058 = vmul.f32 %v1057, 1.442695
    %v1059 = vpow.pop %v1058
    %v1060 = vadd.f32 %v1059, 1.0
    %v1061 = vrcp.pop %v1060
    %v1062 = vmul.f32 %v1060, %v1061
    %v1063 = vsub.f32 1.0, %v1062
    %v1064 = vmul.f32 %v1061, %v1063
    %v1065 = vadd.f32 %v1061, %v1064
    %vm1066 = vweird.f32 %v1060
    %vm1067 = vweird.f32 %v1061
    %vm1068 = vmor %vm1066, %vm1067
    %v1069 = vsel %vm1068, %v1061, %v1065
    %v1070 = vand.u32 2147483647, %v1060
    %vm1071 = vcmp.eq.f32.partialorder %v1070, 8.507059e+37
    %v1072 = vand.u32 %v1060, 2147483648
    %v1073 = vor.u32 1.1754944e-38, %v1072
    %v1074 = vsel %vm1071, %v1073, %v1069
    %v1075 = vmul.f32 1.0, %v1074
    %v1076 = vtanh.pop %v1007
    %v1077 = vxor.u32 %v1007, 2147483648
    %v1078 = vmul.f32 %v1077, 1.442695
    %v1079 = vpow.pop %v1078
    %v1080 = vadd.f32 %v1079, 1.0
    %v1081 = vrcp.pop %v1080
    %v1082 = vmul.f32 %v1080, %v1081
    %v1083 = vsub.f32 1.0, %v1082
    %v1084 = vmul.f32 %v1081, %v1083
    %v1085 = vadd.f32 %v1081, %v1084
    %vm1086 = vweird.f32 %v1080
    %vm1087 = vweird.f32 %v1081
    %vm1088 = vmor %vm1086, %vm1087
    %v1089 = vsel %vm1088, %v1081, %v1085
    %v1090 = vand.u32 2147483647, %v1080
    %vm1091 = vcmp.eq.f32.partialorder %v1090, 8.507059e+37
    %v1092 = vand.u32 %v1080, 2147483648
    %v1093 = vor.u32 1.1754944e-38, %v1092
    %v1094 = vsel %vm1091, %v1093, %v1089
    %v1095 = vmul.f32 1.0, %v1094
    %v1096 = vmul.f32 %v1075, %v908
    %v1097 = vmul.f32 %v1075, %v1076
    %1099 = vrot.lane.b32.xlu0 %v1097, 64
    %v1100 = vpop.permute.xlu0 %1099
    %v1102 = vadd.f32 %v1096, %v1100
    %v1103 = vtanh.pop %v1102
    %v1104 = vmul.f32 %v1095, %v1103
    %v1105 = vxor.u32 %v1055, 2147483648
    %v1106 = vmul.f32 %v1105, 1.442695
    %v1107 = vpow.pop %v1106
    %v1108 = vadd.f32 %v1107, 1.0
    %v1109 = vrcp.pop %v1108
    %v1110 = vmul.f32 %v1108, %v1109
    %v1111 = vsub.f32 1.0, %v1110
    %v1112 = vmul.f32 %v1109, %v1111
    %v1113 = vadd.f32 %v1109, %v1112
    %vm1114 = vweird.f32 %v1108
    %vm1115 = vweird.f32 %v1109
    %vm1116 = vmor %vm1114, %vm1115
    %v1117 = vsel %vm1116, %v1109, %v1113
    %v1118 = vand.u32 2147483647, %v1108
    %vm1119 = vcmp.eq.f32.partialorder %v1118, 8.507059e+37
    %v1120 = vand.u32 %v1108, 2147483648
    %v1121 = vor.u32 1.1754944e-38, %v1120
    %v1122 = vsel %vm1119, %v1121, %v1117
    %v1123 = vmul.f32 1.0, %v1122
    %v1124 = vtanh.pop %v1056
    %v1125 = vxor.u32 %v1056, 2147483648
    %v1126 = vmul.f32 %v1125, 1.442695
    %v1127 = vpow.pop %v1126
    %v1128 = vadd.f32 %v1127, 1.0
    %v1129 = vrcp.pop %v1128
    %v1130 = vmul.f32 %v1128, %v1129
    %v1131 = vsub.f32 1.0, %v1130
    %v1132 = vmul.f32 %v1129, %v1131
    %v1133 = vadd.f32 %v1129, %v1132
    %vm1134 = vweird.f32 %v1128
    %vm1135 = vweird.f32 %v1129
    %vm1136 = vmor %vm1134, %vm1135
    %v1137 = vsel %vm1136, %v1129, %v1133
    %v1138 = vand.u32 2147483647, %v1128
    %vm1139 = vcmp.eq.f32.partialorder %v1138, 8.507059e+37
    %v1140 = vand.u32 %v1128, 2147483648
    %v1141 = vor.u32 1.1754944e-38, %v1140
    %v1142 = vsel %vm1139, %v1141, %v1137
    %v1143 = vmul.f32 1.0, %v1142
    %v1144 = vmul.f32 %v1123, %v956
    %v1145 = vmul.f32 %v1123, %v1124
    %1147 = vrot.lane.b32.xlu0 %v1145, 64
    %v1148 = vpop.permute.xlu0 %1147
    %v1150 = vadd.f32 %v1144, %v1148
    %v1151 = vtanh.pop %v1150
    %v1152 = vmul.f32 %v1143, %v1151
    %v1153 = vld [vmem:[#allocation6 + $0x50] sm:$0xff]
    %v1154 = vld [vmem:[#allocation6 + $0x58] sm:$0xff]
    %1156 = vrot.lane.b32.xlu0 %v1104, 64
    %v1157 = vpop.permute.xlu0 %1156
    %v1158 = vsel %vm180, %v1157, 0
    %1160 = vmatpush.msra.mxu0 0.0
    %1161 = vmatpush.msra.mxu0 0.0
    %1162 = vmatpush.msra.mxu0 0.0
    %1163 = vmatpush.msra.mxu0 0.0
    %1164 = vmatpush.msra.mxu0 0.0
    %1165 = vmatpush.msra.mxu0 0.0
    %1166 = vmatpush.msra.mxu0 0.0
    %1167 = vmatpush.msra.mxu0 0.0
    %1168 = vmatpush.msra.mxu0 %v155
    %1169 = vmatpush.msra.mxu0 %v153
    %1170 = vmatpush.msra.mxu0 %v151
    %1171 = vmatpush.msra.mxu0 %v149
    %1172 = vmatpush.msra.mxu0 %v147
    %1173 = vmatpush.msra.mxu0 %v145
    %1174 = vmatpush.msra.mxu0 %v143
    %1175 = vmatpush.msra.mxu0 %v141
    %1176 = vmatmul.f32.gmra.mxu0 %v1158
    %v1177 = vpop.f32.mrf.mxu0
    %v1178 = vadd.f32 0.0, %v1177
    %1179 = vdwg.mxu0
    %1180 = vmatpush.msra.mxu0 0.0
    %1181 = vmatpush.msra.mxu0 0.0
    %1182 = vmatpush.msra.mxu0 0.0
    %1183 = vmatpush.msra.mxu0 0.0
    %1184 = vmatpush.msra.mxu0 0.0
    %1185 = vmatpush.msra.mxu0 0.0
    %1186 = vmatpush.msra.mxu0 0.0
    %1187 = vmatpush.msra.mxu0 0.0
    %1188 = vmatpush.msra.mxu0 %v156
    %1189 = vmatpush.msra.mxu0 %v154
    %1190 = vmatpush.msra.mxu0 %v152
    %1191 = vmatpush.msra.mxu0 %v150
    %1192 = vmatpush.msra.mxu0 %v148
    %1193 = vmatpush.msra.mxu0 %v146
    %1194 = vmatpush.msra.mxu0 %v144
    %1195 = vmatpush.msra.mxu0 %v142
    %1196 = vmatmul.f32.gmra.mxu0 %v1158
    %v1197 = vpop.f32.mrf.mxu0
    %v1198 = vadd.f32 0.0, %v1197
    %1199 = vdwg.mxu0
    %v1200 = vadd.f32 %v1153, %v1178
    %v1201 = vadd.f32 %v1154, %v1198
    %v1202 = vld [vmem:[#allocation7 + $0x20] sm:$0xff]
    %v1203 = vld [vmem:[#allocation7 + $0x28] sm:$0xff]
    %1205 = vrot.lane.b32.xlu0 %v1152, 64
    %v1206 = vpop.permute.xlu0 %1205
    %v1207 = vsel %vm180, %v1206, 0
    %1209 = vmatpush.msra.mxu0 0.0
    %1210 = vmatpush.msra.mxu0 0.0
    %1211 = vmatpush.msra.mxu0 0.0
    %1212 = vmatpush.msra.mxu0 0.0
    %1213 = vmatpush.msra.mxu0 0.0
    %1214 = vmatpush.msra.mxu0 0.0
    %1215 = vmatpush.msra.mxu0 0.0
    %1216 = vmatpush.msra.mxu0 0.0
    %1217 = vmatpush.msra.mxu0 %v172
    %1218 = vmatpush.msra.mxu0 %v170
    %1219 = vmatpush.msra.mxu0 %v168
    %1220 = vmatpush.msra.mxu0 %v166
    %1221 = vmatpush.msra.mxu0 %v164
    %1222 = vmatpush.msra.mxu0 %v162
    %1223 = vmatpush.msra.mxu0 %v160
    %1224 = vmatpush.msra.mxu0 %v158
    %1225 = vmatmul.f32.gmra.mxu0 %v1207
    %v1226 = vpop.f32.mrf.mxu0
    %v1227 = vadd.f32 0.0, %v1226
    %1228 = vdwg.mxu0
    %1229 = vmatpush.msra.mxu0 0.0
    %1230 = vmatpush.msra.mxu0 0.0
    %1231 = vmatpush.msra.mxu0 0.0
    %1232 = vmatpush.msra.mxu0 0.0
    %1233 = vmatpush.msra.mxu0 0.0
    %1234 = vmatpush.msra.mxu0 0.0
    %1235 = vmatpush.msra.mxu0 0.0
    %1236 = vmatpush.msra.mxu0 0.0
    %1237 = vmatpush.msra.mxu0 %v173
    %1238 = vmatpush.msra.mxu0 %v171
    %1239 = vmatpush.msra.mxu0 %v169
    %1240 = vmatpush.msra.mxu0 %v167
    %1241 = vmatpush.msra.mxu0 %v165
    %1242 = vmatpush.msra.mxu0 %v163
    %1243 = vmatpush.msra.mxu0 %v161
    %1244 = vmatpush.msra.mxu0 %v159
    %1245 = vmatmul.f32.gmra.mxu0 %v1207
    %v1246 = vpop.f32.mrf.mxu0
    %v1247 = vadd.f32 0.0, %v1246
    %1248 = vdwg.mxu0
    %v1249 = vadd.f32 %v1202, %v1227
    %v1250 = vadd.f32 %v1203, %v1247
    %v1251 = vxor.u32 %v1200, 2147483648
    %v1252 = vmul.f32 %v1251, 1.442695
    %v1253 = vpow.pop %v1252
    %v1254 = vadd.f32 %v1253, 1.0
    %v1255 = vrcp.pop %v1254
    %v1256 = vmul.f32 %v1254, %v1255
    %v1257 = vsub.f32 1.0, %v1256
    %v1258 = vmul.f32 %v1255, %v1257
    %v1259 = vadd.f32 %v1255, %v1258
    %vm1260 = vweird.f32 %v1254
    %vm1261 = vweird.f32 %v1255
    %vm1262 = vmor %vm1260, %vm1261
    %v1263 = vsel %vm1262, %v1255, %v1259
    %v1264 = vand.u32 2147483647, %v1254
    %vm1265 = vcmp.eq.f32.partialorder %v1264, 8.507059e+37
    %v1266 = vand.u32 %v1254, 2147483648
    %v1267 = vor.u32 1.1754944e-38, %v1266
    %v1268 = vsel %vm1265, %v1267, %v1263
    %v1269 = vmul.f32 1.0, %v1268
    %v1270 = vtanh.pop %v1201
    %v1271 = vxor.u32 %v1201, 2147483648
    %v1272 = vmul.f32 %v1271, 1.442695
    %v1273 = vpow.pop %v1272
    %v1274 = vadd.f32 %v1273, 1.0
    %v1275 = vrcp.pop %v1274
    %v1276 = vmul.f32 %v1274, %v1275
    %v1277 = vsub.f32 1.0, %v1276
    %v1278 = vmul.f32 %v1275, %v1277
    %v1279 = vadd.f32 %v1275, %v1278
    %vm1280 = vweird.f32 %v1274
    %vm1281 = vweird.f32 %v1275
    %vm1282 = vmor %vm1280, %vm1281
    %v1283 = vsel %vm1282, %v1275, %v1279
    %v1284 = vand.u32 2147483647, %v1274
    %vm1285 = vcmp.eq.f32.partialorder %v1284, 8.507059e+37
    %v1286 = vand.u32 %v1274, 2147483648
    %v1287 = vor.u32 1.1754944e-38, %v1286
    %v1288 = vsel %vm1285, %v1287, %v1283
    %v1289 = vmul.f32 1.0, %v1288
    %v1290 = vmul.f32 %v1269, %v1102
    %v1291 = vmul.f32 %v1269, %v1270
    %1293 = vrot.lane.b32.xlu0 %v1291, 64
    %v1294 = vpop.permute.xlu0 %1293
    %v1296 = vadd.f32 %v1290, %v1294
    %v1297 = vtanh.pop %v1296
    %v1298 = vmul.f32 %v1289, %v1297
    %v1299 = vxor.u32 %v1249, 2147483648
    %v1300 = vmul.f32 %v1299, 1.442695
    %v1301 = vpow.pop %v1300
    %v1302 = vadd.f32 %v1301, 1.0
    %v1303 = vrcp.pop %v1302
    %v1304 = vmul.f32 %v1302, %v1303
    %v1305 = vsub.f32 1.0, %v1304
    %v1306 = vmul.f32 %v1303, %v1305
    %v1307 = vadd.f32 %v1303, %v1306
    %vm1308 = vweird.f32 %v1302
    %vm1309 = vweird.f32 %v1303
    %vm1310 = vmor %vm1308, %vm1309
    %v1311 = vsel %vm1310, %v1303, %v1307
    %v1312 = vand.u32 2147483647, %v1302
    %vm1313 = vcmp.eq.f32.partialorder %v1312, 8.507059e+37
    %v1314 = vand.u32 %v1302, 2147483648
    %v1315 = vor.u32 1.1754944e-38, %v1314
    %v1316 = vsel %vm1313, %v1315, %v1311
    %v1317 = vmul.f32 1.0, %v1316
    %v1318 = vtanh.pop %v1250
    %v1319 = vxor.u32 %v1250, 2147483648
    %v1320 = vmul.f32 %v1319, 1.442695
    %v1321 = vpow.pop %v1320
    %v1322 = vadd.f32 %v1321, 1.0
    %v1323 = vrcp.pop %v1322
    %v1324 = vmul.f32 %v1322, %v1323
    %v1325 = vsub.f32 1.0, %v1324
    %v1326 = vmul.f32 %v1323, %v1325
    %v1327 = vadd.f32 %v1323, %v1326
    %vm1328 = vweird.f32 %v1322
    %vm1329 = vweird.f32 %v1323
    %vm1330 = vmor %vm1328, %vm1329
    %v1331 = vsel %vm1330, %v1323, %v1327
    %v1332 = vand.u32 2147483647, %v1322
    %vm1333 = vcmp.eq.f32.partialorder %v1332, 8.507059e+37
    %v1334 = vand.u32 %v1322, 2147483648
    %v1335 = vor.u32 1.1754944e-38, %v1334
    %v1336 = vsel %vm1333, %v1335, %v1331
    %v1337 = vmul.f32 1.0, %v1336
    %v1338 = vmul.f32 %v1317, %v1150
    %v1339 = vmul.f32 %v1317, %v1318
    %1341 = vrot.lane.b32.xlu0 %v1339, 64
    %v1342 = vpop.permute.xlu0 %1341
    %v1344 = vadd.f32 %v1338, %v1342
    %v1345 = vtanh.pop %v1344
    %v1346 = vmul.f32 %v1337, %v1345
    %v1347 = vld [vmem:[#allocation6 + $0x60] sm:$0xff]
    %v1348 = vld [vmem:[#allocation6 + $0x68] sm:$0xff]
    %1350 = vrot.lane.b32.xlu0 %v1298, 64
    %v1351 = vpop.permute.xlu0 %1350
    %v1352 = vsel %vm180, %v1351, 0
    %1354 = vmatpush.msra.mxu0 0.0
    %1355 = vmatpush.msra.mxu0 0.0
    %1356 = vmatpush.msra.mxu0 0.0
    %1357 = vmatpush.msra.mxu0 0.0
    %1358 = vmatpush.msra.mxu0 0.0
    %1359 = vmatpush.msra.mxu0 0.0
    %1360 = vmatpush.msra.mxu0 0.0
    %1361 = vmatpush.msra.mxu0 0.0
    %1362 = vmatpush.msra.mxu0 %v155
    %1363 = vmatpush.msra.mxu0 %v153
    %1364 = vmatpush.msra.mxu0 %v151
    %1365 = vmatpush.msra.mxu0 %v149
    %1366 = vmatpush.msra.mxu0 %v147
    %1367 = vmatpush.msra.mxu0 %v145
    %1368 = vmatpush.msra.mxu0 %v143
    %1369 = vmatpush.msra.mxu0 %v141
    %1370 = vmatmul.f32.gmra.mxu0 %v1352
    %v1371 = vpop.f32.mrf.mxu0
    %v1372 = vadd.f32 0.0, %v1371
    %1373 = vdwg.mxu0
    %1374 = vmatpush.msra.mxu0 0.0
    %1375 = vmatpush.msra.mxu0 0.0
    %1376 = vmatpush.msra.mxu0 0.0
    %1377 = vmatpush.msra.mxu0 0.0
    %1378 = vmatpush.msra.mxu0 0.0
    %1379 = vmatpush.msra.mxu0 0.0
    %1380 = vmatpush.msra.mxu0 0.0
    %1381 = vmatpush.msra.mxu0 0.0
    %1382 = vmatpush.msra.mxu0 %v156
    %1383 = vmatpush.msra.mxu0 %v154
    %1384 = vmatpush.msra.mxu0 %v152
    %1385 = vmatpush.msra.mxu0 %v150
    %1386 = vmatpush.msra.mxu0 %v148
    %1387 = vmatpush.msra.mxu0 %v146
    %1388 = vmatpush.msra.mxu0 %v144
    %1389 = vmatpush.msra.mxu0 %v142
    %1390 = vmatmul.f32.gmra.mxu0 %v1352
    %v1391 = vpop.f32.mrf.mxu0
    %v1392 = vadd.f32 0.0, %v1391
    %1393 = vdwg.mxu0
    %v1394 = vadd.f32 %v1347, %v1372
    %v1395 = vadd.f32 %v1348, %v1392
    %v1396 = vld [vmem:[#allocation7 + $0x10] sm:$0xff]
    %v1397 = vld [vmem:[#allocation7 + $0x18] sm:$0xff]
    %1399 = vrot.lane.b32.xlu0 %v1346, 64
    %v1400 = vpop.permute.xlu0 %1399
    %v1401 = vsel %vm180, %v1400, 0
    %1403 = vmatpush.msra.mxu0 0.0
    %1404 = vmatpush.msra.mxu0 0.0
    %1405 = vmatpush.msra.mxu0 0.0
    %1406 = vmatpush.msra.mxu0 0.0
    %1407 = vmatpush.msra.mxu0 0.0
    %1408 = vmatpush.msra.mxu0 0.0
    %1409 = vmatpush.msra.mxu0 0.0
    %1410 = vmatpush.msra.mxu0 0.0
    %1411 = vmatpush.msra.mxu0 %v172
    %1412 = vmatpush.msra.mxu0 %v170
    %1413 = vmatpush.msra.mxu0 %v168
    %1414 = vmatpush.msra.mxu0 %v166
    %1415 = vmatpush.msra.mxu0 %v164
    %1416 = vmatpush.msra.mxu0 %v162
    %1417 = vmatpush.msra.mxu0 %v160
    %1418 = vmatpush.msra.mxu0 %v158
    %1419 = vmatmul.f32.gmra.mxu0 %v1401
    %v1420 = vpop.f32.mrf.mxu0
    %v1421 = vadd.f32 0.0, %v1420
    %1422 = vdwg.mxu0
    %1423 = vmatpush.msra.mxu0 0.0
    %1424 = vmatpush.msra.mxu0 0.0
    %1425 = vmatpush.msra.mxu0 0.0
    %1426 = vmatpush.msra.mxu0 0.0
    %1427 = vmatpush.msra.mxu0 0.0
    %1428 = vmatpush.msra.mxu0 0.0
    %1429 = vmatpush.msra.mxu0 0.0
    %1430 = vmatpush.msra.mxu0 0.0
    %1431 = vmatpush.msra.mxu0 %v173
    %1432 = vmatpush.msra.mxu0 %v171
    %1433 = vmatpush.msra.mxu0 %v169
    %1434 = vmatpush.msra.mxu0 %v167
    %1435 = vmatpush.msra.mxu0 %v165
    %1436 = vmatpush.msra.mxu0 %v163
    %1437 = vmatpush.msra.mxu0 %v161
    %1438 = vmatpush.msra.mxu0 %v159
    %1439 = vmatmul.f32.gmra.mxu0 %v1401
    %v1440 = vpop.f32.mrf.mxu0
    %v1441 = vadd.f32 0.0, %v1440
    %1442 = vdwg.mxu0
    %v1443 = vadd.f32 %v1396, %v1421
    %v1444 = vadd.f32 %v1397, %v1441
    %v1445 = vxor.u32 %v1394, 2147483648
    %v1446 = vmul.f32 %v1445, 1.442695
    %v1447 = vpow.pop %v1446
    %v1448 = vadd.f32 %v1447, 1.0
    %v1449 = vrcp.pop %v1448
    %v1450 = vmul.f32 %v1448, %v1449
    %v1451 = vsub.f32 1.0, %v1450
    %v1452 = vmul.f32 %v1449, %v1451
    %v1453 = vadd.f32 %v1449, %v1452
    %vm1454 = vweird.f32 %v1448
    %vm1455 = vweird.f32 %v1449
    %vm1456 = vmor %vm1454, %vm1455
    %v1457 = vsel %vm1456, %v1449, %v1453
    %v1458 = vand.u32 2147483647, %v1448
    %vm1459 = vcmp.eq.f32.partialorder %v1458, 8.507059e+37
    %v1460 = vand.u32 %v1448, 2147483648
    %v1461 = vor.u32 1.1754944e-38, %v1460
    %v1462 = vsel %vm1459, %v1461, %v1457
    %v1463 = vmul.f32 1.0, %v1462
    %v1464 = vtanh.pop %v1395
    %v1465 = vxor.u32 %v1395, 2147483648
    %v1466 = vmul.f32 %v1465, 1.442695
    %v1467 = vpow.pop %v1466
    %v1468 = vadd.f32 %v1467, 1.0
    %v1469 = vrcp.pop %v1468
    %v1470 = vmul.f32 %v1468, %v1469
    %v1471 = vsub.f32 1.0, %v1470
    %v1472 = vmul.f32 %v1469, %v1471
    %v1473 = vadd.f32 %v1469, %v1472
    %vm1474 = vweird.f32 %v1468
    %vm1475 = vweird.f32 %v1469
    %vm1476 = vmor %vm1474, %vm1475
    %v1477 = vsel %vm1476, %v1469, %v1473
    %v1478 = vand.u32 2147483647, %v1468
    %vm1479 = vcmp.eq.f32.partialorder %v1478, 8.507059e+37
    %v1480 = vand.u32 %v1468, 2147483648
    %v1481 = vor.u32 1.1754944e-38, %v1480
    %v1482 = vsel %vm1479, %v1481, %v1477
    %v1483 = vmul.f32 1.0, %v1482
    %v1484 = vmul.f32 %v1463, %v1296
    %v1485 = vmul.f32 %v1463, %v1464
    %1487 = vrot.lane.b32.xlu0 %v1485, 64
    %v1488 = vpop.permute.xlu0 %1487
    %v1490 = vadd.f32 %v1484, %v1488
    %v1491 = vtanh.pop %v1490
    %v1492 = vmul.f32 %v1483, %v1491
    %v1493 = vxor.u32 %v1443, 2147483648
    %v1494 = vmul.f32 %v1493, 1.442695
    %v1495 = vpow.pop %v1494
    %v1496 = vadd.f32 %v1495, 1.0
    %v1497 = vrcp.pop %v1496
    %v1498 = vmul.f32 %v1496, %v1497
    %v1499 = vsub.f32 1.0, %v1498
    %v1500 = vmul.f32 %v1497, %v1499
    %v1501 = vadd.f32 %v1497, %v1500
    %vm1502 = vweird.f32 %v1496
    %vm1503 = vweird.f32 %v1497
    %vm1504 = vmor %vm1502, %vm1503
    %v1505 = vsel %vm1504, %v1497, %v1501
    %v1506 = vand.u32 2147483647, %v1496
    %vm1507 = vcmp.eq.f32.partialorder %v1506, 8.507059e+37
    %v1508 = vand.u32 %v1496, 2147483648
    %v1509 = vor.u32 1.1754944e-38, %v1508
    %v1510 = vsel %vm1507, %v1509, %v1505
    %v1511 = vmul.f32 1.0, %v1510
    %v1512 = vtanh.pop %v1444
    %v1513 = vxor.u32 %v1444, 2147483648
    %v1514 = vmul.f32 %v1513, 1.442695
    %v1515 = vpow.pop %v1514
    %v1516 = vadd.f32 %v1515, 1.0
    %v1517 = vrcp.pop %v1516
    %v1518 = vmul.f32 %v1516, %v1517
    %v1519 = vsub.f32 1.0, %v1518
    %v1520 = vmul.f32 %v1517, %v1519
    %v1521 = vadd.f32 %v1517, %v1520
    %vm1522 = vweird.f32 %v1516
    %vm1523 = vweird.f32 %v1517
    %vm1524 = vmor %vm1522, %vm1523
    %v1525 = vsel %vm1524, %v1517, %v1521
    %v1526 = vand.u32 2147483647, %v1516
    %vm1527 = vcmp.eq.f32.partialorder %v1526, 8.507059e+37
    %v1528 = vand.u32 %v1516, 2147483648
    %v1529 = vor.u32 1.1754944e-38, %v1528
    %v1530 = vsel %vm1527, %v1529, %v1525
    %v1531 = vmul.f32 1.0, %v1530
    %v1532 = vmul.f32 %v1511, %v1344
    %v1533 = vmul.f32 %v1511, %v1512
    %1535 = vrot.lane.b32.xlu0 %v1533, 64
    %v1536 = vpop.permute.xlu0 %1535
    %v1538 = vadd.f32 %v1532, %v1536
    %v1539 = vtanh.pop %v1538
    %v1540 = vmul.f32 %v1531, %v1539
    %v1541 = vld [vmem:[#allocation6 + $0x70] sm:$0xff]
    %v1542 = vld [vmem:[#allocation6 + $0x78] sm:$0xff]
    %1544 = vrot.lane.b32.xlu0 %v1492, 64
    %v1545 = vpop.permute.xlu0 %1544
    %v1546 = vsel %vm180, %v1545, 0
    %1548 = vmatpush.msra.mxu0 0.0
    %1549 = vmatpush.msra.mxu0 0.0
    %1550 = vmatpush.msra.mxu0 0.0
    %1551 = vmatpush.msra.mxu0 0.0
    %1552 = vmatpush.msra.mxu0 0.0
    %1553 = vmatpush.msra.mxu0 0.0
    %1554 = vmatpush.msra.mxu0 0.0
    %1555 = vmatpush.msra.mxu0 0.0
    %1556 = vmatpush.msra.mxu0 %v155
    %1557 = vmatpush.msra.mxu0 %v153
    %1558 = vmatpush.msra.mxu0 %v151
    %1559 = vmatpush.msra.mxu0 %v149
    %1560 = vmatpush.msra.mxu0 %v147
    %1561 = vmatpush.msra.mxu0 %v145
    %1562 = vmatpush.msra.mxu0 %v143
    %1563 = vmatpush.msra.mxu0 %v141
    %1564 = vmatmul.f32.gmra.mxu0 %v1546
    %v1565 = vpop.f32.mrf.mxu0
    %v1566 = vadd.f32 0.0, %v1565
    %1567 = vdwg.mxu0
    %1568 = vmatpush.msra.mxu0 0.0
    %1569 = vmatpush.msra.mxu0 0.0
    %1570 = vmatpush.msra.mxu0 0.0
    %1571 = vmatpush.msra.mxu0 0.0
    %1572 = vmatpush.msra.mxu0 0.0
    %1573 = vmatpush.msra.mxu0 0.0
    %1574 = vmatpush.msra.mxu0 0.0
    %1575 = vmatpush.msra.mxu0 0.0
    %1576 = vmatpush.msra.mxu0 %v156
    %1577 = vmatpush.msra.mxu0 %v154
    %1578 = vmatpush.msra.mxu0 %v152
    %1579 = vmatpush.msra.mxu0 %v150
    %1580 = vmatpush.msra.mxu0 %v148
    %1581 = vmatpush.msra.mxu0 %v146
    %1582 = vmatpush.msra.mxu0 %v144
    %1583 = vmatpush.msra.mxu0 %v142
    %1584 = vmatmul.f32.gmra.mxu0 %v1546
    %v1585 = vpop.f32.mrf.mxu0
    %v1586 = vadd.f32 0.0, %v1585
    %1587 = vdwg.mxu0
    %v1588 = vadd.f32 %v1541, %v1566
    %v1589 = vadd.f32 %v1542, %v1586
    %v1590 = vld [vmem:[#allocation7] sm:$0xff]
    %v1591 = vld [vmem:[#allocation7 + $0x8] sm:$0xff]
    %1593 = vrot.lane.b32.xlu0 %v1540, 64
    %v1594 = vpop.permute.xlu0 %1593
    %v1595 = vsel %vm180, %v1594, 0
    %1597 = vmatpush.msra.mxu0 0.0
    %1598 = vmatpush.msra.mxu0 0.0
    %1599 = vmatpush.msra.mxu0 0.0
    %1600 = vmatpush.msra.mxu0 0.0
    %1601 = vmatpush.msra.mxu0 0.0
    %1602 = vmatpush.msra.mxu0 0.0
    %1603 = vmatpush.msra.mxu0 0.0
    %1604 = vmatpush.msra.mxu0 0.0
    %1605 = vmatpush.msra.mxu0 %v172
    %1606 = vmatpush.msra.mxu0 %v170
    %1607 = vmatpush.msra.mxu0 %v168
    %1608 = vmatpush.msra.mxu0 %v166
    %1609 = vmatpush.msra.mxu0 %v164
    %1610 = vmatpush.msra.mxu0 %v162
    %1611 = vmatpush.msra.mxu0 %v160
    %1612 = vmatpush.msra.mxu0 %v158
    %1613 = vmatmul.f32.gmra.mxu0 %v1595
    %v1614 = vpop.f32.mrf.mxu0
    %v1615 = vadd.f32 0.0, %v1614
    %1616 = vdwg.mxu0
    %1617 = vmatpush.msra.mxu0 0.0
    %1618 = vmatpush.msra.mxu0 0.0
    %1619 = vmatpush.msra.mxu0 0.0
    %1620 = vmatpush.msra.mxu0 0.0
    %1621 = vmatpush.msra.mxu0 0.0
    %1622 = vmatpush.msra.mxu0 0.0
    %1623 = vmatpush.msra.mxu0 0.0
    %1624 = vmatpush.msra.mxu0 0.0
    %1625 = vmatpush.msra.mxu0 %v173
    %1626 = vmatpush.msra.mxu0 %v171
    %1627 = vmatpush.msra.mxu0 %v169
    %1628 = vmatpush.msra.mxu0 %v167
    %1629 = vmatpush.msra.mxu0 %v165
    %1630 = vmatpush.msra.mxu0 %v163
    %1631 = vmatpush.msra.mxu0 %v161
    %1632 = vmatpush.msra.mxu0 %v159
    %1633 = vmatmul.f32.gmra.mxu0 %v1595
    %v1634 = vpop.f32.mrf.mxu0
    %v1635 = vadd.f32 0.0, %v1634
    %1636 = vdwg.mxu0
    %v1637 = vadd.f32 %v1590, %v1615
    %v1638 = vadd.f32 %v1591, %v1635
    %v1639 = vxor.u32 %v1588, 2147483648
    %v1640 = vmul.f32 %v1639, 1.442695
    %v1641 = vpow.pop %v1640
    %v1642 = vadd.f32 %v1641, 1.0
    %v1643 = vrcp.pop %v1642
    %v1644 = vmul.f32 %v1642, %v1643
    %v1645 = vsub.f32 1.0, %v1644
    %v1646 = vmul.f32 %v1643, %v1645
    %v1647 = vadd.f32 %v1643, %v1646
    %vm1648 = vweird.f32 %v1642
    %vm1649 = vweird.f32 %v1643
    %vm1650 = vmor %vm1648, %vm1649
    %v1651 = vsel %vm1650, %v1643, %v1647
    %v1652 = vand.u32 2147483647, %v1642
    %vm1653 = vcmp.eq.f32.partialorder %v1652, 8.507059e+37
    %v1654 = vand.u32 %v1642, 2147483648
    %v1655 = vor.u32 1.1754944e-38, %v1654
    %v1656 = vsel %vm1653, %v1655, %v1651
    %v1657 = vmul.f32 1.0, %v1656
    %v1658 = vtanh.pop %v1589
    %v1659 = vxor.u32 %v1589, 2147483648
    %v1660 = vmul.f32 %v1659, 1.442695
    %v1661 = vpow.pop %v1660
    %v1662 = vadd.f32 %v1661, 1.0
    %v1663 = vrcp.pop %v1662
    %v1664 = vmul.f32 %v1662, %v1663
    %v1665 = vsub.f32 1.0, %v1664
    %v1666 = vmul.f32 %v1663, %v1665
    %v1667 = vadd.f32 %v1663, %v1666
    %vm1668 = vweird.f32 %v1662
    %vm1669 = vweird.f32 %v1663
    %vm1670 = vmor %vm1668, %vm1669
    %v1671 = vsel %vm1670, %v1663, %v1667
    %v1672 = vand.u32 2147483647, %v1662
    %vm1673 = vcmp.eq.f32.partialorder %v1672, 8.507059e+37
    %v1674 = vand.u32 %v1662, 2147483648
    %v1675 = vor.u32 1.1754944e-38, %v1674
    %v1676 = vsel %vm1673, %v1675, %v1671
    %v1677 = vmul.f32 1.0, %v1676
    %v1678 = vmul.f32 %v1657, %v1490
    %v1679 = vmul.f32 %v1657, %v1658
    %1681 = vrot.lane.b32.xlu0 %v1679, 64
    %v1682 = vpop.permute.xlu0 %1681
    %v1684 = vadd.f32 %v1678, %v1682
    %v1685 = vtanh.pop %v1684
    %v1686 = vmul.f32 %v1677, %v1685
    %v1687 = vxor.u32 %v1637, 2147483648
    %v1688 = vmul.f32 %v1687, 1.442695
    %v1689 = vpow.pop %v1688
    %v1690 = vadd.f32 %v1689, 1.0
    %v1691 = vrcp.pop %v1690
    %v1692 = vmul.f32 %v1690, %v1691
    %v1693 = vsub.f32 1.0, %v1692
    %v1694 = vmul.f32 %v1691, %v1693
    %v1695 = vadd.f32 %v1691, %v1694
    %vm1696 = vweird.f32 %v1690
    %vm1697 = vweird.f32 %v1691
    %vm1698 = vmor %vm1696, %vm1697
    %v1699 = vsel %vm1698, %v1691, %v1695
    %v1700 = vand.u32 2147483647, %v1690
    %vm1701 = vcmp.eq.f32.partialorder %v1700, 8.507059e+37
    %v1702 = vand.u32 %v1690, 2147483648
    %v1703 = vor.u32 1.1754944e-38, %v1702
    %v1704 = vsel %vm1701, %v1703, %v1699
    %v1705 = vmul.f32 1.0, %v1704
    %v1706 = vtanh.pop %v1638
    %v1707 = vxor.u32 %v1638, 2147483648
    %v1708 = vmul.f32 %v1707, 1.442695
    %v1709 = vpow.pop %v1708
    %v1710 = vadd.f32 %v1709, 1.0
    %v1711 = vrcp.pop %v1710
    %v1712 = vmul.f32 %v1710, %v1711
    %v1713 = vsub.f32 1.0, %v1712
    %v1714 = vmul.f32 %v1711, %v1713
    %v1715 = vadd.f32 %v1711, %v1714
    %vm1716 = vweird.f32 %v1710
    %vm1717 = vweird.f32 %v1711
    %vm1718 = vmor %vm1716, %vm1717
    %v1719 = vsel %vm1718, %v1711, %v1715
    %v1720 = vand.u32 2147483647, %v1710
    %vm1721 = vcmp.eq.f32.partialorder %v1720, 8.507059e+37
    %v1722 = vand.u32 %v1710, 2147483648
    %v1723 = vor.u32 1.1754944e-38, %v1722
    %v1724 = vsel %vm1721, %v1723, %v1719
    %v1725 = vmul.f32 1.0, %v1724
    %v1726 = vmul.f32 %v1705, %v1538
    %v1727 = vmul.f32 %v1705, %v1706
    %1729 = vrot.lane.b32.xlu0 %v1727, 64
    %v1730 = vpop.permute.xlu0 %1729
    %v1732 = vadd.f32 %v1726, %v1730
    %v1733 = vtanh.pop %v1732
    %v1734 = vmul.f32 %v1725, %v1733
    %1736 = vrot.lane.b32.xlu0 %v1686, 64
    %v1737 = vpop.permute.xlu0 %1736
    %1739 = vst.msk [vmem:[#allocation2] sm:$0xff] %vm180, %v1737
    %1741 = vrot.lane.b32.xlu0 %v1684, 64
    %v1742 = vpop.permute.xlu0 %1741
    %1744 = vst.msk [vmem:[#allocation3] sm:$0xff] %vm180, %v1742
    %1746 = vrot.lane.b32.xlu0 %v1734, 64
    %v1747 = vpop.permute.xlu0 %1746
    %1749 = vst.msk [vmem:[#allocation4] sm:$0xff] %vm180, %v1747
    %1751 = vrot.lane.b32.xlu0 %v1732, 64
    %v1752 = vpop.permute.xlu0 %1751
    %1754 = vst.msk [vmem:[#allocation5] sm:$0xff] %vm180, %v1752
    // Predicated region
    $region80: #{imdb_forward.7} parent=1 // pred_check
      %p1755 = pneg %p132
    $region81: #{imdb_forward.7} parent=1 // pred_check_branch
      %1757 = sbr.rel (%p1755) target = $region83
    $region82: #{imdb_forward.7} parent=1 // pred_region
      %v1758 = vld [vmem:[#allocation4] sm:$0xff]
      %v1759 = vld [vmem:[#allocation2] sm:$0xff]
      %1761 = vrot.lane.b32.xlu0 %v1759, 64
      %v1762 = vpop.permute.xlu0 %1761
      %v1764 = vsel %vm180, %v1758, %v1762
      %v1765 = vld [vmem:[%s3] sm:$0xff]
      %v1766 = vld [vmem:[%s3 + $0x8] sm:$0xff]
      %v1767 = vld [vmem:[%s3 + $0x10] sm:$0xff]
      %v1768 = vld [vmem:[%s3 + $0x18] sm:$0xff]
      %v1769 = vld [vmem:[%s3 + $0x20] sm:$0xff]
      %v1770 = vld [vmem:[%s3 + $0x28] sm:$0xff]
      %v1771 = vld [vmem:[%s3 + $0x30] sm:$0xff]
      %v1772 = vld [vmem:[%s3 + $0x38] sm:$0xff]
      %v1773 = vld [vmem:[%s3 + $0x40] sm:$0xff]
      %v1774 = vld [vmem:[%s3 + $0x48] sm:$0xff]
      %v1775 = vld [vmem:[%s3 + $0x50] sm:$0xff]
      %v1776 = vld [vmem:[%s3 + $0x58] sm:$0xff]
      %v1777 = vld [vmem:[%s3 + $0x60] sm:$0xff]
      %v1778 = vld [vmem:[%s3 + $0x68] sm:$0xff]
      %v1779 = vld [vmem:[%s3 + $0x70] sm:$0xff]
      %v1780 = vld [vmem:[%s3 + $0x78] sm:$0xff]
      %v1781 = vld [vmem:[%s4] sm:$0x1]
      %v1783 = vperm.slane %v1781, 0
      %1785 = vmatpush.msra.mxu0 %v1780
      %1786 = vmatpush.msra.mxu0 %v1779
      %1787 = vmatpush.msra.mxu0 %v1778
      %1788 = vmatpush.msra.mxu0 %v1777
      %1789 = vmatpush.msra.mxu0 %v1776
      %1790 = vmatpush.msra.mxu0 %v1775
      %1791 = vmatpush.msra.mxu0 %v1774
      %1792 = vmatpush.msra.mxu0 %v1773
      %1793 = vmatpush.msra.mxu0 %v1772
      %1794 = vmatpush.msra.mxu0 %v1771
      %1795 = vmatpush.msra.mxu0 %v1770
      %1796 = vmatpush.msra.mxu0 %v1769
      %1797 = vmatpush.msra.mxu0 %v1768
      %1798 = vmatpush.msra.mxu0 %v1767
      %1799 = vmatpush.msra.mxu0 %v1766
      %1800 = vmatpush.msra.mxu0 %v1765
      %1801 = vmatmul.f32.gmra.mxu0 %v1764
      %v1802 = vpop.f32.mrf.mxu0
      %v1803 = vadd.f32 %v1783, %v1802
      %1804 = vdwg.mxu0
      %v1805 = vmax.f32 %v1803, 0.0
      %v1806 = vld [vmem:[%s5] sm:$0xff]
      %v1807 = vld [vmem:[%s5 + $0x8] sm:$0xff]
      %v1808 = vld [vmem:[%s5 + $0x10] sm:$0xff]
      %v1809 = vld [vmem:[%s5 + $0x18] sm:$0xff]
      %v1810 = vld [vmem:[%s5 + $0x20] sm:$0xff]
      %v1811 = vld [vmem:[%s5 + $0x28] sm:$0xff]
      %v1812 = vld [vmem:[%s5 + $0x30] sm:$0xff]
      %v1813 = vld [vmem:[%s5 + $0x38] sm:$0xff]
      %v1814 = vld [vmem:[%s6] sm:$0x1]
      %v1816 = vperm.slane %v1814, 0
      %v1819 = vsel %vm180, %v1805, 0
      %1821 = vmatpush.msra.mxu0 0.0
      %1822 = vmatpush.msra.mxu0 0.0
      %1823 = vmatpush.msra.mxu0 0.0
      %1824 = vmatpush.msra.mxu0 0.0
      %1825 = vmatpush.msra.mxu0 0.0
      %1826 = vmatpush.msra.mxu0 0.0
      %1827 = vmatpush.msra.mxu0 0.0
      %1828 = vmatpush.msra.mxu0 0.0
      %1829 = vmatpush.msra.mxu0 %v1813
      %1830 = vmatpush.msra.mxu0 %v1812
      %1831 = vmatpush.msra.mxu0 %v1811
      %1832 = vmatpush.msra.mxu0 %v1810
      %1833 = vmatpush.msra.mxu0 %v1809
      %1834 = vmatpush.msra.mxu0 %v1808
      %1835 = vmatpush.msra.mxu0 %v1807
      %1836 = vmatpush.msra.mxu0 %v1806
      %1837 = vmatmul.f32.gmra.mxu0 %v1819
      %v1838 = vpop.f32.mrf.mxu0
      %v1839 = vadd.f32 %v1816, %v1838
      %1840 = vdwg.mxu0
      %vm1841 = vcmask 15360
      %v1842 = vsel %vm1841, %v1839, -inf
      %1843 = vmax.xlane.f32.xlu0 %v1842
      %v1844 = vpop.xlane.xlu0 %1843
      %v1845 = vsub.f32 %v1839, %v1844
      %v1846 = vmul.f32 %v1845, 1.442695
      %v1847 = vpow.pop %v1846
      %v1848 = vsel %vm1841, %v1847, 0.0
      %1849 = vadd.xlane.f32.xlu0 %v1848
      %v1850 = vpop.xlane.xlu0 %1849
      %v1851 = vlog2.pop %v1850
      %v1852 = vmul.f32 %v1851, 0.6931472
      %v1853 = vsub.f32 %v1845, %v1852
      %1854 = vst.msk [vmem:[%s7] sm:$0xff] %vm1841, %v1853
    $region83: #{imdb_forward.7} parent=1 // pred_fallthru
      _
    // Predicated region
    $region84: #{imdb_forward.7} parent=1 // pred_check
      _
    $region85: #{imdb_forward.7} parent=1 // pred_check_branch
      %1856 = sbr.rel (0) target = $region87
    $region86: #{imdb_forward.7} parent=1 // pred_region
      _
    $region87: #{imdb_forward.7} parent=1 // pred_fallthru
      _
    // Predicated region
    $region88: #{imdb_forward.7} parent=1 // pred_check
      _
    $region89: #{imdb_forward.7} parent=1 // pred_check_branch
      %1858 = sbr.rel (0) target = $region91
    $region90: #{imdb_forward.7} parent=1 // pred_region
      _
    $region91: #{imdb_forward.7} parent=1 // pred_fallthru
      _

</llo_original>
